<compile_context>
chip_gen: v5e
topology: v5e:2x2
jax: 0.10.0
libtpu: 0.0.40
codegen_flags: <defaults>
</compile_context>

<pallas_src>
from functools import partial

import jax
import jax.numpy as jnp
from jax.experimental import pallas as pl
from jax.experimental.pallas import tpu as pltpu


def _pad_base(W):
    # Lane-aligned start offset of the plane inside the flat padded scratch.
    return ((W + 1 + 127) // 128) * 128


# ---------------------------------------------------------------------------
# Fused kernel: 3x3 conv (2C -> 4) + two bilinear flow warps, one batch element
# per grid step.
# ---------------------------------------------------------------------------
def _align_kernel(x1_ref, x2_ref, w_ref, o1_ref, o2_ref, pad_ref, *,
                  H, W, dst_tile):
    # x1_ref, x2_ref : (1, C, H*W) input features (original dtype), lane-dense
    # w_ref          : (2C*3*3*4,) conv weights in SMEM,
    #                  flat index ((c*3 + ky)*3 + kx)*4 + o
    # o1_ref, o2_ref : (1, C, H*W) warped outputs
    # pad_ref        : (1, L) f32 VMEM scratch holding one zero-padded flat plane
    C = x1_ref.shape[1]
    HW = H * W
    cin = 2 * C
    f32 = jnp.float32

    # Flat destination-pixel coordinates p = y*W + x (float math; avoids int div).
    p_all = jax.lax.broadcasted_iota(jnp.int32, (1, HW), 1).astype(f32)
    py_all = jnp.floor((p_all + 0.5) / W)          # robust floor(p / W)
    px_all = p_all - py_all * W                    # p mod W

    # ------------------ 3x3 conv (2C -> 4), zero padding --------------------
    # Vertical out-of-range taps fall into the zeroed pad regions of the flat
    # scratch; horizontal wrap across row boundaries is masked on px.
    pad_ref[...] = jnp.zeros_like(pad_ref)
    base = _pad_base(W)                            # lane-aligned plane offset
    m_left = px_all >= 0.5                         # src x-1 is in range
    m_right = px_all <= W - 1.5                    # src x+1 is in range

    accs = [jnp.zeros((1, HW), f32) for _ in range(4)]
    for c in range(cin):
        src, cc = (x1_ref, c) if c < C else (x2_ref, c - C)
        pad_ref[0:1, base:base + HW] = src[0, cc:cc + 1, :].astype(f32)
        for ky in (-1, 0, 1):
            for kx in (-1, 0, 1):
                d = ky * W + kx
                tap = pad_ref[0:1, base + d: base + d + HW]
                if kx == -1:
                    tap = jnp.where(m_left, tap, 0.0)
                elif kx == 1:
                    tap = jnp.where(m_right, tap, 0.0)
                wbase = ((c * 3 + (ky + 1)) * 3 + (kx + 1)) * 4
                for o in range(4):
                    accs[o] = accs[o] + w_ref[wbase + o] * tap
    # flow channels: [f1x, f1y, f2x, f2y], each (1, HW) f32 (never hits HBM)
    flow = accs

    # ------- flow_warp == grid_sample(bilinear, zeros, align_corners=False) --
    # Un-normalized sample coord: u = p * size/(size-1) - 0.5 + 0.5 * flow
    sx = W / max(W - 1, 1)
    sy = H / max(H - 1, 1)
    q_src = jax.lax.broadcasted_iota(jnp.int32, (HW, 1), 0)    # source flat idx
    x1m = x1_ref[0].astype(jnp.bfloat16)                       # (C, HW) MXU lhs
    x2m = x2_ref[0].astype(jnp.bfloat16)

    for t in range(HW // dst_tile):                            # destination tiles
        s0 = t * dst_tile
        px = px_all[:, s0:s0 + dst_tile]                       # (1, T)
        py = py_all[:, s0:s0 + dst_tile]

        def warp_tile(xm, fx, fy, o_ref):
            ux = px * sx - 0.5 + 0.5 * fx[:, s0:s0 + dst_tile]
            uy = py * sy - 0.5 + 0.5 * fy[:, s0:s0 + dst_tile]
            x0 = jnp.floor(ux)
            y0 = jnp.floor(uy)
            tx = ux - x0
            ty = uy - y0

            def corner(ycf, xcf, wgt):
                ok = ((xcf >= 0.0) & (xcf <= W - 1.0) &
                      (ycf >= 0.0) & (ycf <= H - 1.0))
                wgt = jnp.where(ok, wgt, 0.0)                  # zeros padding mode
                xi = jnp.clip(xcf, 0.0, W - 1.0).astype(jnp.int32)
                yi = jnp.clip(ycf, 0.0, H - 1.0).astype(jnp.int32)
                qc = yi * W + xi                               # (1, T) src index
                return jnp.where(q_src == qc, wgt, 0.0)        # (HW, T) one-hot slab

            m = (corner(y0,       x0,       (1.0 - tx) * (1.0 - ty)) +
                 corner(y0,       x0 + 1.0, tx * (1.0 - ty)) +
                 corner(y0 + 1.0, x0,       (1.0 - tx) * ty) +
                 corner(y0 + 1.0, x0 + 1.0, tx * ty))
            out = jnp.dot(xm, m.astype(jnp.bfloat16),
                          preferred_element_type=jnp.float32)  # (C, T) f32
            o_ref[0, :, s0:s0 + dst_tile] = out.astype(o_ref.dtype)

        warp_tile(x1m, flow[0], flow[1], o1_ref)
        warp_tile(x2m, flow[2], flow[3], o2_ref)


# ---------------------------------------------------------------------------
# Wrapper: AlignModule.forward
# ---------------------------------------------------------------------------
def align_module_forward(x1, x2, flow_weight):
    """x1, x2: (N, C, H, W); flow_weight: (4, 2C, 3, 3) (Conv2d weight, no bias)."""
    N, C, H, W = x1.shape
    HW = H * W
    out_dtype = x1.dtype

    # Conv weights -> flat f32 vector for SMEM; index ((c*3 + ky)*3 + kx)*4 + o.
    w_flat = jnp.transpose(flow_weight.astype(jnp.float32), (1, 2, 3, 0)).reshape(-1)

    # Free (metadata-only) reshapes to a lane-dense layout; no dtype upcast.
    x1f = x1.reshape(N, C, HW)
    x2f = x2.reshape(N, C, HW)

    # Destination-pixel tile for the warp's one-hot slab: VMEM stays O(HW * T).
    dst_tile = HW
    if HW > 512:
        for cand in (512, 256, 128):
            if HW % cand == 0:
                dst_tile = cand
                break
    # TODO(synk): for very large H*W (where even an (HW, 512) slab / O(HW^2)
    # build dominates) a DMA-gather flow_warp variant is needed, and for
    # 2C >= 128 the conv channel reduction should move to the MXU.

    base = _pad_base(W)
    pad_len = base + HW + W + 1

    feat_spec = pl.BlockSpec((1, C, HW), lambda n: (n, 0, 0))
    o1, o2 = pl.pallas_call(
        partial(_align_kernel, H=H, W=W, dst_tile=dst_tile),
        out_shape=(jax.ShapeDtypeStruct((N, C, HW), out_dtype),
                   jax.ShapeDtypeStruct((N, C, HW), out_dtype)),
        grid_spec=pltpu.PrefetchScalarGridSpec(
            num_scalar_prefetch=0,
            grid=(N,),
            in_specs=[
                feat_spec,
                feat_spec,
                pl.BlockSpec(memory_space=pltpu.MemorySpace.SMEM),
            ],
            out_specs=(feat_spec, feat_spec),
            scratch_shapes=[pltpu.VMEM((1, pad_len), jnp.float32)],
        ),
        compiler_params=pltpu.CompilerParams(
            dimension_semantics=("parallel",),
            vmem_limit_bytes=32 * 1024 * 1024),
    )(x1f, x2f, w_flat)

    return o1.reshape(N, C, H, W), o2.reshape(N, C, H, W)


# ---------------------------------------------------------------------------
# Pure-JAX reference (mirrors the PyTorch module).
# ---------------------------------------------------------------------------
def _grid_sample_ref(x, flow):
    N, C, H, W = x.shape

    def one(xb, fb):                                   # xb: (C,H,W), fb: (2,H,W)
        jj = jnp.arange(W, dtype=jnp.float32)[None, :]
        ii = jnp.arange(H, dtype=jnp.float32)[:, None]
        gx = (-1.0 + 2.0 * jj / (W - 1)) + fb[0] / W
        gy = (-1.0 + 2.0 * ii / (H - 1)) + fb[1] / H
        ux = ((gx + 1.0) * W - 1.0) * 0.5              # align_corners=False
        uy = ((gy + 1.0) * H - 1.0) * 0.5
        x0 = jnp.floor(ux)
        y0 = jnp.floor(uy)
        tx = ux - x0
        ty = uy - y0

        def corner(ycf, xcf, wgt):
            ok = (xcf >= 0) & (xcf <= W - 1) & (ycf >= 0) & (ycf <= H - 1)
            wgt = jnp.where(ok, wgt, 0.0)
            xi = jnp.clip(xcf, 0, W - 1).astype(jnp.int32)
            yi = jnp.clip(ycf, 0, H - 1).astype(jnp.int32)
            return wgt[None] * xb[:, yi, xi]           # (C, H, W)

        return (corner(y0, x0, (1 - tx) * (1 - ty)) +
                corner(y0, x0 + 1, tx * (1 - ty)) +
                corner(y0 + 1, x0, (1 - tx) * ty) +
                corner(y0 + 1, x0 + 1, tx * ty))

    return jax.vmap(one)(x, flow)


def _align_module_ref(x1, x2, flow_weight):
    flow = jax.lax.conv_general_dilated(
        jnp.concatenate([x1, x2], axis=1), flow_weight,
        window_strides=(1, 1), padding=((1, 1), (1, 1)),
        dimension_numbers=("NCHW", "OIHW", "NCHW"),
        precision=jax.lax.Precision.HIGHEST)
    return (_grid_sample_ref(x1, flow[:, 0:2]),
            _grid_sample_ref(x2, flow[:, 2:4]))


if __name__ == "__main__":
    key = jax.random.PRNGKey(0)
    N, C, H, W = 2, 4, 16, 16
    k1, k2, kw = jax.random.split(key, 3)
    x1 = jax.random.normal(k1, (N, C, H, W), dtype=jnp.float32)
    x2 = jax.random.normal(k2, (N, C, H, W), dtype=jnp.float32)
    # Conv2d(2C -> 4, 3x3, bias=False) weight; scaled so flows stay moderate.
    flow_w = 0.2 * jax.random.normal(kw, (4, 2 * C, 3, 3), dtype=jnp.float32)

    fwd = jax.jit(align_module_forward)
    o1, o2 = fwd(x1, x2, flow_w)
    o1, o2 = jax.block_until_ready((o1, o2))

    r1, r2 = _align_module_ref(x1, x2, flow_w)
    # Tolerance covers the bf16 MXU path of the gather-matmul (features and
    # one-hot weights rounded to bf16, f32 accumulation); an indexing / bilinear
    # weight bug produces O(0.1 - 1) differences.
    assert jnp.allclose(o1, r1, atol=2e-2, rtol=2e-3), "x1_feat mismatch vs reference"
    assert jnp.allclose(o2, r2, atol=2e-2, rtol=2e-3), "x2_feat mismatch vs reference"

    print("KERNEL_OK")
</pallas_src>

<mosaic_0001>
module attributes {stable_mosaic.version = 11 : i64} {
  func.func @_align_kernel(%arg0: i32, %arg1: memref<1x4x256xf32, #tpu.memory_space<vmem>>, %arg2: memref<1x4x256xf32, #tpu.memory_space<vmem>>, %arg3: memref<288xf32, #tpu.memory_space<smem>>, %arg4: memref<1x4x256xf32, #tpu.memory_space<vmem>>, %arg5: memref<1x4x256xf32, #tpu.memory_space<vmem>>, %arg6: memref<1x401xf32, #tpu.memory_space<vmem>>) attributes {dimension_semantics = [#tpu.dimension_semantics<parallel>], iteration_bounds = array<i64: 2>, scalar_prefetch = 0 : i64, scratch_operands = 1 : i64, tpu.core_type = #tpu.core_type<tc>, window_params = [{transform_indices = @transform_0, window_bounds = array<i64: 1, 4, 256>}, {transform_indices = @transform_1, window_bounds = array<i64: 1, 4, 256>}, {transform_indices = @transform_2, window_bounds = array<i64: 288>}, {transform_indices = @transform_3, window_bounds = array<i64: 1, 4, 256>}, {transform_indices = @transform_4, window_bounds = array<i64: 1, 4, 256>}]} {
    %0 = tpu.iota {dimensions = array<i32: 1>} : vector<1x256xi32>
    %1 = arith.sitofp %0 : vector<1x256xi32> to vector<1x256xf32>
    %cst = arith.constant 5.000000e-01 : f32
    %2 = vector.broadcast %cst : f32 to vector<1x256xf32>
    %3 = arith.addf %1, %2 : vector<1x256xf32>
    %cst_0 = arith.constant 1.600000e+01 : f32
    %4 = vector.broadcast %cst_0 : f32 to vector<1x256xf32>
    %5 = arith.divf %3, %4 : vector<1x256xf32>
    %6 = math.floor %5 : vector<1x256xf32>
    %cst_1 = arith.constant 1.600000e+01 : f32
    %7 = vector.broadcast %cst_1 : f32 to vector<1x256xf32>
    %8 = arith.mulf %6, %7 : vector<1x256xf32>
    %9 = arith.subf %1, %8 : vector<1x256xf32>
    %cst_2 = arith.constant 0.000000e+00 : f32
    %10 = vector.broadcast %cst_2 : f32 to vector<1x401xf32>
    %c0 = arith.constant 0 : index
    %c0_3 = arith.constant 0 : index
    %11 = vector.load %arg6[%c0, %c0_3] : memref<1x401xf32, #tpu.memory_space<vmem>>, vector<1x401xf32>
    tpu.vector_store %arg6[%c0, %c0_3], %10 {strides = array<i32>} : memref<1x401xf32, #tpu.memory_space<vmem>>, vector<1x401xf32>,
    %cst_4 = arith.constant 5.000000e-01 : f32
    %12 = vector.broadcast %cst_4 : f32 to vector<1x256xf32>
    %13 = arith.cmpf oge, %9, %12 : vector<1x256xf32>
    %cst_5 = arith.constant 1.450000e+01 : f32
    %14 = vector.broadcast %cst_5 : f32 to vector<1x256xf32>
    %15 = arith.cmpf ole, %9, %14 : vector<1x256xf32>
    %cst_6 = arith.constant 0.000000e+00 : f32
    %16 = vector.broadcast %cst_6 : f32 to vector<1x256xf32>
    %cst_7 = arith.constant 0.000000e+00 : f32
    %17 = vector.broadcast %cst_7 : f32 to vector<1x256xf32>
    %cst_8 = arith.constant 0.000000e+00 : f32
    %18 = vector.broadcast %cst_8 : f32 to vector<1x256xf32>
    %cst_9 = arith.constant 0.000000e+00 : f32
    %19 = vector.broadcast %cst_9 : f32 to vector<1x256xf32>
    %c0_10 = arith.constant 0 : index
    %c0_11 = arith.constant 0 : index
    %c0_12 = arith.constant 0 : index
    %20 = vector.load %arg1[%c0_10, %c0_11, %c0_12] : memref<1x4x256xf32, #tpu.memory_space<vmem>>, vector<1x1x256xf32>
    %21 = vector.shape_cast %20 : vector<1x1x256xf32> to vector<1x256xf32>
    %c0_13 = arith.constant 0 : index
    %c128 = arith.constant 128 : index
    %22 = vector.load %arg6[%c0_13, %c128] : memref<1x401xf32, #tpu.memory_space<vmem>>, vector<1x256xf32>
    tpu.vector_store %arg6[%c0_13, %c128], %21 {strides = array<i32>} : memref<1x401xf32, #tpu.memory_space<vmem>>, vector<1x256xf32>,
    %c0_14 = arith.constant 0 : index
    %c111 = arith.constant 111 : index
    %23 = vector.load %arg6[%c0_14, %c111] : memref<1x401xf32, #tpu.memory_space<vmem>>, vector<1x256xf32>
    %cst_15 = arith.constant 0.000000e+00 : f32
    %24 = vector.broadcast %cst_15 : f32 to vector<1x256xf32>
    %25 = arith.select %13, %23, %24 : vector<1x256xi1>, vector<1x256xf32>
    %c0_16 = arith.constant 0 : index
    %26 = memref.load %arg3[%c0_16] : memref<288xf32, #tpu.memory_space<smem>>
    %27 = vector.broadcast %26 : f32 to vector<1x256xf32>
    %28 = arith.mulf %27, %25 : vector<1x256xf32>
    %29 = arith.addf %16, %28 : vector<1x256xf32>
    %c1 = arith.constant 1 : index
    %30 = memref.load %arg3[%c1] : memref<288xf32, #tpu.memory_space<smem>>
    %31 = vector.broadcast %30 : f32 to vector<1x256xf32>
    %32 = arith.mulf %31, %25 : vector<1x256xf32>
    %33 = arith.addf %17, %32 : vector<1x256xf32>
    %c2 = arith.constant 2 : index
    %34 = memref.load %arg3[%c2] : memref<288xf32, #tpu.memory_space<smem>>
    %35 = vector.broadcast %34 : f32 to vector<1x256xf32>
    %36 = arith.mulf %35, %25 : vector<1x256xf32>
    %37 = arith.addf %18, %36 : vector<1x256xf32>
    %c3 = arith.constant 3 : index
    %38 = memref.load %arg3[%c3] : memref<288xf32, #tpu.memory_space<smem>>
    %39 = vector.broadcast %38 : f32 to vector<1x256xf32>
    %40 = arith.mulf %39, %25 : vector<1x256xf32>
    %41 = arith.addf %19, %40 : vector<1x256xf32>
    %c0_17 = arith.constant 0 : index
    %c112 = arith.constant 112 : index
    %42 = vector.load %arg6[%c0_17, %c112] : memref<1x401xf32, #tpu.memory_space<vmem>>, vector<1x256xf32>
    %c4 = arith.constant 4 : index
    %43 = memref.load %arg3[%c4] : memref<288xf32, #tpu.memory_space<smem>>
    %44 = vector.broadcast %43 : f32 to vector<1x256xf32>
    %45 = arith.mulf %44, %42 : vector<1x256xf32>
    %46 = arith.addf %29, %45 : vector<1x256xf32>
    %c5 = arith.constant 5 : index
    %47 = memref.load %arg3[%c5] : memref<288xf32, #tpu.memory_space<smem>>
    %48 = vector.broadcast %47 : f32 to vector<1x256xf32>
    %49 = arith.mulf %48, %42 : vector<1x256xf32>
    %50 = arith.addf %33, %49 : vector<1x256xf32>
    %c6 = arith.constant 6 : index
    %51 = memref.load %arg3[%c6] : memref<288xf32, #tpu.memory_space<smem>>
    %52 = vector.broadcast %51 : f32 to vector<1x256xf32>
    %53 = arith.mulf %52, %42 : vector<1x256xf32>
    %54 = arith.addf %37, %53 : vector<1x256xf32>
    %c7 = arith.constant 7 : index
    %55 = memref.load %arg3[%c7] : memref<288xf32, #tpu.memory_space<smem>>
    %56 = vector.broadcast %55 : f32 to vector<1x256xf32>
    %57 = arith.mulf %56, %42 : vector<1x256xf32>
    %58 = arith.addf %41, %57 : vector<1x256xf32>
    %c0_18 = arith.constant 0 : index
    %c113 = arith.constant 113 : index
    %59 = vector.load %arg6[%c0_18, %c113] : memref<1x401xf32, #tpu.memory_space<vmem>>, vector<1x256xf32>
    %cst_19 = arith.constant 0.000000e+00 : f32
    %60 = vector.broadcast %cst_19 : f32 to vector<1x256xf32>
    %61 = arith.select %15, %59, %60 : vector<1x256xi1>, vector<1x256xf32>
    %c8 = arith.constant 8 : index
    %62 = memref.load %arg3[%c8] : memref<288xf32, #tpu.memory_space<smem>>
    %63 = vector.broadcast %62 : f32 to vector<1x256xf32>
    %64 = arith.mulf %63, %61 : vector<1x256xf32>
    %65 = arith.addf %46, %64 : vector<1x256xf32>
    %c9 = arith.constant 9 : index
    %66 = memref.load %arg3[%c9] : memref<288xf32, #tpu.memory_space<smem>>
    %67 = vector.broadcast %66 : f32 to vector<1x256xf32>
    %68 = arith.mulf %67, %61 : vector<1x256xf32>
    %69 = arith.addf %50, %68 : vector<1x256xf32>
    %c10 = arith.constant 10 : index
    %70 = memref.load %arg3[%c10] : memref<288xf32, #tpu.memory_space<smem>>
    %71 = vector.broadcast %70 : f32 to vector<1x256xf32>
    %72 = arith.mulf %71, %61 : vector<1x256xf32>
    %73 = arith.addf %54, %72 : vector<1x256xf32>
    %c11 = arith.constant 11 : index
    %74 = memref.load %arg3[%c11] : memref<288xf32, #tpu.memory_space<smem>>
    %75 = vector.broadcast %74 : f32 to vector<1x256xf32>
    %76 = arith.mulf %75, %61 : vector<1x256xf32>
    %77 = arith.addf %58, %76 : vector<1x256xf32>
    %c0_20 = arith.constant 0 : index
    %c127 = arith.constant 127 : index
    %78 = vector.load %arg6[%c0_20, %c127] : memref<1x401xf32, #tpu.memory_space<vmem>>, vector<1x256xf32>
    %cst_21 = arith.constant 0.000000e+00 : f32
    %79 = vector.broadcast %cst_21 : f32 to vector<1x256xf32>
    %80 = arith.select %13, %78, %79 : vector<1x256xi1>, vector<1x256xf32>
    %c12 = arith.constant 12 : index
    %81 = memref.load %arg3[%c12] : memref<288xf32, #tpu.memory_space<smem>>
    %82 = vector.broadcast %81 : f32 to vector<1x256xf32>
    %83 = arith.mulf %82, %80 : vector<1x256xf32>
    %84 = arith.addf %65, %83 : vector<1x256xf32>
    %c13 = arith.constant 13 : index
    %85 = memref.load %arg3[%c13] : memref<288xf32, #tpu.memory_space<smem>>
    %86 = vector.broadcast %85 : f32 to vector<1x256xf32>
    %87 = arith.mulf %86, %80 : vector<1x256xf32>
    %88 = arith.addf %69, %87 : vector<1x256xf32>
    %c14 = arith.constant 14 : index
    %89 = memref.load %arg3[%c14] : memref<288xf32, #tpu.memory_space<smem>>
    %90 = vector.broadcast %89 : f32 to vector<1x256xf32>
    %91 = arith.mulf %90, %80 : vector<1x256xf32>
    %92 = arith.addf %73, %91 : vector<1x256xf32>
    %c15 = arith.constant 15 : index
    %93 = memref.load %arg3[%c15] : memref<288xf32, #tpu.memory_space<smem>>
    %94 = vector.broadcast %93 : f32 to vector<1x256xf32>
    %95 = arith.mulf %94, %80 : vector<1x256xf32>
    %96 = arith.addf %77, %95 : vector<1x256xf32>
    %c0_22 = arith.constant 0 : index
    %c128_23 = arith.constant 128 : index
    %97 = vector.load %arg6[%c0_22, %c128_23] : memref<1x401xf32, #tpu.memory_space<vmem>>, vector<1x256xf32>
    %c16 = arith.constant 16 : index
    %98 = memref.load %arg3[%c16] : memref<288xf32, #tpu.memory_space<smem>>
    %99 = vector.broadcast %98 : f32 to vector<1x256xf32>
    %100 = arith.mulf %99, %97 : vector<1x256xf32>
    %101 = arith.addf %84, %100 : vector<1x256xf32>
    %c17 = arith.constant 17 : index
    %102 = memref.load %arg3[%c17] : memref<288xf32, #tpu.memory_space<smem>>
    %103 = vector.broadcast %102 : f32 to vector<1x256xf32>
    %104 = arith.mulf %103, %97 : vector<1x256xf32>
    %105 = arith.addf %88, %104 : vector<1x256xf32>
    %c18 = arith.constant 18 : index
    %106 = memref.load %arg3[%c18] : memref<288xf32, #tpu.memory_space<smem>>
    %107 = vector.broadcast %106 : f32 to vector<1x256xf32>
    %108 = arith.mulf %107, %97 : vector<1x256xf32>
    %109 = arith.addf %92, %108 : vector<1x256xf32>
    %c19 = arith.constant 19 : index
    %110 = memref.load %arg3[%c19] : memref<288xf32, #tpu.memory_space<smem>>
    %111 = vector.broadcast %110 : f32 to vector<1x256xf32>
    %112 = arith.mulf %111, %97 : vector<1x256xf32>
    %113 = arith.addf %96, %112 : vector<1x256xf32>
    %c0_24 = arith.constant 0 : index
    %c129 = arith.constant 129 : index
    %114 = vector.load %arg6[%c0_24, %c129] : memref<1x401xf32, #tpu.memory_space<vmem>>, vector<1x256xf32>
    %cst_25 = arith.constant 0.000000e+00 : f32
    %115 = vector.broadcast %cst_25 : f32 to vector<1x256xf32>
    %116 = arith.select %15, %114, %115 : vector<1x256xi1>, vector<1x256xf32>
    %c20 = arith.constant 20 : index
    %117 = memref.load %arg3[%c20] : memref<288xf32, #tpu.memory_space<smem>>
    %118 = vector.broadcast %117 : f32 to vector<1x256xf32>
    %119 = arith.mulf %118, %116 : vector<1x256xf32>
    %120 = arith.addf %101, %119 : vector<1x256xf32>
    %c21 = arith.constant 21 : index
    %121 = memref.load %arg3[%c21] : memref<288xf32, #tpu.memory_space<smem>>
    %122 = vector.broadcast %121 : f32 to vector<1x256xf32>
    %123 = arith.mulf %122, %116 : vector<1x256xf32>
    %124 = arith.addf %105, %123 : vector<1x256xf32>
    %c22 = arith.constant 22 : index
    %125 = memref.load %arg3[%c22] : memref<288xf32, #tpu.memory_space<smem>>
    %126 = vector.broadcast %125 : f32 to vector<1x256xf32>
    %127 = arith.mulf %126, %116 : vector<1x256xf32>
    %128 = arith.addf %109, %127 : vector<1x256xf32>
    %c23 = arith.constant 23 : index
    %129 = memref.load %arg3[%c23] : memref<288xf32, #tpu.memory_space<smem>>
    %130 = vector.broadcast %129 : f32 to vector<1x256xf32>
    %131 = arith.mulf %130, %116 : vector<1x256xf32>
    %132 = arith.addf %113, %131 : vector<1x256xf32>
    %c0_26 = arith.constant 0 : index
    %c143 = arith.constant 143 : index
    %133 = vector.load %arg6[%c0_26, %c143] : memref<1x401xf32, #tpu.memory_space<vmem>>, vector<1x256xf32>
    %cst_27 = arith.constant 0.000000e+00 : f32
    %134 = vector.broadcast %cst_27 : f32 to vector<1x256xf32>
    %135 = arith.select %13, %133, %134 : vector<1x256xi1>, vector<1x256xf32>
    %c24 = arith.constant 24 : index
    %136 = memref.load %arg3[%c24] : memref<288xf32, #tpu.memory_space<smem>>
    %137 = vector.broadcast %136 : f32 to vector<1x256xf32>
    %138 = arith.mulf %137, %135 : vector<1x256xf32>
    %139 = arith.addf %120, %138 : vector<1x256xf32>
    %c25 = arith.constant 25 : index
    %140 = memref.load %arg3[%c25] : memref<288xf32, #tpu.memory_space<smem>>
    %141 = vector.broadcast %140 : f32 to vector<1x256xf32>
    %142 = arith.mulf %141, %135 : vector<1x256xf32>
    %143 = arith.addf %124, %142 : vector<1x256xf32>
    %c26 = arith.constant 26 : index
    %144 = memref.load %arg3[%c26] : memref<288xf32, #tpu.memory_space<smem>>
    %145 = vector.broadcast %144 : f32 to vector<1x256xf32>
    %146 = arith.mulf %145, %135 : vector<1x256xf32>
    %147 = arith.addf %128, %146 : vector<1x256xf32>
    %c27 = arith.constant 27 : index
    %148 = memref.load %arg3[%c27] : memref<288xf32, #tpu.memory_space<smem>>
    %149 = vector.broadcast %148 : f32 to vector<1x256xf32>
    %150 = arith.mulf %149, %135 : vector<1x256xf32>
    %151 = arith.addf %132, %150 : vector<1x256xf32>
    %c0_28 = arith.constant 0 : index
    %c144 = arith.constant 144 : index
    %152 = vector.load %arg6[%c0_28, %c144] : memref<1x401xf32, #tpu.memory_space<vmem>>, vector<1x256xf32>
    %c28 = arith.constant 28 : index
    %153 = memref.load %arg3[%c28] : memref<288xf32, #tpu.memory_space<smem>>
    %154 = vector.broadcast %153 : f32 to vector<1x256xf32>
    %155 = arith.mulf %154, %152 : vector<1x256xf32>
    %156 = arith.addf %139, %155 : vector<1x256xf32>
    %c29 = arith.constant 29 : index
    %157 = memref.load %arg3[%c29] : memref<288xf32, #tpu.memory_space<smem>>
    %158 = vector.broadcast %157 : f32 to vector<1x256xf32>
    %159 = arith.mulf %158, %152 : vector<1x256xf32>
    %160 = arith.addf %143, %159 : vector<1x256xf32>
    %c30 = arith.constant 30 : index
    %161 = memref.load %arg3[%c30] : memref<288xf32, #tpu.memory_space<smem>>
    %162 = vector.broadcast %161 : f32 to vector<1x256xf32>
    %163 = arith.mulf %162, %152 : vector<1x256xf32>
    %164 = arith.addf %147, %163 : vector<1x256xf32>
    %c31 = arith.constant 31 : index
    %165 = memref.load %arg3[%c31] : memref<288xf32, #tpu.memory_space<smem>>
    %166 = vector.broadcast %165 : f32 to vector<1x256xf32>
    %167 = arith.mulf %166, %152 : vector<1x256xf32>
    %168 = arith.addf %151, %167 : vector<1x256xf32>
    %c0_29 = arith.constant 0 : index
    %c145 = arith.constant 145 : index
    %169 = vector.load %arg6[%c0_29, %c145] : memref<1x401xf32, #tpu.memory_space<vmem>>, vector<1x256xf32>
    %cst_30 = arith.constant 0.000000e+00 : f32
    %170 = vector.broadcast %cst_30 : f32 to vector<1x256xf32>
    %171 = arith.select %15, %169, %170 : vector<1x256xi1>, vector<1x256xf32>
    %c32 = arith.constant 32 : index
    %172 = memref.load %arg3[%c32] : memref<288xf32, #tpu.memory_space<smem>>
    %173 = vector.broadcast %172 : f32 to vector<1x256xf32>
    %174 = arith.mulf %173, %171 : vector<1x256xf32>
    %175 = arith.addf %156, %174 : vector<1x256xf32>
    %c33 = arith.constant 33 : index
    %176 = memref.load %arg3[%c33] : memref<288xf32, #tpu.memory_space<smem>>
    %177 = vector.broadcast %176 : f32 to vector<1x256xf32>
    %178 = arith.mulf %177, %171 : vector<1x256xf32>
    %179 = arith.addf %160, %178 : vector<1x256xf32>
    %c34 = arith.constant 34 : index
    %180 = memref.load %arg3[%c34] : memref<288xf32, #tpu.memory_space<smem>>
    %181 = vector.broadcast %180 : f32 to vector<1x256xf32>
    %182 = arith.mulf %181, %171 : vector<1x256xf32>
    %183 = arith.addf %164, %182 : vector<1x256xf32>
    %c35 = arith.constant 35 : index
    %184 = memref.load %arg3[%c35] : memref<288xf32, #tpu.memory_space<smem>>
    %185 = vector.broadcast %184 : f32 to vector<1x256xf32>
    %186 = arith.mulf %185, %171 : vector<1x256xf32>
    %187 = arith.addf %168, %186 : vector<1x256xf32>
    %c0_31 = arith.constant 0 : index
    %c1_32 = arith.constant 1 : index
    %c0_33 = arith.constant 0 : index
    %188 = vector.load %arg1[%c0_31, %c1_32, %c0_33] : memref<1x4x256xf32, #tpu.memory_space<vmem>>, vector<1x1x256xf32>
    %189 = vector.shape_cast %188 : vector<1x1x256xf32> to vector<1x256xf32>
    %c0_34 = arith.constant 0 : index
    %c128_35 = arith.constant 128 : index
    %190 = vector.load %arg6[%c0_34, %c128_35] : memref<1x401xf32, #tpu.memory_space<vmem>>, vector<1x256xf32>
    tpu.vector_store %arg6[%c0_34, %c128_35], %189 {strides = array<i32>} : memref<1x401xf32, #tpu.memory_space<vmem>>, vector<1x256xf32>,
    %c0_36 = arith.constant 0 : index
    %c111_37 = arith.constant 111 : index
    %191 = vector.load %arg6[%c0_36, %c111_37] : memref<1x401xf32, #tpu.memory_space<vmem>>, vector<1x256xf32>
    %cst_38 = arith.constant 0.000000e+00 : f32
    %192 = vector.broadcast %cst_38 : f32 to vector<1x256xf32>
    %193 = arith.select %13, %191, %192 : vector<1x256xi1>, vector<1x256xf32>
    %c36 = arith.constant 36 : index
    %194 = memref.load %arg3[%c36] : memref<288xf32, #tpu.memory_space<smem>>
    %195 = vector.broadcast %194 : f32 to vector<1x256xf32>
    %196 = arith.mulf %195, %193 : vector<1x256xf32>
    %197 = arith.addf %175, %196 : vector<1x256xf32>
    %c37 = arith.constant 37 : index
    %198 = memref.load %arg3[%c37] : memref<288xf32, #tpu.memory_space<smem>>
    %199 = vector.broadcast %198 : f32 to vector<1x256xf32>
    %200 = arith.mulf %199, %193 : vector<1x256xf32>
    %201 = arith.addf %179, %200 : vector<1x256xf32>
    %c38 = arith.constant 38 : index
    %202 = memref.load %arg3[%c38] : memref<288xf32, #tpu.memory_space<smem>>
    %203 = vector.broadcast %202 : f32 to vector<1x256xf32>
    %204 = arith.mulf %203, %193 : vector<1x256xf32>
    %205 = arith.addf %183, %204 : vector<1x256xf32>
    %c39 = arith.constant 39 : index
    %206 = memref.load %arg3[%c39] : memref<288xf32, #tpu.memory_space<smem>>
    %207 = vector.broadcast %206 : f32 to vector<1x256xf32>
    %208 = arith.mulf %207, %193 : vector<1x256xf32>
    %209 = arith.addf %187, %208 : vector<1x256xf32>
    %c0_39 = arith.constant 0 : index
    %c112_40 = arith.constant 112 : index
    %210 = vector.load %arg6[%c0_39, %c112_40] : memref<1x401xf32, #tpu.memory_space<vmem>>, vector<1x256xf32>
    %c40 = arith.constant 40 : index
    %211 = memref.load %arg3[%c40] : memref<288xf32, #tpu.memory_space<smem>>
    %212 = vector.broadcast %211 : f32 to vector<1x256xf32>
    %213 = arith.mulf %212, %210 : vector<1x256xf32>
    %214 = arith.addf %197, %213 : vector<1x256xf32>
    %c41 = arith.constant 41 : index
    %215 = memref.load %arg3[%c41] : memref<288xf32, #tpu.memory_space<smem>>
    %216 = vector.broadcast %215 : f32 to vector<1x256xf32>
    %217 = arith.mulf %216, %210 : vector<1x256xf32>
    %218 = arith.addf %201, %217 : vector<1x256xf32>
    %c42 = arith.constant 42 : index
    %219 = memref.load %arg3[%c42] : memref<288xf32, #tpu.memory_space<smem>>
    %220 = vector.broadcast %219 : f32 to vector<1x256xf32>
    %221 = arith.mulf %220, %210 : vector<1x256xf32>
    %222 = arith.addf %205, %221 : vector<1x256xf32>
    %c43 = arith.constant 43 : index
    %223 = memref.load %arg3[%c43] : memref<288xf32, #tpu.memory_space<smem>>
    %224 = vector.broadcast %223 : f32 to vector<1x256xf32>
    %225 = arith.mulf %224, %210 : vector<1x256xf32>
    %226 = arith.addf %209, %225 : vector<1x256xf32>
    %c0_41 = arith.constant 0 : index
    %c113_42 = arith.constant 113 : index
    %227 = vector.load %arg6[%c0_41, %c113_42] : memref<1x401xf32, #tpu.memory_space<vmem>>, vector<1x256xf32>
    %cst_43 = arith.constant 0.000000e+00 : f32
    %228 = vector.broadcast %cst_43 : f32 to vector<1x256xf32>
    %229 = arith.select %15, %227, %228 : vector<1x256xi1>, vector<1x256xf32>
    %c44 = arith.constant 44 : index
    %230 = memref.load %arg3[%c44] : memref<288xf32, #tpu.memory_space<smem>>
    %231 = vector.broadcast %230 : f32 to vector<1x256xf32>
    %232 = arith.mulf %231, %229 : vector<1x256xf32>
    %233 = arith.addf %214, %232 : vector<1x256xf32>
    %c45 = arith.constant 45 : index
    %234 = memref.load %arg3[%c45] : memref<288xf32, #tpu.memory_space<smem>>
    %235 = vector.broadcast %234 : f32 to vector<1x256xf32>
    %236 = arith.mulf %235, %229 : vector<1x256xf32>
    %237 = arith.addf %218, %236 : vector<1x256xf32>
    %c46 = arith.constant 46 : index
    %238 = memref.load %arg3[%c46] : memref<288xf32, #tpu.memory_space<smem>>
    %239 = vector.broadcast %238 : f32 to vector<1x256xf32>
    %240 = arith.mulf %239, %229 : vector<1x256xf32>
    %241 = arith.addf %222, %240 : vector<1x256xf32>
    %c47 = arith.constant 47 : index
    %242 = memref.load %arg3[%c47] : memref<288xf32, #tpu.memory_space<smem>>
    %243 = vector.broadcast %242 : f32 to vector<1x256xf32>
    %244 = arith.mulf %243, %229 : vector<1x256xf32>
    %245 = arith.addf %226, %244 : vector<1x256xf32>
    %c0_44 = arith.constant 0 : index
    %c127_45 = arith.constant 127 : index
    %246 = vector.load %arg6[%c0_44, %c127_45] : memref<1x401xf32, #tpu.memory_space<vmem>>, vector<1x256xf32>
    %cst_46 = arith.constant 0.000000e+00 : f32
    %247 = vector.broadcast %cst_46 : f32 to vector<1x256xf32>
    %248 = arith.select %13, %246, %247 : vector<1x256xi1>, vector<1x256xf32>
    %c48 = arith.constant 48 : index
    %249 = memref.load %arg3[%c48] : memref<288xf32, #tpu.memory_space<smem>>
    %250 = vector.broadcast %249 : f32 to vector<1x256xf32>
    %251 = arith.mulf %250, %248 : vector<1x256xf32>
    %252 = arith.addf %233, %251 : vector<1x256xf32>
    %c49 = arith.constant 49 : index
    %253 = memref.load %arg3[%c49] : memref<288xf32, #tpu.memory_space<smem>>
    %254 = vector.broadcast %253 : f32 to vector<1x256xf32>
    %255 = arith.mulf %254, %248 : vector<1x256xf32>
    %256 = arith.addf %237, %255 : vector<1x256xf32>
    %c50 = arith.constant 50 : index
    %257 = memref.load %arg3[%c50] : memref<288xf32, #tpu.memory_space<smem>>
    %258 = vector.broadcast %257 : f32 to vector<1x256xf32>
    %259 = arith.mulf %258, %248 : vector<1x256xf32>
    %260 = arith.addf %241, %259 : vector<1x256xf32>
    %c51 = arith.constant 51 : index
    %261 = memref.load %arg3[%c51] : memref<288xf32, #tpu.memory_space<smem>>
    %262 = vector.broadcast %261 : f32 to vector<1x256xf32>
    %263 = arith.mulf %262, %248 : vector<1x256xf32>
    %264 = arith.addf %245, %263 : vector<1x256xf32>
    %c0_47 = arith.constant 0 : index
    %c128_48 = arith.constant 128 : index
    %265 = vector.load %arg6[%c0_47, %c128_48] : memref<1x401xf32, #tpu.memory_space<vmem>>, vector<1x256xf32>
    %c52 = arith.constant 52 : index
    %266 = memref.load %arg3[%c52] : memref<288xf32, #tpu.memory_space<smem>>
    %267 = vector.broadcast %266 : f32 to vector<1x256xf32>
    %268 = arith.mulf %267, %265 : vector<1x256xf32>
    %269 = arith.addf %252, %268 : vector<1x256xf32>
    %c53 = arith.constant 53 : index
    %270 = memref.load %arg3[%c53] : memref<288xf32, #tpu.memory_space<smem>>
    %271 = vector.broadcast %270 : f32 to vector<1x256xf32>
    %272 = arith.mulf %271, %265 : vector<1x256xf32>
    %273 = arith.addf %256, %272 : vector<1x256xf32>
    %c54 = arith.constant 54 : index
    %274 = memref.load %arg3[%c54] : memref<288xf32, #tpu.memory_space<smem>>
    %275 = vector.broadcast %274 : f32 to vector<1x256xf32>
    %276 = arith.mulf %275, %265 : vector<1x256xf32>
    %277 = arith.addf %260, %276 : vector<1x256xf32>
    %c55 = arith.constant 55 : index
    %278 = memref.load %arg3[%c55] : memref<288xf32, #tpu.memory_space<smem>>
    %279 = vector.broadcast %278 : f32 to vector<1x256xf32>
    %280 = arith.mulf %279, %265 : vector<1x256xf32>
    %281 = arith.addf %264, %280 : vector<1x256xf32>
    %c0_49 = arith.constant 0 : index
    %c129_50 = arith.constant 129 : index
    %282 = vector.load %arg6[%c0_49, %c129_50] : memref<1x401xf32, #tpu.memory_space<vmem>>, vector<1x256xf32>
    %cst_51 = arith.constant 0.000000e+00 : f32
    %283 = vector.broadcast %cst_51 : f32 to vector<1x256xf32>
    %284 = arith.select %15, %282, %283 : vector<1x256xi1>, vector<1x256xf32>
    %c56 = arith.constant 56 : index
    %285 = memref.load %arg3[%c56] : memref<288xf32, #tpu.memory_space<smem>>
    %286 = vector.broadcast %285 : f32 to vector<1x256xf32>
    %287 = arith.mulf %286, %284 : vector<1x256xf32>
    %288 = arith.addf %269, %287 : vector<1x256xf32>
    %c57 = arith.constant 57 : index
    %289 = memref.load %arg3[%c57] : memref<288xf32, #tpu.memory_space<smem>>
    %290 = vector.broadcast %289 : f32 to vector<1x256xf32>
    %291 = arith.mulf %290, %284 : vector<1x256xf32>
    %292 = arith.addf %273, %291 : vector<1x256xf32>
    %c58 = arith.constant 58 : index
    %293 = memref.load %arg3[%c58] : memref<288xf32, #tpu.memory_space<smem>>
    %294 = vector.broadcast %293 : f32 to vector<1x256xf32>
    %295 = arith.mulf %294, %284 : vector<1x256xf32>
    %296 = arith.addf %277, %295 : vector<1x256xf32>
    %c59 = arith.constant 59 : index
    %297 = memref.load %arg3[%c59] : memref<288xf32, #tpu.memory_space<smem>>
    %298 = vector.broadcast %297 : f32 to vector<1x256xf32>
    %299 = arith.mulf %298, %284 : vector<1x256xf32>
    %300 = arith.addf %281, %299 : vector<1x256xf32>
    %c0_52 = arith.constant 0 : index
    %c143_53 = arith.constant 143 : index
    %301 = vector.load %arg6[%c0_52, %c143_53] : memref<1x401xf32, #tpu.memory_space<vmem>>, vector<1x256xf32>
    %cst_54 = arith.constant 0.000000e+00 : f32
    %302 = vector.broadcast %cst_54 : f32 to vector<1x256xf32>
    %303 = arith.select %13, %301, %302 : vector<1x256xi1>, vector<1x256xf32>
    %c60 = arith.constant 60 : index
    %304 = memref.load %arg3[%c60] : memref<288xf32, #tpu.memory_space<smem>>
    %305 = vector.broadcast %304 : f32 to vector<1x256xf32>
    %306 = arith.mulf %305, %303 : vector<1x256xf32>
    %307 = arith.addf %288, %306 : vector<1x256xf32>
    %c61 = arith.constant 61 : index
    %308 = memref.load %arg3[%c61] : memref<288xf32, #tpu.memory_space<smem>>
    %309 = vector.broadcast %308 : f32 to vector<1x256xf32>
    %310 = arith.mulf %309, %303 : vector<1x256xf32>
    %311 = arith.addf %292, %310 : vector<1x256xf32>
    %c62 = arith.constant 62 : index
    %312 = memref.load %arg3[%c62] : memref<288xf32, #tpu.memory_space<smem>>
    %313 = vector.broadcast %312 : f32 to vector<1x256xf32>
    %314 = arith.mulf %313, %303 : vector<1x256xf32>
    %315 = arith.addf %296, %314 : vector<1x256xf32>
    %c63 = arith.constant 63 : index
    %316 = memref.load %arg3[%c63] : memref<288xf32, #tpu.memory_space<smem>>
    %317 = vector.broadcast %316 : f32 to vector<1x256xf32>
    %318 = arith.mulf %317, %303 : vector<1x256xf32>
    %319 = arith.addf %300, %318 : vector<1x256xf32>
    %c0_55 = arith.constant 0 : index
    %c144_56 = arith.constant 144 : index
    %320 = vector.load %arg6[%c0_55, %c144_56] : memref<1x401xf32, #tpu.memory_space<vmem>>, vector<1x256xf32>
    %c64 = arith.constant 64 : index
    %321 = memref.load %arg3[%c64] : memref<288xf32, #tpu.memory_space<smem>>
    %322 = vector.broadcast %321 : f32 to vector<1x256xf32>
    %323 = arith.mulf %322, %320 : vector<1x256xf32>
    %324 = arith.addf %307, %323 : vector<1x256xf32>
    %c65 = arith.constant 65 : index
    %325 = memref.load %arg3[%c65] : memref<288xf32, #tpu.memory_space<smem>>
    %326 = vector.broadcast %325 : f32 to vector<1x256xf32>
    %327 = arith.mulf %326, %320 : vector<1x256xf32>
    %328 = arith.addf %311, %327 : vector<1x256xf32>
    %c66 = arith.constant 66 : index
    %329 = memref.load %arg3[%c66] : memref<288xf32, #tpu.memory_space<smem>>
    %330 = vector.broadcast %329 : f32 to vector<1x256xf32>
    %331 = arith.mulf %330, %320 : vector<1x256xf32>
    %332 = arith.addf %315, %331 : vector<1x256xf32>
    %c67 = arith.constant 67 : index
    %333 = memref.load %arg3[%c67] : memref<288xf32, #tpu.memory_space<smem>>
    %334 = vector.broadcast %333 : f32 to vector<1x256xf32>
    %335 = arith.mulf %334, %320 : vector<1x256xf32>
    %336 = arith.addf %319, %335 : vector<1x256xf32>
    %c0_57 = arith.constant 0 : index
    %c145_58 = arith.constant 145 : index
    %337 = vector.load %arg6[%c0_57, %c145_58] : memref<1x401xf32, #tpu.memory_space<vmem>>, vector<1x256xf32>
    %cst_59 = arith.constant 0.000000e+00 : f32
    %338 = vector.broadcast %cst_59 : f32 to vector<1x256xf32>
    %339 = arith.select %15, %337, %338 : vector<1x256xi1>, vector<1x256xf32>
    %c68 = arith.constant 68 : index
    %340 = memref.load %arg3[%c68] : memref<288xf32, #tpu.memory_space<smem>>
    %341 = vector.broadcast %340 : f32 to vector<1x256xf32>
    %342 = arith.mulf %341, %339 : vector<1x256xf32>
    %343 = arith.addf %324, %342 : vector<1x256xf32>
    %c69 = arith.constant 69 : index
    %344 = memref.load %arg3[%c69] : memref<288xf32, #tpu.memory_space<smem>>
    %345 = vector.broadcast %344 : f32 to vector<1x256xf32>
    %346 = arith.mulf %345, %339 : vector<1x256xf32>
    %347 = arith.addf %328, %346 : vector<1x256xf32>
    %c70 = arith.constant 70 : index
    %348 = memref.load %arg3[%c70] : memref<288xf32, #tpu.memory_space<smem>>
    %349 = vector.broadcast %348 : f32 to vector<1x256xf32>
    %350 = arith.mulf %349, %339 : vector<1x256xf32>
    %351 = arith.addf %332, %350 : vector<1x256xf32>
    %c71 = arith.constant 71 : index
    %352 = memref.load %arg3[%c71] : memref<288xf32, #tpu.memory_space<smem>>
    %353 = vector.broadcast %352 : f32 to vector<1x256xf32>
    %354 = arith.mulf %353, %339 : vector<1x256xf32>
    %355 = arith.addf %336, %354 : vector<1x256xf32>
    %c0_60 = arith.constant 0 : index
    %c2_61 = arith.constant 2 : index
    %c0_62 = arith.constant 0 : index
    %356 = vector.load %arg1[%c0_60, %c2_61, %c0_62] : memref<1x4x256xf32, #tpu.memory_space<vmem>>, vector<1x1x256xf32>
    %357 = vector.shape_cast %356 : vector<1x1x256xf32> to vector<1x256xf32>
    %c0_63 = arith.constant 0 : index
    %c128_64 = arith.constant 128 : index
    %358 = vector.load %arg6[%c0_63, %c128_64] : memref<1x401xf32, #tpu.memory_space<vmem>>, vector<1x256xf32>
    tpu.vector_store %arg6[%c0_63, %c128_64], %357 {strides = array<i32>} : memref<1x401xf32, #tpu.memory_space<vmem>>, vector<1x256xf32>,
    %c0_65 = arith.constant 0 : index
    %c111_66 = arith.constant 111 : index
    %359 = vector.load %arg6[%c0_65, %c111_66] : memref<1x401xf32, #tpu.memory_space<vmem>>, vector<1x256xf32>
    %cst_67 = arith.constant 0.000000e+00 : f32
    %360 = vector.broadcast %cst_67 : f32 to vector<1x256xf32>
    %361 = arith.select %13, %359, %360 : vector<1x256xi1>, vector<1x256xf32>
    %c72 = arith.constant 72 : index
    %362 = memref.load %arg3[%c72] : memref<288xf32, #tpu.memory_space<smem>>
    %363 = vector.broadcast %362 : f32 to vector<1x256xf32>
    %364 = arith.mulf %363, %361 : vector<1x256xf32>
    %365 = arith.addf %343, %364 : vector<1x256xf32>
    %c73 = arith.constant 73 : index
    %366 = memref.load %arg3[%c73] : memref<288xf32, #tpu.memory_space<smem>>
    %367 = vector.broadcast %366 : f32 to vector<1x256xf32>
    %368 = arith.mulf %367, %361 : vector<1x256xf32>
    %369 = arith.addf %347, %368 : vector<1x256xf32>
    %c74 = arith.constant 74 : index
    %370 = memref.load %arg3[%c74] : memref<288xf32, #tpu.memory_space<smem>>
    %371 = vector.broadcast %370 : f32 to vector<1x256xf32>
    %372 = arith.mulf %371, %361 : vector<1x256xf32>
    %373 = arith.addf %351, %372 : vector<1x256xf32>
    %c75 = arith.constant 75 : index
    %374 = memref.load %arg3[%c75] : memref<288xf32, #tpu.memory_space<smem>>
    %375 = vector.broadcast %374 : f32 to vector<1x256xf32>
    %376 = arith.mulf %375, %361 : vector<1x256xf32>
    %377 = arith.addf %355, %376 : vector<1x256xf32>
    %c0_68 = arith.constant 0 : index
    %c112_69 = arith.constant 112 : index
    %378 = vector.load %arg6[%c0_68, %c112_69] : memref<1x401xf32, #tpu.memory_space<vmem>>, vector<1x256xf32>
    %c76 = arith.constant 76 : index
    %379 = memref.load %arg3[%c76] : memref<288xf32, #tpu.memory_space<smem>>
    %380 = vector.broadcast %379 : f32 to vector<1x256xf32>
    %381 = arith.mulf %380, %378 : vector<1x256xf32>
    %382 = arith.addf %365, %381 : vector<1x256xf32>
    %c77 = arith.constant 77 : index
    %383 = memref.load %arg3[%c77] : memref<288xf32, #tpu.memory_space<smem>>
    %384 = vector.broadcast %383 : f32 to vector<1x256xf32>
    %385 = arith.mulf %384, %378 : vector<1x256xf32>
    %386 = arith.addf %369, %385 : vector<1x256xf32>
    %c78 = arith.constant 78 : index
    %387 = memref.load %arg3[%c78] : memref<288xf32, #tpu.memory_space<smem>>
    %388 = vector.broadcast %387 : f32 to vector<1x256xf32>
    %389 = arith.mulf %388, %378 : vector<1x256xf32>
    %390 = arith.addf %373, %389 : vector<1x256xf32>
    %c79 = arith.constant 79 : index
    %391 = memref.load %arg3[%c79] : memref<288xf32, #tpu.memory_space<smem>>
    %392 = vector.broadcast %391 : f32 to vector<1x256xf32>
    %393 = arith.mulf %392, %378 : vector<1x256xf32>
    %394 = arith.addf %377, %393 : vector<1x256xf32>
    %c0_70 = arith.constant 0 : index
    %c113_71 = arith.constant 113 : index
    %395 = vector.load %arg6[%c0_70, %c113_71] : memref<1x401xf32, #tpu.memory_space<vmem>>, vector<1x256xf32>
    %cst_72 = arith.constant 0.000000e+00 : f32
    %396 = vector.broadcast %cst_72 : f32 to vector<1x256xf32>
    %397 = arith.select %15, %395, %396 : vector<1x256xi1>, vector<1x256xf32>
    %c80 = arith.constant 80 : index
    %398 = memref.load %arg3[%c80] : memref<288xf32, #tpu.memory_space<smem>>
    %399 = vector.broadcast %398 : f32 to vector<1x256xf32>
    %400 = arith.mulf %399, %397 : vector<1x256xf32>
    %401 = arith.addf %382, %400 : vector<1x256xf32>
    %c81 = arith.constant 81 : index
    %402 = memref.load %arg3[%c81] : memref<288xf32, #tpu.memory_space<smem>>
    %403 = vector.broadcast %402 : f32 to vector<1x256xf32>
    %404 = arith.mulf %403, %397 : vector<1x256xf32>
    %405 = arith.addf %386, %404 : vector<1x256xf32>
    %c82 = arith.constant 82 : index
    %406 = memref.load %arg3[%c82] : memref<288xf32, #tpu.memory_space<smem>>
    %407 = vector.broadcast %406 : f32 to vector<1x256xf32>
    %408 = arith.mulf %407, %397 : vector<1x256xf32>
    %409 = arith.addf %390, %408 : vector<1x256xf32>
    %c83 = arith.constant 83 : index
    %410 = memref.load %arg3[%c83] : memref<288xf32, #tpu.memory_space<smem>>
    %411 = vector.broadcast %410 : f32 to vector<1x256xf32>
    %412 = arith.mulf %411, %397 : vector<1x256xf32>
    %413 = arith.addf %394, %412 : vector<1x256xf32>
    %c0_73 = arith.constant 0 : index
    %c127_74 = arith.constant 127 : index
    %414 = vector.load %arg6[%c0_73, %c127_74] : memref<1x401xf32, #tpu.memory_space<vmem>>, vector<1x256xf32>
    %cst_75 = arith.constant 0.000000e+00 : f32
    %415 = vector.broadcast %cst_75 : f32 to vector<1x256xf32>
    %416 = arith.select %13, %414, %415 : vector<1x256xi1>, vector<1x256xf32>
    %c84 = arith.constant 84 : index
    %417 = memref.load %arg3[%c84] : memref<288xf32, #tpu.memory_space<smem>>
    %418 = vector.broadcast %417 : f32 to vector<1x256xf32>
    %419 = arith.mulf %418, %416 : vector<1x256xf32>
    %420 = arith.addf %401, %419 : vector<1x256xf32>
    %c85 = arith.constant 85 : index
    %421 = memref.load %arg3[%c85] : memref<288xf32, #tpu.memory_space<smem>>
    %422 = vector.broadcast %421 : f32 to vector<1x256xf32>
    %423 = arith.mulf %422, %416 : vector<1x256xf32>
    %424 = arith.addf %405, %423 : vector<1x256xf32>
    %c86 = arith.constant 86 : index
    %425 = memref.load %arg3[%c86] : memref<288xf32, #tpu.memory_space<smem>>
    %426 = vector.broadcast %425 : f32 to vector<1x256xf32>
    %427 = arith.mulf %426, %416 : vector<1x256xf32>
    %428 = arith.addf %409, %427 : vector<1x256xf32>
    %c87 = arith.constant 87 : index
    %429 = memref.load %arg3[%c87] : memref<288xf32, #tpu.memory_space<smem>>
    %430 = vector.broadcast %429 : f32 to vector<1x256xf32>
    %431 = arith.mulf %430, %416 : vector<1x256xf32>
    %432 = arith.addf %413, %431 : vector<1x256xf32>
    %c0_76 = arith.constant 0 : index
    %c128_77 = arith.constant 128 : index
    %433 = vector.load %arg6[%c0_76, %c128_77] : memref<1x401xf32, #tpu.memory_space<vmem>>, vector<1x256xf32>
    %c88 = arith.constant 88 : index
    %434 = memref.load %arg3[%c88] : memref<288xf32, #tpu.memory_space<smem>>
    %435 = vector.broadcast %434 : f32 to vector<1x256xf32>
    %436 = arith.mulf %435, %433 : vector<1x256xf32>
    %437 = arith.addf %420, %436 : vector<1x256xf32>
    %c89 = arith.constant 89 : index
    %438 = memref.load %arg3[%c89] : memref<288xf32, #tpu.memory_space<smem>>
    %439 = vector.broadcast %438 : f32 to vector<1x256xf32>
    %440 = arith.mulf %439, %433 : vector<1x256xf32>
    %441 = arith.addf %424, %440 : vector<1x256xf32>
    %c90 = arith.constant 90 : index
    %442 = memref.load %arg3[%c90] : memref<288xf32, #tpu.memory_space<smem>>
    %443 = vector.broadcast %442 : f32 to vector<1x256xf32>
    %444 = arith.mulf %443, %433 : vector<1x256xf32>
    %445 = arith.addf %428, %444 : vector<1x256xf32>
    %c91 = arith.constant 91 : index
    %446 = memref.load %arg3[%c91] : memref<288xf32, #tpu.memory_space<smem>>
    %447 = vector.broadcast %446 : f32 to vector<1x256xf32>
    %448 = arith.mulf %447, %433 : vector<1x256xf32>
    %449 = arith.addf %432, %448 : vector<1x256xf32>
    %c0_78 = arith.constant 0 : index
    %c129_79 = arith.constant 129 : index
    %450 = vector.load %arg6[%c0_78, %c129_79] : memref<1x401xf32, #tpu.memory_space<vmem>>, vector<1x256xf32>
    %cst_80 = arith.constant 0.000000e+00 : f32
    %451 = vector.broadcast %cst_80 : f32 to vector<1x256xf32>
    %452 = arith.select %15, %450, %451 : vector<1x256xi1>, vector<1x256xf32>
    %c92 = arith.constant 92 : index
    %453 = memref.load %arg3[%c92] : memref<288xf32, #tpu.memory_space<smem>>
    %454 = vector.broadcast %453 : f32 to vector<1x256xf32>
    %455 = arith.mulf %454, %452 : vector<1x256xf32>
    %456 = arith.addf %437, %455 : vector<1x256xf32>
    %c93 = arith.constant 93 : index
    %457 = memref.load %arg3[%c93] : memref<288xf32, #tpu.memory_space<smem>>
    %458 = vector.broadcast %457 : f32 to vector<1x256xf32>
    %459 = arith.mulf %458, %452 : vector<1x256xf32>
    %460 = arith.addf %441, %459 : vector<1x256xf32>
    %c94 = arith.constant 94 : index
    %461 = memref.load %arg3[%c94] : memref<288xf32, #tpu.memory_space<smem>>
    %462 = vector.broadcast %461 : f32 to vector<1x256xf32>
    %463 = arith.mulf %462, %452 : vector<1x256xf32>
    %464 = arith.addf %445, %463 : vector<1x256xf32>
    %c95 = arith.constant 95 : index
    %465 = memref.load %arg3[%c95] : memref<288xf32, #tpu.memory_space<smem>>
    %466 = vector.broadcast %465 : f32 to vector<1x256xf32>
    %467 = arith.mulf %466, %452 : vector<1x256xf32>
    %468 = arith.addf %449, %467 : vector<1x256xf32>
    %c0_81 = arith.constant 0 : index
    %c143_82 = arith.constant 143 : index
    %469 = vector.load %arg6[%c0_81, %c143_82] : memref<1x401xf32, #tpu.memory_space<vmem>>, vector<1x256xf32>
    %cst_83 = arith.constant 0.000000e+00 : f32
    %470 = vector.broadcast %cst_83 : f32 to vector<1x256xf32>
    %471 = arith.select %13, %469, %470 : vector<1x256xi1>, vector<1x256xf32>
    %c96 = arith.constant 96 : index
    %472 = memref.load %arg3[%c96] : memref<288xf32, #tpu.memory_space<smem>>
    %473 = vector.broadcast %472 : f32 to vector<1x256xf32>
    %474 = arith.mulf %473, %471 : vector<1x256xf32>
    %475 = arith.addf %456, %474 : vector<1x256xf32>
    %c97 = arith.constant 97 : index
    %476 = memref.load %arg3[%c97] : memref<288xf32, #tpu.memory_space<smem>>
    %477 = vector.broadcast %476 : f32 to vector<1x256xf32>
    %478 = arith.mulf %477, %471 : vector<1x256xf32>
    %479 = arith.addf %460, %478 : vector<1x256xf32>
    %c98 = arith.constant 98 : index
    %480 = memref.load %arg3[%c98] : memref<288xf32, #tpu.memory_space<smem>>
    %481 = vector.broadcast %480 : f32 to vector<1x256xf32>
    %482 = arith.mulf %481, %471 : vector<1x256xf32>
    %483 = arith.addf %464, %482 : vector<1x256xf32>
    %c99 = arith.constant 99 : index
    %484 = memref.load %arg3[%c99] : memref<288xf32, #tpu.memory_space<smem>>
    %485 = vector.broadcast %484 : f32 to vector<1x256xf32>
    %486 = arith.mulf %485, %471 : vector<1x256xf32>
    %487 = arith.addf %468, %486 : vector<1x256xf32>
    %c0_84 = arith.constant 0 : index
    %c144_85 = arith.constant 144 : index
    %488 = vector.load %arg6[%c0_84, %c144_85] : memref<1x401xf32, #tpu.memory_space<vmem>>, vector<1x256xf32>
    %c100 = arith.constant 100 : index
    %489 = memref.load %arg3[%c100] : memref<288xf32, #tpu.memory_space<smem>>
    %490 = vector.broadcast %489 : f32 to vector<1x256xf32>
    %491 = arith.mulf %490, %488 : vector<1x256xf32>
    %492 = arith.addf %475, %491 : vector<1x256xf32>
    %c101 = arith.constant 101 : index
    %493 = memref.load %arg3[%c101] : memref<288xf32, #tpu.memory_space<smem>>
    %494 = vector.broadcast %493 : f32 to vector<1x256xf32>
    %495 = arith.mulf %494, %488 : vector<1x256xf32>
    %496 = arith.addf %479, %495 : vector<1x256xf32>
    %c102 = arith.constant 102 : index
    %497 = memref.load %arg3[%c102] : memref<288xf32, #tpu.memory_space<smem>>
    %498 = vector.broadcast %497 : f32 to vector<1x256xf32>
    %499 = arith.mulf %498, %488 : vector<1x256xf32>
    %500 = arith.addf %483, %499 : vector<1x256xf32>
    %c103 = arith.constant 103 : index
    %501 = memref.load %arg3[%c103] : memref<288xf32, #tpu.memory_space<smem>>
    %502 = vector.broadcast %501 : f32 to vector<1x256xf32>
    %503 = arith.mulf %502, %488 : vector<1x256xf32>
    %504 = arith.addf %487, %503 : vector<1x256xf32>
    %c0_86 = arith.constant 0 : index
    %c145_87 = arith.constant 145 : index
    %505 = vector.load %arg6[%c0_86, %c145_87] : memref<1x401xf32, #tpu.memory_space<vmem>>, vector<1x256xf32>
    %cst_88 = arith.constant 0.000000e+00 : f32
    %506 = vector.broadcast %cst_88 : f32 to vector<1x256xf32>
    %507 = arith.select %15, %505, %506 : vector<1x256xi1>, vector<1x256xf32>
    %c104 = arith.constant 104 : index
    %508 = memref.load %arg3[%c104] : memref<288xf32, #tpu.memory_space<smem>>
    %509 = vector.broadcast %508 : f32 to vector<1x256xf32>
    %510 = arith.mulf %509, %507 : vector<1x256xf32>
    %511 = arith.addf %492, %510 : vector<1x256xf32>
    %c105 = arith.constant 105 : index
    %512 = memref.load %arg3[%c105] : memref<288xf32, #tpu.memory_space<smem>>
    %513 = vector.broadcast %512 : f32 to vector<1x256xf32>
    %514 = arith.mulf %513, %507 : vector<1x256xf32>
    %515 = arith.addf %496, %514 : vector<1x256xf32>
    %c106 = arith.constant 106 : index
    %516 = memref.load %arg3[%c106] : memref<288xf32, #tpu.memory_space<smem>>
    %517 = vector.broadcast %516 : f32 to vector<1x256xf32>
    %518 = arith.mulf %517, %507 : vector<1x256xf32>
    %519 = arith.addf %500, %518 : vector<1x256xf32>
    %c107 = arith.constant 107 : index
    %520 = memref.load %arg3[%c107] : memref<288xf32, #tpu.memory_space<smem>>
    %521 = vector.broadcast %520 : f32 to vector<1x256xf32>
    %522 = arith.mulf %521, %507 : vector<1x256xf32>
    %523 = arith.addf %504, %522 : vector<1x256xf32>
    %c0_89 = arith.constant 0 : index
    %c3_90 = arith.constant 3 : index
    %c0_91 = arith.constant 0 : index
    %524 = vector.load %arg1[%c0_89, %c3_90, %c0_91] : memref<1x4x256xf32, #tpu.memory_space<vmem>>, vector<1x1x256xf32>
    %525 = vector.shape_cast %524 : vector<1x1x256xf32> to vector<1x256xf32>
    %c0_92 = arith.constant 0 : index
    %c128_93 = arith.constant 128 : index
    %526 = vector.load %arg6[%c0_92, %c128_93] : memref<1x401xf32, #tpu.memory_space<vmem>>, vector<1x256xf32>
    tpu.vector_store %arg6[%c0_92, %c128_93], %525 {strides = array<i32>} : memref<1x401xf32, #tpu.memory_space<vmem>>, vector<1x256xf32>,
    %c0_94 = arith.constant 0 : index
    %c111_95 = arith.constant 111 : index
    %527 = vector.load %arg6[%c0_94, %c111_95] : memref<1x401xf32, #tpu.memory_space<vmem>>, vector<1x256xf32>
    %cst_96 = arith.constant 0.000000e+00 : f32
    %528 = vector.broadcast %cst_96 : f32 to vector<1x256xf32>
    %529 = arith.select %13, %527, %528 : vector<1x256xi1>, vector<1x256xf32>
    %c108 = arith.constant 108 : index
    %530 = memref.load %arg3[%c108] : memref<288xf32, #tpu.memory_space<smem>>
    %531 = vector.broadcast %530 : f32 to vector<1x256xf32>
    %532 = arith.mulf %531, %529 : vector<1x256xf32>
    %533 = arith.addf %511, %532 : vector<1x256xf32>
    %c109 = arith.constant 109 : index
    %534 = memref.load %arg3[%c109] : memref<288xf32, #tpu.memory_space<smem>>
    %535 = vector.broadcast %534 : f32 to vector<1x256xf32>
    %536 = arith.mulf %535, %529 : vector<1x256xf32>
    %537 = arith.addf %515, %536 : vector<1x256xf32>
    %c110 = arith.constant 110 : index
    %538 = memref.load %arg3[%c110] : memref<288xf32, #tpu.memory_space<smem>>
    %539 = vector.broadcast %538 : f32 to vector<1x256xf32>
    %540 = arith.mulf %539, %529 : vector<1x256xf32>
    %541 = arith.addf %519, %540 : vector<1x256xf32>
    %c111_97 = arith.constant 111 : index
    %542 = memref.load %arg3[%c111_97] : memref<288xf32, #tpu.memory_space<smem>>
    %543 = vector.broadcast %542 : f32 to vector<1x256xf32>
    %544 = arith.mulf %543, %529 : vector<1x256xf32>
    %545 = arith.addf %523, %544 : vector<1x256xf32>
    %c0_98 = arith.constant 0 : index
    %c112_99 = arith.constant 112 : index
    %546 = vector.load %arg6[%c0_98, %c112_99] : memref<1x401xf32, #tpu.memory_space<vmem>>, vector<1x256xf32>
    %c112_100 = arith.constant 112 : index
    %547 = memref.load %arg3[%c112_100] : memref<288xf32, #tpu.memory_space<smem>>
    %548 = vector.broadcast %547 : f32 to vector<1x256xf32>
    %549 = arith.mulf %548, %546 : vector<1x256xf32>
    %550 = arith.addf %533, %549 : vector<1x256xf32>
    %c113_101 = arith.constant 113 : index
    %551 = memref.load %arg3[%c113_101] : memref<288xf32, #tpu.memory_space<smem>>
    %552 = vector.broadcast %551 : f32 to vector<1x256xf32>
    %553 = arith.mulf %552, %546 : vector<1x256xf32>
    %554 = arith.addf %537, %553 : vector<1x256xf32>
    %c114 = arith.constant 114 : index
    %555 = memref.load %arg3[%c114] : memref<288xf32, #tpu.memory_space<smem>>
    %556 = vector.broadcast %555 : f32 to vector<1x256xf32>
    %557 = arith.mulf %556, %546 : vector<1x256xf32>
    %558 = arith.addf %541, %557 : vector<1x256xf32>
    %c115 = arith.constant 115 : index
    %559 = memref.load %arg3[%c115] : memref<288xf32, #tpu.memory_space<smem>>
    %560 = vector.broadcast %559 : f32 to vector<1x256xf32>
    %561 = arith.mulf %560, %546 : vector<1x256xf32>
    %562 = arith.addf %545, %561 : vector<1x256xf32>
    %c0_102 = arith.constant 0 : index
    %c113_103 = arith.constant 113 : index
    %563 = vector.load %arg6[%c0_102, %c113_103] : memref<1x401xf32, #tpu.memory_space<vmem>>, vector<1x256xf32>
    %cst_104 = arith.constant 0.000000e+00 : f32
    %564 = vector.broadcast %cst_104 : f32 to vector<1x256xf32>
    %565 = arith.select %15, %563, %564 : vector<1x256xi1>, vector<1x256xf32>
    %c116 = arith.constant 116 : index
    %566 = memref.load %arg3[%c116] : memref<288xf32, #tpu.memory_space<smem>>
    %567 = vector.broadcast %566 : f32 to vector<1x256xf32>
    %568 = arith.mulf %567, %565 : vector<1x256xf32>
    %569 = arith.addf %550, %568 : vector<1x256xf32>
    %c117 = arith.constant 117 : index
    %570 = memref.load %arg3[%c117] : memref<288xf32, #tpu.memory_space<smem>>
    %571 = vector.broadcast %570 : f32 to vector<1x256xf32>
    %572 = arith.mulf %571, %565 : vector<1x256xf32>
    %573 = arith.addf %554, %572 : vector<1x256xf32>
    %c118 = arith.constant 118 : index
    %574 = memref.load %arg3[%c118] : memref<288xf32, #tpu.memory_space<smem>>
    %575 = vector.broadcast %574 : f32 to vector<1x256xf32>
    %576 = arith.mulf %575, %565 : vector<1x256xf32>
    %577 = arith.addf %558, %576 : vector<1x256xf32>
    %c119 = arith.constant 119 : index
    %578 = memref.load %arg3[%c119] : memref<288xf32, #tpu.memory_space<smem>>
    %579 = vector.broadcast %578 : f32 to vector<1x256xf32>
    %580 = arith.mulf %579, %565 : vector<1x256xf32>
    %581 = arith.addf %562, %580 : vector<1x256xf32>
    %c0_105 = arith.constant 0 : index
    %c127_106 = arith.constant 127 : index
    %582 = vector.load %arg6[%c0_105, %c127_106] : memref<1x401xf32, #tpu.memory_space<vmem>>, vector<1x256xf32>
    %cst_107 = arith.constant 0.000000e+00 : f32
    %583 = vector.broadcast %cst_107 : f32 to vector<1x256xf32>
    %584 = arith.select %13, %582, %583 : vector<1x256xi1>, vector<1x256xf32>
    %c120 = arith.constant 120 : index
    %585 = memref.load %arg3[%c120] : memref<288xf32, #tpu.memory_space<smem>>
    %586 = vector.broadcast %585 : f32 to vector<1x256xf32>
    %587 = arith.mulf %586, %584 : vector<1x256xf32>
    %588 = arith.addf %569, %587 : vector<1x256xf32>
    %c121 = arith.constant 121 : index
    %589 = memref.load %arg3[%c121] : memref<288xf32, #tpu.memory_space<smem>>
    %590 = vector.broadcast %589 : f32 to vector<1x256xf32>
    %591 = arith.mulf %590, %584 : vector<1x256xf32>
    %592 = arith.addf %573, %591 : vector<1x256xf32>
    %c122 = arith.constant 122 : index
    %593 = memref.load %arg3[%c122] : memref<288xf32, #tpu.memory_space<smem>>
    %594 = vector.broadcast %593 : f32 to vector<1x256xf32>
    %595 = arith.mulf %594, %584 : vector<1x256xf32>
    %596 = arith.addf %577, %595 : vector<1x256xf32>
    %c123 = arith.constant 123 : index
    %597 = memref.load %arg3[%c123] : memref<288xf32, #tpu.memory_space<smem>>
    %598 = vector.broadcast %597 : f32 to vector<1x256xf32>
    %599 = arith.mulf %598, %584 : vector<1x256xf32>
    %600 = arith.addf %581, %599 : vector<1x256xf32>
    %c0_108 = arith.constant 0 : index
    %c128_109 = arith.constant 128 : index
    %601 = vector.load %arg6[%c0_108, %c128_109] : memref<1x401xf32, #tpu.memory_space<vmem>>, vector<1x256xf32>
    %c124 = arith.constant 124 : index
    %602 = memref.load %arg3[%c124] : memref<288xf32, #tpu.memory_space<smem>>
    %603 = vector.broadcast %602 : f32 to vector<1x256xf32>
    %604 = arith.mulf %603, %601 : vector<1x256xf32>
    %605 = arith.addf %588, %604 : vector<1x256xf32>
    %c125 = arith.constant 125 : index
    %606 = memref.load %arg3[%c125] : memref<288xf32, #tpu.memory_space<smem>>
    %607 = vector.broadcast %606 : f32 to vector<1x256xf32>
    %608 = arith.mulf %607, %601 : vector<1x256xf32>
    %609 = arith.addf %592, %608 : vector<1x256xf32>
    %c126 = arith.constant 126 : index
    %610 = memref.load %arg3[%c126] : memref<288xf32, #tpu.memory_space<smem>>
    %611 = vector.broadcast %610 : f32 to vector<1x256xf32>
    %612 = arith.mulf %611, %601 : vector<1x256xf32>
    %613 = arith.addf %596, %612 : vector<1x256xf32>
    %c127_110 = arith.constant 127 : index
    %614 = memref.load %arg3[%c127_110] : memref<288xf32, #tpu.memory_space<smem>>
    %615 = vector.broadcast %614 : f32 to vector<1x256xf32>
    %616 = arith.mulf %615, %601 : vector<1x256xf32>
    %617 = arith.addf %600, %616 : vector<1x256xf32>
    %c0_111 = arith.constant 0 : index
    %c129_112 = arith.constant 129 : index
    %618 = vector.load %arg6[%c0_111, %c129_112] : memref<1x401xf32, #tpu.memory_space<vmem>>, vector<1x256xf32>
    %cst_113 = arith.constant 0.000000e+00 : f32
    %619 = vector.broadcast %cst_113 : f32 to vector<1x256xf32>
    %620 = arith.select %15, %618, %619 : vector<1x256xi1>, vector<1x256xf32>
    %c128_114 = arith.constant 128 : index
    %621 = memref.load %arg3[%c128_114] : memref<288xf32, #tpu.memory_space<smem>>
    %622 = vector.broadcast %621 : f32 to vector<1x256xf32>
    %623 = arith.mulf %622, %620 : vector<1x256xf32>
    %624 = arith.addf %605, %623 : vector<1x256xf32>
    %c129_115 = arith.constant 129 : index
    %625 = memref.load %arg3[%c129_115] : memref<288xf32, #tpu.memory_space<smem>>
    %626 = vector.broadcast %625 : f32 to vector<1x256xf32>
    %627 = arith.mulf %626, %620 : vector<1x256xf32>
    %628 = arith.addf %609, %627 : vector<1x256xf32>
    %c130 = arith.constant 130 : index
    %629 = memref.load %arg3[%c130] : memref<288xf32, #tpu.memory_space<smem>>
    %630 = vector.broadcast %629 : f32 to vector<1x256xf32>
    %631 = arith.mulf %630, %620 : vector<1x256xf32>
    %632 = arith.addf %613, %631 : vector<1x256xf32>
    %c131 = arith.constant 131 : index
    %633 = memref.load %arg3[%c131] : memref<288xf32, #tpu.memory_space<smem>>
    %634 = vector.broadcast %633 : f32 to vector<1x256xf32>
    %635 = arith.mulf %634, %620 : vector<1x256xf32>
    %636 = arith.addf %617, %635 : vector<1x256xf32>
    %c0_116 = arith.constant 0 : index
    %c143_117 = arith.constant 143 : index
    %637 = vector.load %arg6[%c0_116, %c143_117] : memref<1x401xf32, #tpu.memory_space<vmem>>, vector<1x256xf32>
    %cst_118 = arith.constant 0.000000e+00 : f32
    %638 = vector.broadcast %cst_118 : f32 to vector<1x256xf32>
    %639 = arith.select %13, %637, %638 : vector<1x256xi1>, vector<1x256xf32>
    %c132 = arith.constant 132 : index
    %640 = memref.load %arg3[%c132] : memref<288xf32, #tpu.memory_space<smem>>
    %641 = vector.broadcast %640 : f32 to vector<1x256xf32>
    %642 = arith.mulf %641, %639 : vector<1x256xf32>
    %643 = arith.addf %624, %642 : vector<1x256xf32>
    %c133 = arith.constant 133 : index
    %644 = memref.load %arg3[%c133] : memref<288xf32, #tpu.memory_space<smem>>
    %645 = vector.broadcast %644 : f32 to vector<1x256xf32>
    %646 = arith.mulf %645, %639 : vector<1x256xf32>
    %647 = arith.addf %628, %646 : vector<1x256xf32>
    %c134 = arith.constant 134 : index
    %648 = memref.load %arg3[%c134] : memref<288xf32, #tpu.memory_space<smem>>
    %649 = vector.broadcast %648 : f32 to vector<1x256xf32>
    %650 = arith.mulf %649, %639 : vector<1x256xf32>
    %651 = arith.addf %632, %650 : vector<1x256xf32>
    %c135 = arith.constant 135 : index
    %652 = memref.load %arg3[%c135] : memref<288xf32, #tpu.memory_space<smem>>
    %653 = vector.broadcast %652 : f32 to vector<1x256xf32>
    %654 = arith.mulf %653, %639 : vector<1x256xf32>
    %655 = arith.addf %636, %654 : vector<1x256xf32>
    %c0_119 = arith.constant 0 : index
    %c144_120 = arith.constant 144 : index
    %656 = vector.load %arg6[%c0_119, %c144_120] : memref<1x401xf32, #tpu.memory_space<vmem>>, vector<1x256xf32>
    %c136 = arith.constant 136 : index
    %657 = memref.load %arg3[%c136] : memref<288xf32, #tpu.memory_space<smem>>
    %658 = vector.broadcast %657 : f32 to vector<1x256xf32>
    %659 = arith.mulf %658, %656 : vector<1x256xf32>
    %660 = arith.addf %643, %659 : vector<1x256xf32>
    %c137 = arith.constant 137 : index
    %661 = memref.load %arg3[%c137] : memref<288xf32, #tpu.memory_space<smem>>
    %662 = vector.broadcast %661 : f32 to vector<1x256xf32>
    %663 = arith.mulf %662, %656 : vector<1x256xf32>
    %664 = arith.addf %647, %663 : vector<1x256xf32>
    %c138 = arith.constant 138 : index
    %665 = memref.load %arg3[%c138] : memref<288xf32, #tpu.memory_space<smem>>
    %666 = vector.broadcast %665 : f32 to vector<1x256xf32>
    %667 = arith.mulf %666, %656 : vector<1x256xf32>
    %668 = arith.addf %651, %667 : vector<1x256xf32>
    %c139 = arith.constant 139 : index
    %669 = memref.load %arg3[%c139] : memref<288xf32, #tpu.memory_space<smem>>
    %670 = vector.broadcast %669 : f32 to vector<1x256xf32>
    %671 = arith.mulf %670, %656 : vector<1x256xf32>
    %672 = arith.addf %655, %671 : vector<1x256xf32>
    %c0_121 = arith.constant 0 : index
    %c145_122 = arith.constant 145 : index
    %673 = vector.load %arg6[%c0_121, %c145_122] : memref<1x401xf32, #tpu.memory_space<vmem>>, vector<1x256xf32>
    %cst_123 = arith.constant 0.000000e+00 : f32
    %674 = vector.broadcast %cst_123 : f32 to vector<1x256xf32>
    %675 = arith.select %15, %673, %674 : vector<1x256xi1>, vector<1x256xf32>
    %c140 = arith.constant 140 : index
    %676 = memref.load %arg3[%c140] : memref<288xf32, #tpu.memory_space<smem>>
    %677 = vector.broadcast %676 : f32 to vector<1x256xf32>
    %678 = arith.mulf %677, %675 : vector<1x256xf32>
    %679 = arith.addf %660, %678 : vector<1x256xf32>
    %c141 = arith.constant 141 : index
    %680 = memref.load %arg3[%c141] : memref<288xf32, #tpu.memory_space<smem>>
    %681 = vector.broadcast %680 : f32 to vector<1x256xf32>
    %682 = arith.mulf %681, %675 : vector<1x256xf32>
    %683 = arith.addf %664, %682 : vector<1x256xf32>
    %c142 = arith.constant 142 : index
    %684 = memref.load %arg3[%c142] : memref<288xf32, #tpu.memory_space<smem>>
    %685 = vector.broadcast %684 : f32 to vector<1x256xf32>
    %686 = arith.mulf %685, %675 : vector<1x256xf32>
    %687 = arith.addf %668, %686 : vector<1x256xf32>
    %c143_124 = arith.constant 143 : index
    %688 = memref.load %arg3[%c143_124] : memref<288xf32, #tpu.memory_space<smem>>
    %689 = vector.broadcast %688 : f32 to vector<1x256xf32>
    %690 = arith.mulf %689, %675 : vector<1x256xf32>
    %691 = arith.addf %672, %690 : vector<1x256xf32>
    %c0_125 = arith.constant 0 : index
    %c0_126 = arith.constant 0 : index
    %c0_127 = arith.constant 0 : index
    %692 = vector.load %arg2[%c0_125, %c0_126, %c0_127] : memref<1x4x256xf32, #tpu.memory_space<vmem>>, vector<1x1x256xf32>
    %693 = vector.shape_cast %692 : vector<1x1x256xf32> to vector<1x256xf32>
    %c0_128 = arith.constant 0 : index
    %c128_129 = arith.constant 128 : index
    %694 = vector.load %arg6[%c0_128, %c128_129] : memref<1x401xf32, #tpu.memory_space<vmem>>, vector<1x256xf32>
    tpu.vector_store %arg6[%c0_128, %c128_129], %693 {strides = array<i32>} : memref<1x401xf32, #tpu.memory_space<vmem>>, vector<1x256xf32>,
    %c0_130 = arith.constant 0 : index
    %c111_131 = arith.constant 111 : index
    %695 = vector.load %arg6[%c0_130, %c111_131] : memref<1x401xf32, #tpu.memory_space<vmem>>, vector<1x256xf32>
    %cst_132 = arith.constant 0.000000e+00 : f32
    %696 = vector.broadcast %cst_132 : f32 to vector<1x256xf32>
    %697 = arith.select %13, %695, %696 : vector<1x256xi1>, vector<1x256xf32>
    %c144_133 = arith.constant 144 : index
    %698 = memref.load %arg3[%c144_133] : memref<288xf32, #tpu.memory_space<smem>>
    %699 = vector.broadcast %698 : f32 to vector<1x256xf32>
    %700 = arith.mulf %699, %697 : vector<1x256xf32>
    %701 = arith.addf %679, %700 : vector<1x256xf32>
    %c145_134 = arith.constant 145 : index
    %702 = memref.load %arg3[%c145_134] : memref<288xf32, #tpu.memory_space<smem>>
    %703 = vector.broadcast %702 : f32 to vector<1x256xf32>
    %704 = arith.mulf %703, %697 : vector<1x256xf32>
    %705 = arith.addf %683, %704 : vector<1x256xf32>
    %c146 = arith.constant 146 : index
    %706 = memref.load %arg3[%c146] : memref<288xf32, #tpu.memory_space<smem>>
    %707 = vector.broadcast %706 : f32 to vector<1x256xf32>
    %708 = arith.mulf %707, %697 : vector<1x256xf32>
    %709 = arith.addf %687, %708 : vector<1x256xf32>
    %c147 = arith.constant 147 : index
    %710 = memref.load %arg3[%c147] : memref<288xf32, #tpu.memory_space<smem>>
    %711 = vector.broadcast %710 : f32 to vector<1x256xf32>
    %712 = arith.mulf %711, %697 : vector<1x256xf32>
    %713 = arith.addf %691, %712 : vector<1x256xf32>
    %c0_135 = arith.constant 0 : index
    %c112_136 = arith.constant 112 : index
    %714 = vector.load %arg6[%c0_135, %c112_136] : memref<1x401xf32, #tpu.memory_space<vmem>>, vector<1x256xf32>
    %c148 = arith.constant 148 : index
    %715 = memref.load %arg3[%c148] : memref<288xf32, #tpu.memory_space<smem>>
    %716 = vector.broadcast %715 : f32 to vector<1x256xf32>
    %717 = arith.mulf %716, %714 : vector<1x256xf32>
    %718 = arith.addf %701, %717 : vector<1x256xf32>
    %c149 = arith.constant 149 : index
    %719 = memref.load %arg3[%c149] : memref<288xf32, #tpu.memory_space<smem>>
    %720 = vector.broadcast %719 : f32 to vector<1x256xf32>
    %721 = arith.mulf %720, %714 : vector<1x256xf32>
    %722 = arith.addf %705, %721 : vector<1x256xf32>
    %c150 = arith.constant 150 : index
    %723 = memref.load %arg3[%c150] : memref<288xf32, #tpu.memory_space<smem>>
    %724 = vector.broadcast %723 : f32 to vector<1x256xf32>
    %725 = arith.mulf %724, %714 : vector<1x256xf32>
    %726 = arith.addf %709, %725 : vector<1x256xf32>
    %c151 = arith.constant 151 : index
    %727 = memref.load %arg3[%c151] : memref<288xf32, #tpu.memory_space<smem>>
    %728 = vector.broadcast %727 : f32 to vector<1x256xf32>
    %729 = arith.mulf %728, %714 : vector<1x256xf32>
    %730 = arith.addf %713, %729 : vector<1x256xf32>
    %c0_137 = arith.constant 0 : index
    %c113_138 = arith.constant 113 : index
    %731 = vector.load %arg6[%c0_137, %c113_138] : memref<1x401xf32, #tpu.memory_space<vmem>>, vector<1x256xf32>
    %cst_139 = arith.constant 0.000000e+00 : f32
    %732 = vector.broadcast %cst_139 : f32 to vector<1x256xf32>
    %733 = arith.select %15, %731, %732 : vector<1x256xi1>, vector<1x256xf32>
    %c152 = arith.constant 152 : index
    %734 = memref.load %arg3[%c152] : memref<288xf32, #tpu.memory_space<smem>>
    %735 = vector.broadcast %734 : f32 to vector<1x256xf32>
    %736 = arith.mulf %735, %733 : vector<1x256xf32>
    %737 = arith.addf %718, %736 : vector<1x256xf32>
    %c153 = arith.constant 153 : index
    %738 = memref.load %arg3[%c153] : memref<288xf32, #tpu.memory_space<smem>>
    %739 = vector.broadcast %738 : f32 to vector<1x256xf32>
    %740 = arith.mulf %739, %733 : vector<1x256xf32>
    %741 = arith.addf %722, %740 : vector<1x256xf32>
    %c154 = arith.constant 154 : index
    %742 = memref.load %arg3[%c154] : memref<288xf32, #tpu.memory_space<smem>>
    %743 = vector.broadcast %742 : f32 to vector<1x256xf32>
    %744 = arith.mulf %743, %733 : vector<1x256xf32>
    %745 = arith.addf %726, %744 : vector<1x256xf32>
    %c155 = arith.constant 155 : index
    %746 = memref.load %arg3[%c155] : memref<288xf32, #tpu.memory_space<smem>>
    %747 = vector.broadcast %746 : f32 to vector<1x256xf32>
    %748 = arith.mulf %747, %733 : vector<1x256xf32>
    %749 = arith.addf %730, %748 : vector<1x256xf32>
    %c0_140 = arith.constant 0 : index
    %c127_141 = arith.constant 127 : index
    %750 = vector.load %arg6[%c0_140, %c127_141] : memref<1x401xf32, #tpu.memory_space<vmem>>, vector<1x256xf32>
    %cst_142 = arith.constant 0.000000e+00 : f32
    %751 = vector.broadcast %cst_142 : f32 to vector<1x256xf32>
    %752 = arith.select %13, %750, %751 : vector<1x256xi1>, vector<1x256xf32>
    %c156 = arith.constant 156 : index
    %753 = memref.load %arg3[%c156] : memref<288xf32, #tpu.memory_space<smem>>
    %754 = vector.broadcast %753 : f32 to vector<1x256xf32>
    %755 = arith.mulf %754, %752 : vector<1x256xf32>
    %756 = arith.addf %737, %755 : vector<1x256xf32>
    %c157 = arith.constant 157 : index
    %757 = memref.load %arg3[%c157] : memref<288xf32, #tpu.memory_space<smem>>
    %758 = vector.broadcast %757 : f32 to vector<1x256xf32>
    %759 = arith.mulf %758, %752 : vector<1x256xf32>
    %760 = arith.addf %741, %759 : vector<1x256xf32>
    %c158 = arith.constant 158 : index
    %761 = memref.load %arg3[%c158] : memref<288xf32, #tpu.memory_space<smem>>
    %762 = vector.broadcast %761 : f32 to vector<1x256xf32>
    %763 = arith.mulf %762, %752 : vector<1x256xf32>
    %764 = arith.addf %745, %763 : vector<1x256xf32>
    %c159 = arith.constant 159 : index
    %765 = memref.load %arg3[%c159] : memref<288xf32, #tpu.memory_space<smem>>
    %766 = vector.broadcast %765 : f32 to vector<1x256xf32>
    %767 = arith.mulf %766, %752 : vector<1x256xf32>
    %768 = arith.addf %749, %767 : vector<1x256xf32>
    %c0_143 = arith.constant 0 : index
    %c128_144 = arith.constant 128 : index
    %769 = vector.load %arg6[%c0_143, %c128_144] : memref<1x401xf32, #tpu.memory_space<vmem>>, vector<1x256xf32>
    %c160 = arith.constant 160 : index
    %770 = memref.load %arg3[%c160] : memref<288xf32, #tpu.memory_space<smem>>
    %771 = vector.broadcast %770 : f32 to vector<1x256xf32>
    %772 = arith.mulf %771, %769 : vector<1x256xf32>
    %773 = arith.addf %756, %772 : vector<1x256xf32>
    %c161 = arith.constant 161 : index
    %774 = memref.load %arg3[%c161] : memref<288xf32, #tpu.memory_space<smem>>
    %775 = vector.broadcast %774 : f32 to vector<1x256xf32>
    %776 = arith.mulf %775, %769 : vector<1x256xf32>
    %777 = arith.addf %760, %776 : vector<1x256xf32>
    %c162 = arith.constant 162 : index
    %778 = memref.load %arg3[%c162] : memref<288xf32, #tpu.memory_space<smem>>
    %779 = vector.broadcast %778 : f32 to vector<1x256xf32>
    %780 = arith.mulf %779, %769 : vector<1x256xf32>
    %781 = arith.addf %764, %780 : vector<1x256xf32>
    %c163 = arith.constant 163 : index
    %782 = memref.load %arg3[%c163] : memref<288xf32, #tpu.memory_space<smem>>
    %783 = vector.broadcast %782 : f32 to vector<1x256xf32>
    %784 = arith.mulf %783, %769 : vector<1x256xf32>
    %785 = arith.addf %768, %784 : vector<1x256xf32>
    %c0_145 = arith.constant 0 : index
    %c129_146 = arith.constant 129 : index
    %786 = vector.load %arg6[%c0_145, %c129_146] : memref<1x401xf32, #tpu.memory_space<vmem>>, vector<1x256xf32>
    %cst_147 = arith.constant 0.000000e+00 : f32
    %787 = vector.broadcast %cst_147 : f32 to vector<1x256xf32>
    %788 = arith.select %15, %786, %787 : vector<1x256xi1>, vector<1x256xf32>
    %c164 = arith.constant 164 : index
    %789 = memref.load %arg3[%c164] : memref<288xf32, #tpu.memory_space<smem>>
    %790 = vector.broadcast %789 : f32 to vector<1x256xf32>
    %791 = arith.mulf %790, %788 : vector<1x256xf32>
    %792 = arith.addf %773, %791 : vector<1x256xf32>
    %c165 = arith.constant 165 : index
    %793 = memref.load %arg3[%c165] : memref<288xf32, #tpu.memory_space<smem>>
    %794 = vector.broadcast %793 : f32 to vector<1x256xf32>
    %795 = arith.mulf %794, %788 : vector<1x256xf32>
    %796 = arith.addf %777, %795 : vector<1x256xf32>
    %c166 = arith.constant 166 : index
    %797 = memref.load %arg3[%c166] : memref<288xf32, #tpu.memory_space<smem>>
    %798 = vector.broadcast %797 : f32 to vector<1x256xf32>
    %799 = arith.mulf %798, %788 : vector<1x256xf32>
    %800 = arith.addf %781, %799 : vector<1x256xf32>
    %c167 = arith.constant 167 : index
    %801 = memref.load %arg3[%c167] : memref<288xf32, #tpu.memory_space<smem>>
    %802 = vector.broadcast %801 : f32 to vector<1x256xf32>
    %803 = arith.mulf %802, %788 : vector<1x256xf32>
    %804 = arith.addf %785, %803 : vector<1x256xf32>
    %c0_148 = arith.constant 0 : index
    %c143_149 = arith.constant 143 : index
    %805 = vector.load %arg6[%c0_148, %c143_149] : memref<1x401xf32, #tpu.memory_space<vmem>>, vector<1x256xf32>
    %cst_150 = arith.constant 0.000000e+00 : f32
    %806 = vector.broadcast %cst_150 : f32 to vector<1x256xf32>
    %807 = arith.select %13, %805, %806 : vector<1x256xi1>, vector<1x256xf32>
    %c168 = arith.constant 168 : index
    %808 = memref.load %arg3[%c168] : memref<288xf32, #tpu.memory_space<smem>>
    %809 = vector.broadcast %808 : f32 to vector<1x256xf32>
    %810 = arith.mulf %809, %807 : vector<1x256xf32>
    %811 = arith.addf %792, %810 : vector<1x256xf32>
    %c169 = arith.constant 169 : index
    %812 = memref.load %arg3[%c169] : memref<288xf32, #tpu.memory_space<smem>>
    %813 = vector.broadcast %812 : f32 to vector<1x256xf32>
    %814 = arith.mulf %813, %807 : vector<1x256xf32>
    %815 = arith.addf %796, %814 : vector<1x256xf32>
    %c170 = arith.constant 170 : index
    %816 = memref.load %arg3[%c170] : memref<288xf32, #tpu.memory_space<smem>>
    %817 = vector.broadcast %816 : f32 to vector<1x256xf32>
    %818 = arith.mulf %817, %807 : vector<1x256xf32>
    %819 = arith.addf %800, %818 : vector<1x256xf32>
    %c171 = arith.constant 171 : index
    %820 = memref.load %arg3[%c171] : memref<288xf32, #tpu.memory_space<smem>>
    %821 = vector.broadcast %820 : f32 to vector<1x256xf32>
    %822 = arith.mulf %821, %807 : vector<1x256xf32>
    %823 = arith.addf %804, %822 : vector<1x256xf32>
    %c0_151 = arith.constant 0 : index
    %c144_152 = arith.constant 144 : index
    %824 = vector.load %arg6[%c0_151, %c144_152] : memref<1x401xf32, #tpu.memory_space<vmem>>, vector<1x256xf32>
    %c172 = arith.constant 172 : index
    %825 = memref.load %arg3[%c172] : memref<288xf32, #tpu.memory_space<smem>>
    %826 = vector.broadcast %825 : f32 to vector<1x256xf32>
    %827 = arith.mulf %826, %824 : vector<1x256xf32>
    %828 = arith.addf %811, %827 : vector<1x256xf32>
    %c173 = arith.constant 173 : index
    %829 = memref.load %arg3[%c173] : memref<288xf32, #tpu.memory_space<smem>>
    %830 = vector.broadcast %829 : f32 to vector<1x256xf32>
    %831 = arith.mulf %830, %824 : vector<1x256xf32>
    %832 = arith.addf %815, %831 : vector<1x256xf32>
    %c174 = arith.constant 174 : index
    %833 = memref.load %arg3[%c174] : memref<288xf32, #tpu.memory_space<smem>>
    %834 = vector.broadcast %833 : f32 to vector<1x256xf32>
    %835 = arith.mulf %834, %824 : vector<1x256xf32>
    %836 = arith.addf %819, %835 : vector<1x256xf32>
    %c175 = arith.constant 175 : index
    %837 = memref.load %arg3[%c175] : memref<288xf32, #tpu.memory_space<smem>>
    %838 = vector.broadcast %837 : f32 to vector<1x256xf32>
    %839 = arith.mulf %838, %824 : vector<1x256xf32>
    %840 = arith.addf %823, %839 : vector<1x256xf32>
    %c0_153 = arith.constant 0 : index
    %c145_154 = arith.constant 145 : index
    %841 = vector.load %arg6[%c0_153, %c145_154] : memref<1x401xf32, #tpu.memory_space<vmem>>, vector<1x256xf32>
    %cst_155 = arith.constant 0.000000e+00 : f32
    %842 = vector.broadcast %cst_155 : f32 to vector<1x256xf32>
    %843 = arith.select %15, %841, %842 : vector<1x256xi1>, vector<1x256xf32>
    %c176 = arith.constant 176 : index
    %844 = memref.load %arg3[%c176] : memref<288xf32, #tpu.memory_space<smem>>
    %845 = vector.broadcast %844 : f32 to vector<1x256xf32>
    %846 = arith.mulf %845, %843 : vector<1x256xf32>
    %847 = arith.addf %828, %846 : vector<1x256xf32>
    %c177 = arith.constant 177 : index
    %848 = memref.load %arg3[%c177] : memref<288xf32, #tpu.memory_space<smem>>
    %849 = vector.broadcast %848 : f32 to vector<1x256xf32>
    %850 = arith.mulf %849, %843 : vector<1x256xf32>
    %851 = arith.addf %832, %850 : vector<1x256xf32>
    %c178 = arith.constant 178 : index
    %852 = memref.load %arg3[%c178] : memref<288xf32, #tpu.memory_space<smem>>
    %853 = vector.broadcast %852 : f32 to vector<1x256xf32>
    %854 = arith.mulf %853, %843 : vector<1x256xf32>
    %855 = arith.addf %836, %854 : vector<1x256xf32>
    %c179 = arith.constant 179 : index
    %856 = memref.load %arg3[%c179] : memref<288xf32, #tpu.memory_space<smem>>
    %857 = vector.broadcast %856 : f32 to vector<1x256xf32>
    %858 = arith.mulf %857, %843 : vector<1x256xf32>
    %859 = arith.addf %840, %858 : vector<1x256xf32>
    %c0_156 = arith.constant 0 : index
    %c1_157 = arith.constant 1 : index
    %c0_158 = arith.constant 0 : index
    %860 = vector.load %arg2[%c0_156, %c1_157, %c0_158] : memref<1x4x256xf32, #tpu.memory_space<vmem>>, vector<1x1x256xf32>
    %861 = vector.shape_cast %860 : vector<1x1x256xf32> to vector<1x256xf32>
    %c0_159 = arith.constant 0 : index
    %c128_160 = arith.constant 128 : index
    %862 = vector.load %arg6[%c0_159, %c128_160] : memref<1x401xf32, #tpu.memory_space<vmem>>, vector<1x256xf32>
    tpu.vector_store %arg6[%c0_159, %c128_160], %861 {strides = array<i32>} : memref<1x401xf32, #tpu.memory_space<vmem>>, vector<1x256xf32>,
    %c0_161 = arith.constant 0 : index
    %c111_162 = arith.constant 111 : index
    %863 = vector.load %arg6[%c0_161, %c111_162] : memref<1x401xf32, #tpu.memory_space<vmem>>, vector<1x256xf32>
    %cst_163 = arith.constant 0.000000e+00 : f32
    %864 = vector.broadcast %cst_163 : f32 to vector<1x256xf32>
    %865 = arith.select %13, %863, %864 : vector<1x256xi1>, vector<1x256xf32>
    %c180 = arith.constant 180 : index
    %866 = memref.load %arg3[%c180] : memref<288xf32, #tpu.memory_space<smem>>
    %867 = vector.broadcast %866 : f32 to vector<1x256xf32>
    %868 = arith.mulf %867, %865 : vector<1x256xf32>
    %869 = arith.addf %847, %868 : vector<1x256xf32>
    %c181 = arith.constant 181 : index
    %870 = memref.load %arg3[%c181] : memref<288xf32, #tpu.memory_space<smem>>
    %871 = vector.broadcast %870 : f32 to vector<1x256xf32>
    %872 = arith.mulf %871, %865 : vector<1x256xf32>
    %873 = arith.addf %851, %872 : vector<1x256xf32>
    %c182 = arith.constant 182 : index
    %874 = memref.load %arg3[%c182] : memref<288xf32, #tpu.memory_space<smem>>
    %875 = vector.broadcast %874 : f32 to vector<1x256xf32>
    %876 = arith.mulf %875, %865 : vector<1x256xf32>
    %877 = arith.addf %855, %876 : vector<1x256xf32>
    %c183 = arith.constant 183 : index
    %878 = memref.load %arg3[%c183] : memref<288xf32, #tpu.memory_space<smem>>
    %879 = vector.broadcast %878 : f32 to vector<1x256xf32>
    %880 = arith.mulf %879, %865 : vector<1x256xf32>
    %881 = arith.addf %859, %880 : vector<1x256xf32>
    %c0_164 = arith.constant 0 : index
    %c112_165 = arith.constant 112 : index
    %882 = vector.load %arg6[%c0_164, %c112_165] : memref<1x401xf32, #tpu.memory_space<vmem>>, vector<1x256xf32>
    %c184 = arith.constant 184 : index
    %883 = memref.load %arg3[%c184] : memref<288xf32, #tpu.memory_space<smem>>
    %884 = vector.broadcast %883 : f32 to vector<1x256xf32>
    %885 = arith.mulf %884, %882 : vector<1x256xf32>
    %886 = arith.addf %869, %885 : vector<1x256xf32>
    %c185 = arith.constant 185 : index
    %887 = memref.load %arg3[%c185] : memref<288xf32, #tpu.memory_space<smem>>
    %888 = vector.broadcast %887 : f32 to vector<1x256xf32>
    %889 = arith.mulf %888, %882 : vector<1x256xf32>
    %890 = arith.addf %873, %889 : vector<1x256xf32>
    %c186 = arith.constant 186 : index
    %891 = memref.load %arg3[%c186] : memref<288xf32, #tpu.memory_space<smem>>
    %892 = vector.broadcast %891 : f32 to vector<1x256xf32>
    %893 = arith.mulf %892, %882 : vector<1x256xf32>
    %894 = arith.addf %877, %893 : vector<1x256xf32>
    %c187 = arith.constant 187 : index
    %895 = memref.load %arg3[%c187] : memref<288xf32, #tpu.memory_space<smem>>
    %896 = vector.broadcast %895 : f32 to vector<1x256xf32>
    %897 = arith.mulf %896, %882 : vector<1x256xf32>
    %898 = arith.addf %881, %897 : vector<1x256xf32>
    %c0_166 = arith.constant 0 : index
    %c113_167 = arith.constant 113 : index
    %899 = vector.load %arg6[%c0_166, %c113_167] : memref<1x401xf32, #tpu.memory_space<vmem>>, vector<1x256xf32>
    %cst_168 = arith.constant 0.000000e+00 : f32
    %900 = vector.broadcast %cst_168 : f32 to vector<1x256xf32>
    %901 = arith.select %15, %899, %900 : vector<1x256xi1>, vector<1x256xf32>
    %c188 = arith.constant 188 : index
    %902 = memref.load %arg3[%c188] : memref<288xf32, #tpu.memory_space<smem>>
    %903 = vector.broadcast %902 : f32 to vector<1x256xf32>
    %904 = arith.mulf %903, %901 : vector<1x256xf32>
    %905 = arith.addf %886, %904 : vector<1x256xf32>
    %c189 = arith.constant 189 : index
    %906 = memref.load %arg3[%c189] : memref<288xf32, #tpu.memory_space<smem>>
    %907 = vector.broadcast %906 : f32 to vector<1x256xf32>
    %908 = arith.mulf %907, %901 : vector<1x256xf32>
    %909 = arith.addf %890, %908 : vector<1x256xf32>
    %c190 = arith.constant 190 : index
    %910 = memref.load %arg3[%c190] : memref<288xf32, #tpu.memory_space<smem>>
    %911 = vector.broadcast %910 : f32 to vector<1x256xf32>
    %912 = arith.mulf %911, %901 : vector<1x256xf32>
    %913 = arith.addf %894, %912 : vector<1x256xf32>
    %c191 = arith.constant 191 : index
    %914 = memref.load %arg3[%c191] : memref<288xf32, #tpu.memory_space<smem>>
    %915 = vector.broadcast %914 : f32 to vector<1x256xf32>
    %916 = arith.mulf %915, %901 : vector<1x256xf32>
    %917 = arith.addf %898, %916 : vector<1x256xf32>
    %c0_169 = arith.constant 0 : index
    %c127_170 = arith.constant 127 : index
    %918 = vector.load %arg6[%c0_169, %c127_170] : memref<1x401xf32, #tpu.memory_space<vmem>>, vector<1x256xf32>
    %cst_171 = arith.constant 0.000000e+00 : f32
    %919 = vector.broadcast %cst_171 : f32 to vector<1x256xf32>
    %920 = arith.select %13, %918, %919 : vector<1x256xi1>, vector<1x256xf32>
    %c192 = arith.constant 192 : index
    %921 = memref.load %arg3[%c192] : memref<288xf32, #tpu.memory_space<smem>>
    %922 = vector.broadcast %921 : f32 to vector<1x256xf32>
    %923 = arith.mulf %922, %920 : vector<1x256xf32>
    %924 = arith.addf %905, %923 : vector<1x256xf32>
    %c193 = arith.constant 193 : index
    %925 = memref.load %arg3[%c193] : memref<288xf32, #tpu.memory_space<smem>>
    %926 = vector.broadcast %925 : f32 to vector<1x256xf32>
    %927 = arith.mulf %926, %920 : vector<1x256xf32>
    %928 = arith.addf %909, %927 : vector<1x256xf32>
    %c194 = arith.constant 194 : index
    %929 = memref.load %arg3[%c194] : memref<288xf32, #tpu.memory_space<smem>>
    %930 = vector.broadcast %929 : f32 to vector<1x256xf32>
    %931 = arith.mulf %930, %920 : vector<1x256xf32>
    %932 = arith.addf %913, %931 : vector<1x256xf32>
    %c195 = arith.constant 195 : index
    %933 = memref.load %arg3[%c195] : memref<288xf32, #tpu.memory_space<smem>>
    %934 = vector.broadcast %933 : f32 to vector<1x256xf32>
    %935 = arith.mulf %934, %920 : vector<1x256xf32>
    %936 = arith.addf %917, %935 : vector<1x256xf32>
    %c0_172 = arith.constant 0 : index
    %c128_173 = arith.constant 128 : index
    %937 = vector.load %arg6[%c0_172, %c128_173] : memref<1x401xf32, #tpu.memory_space<vmem>>, vector<1x256xf32>
    %c196 = arith.constant 196 : index
    %938 = memref.load %arg3[%c196] : memref<288xf32, #tpu.memory_space<smem>>
    %939 = vector.broadcast %938 : f32 to vector<1x256xf32>
    %940 = arith.mulf %939, %937 : vector<1x256xf32>
    %941 = arith.addf %924, %940 : vector<1x256xf32>
    %c197 = arith.constant 197 : index
    %942 = memref.load %arg3[%c197] : memref<288xf32, #tpu.memory_space<smem>>
    %943 = vector.broadcast %942 : f32 to vector<1x256xf32>
    %944 = arith.mulf %943, %937 : vector<1x256xf32>
    %945 = arith.addf %928, %944 : vector<1x256xf32>
    %c198 = arith.constant 198 : index
    %946 = memref.load %arg3[%c198] : memref<288xf32, #tpu.memory_space<smem>>
    %947 = vector.broadcast %946 : f32 to vector<1x256xf32>
    %948 = arith.mulf %947, %937 : vector<1x256xf32>
    %949 = arith.addf %932, %948 : vector<1x256xf32>
    %c199 = arith.constant 199 : index
    %950 = memref.load %arg3[%c199] : memref<288xf32, #tpu.memory_space<smem>>
    %951 = vector.broadcast %950 : f32 to vector<1x256xf32>
    %952 = arith.mulf %951, %937 : vector<1x256xf32>
    %953 = arith.addf %936, %952 : vector<1x256xf32>
    %c0_174 = arith.constant 0 : index
    %c129_175 = arith.constant 129 : index
    %954 = vector.load %arg6[%c0_174, %c129_175] : memref<1x401xf32, #tpu.memory_space<vmem>>, vector<1x256xf32>
    %cst_176 = arith.constant 0.000000e+00 : f32
    %955 = vector.broadcast %cst_176 : f32 to vector<1x256xf32>
    %956 = arith.select %15, %954, %955 : vector<1x256xi1>, vector<1x256xf32>
    %c200 = arith.constant 200 : index
    %957 = memref.load %arg3[%c200] : memref<288xf32, #tpu.memory_space<smem>>
    %958 = vector.broadcast %957 : f32 to vector<1x256xf32>
    %959 = arith.mulf %958, %956 : vector<1x256xf32>
    %960 = arith.addf %941, %959 : vector<1x256xf32>
    %c201 = arith.constant 201 : index
    %961 = memref.load %arg3[%c201] : memref<288xf32, #tpu.memory_space<smem>>
    %962 = vector.broadcast %961 : f32 to vector<1x256xf32>
    %963 = arith.mulf %962, %956 : vector<1x256xf32>
    %964 = arith.addf %945, %963 : vector<1x256xf32>
    %c202 = arith.constant 202 : index
    %965 = memref.load %arg3[%c202] : memref<288xf32, #tpu.memory_space<smem>>
    %966 = vector.broadcast %965 : f32 to vector<1x256xf32>
    %967 = arith.mulf %966, %956 : vector<1x256xf32>
    %968 = arith.addf %949, %967 : vector<1x256xf32>
    %c203 = arith.constant 203 : index
    %969 = memref.load %arg3[%c203] : memref<288xf32, #tpu.memory_space<smem>>
    %970 = vector.broadcast %969 : f32 to vector<1x256xf32>
    %971 = arith.mulf %970, %956 : vector<1x256xf32>
    %972 = arith.addf %953, %971 : vector<1x256xf32>
    %c0_177 = arith.constant 0 : index
    %c143_178 = arith.constant 143 : index
    %973 = vector.load %arg6[%c0_177, %c143_178] : memref<1x401xf32, #tpu.memory_space<vmem>>, vector<1x256xf32>
    %cst_179 = arith.constant 0.000000e+00 : f32
    %974 = vector.broadcast %cst_179 : f32 to vector<1x256xf32>
    %975 = arith.select %13, %973, %974 : vector<1x256xi1>, vector<1x256xf32>
    %c204 = arith.constant 204 : index
    %976 = memref.load %arg3[%c204] : memref<288xf32, #tpu.memory_space<smem>>
    %977 = vector.broadcast %976 : f32 to vector<1x256xf32>
    %978 = arith.mulf %977, %975 : vector<1x256xf32>
    %979 = arith.addf %960, %978 : vector<1x256xf32>
    %c205 = arith.constant 205 : index
    %980 = memref.load %arg3[%c205] : memref<288xf32, #tpu.memory_space<smem>>
    %981 = vector.broadcast %980 : f32 to vector<1x256xf32>
    %982 = arith.mulf %981, %975 : vector<1x256xf32>
    %983 = arith.addf %964, %982 : vector<1x256xf32>
    %c206 = arith.constant 206 : index
    %984 = memref.load %arg3[%c206] : memref<288xf32, #tpu.memory_space<smem>>
    %985 = vector.broadcast %984 : f32 to vector<1x256xf32>
    %986 = arith.mulf %985, %975 : vector<1x256xf32>
    %987 = arith.addf %968, %986 : vector<1x256xf32>
    %c207 = arith.constant 207 : index
    %988 = memref.load %arg3[%c207] : memref<288xf32, #tpu.memory_space<smem>>
    %989 = vector.broadcast %988 : f32 to vector<1x256xf32>
    %990 = arith.mulf %989, %975 : vector<1x256xf32>
    %991 = arith.addf %972, %990 : vector<1x256xf32>
    %c0_180 = arith.constant 0 : index
    %c144_181 = arith.constant 144 : index
    %992 = vector.load %arg6[%c0_180, %c144_181] : memref<1x401xf32, #tpu.memory_space<vmem>>, vector<1x256xf32>
    %c208 = arith.constant 208 : index
    %993 = memref.load %arg3[%c208] : memref<288xf32, #tpu.memory_space<smem>>
    %994 = vector.broadcast %993 : f32 to vector<1x256xf32>
    %995 = arith.mulf %994, %992 : vector<1x256xf32>
    %996 = arith.addf %979, %995 : vector<1x256xf32>
    %c209 = arith.constant 209 : index
    %997 = memref.load %arg3[%c209] : memref<288xf32, #tpu.memory_space<smem>>
    %998 = vector.broadcast %997 : f32 to vector<1x256xf32>
    %999 = arith.mulf %998, %992 : vector<1x256xf32>
    %1000 = arith.addf %983, %999 : vector<1x256xf32>
    %c210 = arith.constant 210 : index
    %1001 = memref.load %arg3[%c210] : memref<288xf32, #tpu.memory_space<smem>>
    %1002 = vector.broadcast %1001 : f32 to vector<1x256xf32>
    %1003 = arith.mulf %1002, %992 : vector<1x256xf32>
    %1004 = arith.addf %987, %1003 : vector<1x256xf32>
    %c211 = arith.constant 211 : index
    %1005 = memref.load %arg3[%c211] : memref<288xf32, #tpu.memory_space<smem>>
    %1006 = vector.broadcast %1005 : f32 to vector<1x256xf32>
    %1007 = arith.mulf %1006, %992 : vector<1x256xf32>
    %1008 = arith.addf %991, %1007 : vector<1x256xf32>
    %c0_182 = arith.constant 0 : index
    %c145_183 = arith.constant 145 : index
    %1009 = vector.load %arg6[%c0_182, %c145_183] : memref<1x401xf32, #tpu.memory_space<vmem>>, vector<1x256xf32>
    %cst_184 = arith.constant 0.000000e+00 : f32
    %1010 = vector.broadcast %cst_184 : f32 to vector<1x256xf32>
    %1011 = arith.select %15, %1009, %1010 : vector<1x256xi1>, vector<1x256xf32>
    %c212 = arith.constant 212 : index
    %1012 = memref.load %arg3[%c212] : memref<288xf32, #tpu.memory_space<smem>>
    %1013 = vector.broadcast %1012 : f32 to vector<1x256xf32>
    %1014 = arith.mulf %1013, %1011 : vector<1x256xf32>
    %1015 = arith.addf %996, %1014 : vector<1x256xf32>
    %c213 = arith.constant 213 : index
    %1016 = memref.load %arg3[%c213] : memref<288xf32, #tpu.memory_space<smem>>
    %1017 = vector.broadcast %1016 : f32 to vector<1x256xf32>
    %1018 = arith.mulf %1017, %1011 : vector<1x256xf32>
    %1019 = arith.addf %1000, %1018 : vector<1x256xf32>
    %c214 = arith.constant 214 : index
    %1020 = memref.load %arg3[%c214] : memref<288xf32, #tpu.memory_space<smem>>
    %1021 = vector.broadcast %1020 : f32 to vector<1x256xf32>
    %1022 = arith.mulf %1021, %1011 : vector<1x256xf32>
    %1023 = arith.addf %1004, %1022 : vector<1x256xf32>
    %c215 = arith.constant 215 : index
    %1024 = memref.load %arg3[%c215] : memref<288xf32, #tpu.memory_space<smem>>
    %1025 = vector.broadcast %1024 : f32 to vector<1x256xf32>
    %1026 = arith.mulf %1025, %1011 : vector<1x256xf32>
    %1027 = arith.addf %1008, %1026 : vector<1x256xf32>
    %c0_185 = arith.constant 0 : index
    %c2_186 = arith.constant 2 : index
    %c0_187 = arith.constant 0 : index
    %1028 = vector.load %arg2[%c0_185, %c2_186, %c0_187] : memref<1x4x256xf32, #tpu.memory_space<vmem>>, vector<1x1x256xf32>
    %1029 = vector.shape_cast %1028 : vector<1x1x256xf32> to vector<1x256xf32>
    %c0_188 = arith.constant 0 : index
    %c128_189 = arith.constant 128 : index
    %1030 = vector.load %arg6[%c0_188, %c128_189] : memref<1x401xf32, #tpu.memory_space<vmem>>, vector<1x256xf32>
    tpu.vector_store %arg6[%c0_188, %c128_189], %1029 {strides = array<i32>} : memref<1x401xf32, #tpu.memory_space<vmem>>, vector<1x256xf32>,
    %c0_190 = arith.constant 0 : index
    %c111_191 = arith.constant 111 : index
    %1031 = vector.load %arg6[%c0_190, %c111_191] : memref<1x401xf32, #tpu.memory_space<vmem>>, vector<1x256xf32>
    %cst_192 = arith.constant 0.000000e+00 : f32
    %1032 = vector.broadcast %cst_192 : f32 to vector<1x256xf32>
    %1033 = arith.select %13, %1031, %1032 : vector<1x256xi1>, vector<1x256xf32>
    %c216 = arith.constant 216 : index
    %1034 = memref.load %arg3[%c216] : memref<288xf32, #tpu.memory_space<smem>>
    %1035 = vector.broadcast %1034 : f32 to vector<1x256xf32>
    %1036 = arith.mulf %1035, %1033 : vector<1x256xf32>
    %1037 = arith.addf %1015, %1036 : vector<1x256xf32>
    %c217 = arith.constant 217 : index
    %1038 = memref.load %arg3[%c217] : memref<288xf32, #tpu.memory_space<smem>>
    %1039 = vector.broadcast %1038 : f32 to vector<1x256xf32>
    %1040 = arith.mulf %1039, %1033 : vector<1x256xf32>
    %1041 = arith.addf %1019, %1040 : vector<1x256xf32>
    %c218 = arith.constant 218 : index
    %1042 = memref.load %arg3[%c218] : memref<288xf32, #tpu.memory_space<smem>>
    %1043 = vector.broadcast %1042 : f32 to vector<1x256xf32>
    %1044 = arith.mulf %1043, %1033 : vector<1x256xf32>
    %1045 = arith.addf %1023, %1044 : vector<1x256xf32>
    %c219 = arith.constant 219 : index
    %1046 = memref.load %arg3[%c219] : memref<288xf32, #tpu.memory_space<smem>>
    %1047 = vector.broadcast %1046 : f32 to vector<1x256xf32>
    %1048 = arith.mulf %1047, %1033 : vector<1x256xf32>
    %1049 = arith.addf %1027, %1048 : vector<1x256xf32>
    %c0_193 = arith.constant 0 : index
    %c112_194 = arith.constant 112 : index
    %1050 = vector.load %arg6[%c0_193, %c112_194] : memref<1x401xf32, #tpu.memory_space<vmem>>, vector<1x256xf32>
    %c220 = arith.constant 220 : index
    %1051 = memref.load %arg3[%c220] : memref<288xf32, #tpu.memory_space<smem>>
    %1052 = vector.broadcast %1051 : f32 to vector<1x256xf32>
    %1053 = arith.mulf %1052, %1050 : vector<1x256xf32>
    %1054 = arith.addf %1037, %1053 : vector<1x256xf32>
    %c221 = arith.constant 221 : index
    %1055 = memref.load %arg3[%c221] : memref<288xf32, #tpu.memory_space<smem>>
    %1056 = vector.broadcast %1055 : f32 to vector<1x256xf32>
    %1057 = arith.mulf %1056, %1050 : vector<1x256xf32>
    %1058 = arith.addf %1041, %1057 : vector<1x256xf32>
    %c222 = arith.constant 222 : index
    %1059 = memref.load %arg3[%c222] : memref<288xf32, #tpu.memory_space<smem>>
    %1060 = vector.broadcast %1059 : f32 to vector<1x256xf32>
    %1061 = arith.mulf %1060, %1050 : vector<1x256xf32>
    %1062 = arith.addf %1045, %1061 : vector<1x256xf32>
    %c223 = arith.constant 223 : index
    %1063 = memref.load %arg3[%c223] : memref<288xf32, #tpu.memory_space<smem>>
    %1064 = vector.broadcast %1063 : f32 to vector<1x256xf32>
    %1065 = arith.mulf %1064, %1050 : vector<1x256xf32>
    %1066 = arith.addf %1049, %1065 : vector<1x256xf32>
    %c0_195 = arith.constant 0 : index
    %c113_196 = arith.constant 113 : index
    %1067 = vector.load %arg6[%c0_195, %c113_196] : memref<1x401xf32, #tpu.memory_space<vmem>>, vector<1x256xf32>
    %cst_197 = arith.constant 0.000000e+00 : f32
    %1068 = vector.broadcast %cst_197 : f32 to vector<1x256xf32>
    %1069 = arith.select %15, %1067, %1068 : vector<1x256xi1>, vector<1x256xf32>
    %c224 = arith.constant 224 : index
    %1070 = memref.load %arg3[%c224] : memref<288xf32, #tpu.memory_space<smem>>
    %1071 = vector.broadcast %1070 : f32 to vector<1x256xf32>
    %1072 = arith.mulf %1071, %1069 : vector<1x256xf32>
    %1073 = arith.addf %1054, %1072 : vector<1x256xf32>
    %c225 = arith.constant 225 : index
    %1074 = memref.load %arg3[%c225] : memref<288xf32, #tpu.memory_space<smem>>
    %1075 = vector.broadcast %1074 : f32 to vector<1x256xf32>
    %1076 = arith.mulf %1075, %1069 : vector<1x256xf32>
    %1077 = arith.addf %1058, %1076 : vector<1x256xf32>
    %c226 = arith.constant 226 : index
    %1078 = memref.load %arg3[%c226] : memref<288xf32, #tpu.memory_space<smem>>
    %1079 = vector.broadcast %1078 : f32 to vector<1x256xf32>
    %1080 = arith.mulf %1079, %1069 : vector<1x256xf32>
    %1081 = arith.addf %1062, %1080 : vector<1x256xf32>
    %c227 = arith.constant 227 : index
    %1082 = memref.load %arg3[%c227] : memref<288xf32, #tpu.memory_space<smem>>
    %1083 = vector.broadcast %1082 : f32 to vector<1x256xf32>
    %1084 = arith.mulf %1083, %1069 : vector<1x256xf32>
    %1085 = arith.addf %1066, %1084 : vector<1x256xf32>
    %c0_198 = arith.constant 0 : index
    %c127_199 = arith.constant 127 : index
    %1086 = vector.load %arg6[%c0_198, %c127_199] : memref<1x401xf32, #tpu.memory_space<vmem>>, vector<1x256xf32>
    %cst_200 = arith.constant 0.000000e+00 : f32
    %1087 = vector.broadcast %cst_200 : f32 to vector<1x256xf32>
    %1088 = arith.select %13, %1086, %1087 : vector<1x256xi1>, vector<1x256xf32>
    %c228 = arith.constant 228 : index
    %1089 = memref.load %arg3[%c228] : memref<288xf32, #tpu.memory_space<smem>>
    %1090 = vector.broadcast %1089 : f32 to vector<1x256xf32>
    %1091 = arith.mulf %1090, %1088 : vector<1x256xf32>
    %1092 = arith.addf %1073, %1091 : vector<1x256xf32>
    %c229 = arith.constant 229 : index
    %1093 = memref.load %arg3[%c229] : memref<288xf32, #tpu.memory_space<smem>>
    %1094 = vector.broadcast %1093 : f32 to vector<1x256xf32>
    %1095 = arith.mulf %1094, %1088 : vector<1x256xf32>
    %1096 = arith.addf %1077, %1095 : vector<1x256xf32>
    %c230 = arith.constant 230 : index
    %1097 = memref.load %arg3[%c230] : memref<288xf32, #tpu.memory_space<smem>>
    %1098 = vector.broadcast %1097 : f32 to vector<1x256xf32>
    %1099 = arith.mulf %1098, %1088 : vector<1x256xf32>
    %1100 = arith.addf %1081, %1099 : vector<1x256xf32>
    %c231 = arith.constant 231 : index
    %1101 = memref.load %arg3[%c231] : memref<288xf32, #tpu.memory_space<smem>>
    %1102 = vector.broadcast %1101 : f32 to vector<1x256xf32>
    %1103 = arith.mulf %1102, %1088 : vector<1x256xf32>
    %1104 = arith.addf %1085, %1103 : vector<1x256xf32>
    %c0_201 = arith.constant 0 : index
    %c128_202 = arith.constant 128 : index
    %1105 = vector.load %arg6[%c0_201, %c128_202] : memref<1x401xf32, #tpu.memory_space<vmem>>, vector<1x256xf32>
    %c232 = arith.constant 232 : index
    %1106 = memref.load %arg3[%c232] : memref<288xf32, #tpu.memory_space<smem>>
    %1107 = vector.broadcast %1106 : f32 to vector<1x256xf32>
    %1108 = arith.mulf %1107, %1105 : vector<1x256xf32>
    %1109 = arith.addf %1092, %1108 : vector<1x256xf32>
    %c233 = arith.constant 233 : index
    %1110 = memref.load %arg3[%c233] : memref<288xf32, #tpu.memory_space<smem>>
    %1111 = vector.broadcast %1110 : f32 to vector<1x256xf32>
    %1112 = arith.mulf %1111, %1105 : vector<1x256xf32>
    %1113 = arith.addf %1096, %1112 : vector<1x256xf32>
    %c234 = arith.constant 234 : index
    %1114 = memref.load %arg3[%c234] : memref<288xf32, #tpu.memory_space<smem>>
    %1115 = vector.broadcast %1114 : f32 to vector<1x256xf32>
    %1116 = arith.mulf %1115, %1105 : vector<1x256xf32>
    %1117 = arith.addf %1100, %1116 : vector<1x256xf32>
    %c235 = arith.constant 235 : index
    %1118 = memref.load %arg3[%c235] : memref<288xf32, #tpu.memory_space<smem>>
    %1119 = vector.broadcast %1118 : f32 to vector<1x256xf32>
    %1120 = arith.mulf %1119, %1105 : vector<1x256xf32>
    %1121 = arith.addf %1104, %1120 : vector<1x256xf32>
    %c0_203 = arith.constant 0 : index
    %c129_204 = arith.constant 129 : index
    %1122 = vector.load %arg6[%c0_203, %c129_204] : memref<1x401xf32, #tpu.memory_space<vmem>>, vector<1x256xf32>
    %cst_205 = arith.constant 0.000000e+00 : f32
    %1123 = vector.broadcast %cst_205 : f32 to vector<1x256xf32>
    %1124 = arith.select %15, %1122, %1123 : vector<1x256xi1>, vector<1x256xf32>
    %c236 = arith.constant 236 : index
    %1125 = memref.load %arg3[%c236] : memref<288xf32, #tpu.memory_space<smem>>
    %1126 = vector.broadcast %1125 : f32 to vector<1x256xf32>
    %1127 = arith.mulf %1126, %1124 : vector<1x256xf32>
    %1128 = arith.addf %1109, %1127 : vector<1x256xf32>
    %c237 = arith.constant 237 : index
    %1129 = memref.load %arg3[%c237] : memref<288xf32, #tpu.memory_space<smem>>
    %1130 = vector.broadcast %1129 : f32 to vector<1x256xf32>
    %1131 = arith.mulf %1130, %1124 : vector<1x256xf32>
    %1132 = arith.addf %1113, %1131 : vector<1x256xf32>
    %c238 = arith.constant 238 : index
    %1133 = memref.load %arg3[%c238] : memref<288xf32, #tpu.memory_space<smem>>
    %1134 = vector.broadcast %1133 : f32 to vector<1x256xf32>
    %1135 = arith.mulf %1134, %1124 : vector<1x256xf32>
    %1136 = arith.addf %1117, %1135 : vector<1x256xf32>
    %c239 = arith.constant 239 : index
    %1137 = memref.load %arg3[%c239] : memref<288xf32, #tpu.memory_space<smem>>
    %1138 = vector.broadcast %1137 : f32 to vector<1x256xf32>
    %1139 = arith.mulf %1138, %1124 : vector<1x256xf32>
    %1140 = arith.addf %1121, %1139 : vector<1x256xf32>
    %c0_206 = arith.constant 0 : index
    %c143_207 = arith.constant 143 : index
    %1141 = vector.load %arg6[%c0_206, %c143_207] : memref<1x401xf32, #tpu.memory_space<vmem>>, vector<1x256xf32>
    %cst_208 = arith.constant 0.000000e+00 : f32
    %1142 = vector.broadcast %cst_208 : f32 to vector<1x256xf32>
    %1143 = arith.select %13, %1141, %1142 : vector<1x256xi1>, vector<1x256xf32>
    %c240 = arith.constant 240 : index
    %1144 = memref.load %arg3[%c240] : memref<288xf32, #tpu.memory_space<smem>>
    %1145 = vector.broadcast %1144 : f32 to vector<1x256xf32>
    %1146 = arith.mulf %1145, %1143 : vector<1x256xf32>
    %1147 = arith.addf %1128, %1146 : vector<1x256xf32>
    %c241 = arith.constant 241 : index
    %1148 = memref.load %arg3[%c241] : memref<288xf32, #tpu.memory_space<smem>>
    %1149 = vector.broadcast %1148 : f32 to vector<1x256xf32>
    %1150 = arith.mulf %1149, %1143 : vector<1x256xf32>
    %1151 = arith.addf %1132, %1150 : vector<1x256xf32>
    %c242 = arith.constant 242 : index
    %1152 = memref.load %arg3[%c242] : memref<288xf32, #tpu.memory_space<smem>>
    %1153 = vector.broadcast %1152 : f32 to vector<1x256xf32>
    %1154 = arith.mulf %1153, %1143 : vector<1x256xf32>
    %1155 = arith.addf %1136, %1154 : vector<1x256xf32>
    %c243 = arith.constant 243 : index
    %1156 = memref.load %arg3[%c243] : memref<288xf32, #tpu.memory_space<smem>>
    %1157 = vector.broadcast %1156 : f32 to vector<1x256xf32>
    %1158 = arith.mulf %1157, %1143 : vector<1x256xf32>
    %1159 = arith.addf %1140, %1158 : vector<1x256xf32>
    %c0_209 = arith.constant 0 : index
    %c144_210 = arith.constant 144 : index
    %1160 = vector.load %arg6[%c0_209, %c144_210] : memref<1x401xf32, #tpu.memory_space<vmem>>, vector<1x256xf32>
    %c244 = arith.constant 244 : index
    %1161 = memref.load %arg3[%c244] : memref<288xf32, #tpu.memory_space<smem>>
    %1162 = vector.broadcast %1161 : f32 to vector<1x256xf32>
    %1163 = arith.mulf %1162, %1160 : vector<1x256xf32>
    %1164 = arith.addf %1147, %1163 : vector<1x256xf32>
    %c245 = arith.constant 245 : index
    %1165 = memref.load %arg3[%c245] : memref<288xf32, #tpu.memory_space<smem>>
    %1166 = vector.broadcast %1165 : f32 to vector<1x256xf32>
    %1167 = arith.mulf %1166, %1160 : vector<1x256xf32>
    %1168 = arith.addf %1151, %1167 : vector<1x256xf32>
    %c246 = arith.constant 246 : index
    %1169 = memref.load %arg3[%c246] : memref<288xf32, #tpu.memory_space<smem>>
    %1170 = vector.broadcast %1169 : f32 to vector<1x256xf32>
    %1171 = arith.mulf %1170, %1160 : vector<1x256xf32>
    %1172 = arith.addf %1155, %1171 : vector<1x256xf32>
    %c247 = arith.constant 247 : index
    %1173 = memref.load %arg3[%c247] : memref<288xf32, #tpu.memory_space<smem>>
    %1174 = vector.broadcast %1173 : f32 to vector<1x256xf32>
    %1175 = arith.mulf %1174, %1160 : vector<1x256xf32>
    %1176 = arith.addf %1159, %1175 : vector<1x256xf32>
    %c0_211 = arith.constant 0 : index
    %c145_212 = arith.constant 145 : index
    %1177 = vector.load %arg6[%c0_211, %c145_212] : memref<1x401xf32, #tpu.memory_space<vmem>>, vector<1x256xf32>
    %cst_213 = arith.constant 0.000000e+00 : f32
    %1178 = vector.broadcast %cst_213 : f32 to vector<1x256xf32>
    %1179 = arith.select %15, %1177, %1178 : vector<1x256xi1>, vector<1x256xf32>
    %c248 = arith.constant 248 : index
    %1180 = memref.load %arg3[%c248] : memref<288xf32, #tpu.memory_space<smem>>
    %1181 = vector.broadcast %1180 : f32 to vector<1x256xf32>
    %1182 = arith.mulf %1181, %1179 : vector<1x256xf32>
    %1183 = arith.addf %1164, %1182 : vector<1x256xf32>
    %c249 = arith.constant 249 : index
    %1184 = memref.load %arg3[%c249] : memref<288xf32, #tpu.memory_space<smem>>
    %1185 = vector.broadcast %1184 : f32 to vector<1x256xf32>
    %1186 = arith.mulf %1185, %1179 : vector<1x256xf32>
    %1187 = arith.addf %1168, %1186 : vector<1x256xf32>
    %c250 = arith.constant 250 : index
    %1188 = memref.load %arg3[%c250] : memref<288xf32, #tpu.memory_space<smem>>
    %1189 = vector.broadcast %1188 : f32 to vector<1x256xf32>
    %1190 = arith.mulf %1189, %1179 : vector<1x256xf32>
    %1191 = arith.addf %1172, %1190 : vector<1x256xf32>
    %c251 = arith.constant 251 : index
    %1192 = memref.load %arg3[%c251] : memref<288xf32, #tpu.memory_space<smem>>
    %1193 = vector.broadcast %1192 : f32 to vector<1x256xf32>
    %1194 = arith.mulf %1193, %1179 : vector<1x256xf32>
    %1195 = arith.addf %1176, %1194 : vector<1x256xf32>
    %c0_214 = arith.constant 0 : index
    %c3_215 = arith.constant 3 : index
    %c0_216 = arith.constant 0 : index
    %1196 = vector.load %arg2[%c0_214, %c3_215, %c0_216] : memref<1x4x256xf32, #tpu.memory_space<vmem>>, vector<1x1x256xf32>
    %1197 = vector.shape_cast %1196 : vector<1x1x256xf32> to vector<1x256xf32>
    %c0_217 = arith.constant 0 : index
    %c128_218 = arith.constant 128 : index
    %1198 = vector.load %arg6[%c0_217, %c128_218] : memref<1x401xf32, #tpu.memory_space<vmem>>, vector<1x256xf32>
    tpu.vector_store %arg6[%c0_217, %c128_218], %1197 {strides = array<i32>} : memref<1x401xf32, #tpu.memory_space<vmem>>, vector<1x256xf32>,
    %c0_219 = arith.constant 0 : index
    %c111_220 = arith.constant 111 : index
    %1199 = vector.load %arg6[%c0_219, %c111_220] : memref<1x401xf32, #tpu.memory_space<vmem>>, vector<1x256xf32>
    %cst_221 = arith.constant 0.000000e+00 : f32
    %1200 = vector.broadcast %cst_221 : f32 to vector<1x256xf32>
    %1201 = arith.select %13, %1199, %1200 : vector<1x256xi1>, vector<1x256xf32>
    %c252 = arith.constant 252 : index
    %1202 = memref.load %arg3[%c252] : memref<288xf32, #tpu.memory_space<smem>>
    %1203 = vector.broadcast %1202 : f32 to vector<1x256xf32>
    %1204 = arith.mulf %1203, %1201 : vector<1x256xf32>
    %1205 = arith.addf %1183, %1204 : vector<1x256xf32>
    %c253 = arith.constant 253 : index
    %1206 = memref.load %arg3[%c253] : memref<288xf32, #tpu.memory_space<smem>>
    %1207 = vector.broadcast %1206 : f32 to vector<1x256xf32>
    %1208 = arith.mulf %1207, %1201 : vector<1x256xf32>
    %1209 = arith.addf %1187, %1208 : vector<1x256xf32>
    %c254 = arith.constant 254 : index
    %1210 = memref.load %arg3[%c254] : memref<288xf32, #tpu.memory_space<smem>>
    %1211 = vector.broadcast %1210 : f32 to vector<1x256xf32>
    %1212 = arith.mulf %1211, %1201 : vector<1x256xf32>
    %1213 = arith.addf %1191, %1212 : vector<1x256xf32>
    %c255 = arith.constant 255 : index
    %1214 = memref.load %arg3[%c255] : memref<288xf32, #tpu.memory_space<smem>>
    %1215 = vector.broadcast %1214 : f32 to vector<1x256xf32>
    %1216 = arith.mulf %1215, %1201 : vector<1x256xf32>
    %1217 = arith.addf %1195, %1216 : vector<1x256xf32>
    %c0_222 = arith.constant 0 : index
    %c112_223 = arith.constant 112 : index
    %1218 = vector.load %arg6[%c0_222, %c112_223] : memref<1x401xf32, #tpu.memory_space<vmem>>, vector<1x256xf32>
    %c256 = arith.constant 256 : index
    %1219 = memref.load %arg3[%c256] : memref<288xf32, #tpu.memory_space<smem>>
    %1220 = vector.broadcast %1219 : f32 to vector<1x256xf32>
    %1221 = arith.mulf %1220, %1218 : vector<1x256xf32>
    %1222 = arith.addf %1205, %1221 : vector<1x256xf32>
    %c257 = arith.constant 257 : index
    %1223 = memref.load %arg3[%c257] : memref<288xf32, #tpu.memory_space<smem>>
    %1224 = vector.broadcast %1223 : f32 to vector<1x256xf32>
    %1225 = arith.mulf %1224, %1218 : vector<1x256xf32>
    %1226 = arith.addf %1209, %1225 : vector<1x256xf32>
    %c258 = arith.constant 258 : index
    %1227 = memref.load %arg3[%c258] : memref<288xf32, #tpu.memory_space<smem>>
    %1228 = vector.broadcast %1227 : f32 to vector<1x256xf32>
    %1229 = arith.mulf %1228, %1218 : vector<1x256xf32>
    %1230 = arith.addf %1213, %1229 : vector<1x256xf32>
    %c259 = arith.constant 259 : index
    %1231 = memref.load %arg3[%c259] : memref<288xf32, #tpu.memory_space<smem>>
    %1232 = vector.broadcast %1231 : f32 to vector<1x256xf32>
    %1233 = arith.mulf %1232, %1218 : vector<1x256xf32>
    %1234 = arith.addf %1217, %1233 : vector<1x256xf32>
    %c0_224 = arith.constant 0 : index
    %c113_225 = arith.constant 113 : index
    %1235 = vector.load %arg6[%c0_224, %c113_225] : memref<1x401xf32, #tpu.memory_space<vmem>>, vector<1x256xf32>
    %cst_226 = arith.constant 0.000000e+00 : f32
    %1236 = vector.broadcast %cst_226 : f32 to vector<1x256xf32>
    %1237 = arith.select %15, %1235, %1236 : vector<1x256xi1>, vector<1x256xf32>
    %c260 = arith.constant 260 : index
    %1238 = memref.load %arg3[%c260] : memref<288xf32, #tpu.memory_space<smem>>
    %1239 = vector.broadcast %1238 : f32 to vector<1x256xf32>
    %1240 = arith.mulf %1239, %1237 : vector<1x256xf32>
    %1241 = arith.addf %1222, %1240 : vector<1x256xf32>
    %c261 = arith.constant 261 : index
    %1242 = memref.load %arg3[%c261] : memref<288xf32, #tpu.memory_space<smem>>
    %1243 = vector.broadcast %1242 : f32 to vector<1x256xf32>
    %1244 = arith.mulf %1243, %1237 : vector<1x256xf32>
    %1245 = arith.addf %1226, %1244 : vector<1x256xf32>
    %c262 = arith.constant 262 : index
    %1246 = memref.load %arg3[%c262] : memref<288xf32, #tpu.memory_space<smem>>
    %1247 = vector.broadcast %1246 : f32 to vector<1x256xf32>
    %1248 = arith.mulf %1247, %1237 : vector<1x256xf32>
    %1249 = arith.addf %1230, %1248 : vector<1x256xf32>
    %c263 = arith.constant 263 : index
    %1250 = memref.load %arg3[%c263] : memref<288xf32, #tpu.memory_space<smem>>
    %1251 = vector.broadcast %1250 : f32 to vector<1x256xf32>
    %1252 = arith.mulf %1251, %1237 : vector<1x256xf32>
    %1253 = arith.addf %1234, %1252 : vector<1x256xf32>
    %c0_227 = arith.constant 0 : index
    %c127_228 = arith.constant 127 : index
    %1254 = vector.load %arg6[%c0_227, %c127_228] : memref<1x401xf32, #tpu.memory_space<vmem>>, vector<1x256xf32>
    %cst_229 = arith.constant 0.000000e+00 : f32
    %1255 = vector.broadcast %cst_229 : f32 to vector<1x256xf32>
    %1256 = arith.select %13, %1254, %1255 : vector<1x256xi1>, vector<1x256xf32>
    %c264 = arith.constant 264 : index
    %1257 = memref.load %arg3[%c264] : memref<288xf32, #tpu.memory_space<smem>>
    %1258 = vector.broadcast %1257 : f32 to vector<1x256xf32>
    %1259 = arith.mulf %1258, %1256 : vector<1x256xf32>
    %1260 = arith.addf %1241, %1259 : vector<1x256xf32>
    %c265 = arith.constant 265 : index
    %1261 = memref.load %arg3[%c265] : memref<288xf32, #tpu.memory_space<smem>>
    %1262 = vector.broadcast %1261 : f32 to vector<1x256xf32>
    %1263 = arith.mulf %1262, %1256 : vector<1x256xf32>
    %1264 = arith.addf %1245, %1263 : vector<1x256xf32>
    %c266 = arith.constant 266 : index
    %1265 = memref.load %arg3[%c266] : memref<288xf32, #tpu.memory_space<smem>>
    %1266 = vector.broadcast %1265 : f32 to vector<1x256xf32>
    %1267 = arith.mulf %1266, %1256 : vector<1x256xf32>
    %1268 = arith.addf %1249, %1267 : vector<1x256xf32>
    %c267 = arith.constant 267 : index
    %1269 = memref.load %arg3[%c267] : memref<288xf32, #tpu.memory_space<smem>>
    %1270 = vector.broadcast %1269 : f32 to vector<1x256xf32>
    %1271 = arith.mulf %1270, %1256 : vector<1x256xf32>
    %1272 = arith.addf %1253, %1271 : vector<1x256xf32>
    %c0_230 = arith.constant 0 : index
    %c128_231 = arith.constant 128 : index
    %1273 = vector.load %arg6[%c0_230, %c128_231] : memref<1x401xf32, #tpu.memory_space<vmem>>, vector<1x256xf32>
    %c268 = arith.constant 268 : index
    %1274 = memref.load %arg3[%c268] : memref<288xf32, #tpu.memory_space<smem>>
    %1275 = vector.broadcast %1274 : f32 to vector<1x256xf32>
    %1276 = arith.mulf %1275, %1273 : vector<1x256xf32>
    %1277 = arith.addf %1260, %1276 : vector<1x256xf32>
    %c269 = arith.constant 269 : index
    %1278 = memref.load %arg3[%c269] : memref<288xf32, #tpu.memory_space<smem>>
    %1279 = vector.broadcast %1278 : f32 to vector<1x256xf32>
    %1280 = arith.mulf %1279, %1273 : vector<1x256xf32>
    %1281 = arith.addf %1264, %1280 : vector<1x256xf32>
    %c270 = arith.constant 270 : index
    %1282 = memref.load %arg3[%c270] : memref<288xf32, #tpu.memory_space<smem>>
    %1283 = vector.broadcast %1282 : f32 to vector<1x256xf32>
    %1284 = arith.mulf %1283, %1273 : vector<1x256xf32>
    %1285 = arith.addf %1268, %1284 : vector<1x256xf32>
    %c271 = arith.constant 271 : index
    %1286 = memref.load %arg3[%c271] : memref<288xf32, #tpu.memory_space<smem>>
    %1287 = vector.broadcast %1286 : f32 to vector<1x256xf32>
    %1288 = arith.mulf %1287, %1273 : vector<1x256xf32>
    %1289 = arith.addf %1272, %1288 : vector<1x256xf32>
    %c0_232 = arith.constant 0 : index
    %c129_233 = arith.constant 129 : index
    %1290 = vector.load %arg6[%c0_232, %c129_233] : memref<1x401xf32, #tpu.memory_space<vmem>>, vector<1x256xf32>
    %cst_234 = arith.constant 0.000000e+00 : f32
    %1291 = vector.broadcast %cst_234 : f32 to vector<1x256xf32>
    %1292 = arith.select %15, %1290, %1291 : vector<1x256xi1>, vector<1x256xf32>
    %c272 = arith.constant 272 : index
    %1293 = memref.load %arg3[%c272] : memref<288xf32, #tpu.memory_space<smem>>
    %1294 = vector.broadcast %1293 : f32 to vector<1x256xf32>
    %1295 = arith.mulf %1294, %1292 : vector<1x256xf32>
    %1296 = arith.addf %1277, %1295 : vector<1x256xf32>
    %c273 = arith.constant 273 : index
    %1297 = memref.load %arg3[%c273] : memref<288xf32, #tpu.memory_space<smem>>
    %1298 = vector.broadcast %1297 : f32 to vector<1x256xf32>
    %1299 = arith.mulf %1298, %1292 : vector<1x256xf32>
    %1300 = arith.addf %1281, %1299 : vector<1x256xf32>
    %c274 = arith.constant 274 : index
    %1301 = memref.load %arg3[%c274] : memref<288xf32, #tpu.memory_space<smem>>
    %1302 = vector.broadcast %1301 : f32 to vector<1x256xf32>
    %1303 = arith.mulf %1302, %1292 : vector<1x256xf32>
    %1304 = arith.addf %1285, %1303 : vector<1x256xf32>
    %c275 = arith.constant 275 : index
    %1305 = memref.load %arg3[%c275] : memref<288xf32, #tpu.memory_space<smem>>
    %1306 = vector.broadcast %1305 : f32 to vector<1x256xf32>
    %1307 = arith.mulf %1306, %1292 : vector<1x256xf32>
    %1308 = arith.addf %1289, %1307 : vector<1x256xf32>
    %c0_235 = arith.constant 0 : index
    %c143_236 = arith.constant 143 : index
    %1309 = vector.load %arg6[%c0_235, %c143_236] : memref<1x401xf32, #tpu.memory_space<vmem>>, vector<1x256xf32>
    %cst_237 = arith.constant 0.000000e+00 : f32
    %1310 = vector.broadcast %cst_237 : f32 to vector<1x256xf32>
    %1311 = arith.select %13, %1309, %1310 : vector<1x256xi1>, vector<1x256xf32>
    %c276 = arith.constant 276 : index
    %1312 = memref.load %arg3[%c276] : memref<288xf32, #tpu.memory_space<smem>>
    %1313 = vector.broadcast %1312 : f32 to vector<1x256xf32>
    %1314 = arith.mulf %1313, %1311 : vector<1x256xf32>
    %1315 = arith.addf %1296, %1314 : vector<1x256xf32>
    %c277 = arith.constant 277 : index
    %1316 = memref.load %arg3[%c277] : memref<288xf32, #tpu.memory_space<smem>>
    %1317 = vector.broadcast %1316 : f32 to vector<1x256xf32>
    %1318 = arith.mulf %1317, %1311 : vector<1x256xf32>
    %1319 = arith.addf %1300, %1318 : vector<1x256xf32>
    %c278 = arith.constant 278 : index
    %1320 = memref.load %arg3[%c278] : memref<288xf32, #tpu.memory_space<smem>>
    %1321 = vector.broadcast %1320 : f32 to vector<1x256xf32>
    %1322 = arith.mulf %1321, %1311 : vector<1x256xf32>
    %1323 = arith.addf %1304, %1322 : vector<1x256xf32>
    %c279 = arith.constant 279 : index
    %1324 = memref.load %arg3[%c279] : memref<288xf32, #tpu.memory_space<smem>>
    %1325 = vector.broadcast %1324 : f32 to vector<1x256xf32>
    %1326 = arith.mulf %1325, %1311 : vector<1x256xf32>
    %1327 = arith.addf %1308, %1326 : vector<1x256xf32>
    %c0_238 = arith.constant 0 : index
    %c144_239 = arith.constant 144 : index
    %1328 = vector.load %arg6[%c0_238, %c144_239] : memref<1x401xf32, #tpu.memory_space<vmem>>, vector<1x256xf32>
    %c280 = arith.constant 280 : index
    %1329 = memref.load %arg3[%c280] : memref<288xf32, #tpu.memory_space<smem>>
    %1330 = vector.broadcast %1329 : f32 to vector<1x256xf32>
    %1331 = arith.mulf %1330, %1328 : vector<1x256xf32>
    %1332 = arith.addf %1315, %1331 : vector<1x256xf32>
    %c281 = arith.constant 281 : index
    %1333 = memref.load %arg3[%c281] : memref<288xf32, #tpu.memory_space<smem>>
    %1334 = vector.broadcast %1333 : f32 to vector<1x256xf32>
    %1335 = arith.mulf %1334, %1328 : vector<1x256xf32>
    %1336 = arith.addf %1319, %1335 : vector<1x256xf32>
    %c282 = arith.constant 282 : index
    %1337 = memref.load %arg3[%c282] : memref<288xf32, #tpu.memory_space<smem>>
    %1338 = vector.broadcast %1337 : f32 to vector<1x256xf32>
    %1339 = arith.mulf %1338, %1328 : vector<1x256xf32>
    %1340 = arith.addf %1323, %1339 : vector<1x256xf32>
    %c283 = arith.constant 283 : index
    %1341 = memref.load %arg3[%c283] : memref<288xf32, #tpu.memory_space<smem>>
    %1342 = vector.broadcast %1341 : f32 to vector<1x256xf32>
    %1343 = arith.mulf %1342, %1328 : vector<1x256xf32>
    %1344 = arith.addf %1327, %1343 : vector<1x256xf32>
    %c0_240 = arith.constant 0 : index
    %c145_241 = arith.constant 145 : index
    %1345 = vector.load %arg6[%c0_240, %c145_241] : memref<1x401xf32, #tpu.memory_space<vmem>>, vector<1x256xf32>
    %cst_242 = arith.constant 0.000000e+00 : f32
    %1346 = vector.broadcast %cst_242 : f32 to vector<1x256xf32>
    %1347 = arith.select %15, %1345, %1346 : vector<1x256xi1>, vector<1x256xf32>
    %c284 = arith.constant 284 : index
    %1348 = memref.load %arg3[%c284] : memref<288xf32, #tpu.memory_space<smem>>
    %1349 = vector.broadcast %1348 : f32 to vector<1x256xf32>
    %1350 = arith.mulf %1349, %1347 : vector<1x256xf32>
    %1351 = arith.addf %1332, %1350 : vector<1x256xf32>
    %c285 = arith.constant 285 : index
    %1352 = memref.load %arg3[%c285] : memref<288xf32, #tpu.memory_space<smem>>
    %1353 = vector.broadcast %1352 : f32 to vector<1x256xf32>
    %1354 = arith.mulf %1353, %1347 : vector<1x256xf32>
    %1355 = arith.addf %1336, %1354 : vector<1x256xf32>
    %c286 = arith.constant 286 : index
    %1356 = memref.load %arg3[%c286] : memref<288xf32, #tpu.memory_space<smem>>
    %1357 = vector.broadcast %1356 : f32 to vector<1x256xf32>
    %1358 = arith.mulf %1357, %1347 : vector<1x256xf32>
    %1359 = arith.addf %1340, %1358 : vector<1x256xf32>
    %c287 = arith.constant 287 : index
    %1360 = memref.load %arg3[%c287] : memref<288xf32, #tpu.memory_space<smem>>
    %1361 = vector.broadcast %1360 : f32 to vector<1x256xf32>
    %1362 = arith.mulf %1361, %1347 : vector<1x256xf32>
    %1363 = arith.addf %1344, %1362 : vector<1x256xf32>
    %1364 = tpu.iota {dimensions = array<i32: 0>} : vector<256x1xi32>
    %c0_243 = arith.constant 0 : index
    %c0_244 = arith.constant 0 : index
    %c0_245 = arith.constant 0 : index
    %1365 = vector.load %arg1[%c0_243, %c0_244, %c0_245] : memref<1x4x256xf32, #tpu.memory_space<vmem>>, vector<1x4x256xf32>
    %1366 = vector.shape_cast %1365 : vector<1x4x256xf32> to vector<4x256xf32>
    %1367 = arith.truncf %1366 : vector<4x256xf32> to vector<4x256xbf16>
    %c0_246 = arith.constant 0 : index
    %c0_247 = arith.constant 0 : index
    %c0_248 = arith.constant 0 : index
    %1368 = vector.load %arg2[%c0_246, %c0_247, %c0_248] : memref<1x4x256xf32, #tpu.memory_space<vmem>>, vector<1x4x256xf32>
    %1369 = vector.shape_cast %1368 : vector<1x4x256xf32> to vector<4x256xf32>
    %1370 = arith.truncf %1369 : vector<4x256xf32> to vector<4x256xbf16>
    %cst_249 = arith.constant 1.06666672 : f32
    %1371 = vector.broadcast %cst_249 : f32 to vector<1x256xf32>
    %1372 = arith.mulf %9, %1371 : vector<1x256xf32>
    %cst_250 = arith.constant 5.000000e-01 : f32
    %1373 = vector.broadcast %cst_250 : f32 to vector<1x256xf32>
    %1374 = arith.subf %1372, %1373 : vector<1x256xf32>
    %cst_251 = arith.constant 5.000000e-01 : f32
    %1375 = vector.broadcast %cst_251 : f32 to vector<1x256xf32>
    %1376 = arith.mulf %1375, %1351 : vector<1x256xf32>
    %1377 = arith.addf %1374, %1376 : vector<1x256xf32>
    %cst_252 = arith.constant 1.06666672 : f32
    %1378 = vector.broadcast %cst_252 : f32 to vector<1x256xf32>
    %1379 = arith.mulf %6, %1378 : vector<1x256xf32>
    %cst_253 = arith.constant 5.000000e-01 : f32
    %1380 = vector.broadcast %cst_253 : f32 to vector<1x256xf32>
    %1381 = arith.subf %1379, %1380 : vector<1x256xf32>
    %cst_254 = arith.constant 5.000000e-01 : f32
    %1382 = vector.broadcast %cst_254 : f32 to vector<1x256xf32>
    %1383 = arith.mulf %1382, %1355 : vector<1x256xf32>
    %1384 = arith.addf %1381, %1383 : vector<1x256xf32>
    %1385 = math.floor %1377 : vector<1x256xf32>
    %1386 = math.floor %1384 : vector<1x256xf32>
    %1387 = arith.subf %1377, %1385 : vector<1x256xf32>
    %1388 = arith.subf %1384, %1386 : vector<1x256xf32>
    %cst_255 = arith.constant 1.000000e+00 : f32
    %1389 = vector.broadcast %cst_255 : f32 to vector<1x256xf32>
    %1390 = arith.subf %1389, %1387 : vector<1x256xf32>
    %cst_256 = arith.constant 1.000000e+00 : f32
    %1391 = vector.broadcast %cst_256 : f32 to vector<1x256xf32>
    %1392 = arith.subf %1391, %1388 : vector<1x256xf32>
    %1393 = arith.mulf %1390, %1392 : vector<1x256xf32>
    %cst_257 = arith.constant 0.000000e+00 : f32
    %1394 = vector.broadcast %cst_257 : f32 to vector<1x256xf32>
    %1395 = arith.cmpf oge, %1385, %1394 : vector<1x256xf32>
    %cst_258 = arith.constant 1.500000e+01 : f32
    %1396 = vector.broadcast %cst_258 : f32 to vector<1x256xf32>
    %1397 = arith.cmpf ole, %1385, %1396 : vector<1x256xf32>
    %1398 = arith.andi %1395, %1397 : vector<1x256xi1>
    %cst_259 = arith.constant 0.000000e+00 : f32
    %1399 = vector.broadcast %cst_259 : f32 to vector<1x256xf32>
    %1400 = arith.cmpf oge, %1386, %1399 : vector<1x256xf32>
    %1401 = arith.andi %1398, %1400 : vector<1x256xi1>
    %cst_260 = arith.constant 1.500000e+01 : f32
    %1402 = vector.broadcast %cst_260 : f32 to vector<1x256xf32>
    %1403 = arith.cmpf ole, %1386, %1402 : vector<1x256xf32>
    %1404 = arith.andi %1401, %1403 : vector<1x256xi1>
    %cst_261 = arith.constant 0.000000e+00 : f32
    %1405 = vector.broadcast %cst_261 : f32 to vector<1x256xf32>
    %1406 = arith.select %1404, %1393, %1405 : vector<1x256xi1>, vector<1x256xf32>
    %cst_262 = arith.constant 0.000000e+00 : f32
    %cst_263 = arith.constant 1.500000e+01 : f32
    %1407 = vector.broadcast %cst_262 : f32 to vector<1x256xf32>
    %1408 = arith.maximumf %1407, %1385 : vector<1x256xf32>
    %1409 = vector.broadcast %cst_263 : f32 to vector<1x256xf32>
    %1410 = arith.minimumf %1409, %1408 : vector<1x256xf32>
    %1411 = arith.fptosi %1410 : vector<1x256xf32> to vector<1x256xi32>
    %cst_264 = arith.constant 0.000000e+00 : f32
    %cst_265 = arith.constant 1.500000e+01 : f32
    %1412 = vector.broadcast %cst_264 : f32 to vector<1x256xf32>
    %1413 = arith.maximumf %1412, %1386 : vector<1x256xf32>
    %1414 = vector.broadcast %cst_265 : f32 to vector<1x256xf32>
    %1415 = arith.minimumf %1414, %1413 : vector<1x256xf32>
    %1416 = arith.fptosi %1415 : vector<1x256xf32> to vector<1x256xi32>
    %c16_i32 = arith.constant 16 : i32
    %1417 = vector.broadcast %c16_i32 : i32 to vector<1x256xi32>
    %1418 = arith.muli %1416, %1417 : vector<1x256xi32>
    %1419 = arith.addi %1418, %1411 : vector<1x256xi32>
    %1420 = vector.broadcast %1364 : vector<256x1xi32> to vector<256x256xi32>
    %1421 = vector.broadcast %1419 : vector<1x256xi32> to vector<256x256xi32>
    %1422 = arith.cmpi eq, %1420, %1421 : vector<256x256xi32>
    %cst_266 = arith.constant 0.000000e+00 : f32
    %1423 = vector.shape_cast %1406 : vector<1x256xf32> to vector<1x256xf32>
    %1424 = vector.broadcast %1423 : vector<1x256xf32> to vector<256x256xf32>
    %1425 = vector.broadcast %cst_266 : f32 to vector<256x256xf32>
    %1426 = arith.select %1422, %1424, %1425 : vector<256x256xi1>, vector<256x256xf32>
    %cst_267 = arith.constant 1.000000e+00 : f32
    %1427 = vector.broadcast %cst_267 : f32 to vector<1x256xf32>
    %1428 = arith.addf %1385, %1427 : vector<1x256xf32>
    %cst_268 = arith.constant 1.000000e+00 : f32
    %1429 = vector.broadcast %cst_268 : f32 to vector<1x256xf32>
    %1430 = arith.subf %1429, %1388 : vector<1x256xf32>
    %1431 = arith.mulf %1387, %1430 : vector<1x256xf32>
    %cst_269 = arith.constant 0.000000e+00 : f32
    %1432 = vector.broadcast %cst_269 : f32 to vector<1x256xf32>
    %1433 = arith.cmpf oge, %1428, %1432 : vector<1x256xf32>
    %cst_270 = arith.constant 1.500000e+01 : f32
    %1434 = vector.broadcast %cst_270 : f32 to vector<1x256xf32>
    %1435 = arith.cmpf ole, %1428, %1434 : vector<1x256xf32>
    %1436 = arith.andi %1433, %1435 : vector<1x256xi1>
    %cst_271 = arith.constant 0.000000e+00 : f32
    %1437 = vector.broadcast %cst_271 : f32 to vector<1x256xf32>
    %1438 = arith.cmpf oge, %1386, %1437 : vector<1x256xf32>
    %1439 = arith.andi %1436, %1438 : vector<1x256xi1>
    %cst_272 = arith.constant 1.500000e+01 : f32
    %1440 = vector.broadcast %cst_272 : f32 to vector<1x256xf32>
    %1441 = arith.cmpf ole, %1386, %1440 : vector<1x256xf32>
    %1442 = arith.andi %1439, %1441 : vector<1x256xi1>
    %cst_273 = arith.constant 0.000000e+00 : f32
    %1443 = vector.broadcast %cst_273 : f32 to vector<1x256xf32>
    %1444 = arith.select %1442, %1431, %1443 : vector<1x256xi1>, vector<1x256xf32>
    %cst_274 = arith.constant 0.000000e+00 : f32
    %cst_275 = arith.constant 1.500000e+01 : f32
    %1445 = vector.broadcast %cst_274 : f32 to vector<1x256xf32>
    %1446 = arith.maximumf %1445, %1428 : vector<1x256xf32>
    %1447 = vector.broadcast %cst_275 : f32 to vector<1x256xf32>
    %1448 = arith.minimumf %1447, %1446 : vector<1x256xf32>
    %1449 = arith.fptosi %1448 : vector<1x256xf32> to vector<1x256xi32>
    %cst_276 = arith.constant 0.000000e+00 : f32
    %cst_277 = arith.constant 1.500000e+01 : f32
    %1450 = vector.broadcast %cst_276 : f32 to vector<1x256xf32>
    %1451 = arith.maximumf %1450, %1386 : vector<1x256xf32>
    %1452 = vector.broadcast %cst_277 : f32 to vector<1x256xf32>
    %1453 = arith.minimumf %1452, %1451 : vector<1x256xf32>
    %1454 = arith.fptosi %1453 : vector<1x256xf32> to vector<1x256xi32>
    %c16_i32_278 = arith.constant 16 : i32
    %1455 = vector.broadcast %c16_i32_278 : i32 to vector<1x256xi32>
    %1456 = arith.muli %1454, %1455 : vector<1x256xi32>
    %1457 = arith.addi %1456, %1449 : vector<1x256xi32>
    %1458 = vector.broadcast %1364 : vector<256x1xi32> to vector<256x256xi32>
    %1459 = vector.broadcast %1457 : vector<1x256xi32> to vector<256x256xi32>
    %1460 = arith.cmpi eq, %1458, %1459 : vector<256x256xi32>
    %cst_279 = arith.constant 0.000000e+00 : f32
    %1461 = vector.shape_cast %1444 : vector<1x256xf32> to vector<1x256xf32>
    %1462 = vector.broadcast %1461 : vector<1x256xf32> to vector<256x256xf32>
    %1463 = vector.broadcast %cst_279 : f32 to vector<256x256xf32>
    %1464 = arith.select %1460, %1462, %1463 : vector<256x256xi1>, vector<256x256xf32>
    %1465 = arith.addf %1426, %1464 : vector<256x256xf32>
    %cst_280 = arith.constant 1.000000e+00 : f32
    %1466 = vector.broadcast %cst_280 : f32 to vector<1x256xf32>
    %1467 = arith.addf %1386, %1466 : vector<1x256xf32>
    %cst_281 = arith.constant 1.000000e+00 : f32
    %1468 = vector.broadcast %cst_281 : f32 to vector<1x256xf32>
    %1469 = arith.subf %1468, %1387 : vector<1x256xf32>
    %1470 = arith.mulf %1469, %1388 : vector<1x256xf32>
    %cst_282 = arith.constant 0.000000e+00 : f32
    %1471 = vector.broadcast %cst_282 : f32 to vector<1x256xf32>
    %1472 = arith.cmpf oge, %1385, %1471 : vector<1x256xf32>
    %cst_283 = arith.constant 1.500000e+01 : f32
    %1473 = vector.broadcast %cst_283 : f32 to vector<1x256xf32>
    %1474 = arith.cmpf ole, %1385, %1473 : vector<1x256xf32>
    %1475 = arith.andi %1472, %1474 : vector<1x256xi1>
    %cst_284 = arith.constant 0.000000e+00 : f32
    %1476 = vector.broadcast %cst_284 : f32 to vector<1x256xf32>
    %1477 = arith.cmpf oge, %1467, %1476 : vector<1x256xf32>
    %1478 = arith.andi %1475, %1477 : vector<1x256xi1>
    %cst_285 = arith.constant 1.500000e+01 : f32
    %1479 = vector.broadcast %cst_285 : f32 to vector<1x256xf32>
    %1480 = arith.cmpf ole, %1467, %1479 : vector<1x256xf32>
    %1481 = arith.andi %1478, %1480 : vector<1x256xi1>
    %cst_286 = arith.constant 0.000000e+00 : f32
    %1482 = vector.broadcast %cst_286 : f32 to vector<1x256xf32>
    %1483 = arith.select %1481, %1470, %1482 : vector<1x256xi1>, vector<1x256xf32>
    %cst_287 = arith.constant 0.000000e+00 : f32
    %cst_288 = arith.constant 1.500000e+01 : f32
    %1484 = vector.broadcast %cst_287 : f32 to vector<1x256xf32>
    %1485 = arith.maximumf %1484, %1385 : vector<1x256xf32>
    %1486 = vector.broadcast %cst_288 : f32 to vector<1x256xf32>
    %1487 = arith.minimumf %1486, %1485 : vector<1x256xf32>
    %1488 = arith.fptosi %1487 : vector<1x256xf32> to vector<1x256xi32>
    %cst_289 = arith.constant 0.000000e+00 : f32
    %cst_290 = arith.constant 1.500000e+01 : f32
    %1489 = vector.broadcast %cst_289 : f32 to vector<1x256xf32>
    %1490 = arith.maximumf %1489, %1467 : vector<1x256xf32>
    %1491 = vector.broadcast %cst_290 : f32 to vector<1x256xf32>
    %1492 = arith.minimumf %1491, %1490 : vector<1x256xf32>
    %1493 = arith.fptosi %1492 : vector<1x256xf32> to vector<1x256xi32>
    %c16_i32_291 = arith.constant 16 : i32
    %1494 = vector.broadcast %c16_i32_291 : i32 to vector<1x256xi32>
    %1495 = arith.muli %1493, %1494 : vector<1x256xi32>
    %1496 = arith.addi %1495, %1488 : vector<1x256xi32>
    %1497 = vector.broadcast %1364 : vector<256x1xi32> to vector<256x256xi32>
    %1498 = vector.broadcast %1496 : vector<1x256xi32> to vector<256x256xi32>
    %1499 = arith.cmpi eq, %1497, %1498 : vector<256x256xi32>
    %cst_292 = arith.constant 0.000000e+00 : f32
    %1500 = vector.shape_cast %1483 : vector<1x256xf32> to vector<1x256xf32>
    %1501 = vector.broadcast %1500 : vector<1x256xf32> to vector<256x256xf32>
    %1502 = vector.broadcast %cst_292 : f32 to vector<256x256xf32>
    %1503 = arith.select %1499, %1501, %1502 : vector<256x256xi1>, vector<256x256xf32>
    %1504 = arith.addf %1465, %1503 : vector<256x256xf32>
    %cst_293 = arith.constant 1.000000e+00 : f32
    %1505 = vector.broadcast %cst_293 : f32 to vector<1x256xf32>
    %1506 = arith.addf %1386, %1505 : vector<1x256xf32>
    %cst_294 = arith.constant 1.000000e+00 : f32
    %1507 = vector.broadcast %cst_294 : f32 to vector<1x256xf32>
    %1508 = arith.addf %1385, %1507 : vector<1x256xf32>
    %1509 = arith.mulf %1387, %1388 : vector<1x256xf32>
    %cst_295 = arith.constant 0.000000e+00 : f32
    %1510 = vector.broadcast %cst_295 : f32 to vector<1x256xf32>
    %1511 = arith.cmpf oge, %1508, %1510 : vector<1x256xf32>
    %cst_296 = arith.constant 1.500000e+01 : f32
    %1512 = vector.broadcast %cst_296 : f32 to vector<1x256xf32>
    %1513 = arith.cmpf ole, %1508, %1512 : vector<1x256xf32>
    %1514 = arith.andi %1511, %1513 : vector<1x256xi1>
    %cst_297 = arith.constant 0.000000e+00 : f32
    %1515 = vector.broadcast %cst_297 : f32 to vector<1x256xf32>
    %1516 = arith.cmpf oge, %1506, %1515 : vector<1x256xf32>
    %1517 = arith.andi %1514, %1516 : vector<1x256xi1>
    %cst_298 = arith.constant 1.500000e+01 : f32
    %1518 = vector.broadcast %cst_298 : f32 to vector<1x256xf32>
    %1519 = arith.cmpf ole, %1506, %1518 : vector<1x256xf32>
    %1520 = arith.andi %1517, %1519 : vector<1x256xi1>
    %cst_299 = arith.constant 0.000000e+00 : f32
    %1521 = vector.broadcast %cst_299 : f32 to vector<1x256xf32>
    %1522 = arith.select %1520, %1509, %1521 : vector<1x256xi1>, vector<1x256xf32>
    %cst_300 = arith.constant 0.000000e+00 : f32
    %cst_301 = arith.constant 1.500000e+01 : f32
    %1523 = vector.broadcast %cst_300 : f32 to vector<1x256xf32>
    %1524 = arith.maximumf %1523, %1508 : vector<1x256xf32>
    %1525 = vector.broadcast %cst_301 : f32 to vector<1x256xf32>
    %1526 = arith.minimumf %1525, %1524 : vector<1x256xf32>
    %1527 = arith.fptosi %1526 : vector<1x256xf32> to vector<1x256xi32>
    %cst_302 = arith.constant 0.000000e+00 : f32
    %cst_303 = arith.constant 1.500000e+01 : f32
    %1528 = vector.broadcast %cst_302 : f32 to vector<1x256xf32>
    %1529 = arith.maximumf %1528, %1506 : vector<1x256xf32>
    %1530 = vector.broadcast %cst_303 : f32 to vector<1x256xf32>
    %1531 = arith.minimumf %1530, %1529 : vector<1x256xf32>
    %1532 = arith.fptosi %1531 : vector<1x256xf32> to vector<1x256xi32>
    %c16_i32_304 = arith.constant 16 : i32
    %1533 = vector.broadcast %c16_i32_304 : i32 to vector<1x256xi32>
    %1534 = arith.muli %1532, %1533 : vector<1x256xi32>
    %1535 = arith.addi %1534, %1527 : vector<1x256xi32>
    %1536 = vector.broadcast %1364 : vector<256x1xi32> to vector<256x256xi32>
    %1537 = vector.broadcast %1535 : vector<1x256xi32> to vector<256x256xi32>
    %1538 = arith.cmpi eq, %1536, %1537 : vector<256x256xi32>
    %cst_305 = arith.constant 0.000000e+00 : f32
    %1539 = vector.shape_cast %1522 : vector<1x256xf32> to vector<1x256xf32>
    %1540 = vector.broadcast %1539 : vector<1x256xf32> to vector<256x256xf32>
    %1541 = vector.broadcast %cst_305 : f32 to vector<256x256xf32>
    %1542 = arith.select %1538, %1540, %1541 : vector<256x256xi1>, vector<256x256xf32>
    %1543 = arith.addf %1504, %1542 : vector<256x256xf32>
    %1544 = arith.truncf %1543 : vector<256x256xf32> to vector<256x256xbf16>
    %cst_306 = arith.constant dense<0.000000e+00> : vector<4x256xf32>
    %1545 = tpu.matmul %1367, %1544, %cst_306 {dimension_numbers = #tpu.dot_dimension_numbers<[1], [0], [0], [1], [0, 0, 1, 1], [], []>} : vector<4x256xbf16>, vector<256x256xbf16>, vector<4x256xf32> -> vector<4x256xf32>
    %c0_307 = arith.constant 0 : index
    %c0_308 = arith.constant 0 : index
    %c0_309 = arith.constant 0 : index
    %1546 = vector.load %arg4[%c0_307, %c0_308, %c0_309] : memref<1x4x256xf32, #tpu.memory_space<vmem>>, vector<1x4x256xf32>
    %1547 = vector.shape_cast %1546 : vector<1x4x256xf32> to vector<4x256xf32>
    %1548 = vector.shape_cast %1545 : vector<4x256xf32> to vector<1x4x256xf32>
    tpu.vector_store %arg4[%c0_307, %c0_308, %c0_309], %1548 {strides = array<i32>} : memref<1x4x256xf32, #tpu.memory_space<vmem>>, vector<1x4x256xf32>,
    %cst_310 = arith.constant 1.06666672 : f32
    %1549 = vector.broadcast %cst_310 : f32 to vector<1x256xf32>
    %1550 = arith.mulf %9, %1549 : vector<1x256xf32>
    %cst_311 = arith.constant 5.000000e-01 : f32
    %1551 = vector.broadcast %cst_311 : f32 to vector<1x256xf32>
    %1552 = arith.subf %1550, %1551 : vector<1x256xf32>
    %cst_312 = arith.constant 5.000000e-01 : f32
    %1553 = vector.broadcast %cst_312 : f32 to vector<1x256xf32>
    %1554 = arith.mulf %1553, %1359 : vector<1x256xf32>
    %1555 = arith.addf %1552, %1554 : vector<1x256xf32>
    %cst_313 = arith.constant 1.06666672 : f32
    %1556 = vector.broadcast %cst_313 : f32 to vector<1x256xf32>
    %1557 = arith.mulf %6, %1556 : vector<1x256xf32>
    %cst_314 = arith.constant 5.000000e-01 : f32
    %1558 = vector.broadcast %cst_314 : f32 to vector<1x256xf32>
    %1559 = arith.subf %1557, %1558 : vector<1x256xf32>
    %cst_315 = arith.constant 5.000000e-01 : f32
    %1560 = vector.broadcast %cst_315 : f32 to vector<1x256xf32>
    %1561 = arith.mulf %1560, %1363 : vector<1x256xf32>
    %1562 = arith.addf %1559, %1561 : vector<1x256xf32>
    %1563 = math.floor %1555 : vector<1x256xf32>
    %1564 = math.floor %1562 : vector<1x256xf32>
    %1565 = arith.subf %1555, %1563 : vector<1x256xf32>
    %1566 = arith.subf %1562, %1564 : vector<1x256xf32>
    %cst_316 = arith.constant 1.000000e+00 : f32
    %1567 = vector.broadcast %cst_316 : f32 to vector<1x256xf32>
    %1568 = arith.subf %1567, %1565 : vector<1x256xf32>
    %cst_317 = arith.constant 1.000000e+00 : f32
    %1569 = vector.broadcast %cst_317 : f32 to vector<1x256xf32>
    %1570 = arith.subf %1569, %1566 : vector<1x256xf32>
    %1571 = arith.mulf %1568, %1570 : vector<1x256xf32>
    %cst_318 = arith.constant 0.000000e+00 : f32
    %1572 = vector.broadcast %cst_318 : f32 to vector<1x256xf32>
    %1573 = arith.cmpf oge, %1563, %1572 : vector<1x256xf32>
    %cst_319 = arith.constant 1.500000e+01 : f32
    %1574 = vector.broadcast %cst_319 : f32 to vector<1x256xf32>
    %1575 = arith.cmpf ole, %1563, %1574 : vector<1x256xf32>
    %1576 = arith.andi %1573, %1575 : vector<1x256xi1>
    %cst_320 = arith.constant 0.000000e+00 : f32
    %1577 = vector.broadcast %cst_320 : f32 to vector<1x256xf32>
    %1578 = arith.cmpf oge, %1564, %1577 : vector<1x256xf32>
    %1579 = arith.andi %1576, %1578 : vector<1x256xi1>
    %cst_321 = arith.constant 1.500000e+01 : f32
    %1580 = vector.broadcast %cst_321 : f32 to vector<1x256xf32>
    %1581 = arith.cmpf ole, %1564, %1580 : vector<1x256xf32>
    %1582 = arith.andi %1579, %1581 : vector<1x256xi1>
    %cst_322 = arith.constant 0.000000e+00 : f32
    %1583 = vector.broadcast %cst_322 : f32 to vector<1x256xf32>
    %1584 = arith.select %1582, %1571, %1583 : vector<1x256xi1>, vector<1x256xf32>
    %cst_323 = arith.constant 0.000000e+00 : f32
    %cst_324 = arith.constant 1.500000e+01 : f32
    %1585 = vector.broadcast %cst_323 : f32 to vector<1x256xf32>
    %1586 = arith.maximumf %1585, %1563 : vector<1x256xf32>
    %1587 = vector.broadcast %cst_324 : f32 to vector<1x256xf32>
    %1588 = arith.minimumf %1587, %1586 : vector<1x256xf32>
    %1589 = arith.fptosi %1588 : vector<1x256xf32> to vector<1x256xi32>
    %cst_325 = arith.constant 0.000000e+00 : f32
    %cst_326 = arith.constant 1.500000e+01 : f32
    %1590 = vector.broadcast %cst_325 : f32 to vector<1x256xf32>
    %1591 = arith.maximumf %1590, %1564 : vector<1x256xf32>
    %1592 = vector.broadcast %cst_326 : f32 to vector<1x256xf32>
    %1593 = arith.minimumf %1592, %1591 : vector<1x256xf32>
    %1594 = arith.fptosi %1593 : vector<1x256xf32> to vector<1x256xi32>
    %c16_i32_327 = arith.constant 16 : i32
    %1595 = vector.broadcast %c16_i32_327 : i32 to vector<1x256xi32>
    %1596 = arith.muli %1594, %1595 : vector<1x256xi32>
    %1597 = arith.addi %1596, %1589 : vector<1x256xi32>
    %1598 = vector.broadcast %1364 : vector<256x1xi32> to vector<256x256xi32>
    %1599 = vector.broadcast %1597 : vector<1x256xi32> to vector<256x256xi32>
    %1600 = arith.cmpi eq, %1598, %1599 : vector<256x256xi32>
    %cst_328 = arith.constant 0.000000e+00 : f32
    %1601 = vector.shape_cast %1584 : vector<1x256xf32> to vector<1x256xf32>
    %1602 = vector.broadcast %1601 : vector<1x256xf32> to vector<256x256xf32>
    %1603 = vector.broadcast %cst_328 : f32 to vector<256x256xf32>
    %1604 = arith.select %1600, %1602, %1603 : vector<256x256xi1>, vector<256x256xf32>
    %cst_329 = arith.constant 1.000000e+00 : f32
    %1605 = vector.broadcast %cst_329 : f32 to vector<1x256xf32>
    %1606 = arith.addf %1563, %1605 : vector<1x256xf32>
    %cst_330 = arith.constant 1.000000e+00 : f32
    %1607 = vector.broadcast %cst_330 : f32 to vector<1x256xf32>
    %1608 = arith.subf %1607, %1566 : vector<1x256xf32>
    %1609 = arith.mulf %1565, %1608 : vector<1x256xf32>
    %cst_331 = arith.constant 0.000000e+00 : f32
    %1610 = vector.broadcast %cst_331 : f32 to vector<1x256xf32>
    %1611 = arith.cmpf oge, %1606, %1610 : vector<1x256xf32>
    %cst_332 = arith.constant 1.500000e+01 : f32
    %1612 = vector.broadcast %cst_332 : f32 to vector<1x256xf32>
    %1613 = arith.cmpf ole, %1606, %1612 : vector<1x256xf32>
    %1614 = arith.andi %1611, %1613 : vector<1x256xi1>
    %cst_333 = arith.constant 0.000000e+00 : f32
    %1615 = vector.broadcast %cst_333 : f32 to vector<1x256xf32>
    %1616 = arith.cmpf oge, %1564, %1615 : vector<1x256xf32>
    %1617 = arith.andi %1614, %1616 : vector<1x256xi1>
    %cst_334 = arith.constant 1.500000e+01 : f32
    %1618 = vector.broadcast %cst_334 : f32 to vector<1x256xf32>
    %1619 = arith.cmpf ole, %1564, %1618 : vector<1x256xf32>
    %1620 = arith.andi %1617, %1619 : vector<1x256xi1>
    %cst_335 = arith.constant 0.000000e+00 : f32
    %1621 = vector.broadcast %cst_335 : f32 to vector<1x256xf32>
    %1622 = arith.select %1620, %1609, %1621 : vector<1x256xi1>, vector<1x256xf32>
    %cst_336 = arith.constant 0.000000e+00 : f32
    %cst_337 = arith.constant 1.500000e+01 : f32
    %1623 = vector.broadcast %cst_336 : f32 to vector<1x256xf32>
    %1624 = arith.maximumf %1623, %1606 : vector<1x256xf32>
    %1625 = vector.broadcast %cst_337 : f32 to vector<1x256xf32>
    %1626 = arith.minimumf %1625, %1624 : vector<1x256xf32>
    %1627 = arith.fptosi %1626 : vector<1x256xf32> to vector<1x256xi32>
    %cst_338 = arith.constant 0.000000e+00 : f32
    %cst_339 = arith.constant 1.500000e+01 : f32
    %1628 = vector.broadcast %cst_338 : f32 to vector<1x256xf32>
    %1629 = arith.maximumf %1628, %1564 : vector<1x256xf32>
    %1630 = vector.broadcast %cst_339 : f32 to vector<1x256xf32>
    %1631 = arith.minimumf %1630, %1629 : vector<1x256xf32>
    %1632 = arith.fptosi %1631 : vector<1x256xf32> to vector<1x256xi32>
    %c16_i32_340 = arith.constant 16 : i32
    %1633 = vector.broadcast %c16_i32_340 : i32 to vector<1x256xi32>
    %1634 = arith.muli %1632, %1633 : vector<1x256xi32>
    %1635 = arith.addi %1634, %1627 : vector<1x256xi32>
    %1636 = vector.broadcast %1364 : vector<256x1xi32> to vector<256x256xi32>
    %1637 = vector.broadcast %1635 : vector<1x256xi32> to vector<256x256xi32>
    %1638 = arith.cmpi eq, %1636, %1637 : vector<256x256xi32>
    %cst_341 = arith.constant 0.000000e+00 : f32
    %1639 = vector.shape_cast %1622 : vector<1x256xf32> to vector<1x256xf32>
    %1640 = vector.broadcast %1639 : vector<1x256xf32> to vector<256x256xf32>
    %1641 = vector.broadcast %cst_341 : f32 to vector<256x256xf32>
    %1642 = arith.select %1638, %1640, %1641 : vector<256x256xi1>, vector<256x256xf32>
    %1643 = arith.addf %1604, %1642 : vector<256x256xf32>
    %cst_342 = arith.constant 1.000000e+00 : f32
    %1644 = vector.broadcast %cst_342 : f32 to vector<1x256xf32>
    %1645 = arith.addf %1564, %1644 : vector<1x256xf32>
    %cst_343 = arith.constant 1.000000e+00 : f32
    %1646 = vector.broadcast %cst_343 : f32 to vector<1x256xf32>
    %1647 = arith.subf %1646, %1565 : vector<1x256xf32>
    %1648 = arith.mulf %1647, %1566 : vector<1x256xf32>
    %cst_344 = arith.constant 0.000000e+00 : f32
    %1649 = vector.broadcast %cst_344 : f32 to vector<1x256xf32>
    %1650 = arith.cmpf oge, %1563, %1649 : vector<1x256xf32>
    %cst_345 = arith.constant 1.500000e+01 : f32
    %1651 = vector.broadcast %cst_345 : f32 to vector<1x256xf32>
    %1652 = arith.cmpf ole, %1563, %1651 : vector<1x256xf32>
    %1653 = arith.andi %1650, %1652 : vector<1x256xi1>
    %cst_346 = arith.constant 0.000000e+00 : f32
    %1654 = vector.broadcast %cst_346 : f32 to vector<1x256xf32>
    %1655 = arith.cmpf oge, %1645, %1654 : vector<1x256xf32>
    %1656 = arith.andi %1653, %1655 : vector<1x256xi1>
    %cst_347 = arith.constant 1.500000e+01 : f32
    %1657 = vector.broadcast %cst_347 : f32 to vector<1x256xf32>
    %1658 = arith.cmpf ole, %1645, %1657 : vector<1x256xf32>
    %1659 = arith.andi %1656, %1658 : vector<1x256xi1>
    %cst_348 = arith.constant 0.000000e+00 : f32
    %1660 = vector.broadcast %cst_348 : f32 to vector<1x256xf32>
    %1661 = arith.select %1659, %1648, %1660 : vector<1x256xi1>, vector<1x256xf32>
    %cst_349 = arith.constant 0.000000e+00 : f32
    %cst_350 = arith.constant 1.500000e+01 : f32
    %1662 = vector.broadcast %cst_349 : f32 to vector<1x256xf32>
    %1663 = arith.maximumf %1662, %1563 : vector<1x256xf32>
    %1664 = vector.broadcast %cst_350 : f32 to vector<1x256xf32>
    %1665 = arith.minimumf %1664, %1663 : vector<1x256xf32>
    %1666 = arith.fptosi %1665 : vector<1x256xf32> to vector<1x256xi32>
    %cst_351 = arith.constant 0.000000e+00 : f32
    %cst_352 = arith.constant 1.500000e+01 : f32
    %1667 = vector.broadcast %cst_351 : f32 to vector<1x256xf32>
    %1668 = arith.maximumf %1667, %1645 : vector<1x256xf32>
    %1669 = vector.broadcast %cst_352 : f32 to vector<1x256xf32>
    %1670 = arith.minimumf %1669, %1668 : vector<1x256xf32>
    %1671 = arith.fptosi %1670 : vector<1x256xf32> to vector<1x256xi32>
    %c16_i32_353 = arith.constant 16 : i32
    %1672 = vector.broadcast %c16_i32_353 : i32 to vector<1x256xi32>
    %1673 = arith.muli %1671, %1672 : vector<1x256xi32>
    %1674 = arith.addi %1673, %1666 : vector<1x256xi32>
    %1675 = vector.broadcast %1364 : vector<256x1xi32> to vector<256x256xi32>
    %1676 = vector.broadcast %1674 : vector<1x256xi32> to vector<256x256xi32>
    %1677 = arith.cmpi eq, %1675, %1676 : vector<256x256xi32>
    %cst_354 = arith.constant 0.000000e+00 : f32
    %1678 = vector.shape_cast %1661 : vector<1x256xf32> to vector<1x256xf32>
    %1679 = vector.broadcast %1678 : vector<1x256xf32> to vector<256x256xf32>
    %1680 = vector.broadcast %cst_354 : f32 to vector<256x256xf32>
    %1681 = arith.select %1677, %1679, %1680 : vector<256x256xi1>, vector<256x256xf32>
    %1682 = arith.addf %1643, %1681 : vector<256x256xf32>
    %cst_355 = arith.constant 1.000000e+00 : f32
    %1683 = vector.broadcast %cst_355 : f32 to vector<1x256xf32>
    %1684 = arith.addf %1564, %1683 : vector<1x256xf32>
    %cst_356 = arith.constant 1.000000e+00 : f32
    %1685 = vector.broadcast %cst_356 : f32 to vector<1x256xf32>
    %1686 = arith.addf %1563, %1685 : vector<1x256xf32>
    %1687 = arith.mulf %1565, %1566 : vector<1x256xf32>
    %cst_357 = arith.constant 0.000000e+00 : f32
    %1688 = vector.broadcast %cst_357 : f32 to vector<1x256xf32>
    %1689 = arith.cmpf oge, %1686, %1688 : vector<1x256xf32>
    %cst_358 = arith.constant 1.500000e+01 : f32
    %1690 = vector.broadcast %cst_358 : f32 to vector<1x256xf32>
    %1691 = arith.cmpf ole, %1686, %1690 : vector<1x256xf32>
    %1692 = arith.andi %1689, %1691 : vector<1x256xi1>
    %cst_359 = arith.constant 0.000000e+00 : f32
    %1693 = vector.broadcast %cst_359 : f32 to vector<1x256xf32>
    %1694 = arith.cmpf oge, %1684, %1693 : vector<1x256xf32>
    %1695 = arith.andi %1692, %1694 : vector<1x256xi1>
    %cst_360 = arith.constant 1.500000e+01 : f32
    %1696 = vector.broadcast %cst_360 : f32 to vector<1x256xf32>
    %1697 = arith.cmpf ole, %1684, %1696 : vector<1x256xf32>
    %1698 = arith.andi %1695, %1697 : vector<1x256xi1>
    %cst_361 = arith.constant 0.000000e+00 : f32
    %1699 = vector.broadcast %cst_361 : f32 to vector<1x256xf32>
    %1700 = arith.select %1698, %1687, %1699 : vector<1x256xi1>, vector<1x256xf32>
    %cst_362 = arith.constant 0.000000e+00 : f32
    %cst_363 = arith.constant 1.500000e+01 : f32
    %1701 = vector.broadcast %cst_362 : f32 to vector<1x256xf32>
    %1702 = arith.maximumf %1701, %1686 : vector<1x256xf32>
    %1703 = vector.broadcast %cst_363 : f32 to vector<1x256xf32>
    %1704 = arith.minimumf %1703, %1702 : vector<1x256xf32>
    %1705 = arith.fptosi %1704 : vector<1x256xf32> to vector<1x256xi32>
    %cst_364 = arith.constant 0.000000e+00 : f32
    %cst_365 = arith.constant 1.500000e+01 : f32
    %1706 = vector.broadcast %cst_364 : f32 to vector<1x256xf32>
    %1707 = arith.maximumf %1706, %1684 : vector<1x256xf32>
    %1708 = vector.broadcast %cst_365 : f32 to vector<1x256xf32>
    %1709 = arith.minimumf %1708, %1707 : vector<1x256xf32>
    %1710 = arith.fptosi %1709 : vector<1x256xf32> to vector<1x256xi32>
    %c16_i32_366 = arith.constant 16 : i32
    %1711 = vector.broadcast %c16_i32_366 : i32 to vector<1x256xi32>
    %1712 = arith.muli %1710, %1711 : vector<1x256xi32>
    %1713 = arith.addi %1712, %1705 : vector<1x256xi32>
    %1714 = vector.broadcast %1364 : vector<256x1xi32> to vector<256x256xi32>
    %1715 = vector.broadcast %1713 : vector<1x256xi32> to vector<256x256xi32>
    %1716 = arith.cmpi eq, %1714, %1715 : vector<256x256xi32>
    %cst_367 = arith.constant 0.000000e+00 : f32
    %1717 = vector.shape_cast %1700 : vector<1x256xf32> to vector<1x256xf32>
    %1718 = vector.broadcast %1717 : vector<1x256xf32> to vector<256x256xf32>
    %1719 = vector.broadcast %cst_367 : f32 to vector<256x256xf32>
    %1720 = arith.select %1716, %1718, %1719 : vector<256x256xi1>, vector<256x256xf32>
    %1721 = arith.addf %1682, %1720 : vector<256x256xf32>
    %1722 = arith.truncf %1721 : vector<256x256xf32> to vector<256x256xbf16>
    %cst_368 = arith.constant dense<0.000000e+00> : vector<4x256xf32>
    %1723 = tpu.matmul %1370, %1722, %cst_368 {dimension_numbers = #tpu.dot_dimension_numbers<[1], [0], [0], [1], [0, 0, 1, 1], [], []>} : vector<4x256xbf16>, vector<256x256xbf16>, vector<4x256xf32> -> vector<4x256xf32>
    %c0_369 = arith.constant 0 : index
    %c0_370 = arith.constant 0 : index
    %c0_371 = arith.constant 0 : index
    %1724 = vector.load %arg5[%c0_369, %c0_370, %c0_371] : memref<1x4x256xf32, #tpu.memory_space<vmem>>, vector<1x4x256xf32>
    %1725 = vector.shape_cast %1724 : vector<1x4x256xf32> to vector<4x256xf32>
    %1726 = vector.shape_cast %1723 : vector<4x256xf32> to vector<1x4x256xf32>
    tpu.vector_store %arg5[%c0_369, %c0_370, %c0_371], %1726 {strides = array<i32>} : memref<1x4x256xf32, #tpu.memory_space<vmem>>, vector<1x4x256xf32>,
    return
  }
  func.func @transform_0(%arg0: i32) -> (i32, i32, i32) {
    %c0_i32 = arith.constant 0 : i32
    %c0_i32_0 = arith.constant 0 : i32
    %c0_i32_1 = arith.constant 0 : i32
    return %arg0, %c0_i32, %c0_i32_0 : i32, i32, i32
  }
  func.func @transform_1(%arg0: i32) -> (i32, i32, i32) {
    %c0_i32 = arith.constant 0 : i32
    %c0_i32_0 = arith.constant 0 : i32
    %c0_i32_1 = arith.constant 0 : i32
    return %arg0, %c0_i32, %c0_i32_0 : i32, i32, i32
  }
  func.func @transform_2(%arg0: i32) -> i32 {
    %c0_i32 = arith.constant 0 : i32
    %c0_i32_0 = arith.constant 0 : i32
    return %c0_i32 : i32
  }
  func.func @transform_3(%arg0: i32) -> (i32, i32, i32) {
    %c0_i32 = arith.constant 0 : i32
    %c0_i32_0 = arith.constant 0 : i32
    %c0_i32_1 = arith.constant 0 : i32
    return %arg0, %c0_i32, %c0_i32_0 : i32, i32, i32
  }
  func.func @transform_4(%arg0: i32) -> (i32, i32, i32) {
    %c0_i32 = arith.constant 0 : i32
    %c0_i32_0 = arith.constant 0 : i32
    %c0_i32_1 = arith.constant 0 : i32
    return %arg0, %c0_i32, %c0_i32_0 : i32, i32, i32
  }
}

</mosaic_0001>

<llo_original>
// kernel: align_module_forward.1
$region0: #{align_module_forward.1}
  #allocation0 [shape = 'u32[]', space=smem, size = 0x4, offset = 0x4, fixed_abs, tag = 'smem constant byte address 0x4 - core index']
  #allocation1 [shape = 'u32[72,128]{1,0:T(1,128)}', space=vmem, size = 0x9000, scoped, tag = 'internal scratch']
  #allocation2 [shape = 'f32[1,401]{1,0:T(1,128)}', space=vmem, size = 0x800, scoped, tag = 'scratch operand']
  %s0 = inlined_call_operand.vmem [shape: f32[2,4,256], index: 0, kind: input, shape index: {}]
  %s1 = inlined_call_operand.vmem [shape: f32[2,4,256], index: 1, kind: input, shape index: {}]
  %s2 = inlined_call_operand.vmem [shape: f32[288], index: 2, kind: input, shape index: {}]
  %s3 = inlined_call_operand.vmem [shape: f32[2,4,256], index: 3, kind: output, shape index: {0}]
  %s4 = inlined_call_operand.vmem [shape: f32[2,4,256], index: 4, kind: output, shape index: {1}]
  %5 = xla_tuple %s3, %s4
  %s6 = sld [smem:[#allocation0]]
  $region57: #{align_module_forward.1} parent=0
    _
  %s8 = ssub.s32 1, %s6
  %s9 = scalar_select 0, %s8, %s6
  $region1: #{align_module_forward.1} parent=0
    #allocation3 [shape = 'u8[1536]{0}', space=smem, size = 0x600, scoped, tag = 'input window, operand 2, single buffered']
    #allocation4 [shape = 's32[2]{0}', space=sflag, size = 0x8, scoped, tag = 'scoped memory for align_module_forward.1']
    %10 = vsyncpa [#allocation4], 0
    loop: start=0, step=1, limit=4
    $region2: #{align_module_forward.1} parent=1 // loop_pre_header
      _
    $region3: #{align_module_forward.1} parent=1 // loop_header
      %s12 = sphi 0, %s16
      %p13 = scmp.ge.s32.totalorder %s12, 4
      %s22 = sphi 0, %s24
      %s25 = sphi 0, %s22
      %s26 = sphi 0, %s25
      %s42 = sphi 0, %s26
      %s48 = sphi 0, %s50
      %s51 = sphi 0, %s48
      %s52 = sphi 0, %s51
      %s68 = sphi 0, %s52
      %s72 = sphi 0, %s72
      %s74 = sphi 0, %s72
      %s75 = sphi 0, %s74
      %s89 = sphi 0, %s75
      %s95 = sphi 0, %s97
      %s98 = sphi 0, %s95
      %s99 = sphi 0, %s98
      %s115 = sphi 0, %s99
      %s121 = sphi 0, %s123
      %s124 = sphi 0, %s121
      %s125 = sphi 0, %s124
      %s141 = sphi 0, %s125
    $region4: #{align_module_forward.1} parent=1 // loop_header_branch
      %15 = sbr.rel (%p13) target = $region8
    $region5: #{align_module_forward.1} parent=1 // loop_body
      %s17 = ssub.s32 %s12, 1
      %s18 = ssub.s32 %s12, 2
      %s19 = sadd.s32 %s12, 1
      %s20 = ssub.s32 %s12, %s19
      %p21 = scmp.eq.s32.totalorder %s20, 0
      %s23 = sadd.s32 %s22, 1
      %s24 = scalar_select %p21, %s22, %s23
      %p27 = pneg %p21
      %p28 = scmp.eq.s32.totalorder %s12, 1
      %p29 = por %p27, %p28
      %p30 = scmp.ne.s32.totalorder %s22, %s25
      %p31 = scmp.eq.s32.totalorder %s12, 0
      %p32 = por %p30, %p31
      %p33 = scmp.ne.s32.totalorder %s22, %s25
      %p34 = scmp.eq.s32.totalorder %s17, 1
      %p35 = por %p33, %p34
      %p36 = scmp.ne.s32.totalorder %s25, %s26
      %p37 = scmp.eq.s32.totalorder %s17, 0
      %p38 = por %p36, %p37
      %p39 = scmp.ne.s32.totalorder %s25, %s26
      %p40 = scmp.eq.s32.totalorder %s18, 1
      %p41 = por %p39, %p40
      %p43 = scmp.ne.s32.totalorder %s26, %s42
      %p44 = scmp.eq.s32.totalorder %s18, 0
      %p45 = por %p43, %p44
      %s46 = ssub.s32 %s12, %s19
      %p47 = scmp.eq.s32.totalorder %s46, 0
      %s49 = sadd.s32 %s48, 1
      %s50 = scalar_select %p47, %s48, %s49
      %p53 = pneg %p47
      %p54 = scmp.eq.s32.totalorder %s12, 1
      %p55 = por %p53, %p54
      %p56 = scmp.ne.s32.totalorder %s48, %s51
      %p57 = scmp.eq.s32.totalorder %s12, 0
      %p58 = por %p56, %p57
      %p59 = scmp.ne.s32.totalorder %s48, %s51
      %p60 = scmp.eq.s32.totalorder %s17, 1
      %p61 = por %p59, %p60
      %p62 = scmp.ne.s32.totalorder %s51, %s52
      %p63 = scmp.eq.s32.totalorder %s17, 0
      %p64 = por %p62, %p63
      %p65 = scmp.ne.s32.totalorder %s51, %s52
      %p66 = scmp.eq.s32.totalorder %s18, 1
      %p67 = por %p65, %p66
      %p69 = scmp.ne.s32.totalorder %s52, %s68
      %p70 = scmp.eq.s32.totalorder %s18, 0
      %p71 = por %p69, %p70
      %s73 = sadd.s32 %s72, 1
      %p76 = scmp.eq.s32.totalorder %s12, 1
      %p77 = scmp.ne.s32.totalorder %s72, %s74
      %p78 = scmp.eq.s32.totalorder %s12, 0
      %p79 = por %p77, %p78
      %p80 = scmp.ne.s32.totalorder %s72, %s74
      %p81 = scmp.eq.s32.totalorder %s17, 1
      %p82 = por %p80, %p81
      %p83 = scmp.ne.s32.totalorder %s74, %s75
      %p84 = scmp.eq.s32.totalorder %s17, 0
      %p85 = por %p83, %p84
      %p86 = scmp.ne.s32.totalorder %s74, %s75
      %p87 = scmp.eq.s32.totalorder %s18, 1
      %p88 = por %p86, %p87
      %p90 = scmp.ne.s32.totalorder %s75, %s89
      %p91 = scmp.eq.s32.totalorder %s18, 0
      %p92 = por %p90, %p91
      %s93 = ssub.s32 %s12, %s19
      %p94 = scmp.eq.s32.totalorder %s93, 0
      %s96 = sadd.s32 %s95, 1
      %s97 = scalar_select %p94, %s95, %s96
      %p100 = pneg %p94
      %p101 = scmp.eq.s32.totalorder %s12, 1
      %p102 = por %p100, %p101
      %p103 = scmp.ne.s32.totalorder %s95, %s98
      %p104 = scmp.eq.s32.totalorder %s12, 0
      %p105 = por %p103, %p104
      %p106 = scmp.ne.s32.totalorder %s95, %s98
      %p107 = scmp.eq.s32.totalorder %s17, 1
      %p108 = por %p106, %p107
      %p109 = scmp.ne.s32.totalorder %s98, %s99
      %p110 = scmp.eq.s32.totalorder %s17, 0
      %p111 = por %p109, %p110
      %p112 = scmp.ne.s32.totalorder %s98, %s99
      %p113 = scmp.eq.s32.totalorder %s18, 1
      %p114 = por %p112, %p113
      %p116 = scmp.ne.s32.totalorder %s99, %s115
      %p117 = scmp.eq.s32.totalorder %s18, 0
      %p118 = por %p116, %p117
      %s119 = ssub.s32 %s12, %s19
      %p120 = scmp.eq.s32.totalorder %s119, 0
      %s122 = sadd.s32 %s121, 1
      %s123 = scalar_select %p120, %s121, %s122
      %p126 = pneg %p120
      %p127 = scmp.eq.s32.totalorder %s12, 1
      %p128 = por %p126, %p127
      %p129 = scmp.ne.s32.totalorder %s121, %s124
      %p130 = scmp.eq.s32.totalorder %s12, 0
      %p131 = por %p129, %p130
      %p132 = scmp.ne.s32.totalorder %s121, %s124
      %p133 = scmp.eq.s32.totalorder %s17, 1
      %p134 = por %p132, %p133
      %p135 = scmp.ne.s32.totalorder %s124, %s125
      %p136 = scmp.eq.s32.totalorder %s17, 0
      %p137 = por %p135, %p136
      %p138 = scmp.ne.s32.totalorder %s124, %s125
      %p139 = scmp.eq.s32.totalorder %s18, 1
      %p140 = por %p138, %p139
      %p142 = scmp.ne.s32.totalorder %s125, %s141
      %p143 = scmp.eq.s32.totalorder %s18, 0
      %p144 = por %p142, %p143
      %p145 = scmp.le.s32.totalorder 1, %s12
      %p146 = scmp.lt.s32.totalorder %s12, 3
      %p147 = pnand %p145, %p146
      %p148 = pneg %p147
      // Predicated region
      $region9: #{align_module_forward.1} parent=5 // pred_check
        _
      $region10: #{align_module_forward.1} parent=5 // pred_check_branch
        %150 = sbr.rel (%p147) target = $region12
      $region11: #{align_module_forward.1} parent=5 // pred_region
        %s151 = ssub.s32 %s12, 1
        // Predicated region
        $region13: #{align_module_forward.1} parent=11 // pred_check
          %p152 = pneg %p85
        $region14: #{align_module_forward.1} parent=11 // pred_check_branch
          %154 = sbr.rel (%p152) target = $region16
        $region15: #{align_module_forward.1} parent=11 // pred_region
          %156 = vsyncadd [#allocation4], 0
          %s158 = sshll.u32 %s2, 4
          %s159 = int_to_ptr.vmem [resolvable:$true] %s158
          %161 = dma.vmem_to_smem %s159, 48, [#allocation3], [#allocation4]
        $region16: #{align_module_forward.1} parent=11 // pred_fallthru
          _
      $region12: #{align_module_forward.1} parent=5 // pred_fallthru
        _
      %p162 = scmp.lt.s32.totalorder %s12, 2
      // Predicated region
      $region17: #{align_module_forward.1} parent=5 // pred_check
        %p163 = pneg %p162
      $region18: #{align_module_forward.1} parent=5 // pred_check_branch
        %165 = sbr.rel (%p163) target = $region20
      $region19: #{align_module_forward.1} parent=5 // pred_region
        // Predicated region
        $region21: #{align_module_forward.1} parent=19 // pred_check
          %p166 = pneg %p32
        $region22: #{align_module_forward.1} parent=19 // pred_check_branch
          %168 = sbr.rel (%p166) target = $region24
        $region23: #{align_module_forward.1} parent=19 // pred_region
          %p169 = scmp.lt.s32.totalorder %s12, 1
          %s170 = scalar_select %p169, %s12, 1
          %s171 = smul.addr %s170, 2
          %s172 = smul.addr %s171, 4
          %s173 = scalar_lea.vmem %s0, %s172
        $region24: #{align_module_forward.1} parent=19 // pred_fallthru
          _
        // Predicated region
        $region25: #{align_module_forward.1} parent=19 // pred_check
          %p174 = pneg %p58
        $region26: #{align_module_forward.1} parent=19 // pred_check_branch
          %176 = sbr.rel (%p174) target = $region28
        $region27: #{align_module_forward.1} parent=19 // pred_region
          %p177 = scmp.lt.s32.totalorder %s12, 1
          %s178 = scalar_select %p177, %s12, 1
          %s179 = smul.addr %s178, 2
          %s180 = smul.addr %s179, 4
          %s181 = scalar_lea.vmem %s1, %s180
        $region28: #{align_module_forward.1} parent=19 // pred_fallthru
          _
      $region20: #{align_module_forward.1} parent=5 // pred_fallthru
        _
      %p182 = scmp.le.s32.totalorder 1, %s12
      %p183 = scmp.lt.s32.totalorder %s12, 3
      %p184 = pnand %p182, %p183
      %p185 = pneg %p184
      // Predicated region
      $region29: #{align_module_forward.1} parent=5 // pred_check
        _
      $region30: #{align_module_forward.1} parent=5 // pred_check_branch
        %187 = sbr.rel (%p184) target = $region32
      $region31: #{align_module_forward.1} parent=5 // pred_region
        %s188 = ssub.s32 %s12, 1
        // Predicated region
        $region33: #{align_module_forward.1} parent=31 // pred_check
          %p189 = pneg %p85
        $region34: #{align_module_forward.1} parent=31 // pred_check_branch
          %191 = sbr.rel (%p189) target = $region36
        $region35: #{align_module_forward.1} parent=31 // pred_region
          %193 = dma.done [#allocation4], 48
        $region36: #{align_module_forward.1} parent=31 // pred_fallthru
          _
        %194 = sfence
        %p195 = scmp.lt.s32.totalorder %s17, 1
        %s196 = scalar_select %p195, %s17, 1
        %s197 = smul.addr %s196, 2
        %s198 = smul.addr %s197, 4
        %s199 = scalar_lea.vmem %s0, %s198
        %p200 = pneg %p38
        %p201 = pneg %p35
        %p202 = scmp.lt.s32.totalorder %s17, 1
        %s203 = scalar_select %p202, %s17, 1
        %s204 = smul.addr %s203, 2
        %s205 = smul.addr %s204, 4
        %s206 = scalar_lea.vmem %s1, %s205
        %p207 = pneg %p64
        %p208 = pneg %p61
        %p209 = pneg %p85
        %p210 = pneg %p82
        %p211 = pneg %p111
        %p212 = pneg %p108
        %p213 = scmp.lt.s32.totalorder %s17, 1
        %s214 = scalar_select %p213, %s17, 1
        %s215 = smul.addr %s214, 2
        %s216 = smul.addr %s215, 4
        %s217 = scalar_lea.vmem %s3, %s216
        %p218 = pneg %p137
        %p219 = pneg %p134
        %p220 = scmp.lt.s32.totalorder %s17, 1
        %s221 = scalar_select %p220, %s17, 1
        %s222 = smul.addr %s221, 2
        %s223 = smul.addr %s222, 4
        %s224 = scalar_lea.vmem %s4, %s223
        %p225 = scmp.lt.s32.totalorder %s17, 1
        %s226 = scalar_select %p225, %s17, 1
        %s227 = smul.addr %s226, 2
        %s228 = smul.addr %s227, 4
        %s229 = scalar_lea.vmem %s0, %s228
        %p230 = scmp.lt.s32.totalorder %s17, 1
        %s231 = scalar_select %p230, %s17, 1
        %s232 = smul.addr %s231, 2
        %s233 = smul.addr %s232, 4
        %s234 = scalar_lea.vmem %s1, %s233
        %p235 = scmp.lt.s32.totalorder %s17, 1
        %s236 = scalar_select %p235, %s17, 1
        %s237 = smul.addr %s236, 2
        %s238 = smul.addr %s237, 4
        %s239 = scalar_lea.vmem %s3, %s238
        %p240 = scmp.lt.s32.totalorder %s17, 1
        %s241 = scalar_select %p240, %s17, 1
        %s242 = smul.addr %s241, 2
        %s243 = smul.addr %s242, 4
        %s244 = scalar_lea.vmem %s4, %s243
        %v245 = vlaneseq
        %v246 = vand.u32 %v245, 127
        %v247 = vadd.s32 %v246, 128
        %v248 = vcvt.s32.f32 %v246
        %v249 = vcvt.s32.f32 %v247
        %v250 = vadd.f32 %v248, 0.5
        %v251 = vadd.f32 %v249, 0.5
        %v252 = vrcp.pop 16.0
        %v253 = vmul.f32 16.0, %v252
        %v254 = vsub.f32 1.0, %v253
        %v255 = vmul.f32 %v252, %v254
        %v256 = vadd.f32 %v252, %v255
        %vm257 = vweird.f32 %v252
        %v258 = vsel %vm257, %v252, %v256
        %v259 = vmul.f32 %v250, %v258
        %v260 = vmul.f32 %v251, %v258
        %v261 = vfloor.f32 %v259
        %v262 = vfloor.f32 %v260
        %v263 = vmul.f32 %v261, 16.0
        %v264 = vmul.f32 %v262, 16.0
        %v265 = vsub.f32 %v248, %v263
        %v266 = vsub.f32 %v249, %v264
        %v267 = vlaneseq
        %vm268 = vcmp.ge.s32.totalorder %v267, 0
        %vm269 = vcmp.lt.s32.totalorder %v267, 401
        %vm270 = vmand %vm268, %vm269
        %271 = vst.msk [vmem:[#allocation2] sm:$0xf] %vm270, 0.0
        %vm272 = vcmp.ge.f32.partialorder %v265, 0.5
        %vm273 = vcmp.ge.f32.partialorder %v266, 0.5
        %vm274 = vcmp.le.f32.partialorder %v265, 14.5
        %vm275 = vcmp.le.f32.partialorder %v266, 14.5
        %v276 = vld [vmem:[%s229] ss:$4 sm:$0x3]
        %vm277 = vcmp.lt.s32.totalorder %v267, 256
        %vm278 = vmand %vm268, %vm277
        %279 = vst.msk [vmem:[#allocation2 + $0x1] sm:$0x3] %vm278, %v276
        %v280 = vld [vmem:[#allocation2] sm:$0x7]
        %v282 = vperm.slane %v280, 0
        %v283 = vperm.slane %v280, 1
        %v284 = vperm.slane %v280, 2
        %285 = vrot.lane.b32.xlu0 %v282, 17
        %v286 = vpop.permute.xlu0 %285
        %287 = vrot.lane.b32.xlu0 %v283, 17
        %v288 = vpop.permute.xlu0 %287
        %289 = vrot.lane.b32.xlu0 %v284, 17
        %v290 = vpop.permute.xlu0 %289
        %vm291 = vcmask 138240
        %v292 = vsel %vm291, %v286, %v288
        %v293 = vsel %vm291, %v288, %v290
        %v296 = vsel %vm272, %v292, 0.0
        %v297 = vsel %vm273, %v293, 0.0
        %s298 = sld [smem:[#allocation3]]
        %v299 = vstv %s298
        %v300 = vmul.f32 %v299, %v296
        %v301 = vmul.f32 %v299, %v297
        %v302 = vadd.f32 %v300, 0.0
        %v303 = vadd.f32 %v301, 0.0
        %s304 = sld [smem:[#allocation3 + $0x1]]
        %v305 = vstv %s304
        %v306 = vmul.f32 %v305, %v296
        %v307 = vmul.f32 %v305, %v297
        %v308 = vadd.f32 %v306, 0.0
        %v309 = vadd.f32 %v307, 0.0
        %s310 = sld [smem:[#allocation3 + $0x2]]
        %v311 = vstv %s310
        %v312 = vmul.f32 %v311, %v296
        %v313 = vmul.f32 %v311, %v297
        %v314 = vadd.f32 %v312, 0.0
        %v315 = vadd.f32 %v313, 0.0
        %s316 = sld [smem:[#allocation3 + $0x3]]
        %v317 = vstv %s316
        %v318 = vmul.f32 %v317, %v296
        %v319 = vmul.f32 %v317, %v297
        %v320 = vadd.f32 %v318, 0.0
        %v321 = vadd.f32 %v319, 0.0
        %s322 = sld [smem:[#allocation3 + $0x4]]
        %v323 = vstv %s322
        %v324 = vmul.f32 %v323, %v280
        %v326 = vperm.slane %v324, 0
        %v327 = vperm.slane %v324, 1
        %v328 = vperm.slane %v324, 2
        %329 = vrot.lane.b32.xlu0 %v326, 16
        %v330 = vpop.permute.xlu0 %329
        %331 = vrot.lane.b32.xlu0 %v327, 16
        %v332 = vpop.permute.xlu0 %331
        %333 = vrot.lane.b32.xlu0 %v328, 16
        %v334 = vpop.permute.xlu0 %333
        %vm335 = vcmask 130048
        %v336 = vsel %vm335, %v330, %v332
        %v337 = vsel %vm335, %v332, %v334
        %v340 = vadd.f32 %v302, %v336
        %v341 = vadd.f32 %v303, %v337
        %s342 = sld [smem:[#allocation3 + $0x5]]
        %v343 = vstv %s342
        %v344 = vmul.f32 %v343, %v280
        %v346 = vperm.slane %v344, 0
        %v347 = vperm.slane %v344, 1
        %v348 = vperm.slane %v344, 2
        %349 = vrot.lane.b32.xlu0 %v346, 16
        %v350 = vpop.permute.xlu0 %349
        %351 = vrot.lane.b32.xlu0 %v347, 16
        %v352 = vpop.permute.xlu0 %351
        %353 = vrot.lane.b32.xlu0 %v348, 16
        %v354 = vpop.permute.xlu0 %353
        %v355 = vsel %vm335, %v350, %v352
        %v356 = vsel %vm335, %v352, %v354
        %v359 = vadd.f32 %v308, %v355
        %v360 = vadd.f32 %v309, %v356
        %s361 = sld [smem:[#allocation3 + $0x6]]
        %v362 = vstv %s361
        %v363 = vmul.f32 %v362, %v280
        %v365 = vperm.slane %v363, 0
        %v366 = vperm.slane %v363, 1
        %v367 = vperm.slane %v363, 2
        %368 = vrot.lane.b32.xlu0 %v365, 16
        %v369 = vpop.permute.xlu0 %368
        %370 = vrot.lane.b32.xlu0 %v366, 16
        %v371 = vpop.permute.xlu0 %370
        %372 = vrot.lane.b32.xlu0 %v367, 16
        %v373 = vpop.permute.xlu0 %372
        %v374 = vsel %vm335, %v369, %v371
        %v375 = vsel %vm335, %v371, %v373
        %v378 = vadd.f32 %v314, %v374
        %v379 = vadd.f32 %v315, %v375
        %s380 = sld [smem:[#allocation3 + $0x7]]
        %v381 = vstv %s380
        %v382 = vmul.f32 %v381, %v280
        %v384 = vperm.slane %v382, 0
        %v385 = vperm.slane %v382, 1
        %v386 = vperm.slane %v382, 2
        %387 = vrot.lane.b32.xlu0 %v384, 16
        %v388 = vpop.permute.xlu0 %387
        %389 = vrot.lane.b32.xlu0 %v385, 16
        %v390 = vpop.permute.xlu0 %389
        %391 = vrot.lane.b32.xlu0 %v386, 16
        %v392 = vpop.permute.xlu0 %391
        %v393 = vsel %vm335, %v388, %v390
        %v394 = vsel %vm335, %v390, %v392
        %v397 = vadd.f32 %v320, %v393
        %v398 = vadd.f32 %v321, %v394
        %399 = vrot.lane.b32.xlu0 %v282, 15
        %v400 = vpop.permute.xlu0 %399
        %401 = vrot.lane.b32.xlu0 %v283, 15
        %v402 = vpop.permute.xlu0 %401
        %403 = vrot.lane.b32.xlu0 %v284, 15
        %v404 = vpop.permute.xlu0 %403
        %vm405 = vcmask 121856
        %v406 = vsel %vm405, %v400, %v402
        %v407 = vsel %vm405, %v402, %v404
        %v410 = vsel %vm274, %v406, 0.0
        %v411 = vsel %vm275, %v407, 0.0
        %s412 = sld [smem:[#allocation3 + $0x8]]
        %v413 = vstv %s412
        %v414 = vmul.f32 %v413, %v410
        %v415 = vmul.f32 %v413, %v411
        %v416 = vadd.f32 %v340, %v414
        %v417 = vadd.f32 %v341, %v415
        %s418 = sld [smem:[#allocation3 + $0x9]]
        %v419 = vstv %s418
        %v420 = vmul.f32 %v419, %v410
        %v421 = vmul.f32 %v419, %v411
        %v422 = vadd.f32 %v359, %v420
        %v423 = vadd.f32 %v360, %v421
        %s424 = sld [smem:[#allocation3 + $0xa]]
        %v425 = vstv %s424
        %v426 = vmul.f32 %v425, %v410
        %v427 = vmul.f32 %v425, %v411
        %v428 = vadd.f32 %v378, %v426
        %v429 = vadd.f32 %v379, %v427
        %s430 = sld [smem:[#allocation3 + $0xb]]
        %v431 = vstv %s430
        %v432 = vmul.f32 %v431, %v410
        %v433 = vmul.f32 %v431, %v411
        %v434 = vadd.f32 %v397, %v432
        %v435 = vadd.f32 %v398, %v433
        %436 = vrot.lane.b32.xlu0 %v282, 1
        %v437 = vpop.permute.xlu0 %436
        %438 = vrot.lane.b32.xlu0 %v283, 1
        %v439 = vpop.permute.xlu0 %438
        %440 = vrot.lane.b32.xlu0 %v284, 1
        %v441 = vpop.permute.xlu0 %440
        %vm442 = vcmask 7168
        %v443 = vsel %vm442, %v437, %v439
        %v444 = vsel %vm442, %v439, %v441
        %v447 = vsel %vm272, %v443, 0.0
        %v448 = vsel %vm273, %v444, 0.0
        %s449 = sld [smem:[#allocation3 + $0xc]]
        %v450 = vstv %s449
        %v451 = vmul.f32 %v450, %v447
        %v452 = vmul.f32 %v450, %v448
        %v453 = vadd.f32 %v416, %v451
        %v454 = vadd.f32 %v417, %v452
        %s455 = sld [smem:[#allocation3 + $0xd]]
        %v456 = vstv %s455
        %v457 = vmul.f32 %v456, %v447
        %v458 = vmul.f32 %v456, %v448
        %v459 = vadd.f32 %v422, %v457
        %v460 = vadd.f32 %v423, %v458
        %s461 = sld [smem:[#allocation3 + $0xe]]
        %v462 = vstv %s461
        %v463 = vmul.f32 %v462, %v447
        %v464 = vmul.f32 %v462, %v448
        %v465 = vadd.f32 %v428, %v463
        %v466 = vadd.f32 %v429, %v464
        %s467 = sld [smem:[#allocation3 + $0xf]]
        %v468 = vstv %s467
        %v469 = vmul.f32 %v468, %v447
        %v470 = vmul.f32 %v468, %v448
        %v471 = vadd.f32 %v434, %v469
        %v472 = vadd.f32 %v435, %v470
        %v473 = vld [vmem:[#allocation2 + $0x1] sm:$0x3]
        %s474 = sld [smem:[#allocation3 + $0x10]]
        %v475 = vstv %s474
        %v476 = vmul.f32 %v475, %v473
        %v478 = vperm.slane %v476, 0
        %v479 = vperm.slane %v476, 1
        %v482 = vadd.f32 %v453, %v478
        %v483 = vadd.f32 %v454, %v479
        %s484 = sld [smem:[#allocation3 + $0x11]]
        %v485 = vstv %s484
        %v486 = vmul.f32 %v485, %v473
        %v488 = vperm.slane %v486, 0
        %v489 = vperm.slane %v486, 1
        %v492 = vadd.f32 %v459, %v488
        %v493 = vadd.f32 %v460, %v489
        %s494 = sld [smem:[#allocation3 + $0x12]]
        %v495 = vstv %s494
        %v496 = vmul.f32 %v495, %v473
        %v498 = vperm.slane %v496, 0
        %v499 = vperm.slane %v496, 1
        %v502 = vadd.f32 %v465, %v498
        %v503 = vadd.f32 %v466, %v499
        %s504 = sld [smem:[#allocation3 + $0x13]]
        %v505 = vstv %s504
        %v506 = vmul.f32 %v505, %v473
        %v508 = vperm.slane %v506, 0
        %v509 = vperm.slane %v506, 1
        %v512 = vadd.f32 %v471, %v508
        %v513 = vadd.f32 %v472, %v509
        %v514 = vld [vmem:[#allocation2 + $0x1] sm:$0x7]
        %v516 = vperm.slane %v514, 0
        %v517 = vperm.slane %v514, 1
        %v518 = vperm.slane %v514, 2
        %519 = vrot.lane.b32.xlu0 %v516, 127
        %v520 = vpop.permute.xlu0 %519
        %521 = vrot.lane.b32.xlu0 %v517, 127
        %v522 = vpop.permute.xlu0 %521
        %523 = vrot.lane.b32.xlu0 %v518, 127
        %v524 = vpop.permute.xlu0 %523
        %vm525 = vcmask 1039360
        %v526 = vsel %vm525, %v520, %v522
        %v527 = vsel %vm525, %v522, %v524
        %v530 = vsel %vm274, %v526, 0.0
        %v531 = vsel %vm275, %v527, 0.0
        %s532 = sld [smem:[#allocation3 + $0x14]]
        %v533 = vstv %s532
        %v534 = vmul.f32 %v533, %v530
        %v535 = vmul.f32 %v533, %v531
        %v536 = vadd.f32 %v482, %v534
        %v537 = vadd.f32 %v483, %v535
        %s538 = sld [smem:[#allocation3 + $0x15]]
        %v539 = vstv %s538
        %v540 = vmul.f32 %v539, %v530
        %v541 = vmul.f32 %v539, %v531
        %v542 = vadd.f32 %v492, %v540
        %v543 = vadd.f32 %v493, %v541
        %s544 = sld [smem:[#allocation3 + $0x16]]
        %v545 = vstv %s544
        %v546 = vmul.f32 %v545, %v530
        %v547 = vmul.f32 %v545, %v531
        %v548 = vadd.f32 %v502, %v546
        %v549 = vadd.f32 %v503, %v547
        %s550 = sld [smem:[#allocation3 + $0x17]]
        %v551 = vstv %s550
        %v552 = vmul.f32 %v551, %v530
        %v553 = vmul.f32 %v551, %v531
        %v554 = vadd.f32 %v512, %v552
        %v555 = vadd.f32 %v513, %v553
        %556 = vrot.lane.b32.xlu0 %v516, 113
        %v557 = vpop.permute.xlu0 %556
        %558 = vrot.lane.b32.xlu0 %v517, 113
        %v559 = vpop.permute.xlu0 %558
        %560 = vrot.lane.b32.xlu0 %v518, 113
        %v561 = vpop.permute.xlu0 %560
        %vm562 = vcmask 924672
        %v563 = vsel %vm562, %v557, %v559
        %v564 = vsel %vm562, %v559, %v561
        %v567 = vsel %vm272, %v563, 0.0
        %v568 = vsel %vm273, %v564, 0.0
        %s569 = sld [smem:[#allocation3 + $0x18]]
        %v570 = vstv %s569
        %v571 = vmul.f32 %v570, %v567
        %v572 = vmul.f32 %v570, %v568
        %v573 = vadd.f32 %v536, %v571
        %v574 = vadd.f32 %v537, %v572
        %s575 = sld [smem:[#allocation3 + $0x19]]
        %v576 = vstv %s575
        %v577 = vmul.f32 %v576, %v567
        %v578 = vmul.f32 %v576, %v568
        %v579 = vadd.f32 %v542, %v577
        %v580 = vadd.f32 %v543, %v578
        %s581 = sld [smem:[#allocation3 + $0x1a]]
        %v582 = vstv %s581
        %v583 = vmul.f32 %v582, %v567
        %v584 = vmul.f32 %v582, %v568
        %v585 = vadd.f32 %v548, %v583
        %v586 = vadd.f32 %v549, %v584
        %s587 = sld [smem:[#allocation3 + $0x1b]]
        %v588 = vstv %s587
        %v589 = vmul.f32 %v588, %v567
        %v590 = vmul.f32 %v588, %v568
        %v591 = vadd.f32 %v554, %v589
        %v592 = vadd.f32 %v555, %v590
        %s593 = sld [smem:[#allocation3 + $0x1c]]
        %v594 = vstv %s593
        %v595 = vmul.f32 %v594, %v514
        %v597 = vperm.slane %v595, 0
        %v598 = vperm.slane %v595, 1
        %v599 = vperm.slane %v595, 2
        %600 = vrot.lane.b32.xlu0 %v597, 112
        %v601 = vpop.permute.xlu0 %600
        %602 = vrot.lane.b32.xlu0 %v598, 112
        %v603 = vpop.permute.xlu0 %602
        %604 = vrot.lane.b32.xlu0 %v599, 112
        %v605 = vpop.permute.xlu0 %604
        %vm606 = vcmask 916480
        %v607 = vsel %vm606, %v601, %v603
        %v608 = vsel %vm606, %v603, %v605
        %v611 = vadd.f32 %v573, %v607
        %v612 = vadd.f32 %v574, %v608
        %s613 = sld [smem:[#allocation3 + $0x1d]]
        %v614 = vstv %s613
        %v615 = vmul.f32 %v614, %v514
        %v617 = vperm.slane %v615, 0
        %v618 = vperm.slane %v615, 1
        %v619 = vperm.slane %v615, 2
        %620 = vrot.lane.b32.xlu0 %v617, 112
        %v621 = vpop.permute.xlu0 %620
        %622 = vrot.lane.b32.xlu0 %v618, 112
        %v623 = vpop.permute.xlu0 %622
        %624 = vrot.lane.b32.xlu0 %v619, 112
        %v625 = vpop.permute.xlu0 %624
        %v626 = vsel %vm606, %v621, %v623
        %v627 = vsel %vm606, %v623, %v625
        %v630 = vadd.f32 %v579, %v626
        %v631 = vadd.f32 %v580, %v627
        %s632 = sld [smem:[#allocation3 + $0x1e]]
        %v633 = vstv %s632
        %v634 = vmul.f32 %v633, %v514
        %v636 = vperm.slane %v634, 0
        %v637 = vperm.slane %v634, 1
        %v638 = vperm.slane %v634, 2
        %639 = vrot.lane.b32.xlu0 %v636, 112
        %v640 = vpop.permute.xlu0 %639
        %641 = vrot.lane.b32.xlu0 %v637, 112
        %v642 = vpop.permute.xlu0 %641
        %643 = vrot.lane.b32.xlu0 %v638, 112
        %v644 = vpop.permute.xlu0 %643
        %v645 = vsel %vm606, %v640, %v642
        %v646 = vsel %vm606, %v642, %v644
        %v649 = vadd.f32 %v585, %v645
        %v650 = vadd.f32 %v586, %v646
        %s651 = sld [smem:[#allocation3 + $0x1f]]
        %v652 = vstv %s651
        %v653 = vmul.f32 %v652, %v514
        %v655 = vperm.slane %v653, 0
        %v656 = vperm.slane %v653, 1
        %v657 = vperm.slane %v653, 2
        %658 = vrot.lane.b32.xlu0 %v655, 112
        %v659 = vpop.permute.xlu0 %658
        %660 = vrot.lane.b32.xlu0 %v656, 112
        %v661 = vpop.permute.xlu0 %660
        %662 = vrot.lane.b32.xlu0 %v657, 112
        %v663 = vpop.permute.xlu0 %662
        %v664 = vsel %vm606, %v659, %v661
        %v665 = vsel %vm606, %v661, %v663
        %v668 = vadd.f32 %v591, %v664
        %v669 = vadd.f32 %v592, %v665
        %670 = vrot.lane.b32.xlu0 %v516, 111
        %v671 = vpop.permute.xlu0 %670
        %672 = vrot.lane.b32.xlu0 %v517, 111
        %v673 = vpop.permute.xlu0 %672
        %674 = vrot.lane.b32.xlu0 %v518, 111
        %v675 = vpop.permute.xlu0 %674
        %vm676 = vcmask 908288
        %v677 = vsel %vm676, %v671, %v673
        %v678 = vsel %vm676, %v673, %v675
        %v681 = vsel %vm274, %v677, 0.0
        %v682 = vsel %vm275, %v678, 0.0
        %s683 = sld [smem:[#allocation3 + $0x20]]
        %v684 = vstv %s683
        %v685 = vmul.f32 %v684, %v681
        %v686 = vmul.f32 %v684, %v682
        %v687 = vadd.f32 %v611, %v685
        %v688 = vadd.f32 %v612, %v686
        %s689 = sld [smem:[#allocation3 + $0x21]]
        %v690 = vstv %s689
        %v691 = vmul.f32 %v690, %v681
        %v692 = vmul.f32 %v690, %v682
        %v693 = vadd.f32 %v630, %v691
        %v694 = vadd.f32 %v631, %v692
        %s695 = sld [smem:[#allocation3 + $0x22]]
        %v696 = vstv %s695
        %v697 = vmul.f32 %v696, %v681
        %v698 = vmul.f32 %v696, %v682
        %v699 = vadd.f32 %v649, %v697
        %v700 = vadd.f32 %v650, %v698
        %s701 = sld [smem:[#allocation3 + $0x23]]
        %v702 = vstv %s701
        %v703 = vmul.f32 %v702, %v681
        %v704 = vmul.f32 %v702, %v682
        %v705 = vadd.f32 %v668, %v703
        %v706 = vadd.f32 %v669, %v704
        %s707 = scalar_lea.vmem %s229, 1
        %v708 = vld [vmem:[%s707] ss:$4 sm:$0x3]
        %709 = vst.msk [vmem:[#allocation2 + $0x1] sm:$0x3] %vm278, %v708
        %v710 = vld [vmem:[#allocation2] sm:$0x7]
        %v712 = vperm.slane %v710, 0
        %v713 = vperm.slane %v710, 1
        %v714 = vperm.slane %v710, 2
        %715 = vrot.lane.b32.xlu0 %v712, 17
        %v716 = vpop.permute.xlu0 %715
        %717 = vrot.lane.b32.xlu0 %v713, 17
        %v718 = vpop.permute.xlu0 %717
        %719 = vrot.lane.b32.xlu0 %v714, 17
        %v720 = vpop.permute.xlu0 %719
        %v721 = vsel %vm291, %v716, %v718
        %v722 = vsel %vm291, %v718, %v720
        %v725 = vsel %vm272, %v721, 0.0
        %v726 = vsel %vm273, %v722, 0.0
        %s727 = sld [smem:[#allocation3 + $0x24]]
        %v728 = vstv %s727
        %v729 = vmul.f32 %v728, %v725
        %v730 = vmul.f32 %v728, %v726
        %v731 = vadd.f32 %v687, %v729
        %v732 = vadd.f32 %v688, %v730
        %s733 = sld [smem:[#allocation3 + $0x25]]
        %v734 = vstv %s733
        %v735 = vmul.f32 %v734, %v725
        %v736 = vmul.f32 %v734, %v726
        %v737 = vadd.f32 %v693, %v735
        %v738 = vadd.f32 %v694, %v736
        %s739 = sld [smem:[#allocation3 + $0x26]]
        %v740 = vstv %s739
        %v741 = vmul.f32 %v740, %v725
        %v742 = vmul.f32 %v740, %v726
        %v743 = vadd.f32 %v699, %v741
        %v744 = vadd.f32 %v700, %v742
        %s745 = sld [smem:[#allocation3 + $0x27]]
        %v746 = vstv %s745
        %v747 = vmul.f32 %v746, %v725
        %v748 = vmul.f32 %v746, %v726
        %v749 = vadd.f32 %v705, %v747
        %v750 = vadd.f32 %v706, %v748
        %s751 = sld [smem:[#allocation3 + $0x28]]
        %v752 = vstv %s751
        %v753 = vmul.f32 %v752, %v710
        %v755 = vperm.slane %v753, 0
        %v756 = vperm.slane %v753, 1
        %v757 = vperm.slane %v753, 2
        %758 = vrot.lane.b32.xlu0 %v755, 16
        %v759 = vpop.permute.xlu0 %758
        %760 = vrot.lane.b32.xlu0 %v756, 16
        %v761 = vpop.permute.xlu0 %760
        %762 = vrot.lane.b32.xlu0 %v757, 16
        %v763 = vpop.permute.xlu0 %762
        %v764 = vsel %vm335, %v759, %v761
        %v765 = vsel %vm335, %v761, %v763
        %v768 = vadd.f32 %v731, %v764
        %v769 = vadd.f32 %v732, %v765
        %s770 = sld [smem:[#allocation3 + $0x29]]
        %v771 = vstv %s770
        %v772 = vmul.f32 %v771, %v710
        %v774 = vperm.slane %v772, 0
        %v775 = vperm.slane %v772, 1
        %v776 = vperm.slane %v772, 2
        %777 = vrot.lane.b32.xlu0 %v774, 16
        %v778 = vpop.permute.xlu0 %777
        %779 = vrot.lane.b32.xlu0 %v775, 16
        %v780 = vpop.permute.xlu0 %779
        %781 = vrot.lane.b32.xlu0 %v776, 16
        %v782 = vpop.permute.xlu0 %781
        %v783 = vsel %vm335, %v778, %v780
        %v784 = vsel %vm335, %v780, %v782
        %v787 = vadd.f32 %v737, %v783
        %v788 = vadd.f32 %v738, %v784
        %s789 = sld [smem:[#allocation3 + $0x2a]]
        %v790 = vstv %s789
        %v791 = vmul.f32 %v790, %v710
        %v793 = vperm.slane %v791, 0
        %v794 = vperm.slane %v791, 1
        %v795 = vperm.slane %v791, 2
        %796 = vrot.lane.b32.xlu0 %v793, 16
        %v797 = vpop.permute.xlu0 %796
        %798 = vrot.lane.b32.xlu0 %v794, 16
        %v799 = vpop.permute.xlu0 %798
        %800 = vrot.lane.b32.xlu0 %v795, 16
        %v801 = vpop.permute.xlu0 %800
        %v802 = vsel %vm335, %v797, %v799
        %v803 = vsel %vm335, %v799, %v801
        %v806 = vadd.f32 %v743, %v802
        %v807 = vadd.f32 %v744, %v803
        %s808 = sld [smem:[#allocation3 + $0x2b]]
        %v809 = vstv %s808
        %v810 = vmul.f32 %v809, %v710
        %v812 = vperm.slane %v810, 0
        %v813 = vperm.slane %v810, 1
        %v814 = vperm.slane %v810, 2
        %815 = vrot.lane.b32.xlu0 %v812, 16
        %v816 = vpop.permute.xlu0 %815
        %817 = vrot.lane.b32.xlu0 %v813, 16
        %v818 = vpop.permute.xlu0 %817
        %819 = vrot.lane.b32.xlu0 %v814, 16
        %v820 = vpop.permute.xlu0 %819
        %v821 = vsel %vm335, %v816, %v818
        %v822 = vsel %vm335, %v818, %v820
        %v825 = vadd.f32 %v749, %v821
        %v826 = vadd.f32 %v750, %v822
        %827 = vrot.lane.b32.xlu0 %v712, 15
        %v828 = vpop.permute.xlu0 %827
        %829 = vrot.lane.b32.xlu0 %v713, 15
        %v830 = vpop.permute.xlu0 %829
        %831 = vrot.lane.b32.xlu0 %v714, 15
        %v832 = vpop.permute.xlu0 %831
        %v833 = vsel %vm405, %v828, %v830
        %v834 = vsel %vm405, %v830, %v832
        %v837 = vsel %vm274, %v833, 0.0
        %v838 = vsel %vm275, %v834, 0.0
        %s839 = sld [smem:[#allocation3 + $0x2c]]
        %v840 = vstv %s839
        %v841 = vmul.f32 %v840, %v837
        %v842 = vmul.f32 %v840, %v838
        %v843 = vadd.f32 %v768, %v841
        %v844 = vadd.f32 %v769, %v842
        %s845 = sld [smem:[#allocation3 + $0x2d]]
        %v846 = vstv %s845
        %v847 = vmul.f32 %v846, %v837
        %v848 = vmul.f32 %v846, %v838
        %v849 = vadd.f32 %v787, %v847
        %v850 = vadd.f32 %v788, %v848
        %s851 = sld [smem:[#allocation3 + $0x2e]]
        %v852 = vstv %s851
        %v853 = vmul.f32 %v852, %v837
        %v854 = vmul.f32 %v852, %v838
        %v855 = vadd.f32 %v806, %v853
        %v856 = vadd.f32 %v807, %v854
        %s857 = sld [smem:[#allocation3 + $0x2f]]
        %v858 = vstv %s857
        %v859 = vmul.f32 %v858, %v837
        %v860 = vmul.f32 %v858, %v838
        %v861 = vadd.f32 %v825, %v859
        %v862 = vadd.f32 %v826, %v860
        %863 = vrot.lane.b32.xlu0 %v712, 1
        %v864 = vpop.permute.xlu0 %863
        %865 = vrot.lane.b32.xlu0 %v713, 1
        %v866 = vpop.permute.xlu0 %865
        %867 = vrot.lane.b32.xlu0 %v714, 1
        %v868 = vpop.permute.xlu0 %867
        %v869 = vsel %vm442, %v864, %v866
        %v870 = vsel %vm442, %v866, %v868
        %v873 = vsel %vm272, %v869, 0.0
        %v874 = vsel %vm273, %v870, 0.0
        %s875 = sld [smem:[#allocation3 + $0x30]]
        %v876 = vstv %s875
        %v877 = vmul.f32 %v876, %v873
        %v878 = vmul.f32 %v876, %v874
        %v879 = vadd.f32 %v843, %v877
        %v880 = vadd.f32 %v844, %v878
        %s881 = sld [smem:[#allocation3 + $0x31]]
        %v882 = vstv %s881
        %v883 = vmul.f32 %v882, %v873
        %v884 = vmul.f32 %v882, %v874
        %v885 = vadd.f32 %v849, %v883
        %v886 = vadd.f32 %v850, %v884
        %s887 = sld [smem:[#allocation3 + $0x32]]
        %v888 = vstv %s887
        %v889 = vmul.f32 %v888, %v873
        %v890 = vmul.f32 %v888, %v874
        %v891 = vadd.f32 %v855, %v889
        %v892 = vadd.f32 %v856, %v890
        %s893 = sld [smem:[#allocation3 + $0x33]]
        %v894 = vstv %s893
        %v895 = vmul.f32 %v894, %v873
        %v896 = vmul.f32 %v894, %v874
        %v897 = vadd.f32 %v861, %v895
        %v898 = vadd.f32 %v862, %v896
        %v899 = vld [vmem:[#allocation2 + $0x1] sm:$0x3]
        %s900 = sld [smem:[#allocation3 + $0x34]]
        %v901 = vstv %s900
        %v902 = vmul.f32 %v901, %v899
        %v904 = vperm.slane %v902, 0
        %v905 = vperm.slane %v902, 1
        %v908 = vadd.f32 %v879, %v904
        %v909 = vadd.f32 %v880, %v905
        %s910 = sld [smem:[#allocation3 + $0x35]]
        %v911 = vstv %s910
        %v912 = vmul.f32 %v911, %v899
        %v914 = vperm.slane %v912, 0
        %v915 = vperm.slane %v912, 1
        %v918 = vadd.f32 %v885, %v914
        %v919 = vadd.f32 %v886, %v915
        %s920 = sld [smem:[#allocation3 + $0x36]]
        %v921 = vstv %s920
        %v922 = vmul.f32 %v921, %v899
        %v924 = vperm.slane %v922, 0
        %v925 = vperm.slane %v922, 1
        %v928 = vadd.f32 %v891, %v924
        %v929 = vadd.f32 %v892, %v925
        %s930 = sld [smem:[#allocation3 + $0x37]]
        %v931 = vstv %s930
        %v932 = vmul.f32 %v931, %v899
        %v934 = vperm.slane %v932, 0
        %v935 = vperm.slane %v932, 1
        %v938 = vadd.f32 %v897, %v934
        %v939 = vadd.f32 %v898, %v935
        %v940 = vld [vmem:[#allocation2 + $0x1] sm:$0x7]
        %v942 = vperm.slane %v940, 0
        %v943 = vperm.slane %v940, 1
        %v944 = vperm.slane %v940, 2
        %945 = vrot.lane.b32.xlu0 %v942, 127
        %v946 = vpop.permute.xlu0 %945
        %947 = vrot.lane.b32.xlu0 %v943, 127
        %v948 = vpop.permute.xlu0 %947
        %949 = vrot.lane.b32.xlu0 %v944, 127
        %v950 = vpop.permute.xlu0 %949
        %v951 = vsel %vm525, %v946, %v948
        %v952 = vsel %vm525, %v948, %v950
        %v955 = vsel %vm274, %v951, 0.0
        %v956 = vsel %vm275, %v952, 0.0
        %s957 = sld [smem:[#allocation3 + $0x38]]
        %v958 = vstv %s957
        %v959 = vmul.f32 %v958, %v955
        %v960 = vmul.f32 %v958, %v956
        %v961 = vadd.f32 %v908, %v959
        %v962 = vadd.f32 %v909, %v960
        %s963 = sld [smem:[#allocation3 + $0x39]]
        %v964 = vstv %s963
        %v965 = vmul.f32 %v964, %v955
        %v966 = vmul.f32 %v964, %v956
        %v967 = vadd.f32 %v918, %v965
        %v968 = vadd.f32 %v919, %v966
        %s969 = sld [smem:[#allocation3 + $0x3a]]
        %v970 = vstv %s969
        %v971 = vmul.f32 %v970, %v955
        %v972 = vmul.f32 %v970, %v956
        %v973 = vadd.f32 %v928, %v971
        %v974 = vadd.f32 %v929, %v972
        %s975 = sld [smem:[#allocation3 + $0x3b]]
        %v976 = vstv %s975
        %v977 = vmul.f32 %v976, %v955
        %v978 = vmul.f32 %v976, %v956
        %v979 = vadd.f32 %v938, %v977
        %v980 = vadd.f32 %v939, %v978
        %981 = vrot.lane.b32.xlu0 %v942, 113
        %v982 = vpop.permute.xlu0 %981
        %983 = vrot.lane.b32.xlu0 %v943, 113
        %v984 = vpop.permute.xlu0 %983
        %985 = vrot.lane.b32.xlu0 %v944, 113
        %v986 = vpop.permute.xlu0 %985
        %v987 = vsel %vm562, %v982, %v984
        %v988 = vsel %vm562, %v984, %v986
        %v991 = vsel %vm272, %v987, 0.0
        %v992 = vsel %vm273, %v988, 0.0
        %s993 = sld [smem:[#allocation3 + $0x3c]]
        %v994 = vstv %s993
        %v995 = vmul.f32 %v994, %v991
        %v996 = vmul.f32 %v994, %v992
        %v997 = vadd.f32 %v961, %v995
        %v998 = vadd.f32 %v962, %v996
        %s999 = sld [smem:[#allocation3 + $0x3d]]
        %v1000 = vstv %s999
        %v1001 = vmul.f32 %v1000, %v991
        %v1002 = vmul.f32 %v1000, %v992
        %v1003 = vadd.f32 %v967, %v1001
        %v1004 = vadd.f32 %v968, %v1002
        %s1005 = sld [smem:[#allocation3 + $0x3e]]
        %v1006 = vstv %s1005
        %v1007 = vmul.f32 %v1006, %v991
        %v1008 = vmul.f32 %v1006, %v992
        %v1009 = vadd.f32 %v973, %v1007
        %v1010 = vadd.f32 %v974, %v1008
        %s1011 = sld [smem:[#allocation3 + $0x3f]]
        %v1012 = vstv %s1011
        %v1013 = vmul.f32 %v1012, %v991
        %v1014 = vmul.f32 %v1012, %v992
        %v1015 = vadd.f32 %v979, %v1013
        %v1016 = vadd.f32 %v980, %v1014
        %s1017 = sld [smem:[#allocation3 + $0x40]]
        %v1018 = vstv %s1017
        %v1019 = vmul.f32 %v1018, %v940
        %v1021 = vperm.slane %v1019, 0
        %v1022 = vperm.slane %v1019, 1
        %v1023 = vperm.slane %v1019, 2
        %1024 = vrot.lane.b32.xlu0 %v1021, 112
        %v1025 = vpop.permute.xlu0 %1024
        %1026 = vrot.lane.b32.xlu0 %v1022, 112
        %v1027 = vpop.permute.xlu0 %1026
        %1028 = vrot.lane.b32.xlu0 %v1023, 112
        %v1029 = vpop.permute.xlu0 %1028
        %v1030 = vsel %vm606, %v1025, %v1027
        %v1031 = vsel %vm606, %v1027, %v1029
        %v1034 = vadd.f32 %v997, %v1030
        %v1035 = vadd.f32 %v998, %v1031
        %s1036 = sld [smem:[#allocation3 + $0x41]]
        %v1037 = vstv %s1036
        %v1038 = vmul.f32 %v1037, %v940
        %v1040 = vperm.slane %v1038, 0
        %v1041 = vperm.slane %v1038, 1
        %v1042 = vperm.slane %v1038, 2
        %1043 = vrot.lane.b32.xlu0 %v1040, 112
        %v1044 = vpop.permute.xlu0 %1043
        %1045 = vrot.lane.b32.xlu0 %v1041, 112
        %v1046 = vpop.permute.xlu0 %1045
        %1047 = vrot.lane.b32.xlu0 %v1042, 112
        %v1048 = vpop.permute.xlu0 %1047
        %v1049 = vsel %vm606, %v1044, %v1046
        %v1050 = vsel %vm606, %v1046, %v1048
        %v1053 = vadd.f32 %v1003, %v1049
        %v1054 = vadd.f32 %v1004, %v1050
        %s1055 = sld [smem:[#allocation3 + $0x42]]
        %v1056 = vstv %s1055
        %v1057 = vmul.f32 %v1056, %v940
        %v1059 = vperm.slane %v1057, 0
        %v1060 = vperm.slane %v1057, 1
        %v1061 = vperm.slane %v1057, 2
        %1062 = vrot.lane.b32.xlu0 %v1059, 112
        %v1063 = vpop.permute.xlu0 %1062
        %1064 = vrot.lane.b32.xlu0 %v1060, 112
        %v1065 = vpop.permute.xlu0 %1064
        %1066 = vrot.lane.b32.xlu0 %v1061, 112
        %v1067 = vpop.permute.xlu0 %1066
        %v1068 = vsel %vm606, %v1063, %v1065
        %v1069 = vsel %vm606, %v1065, %v1067
        %v1072 = vadd.f32 %v1009, %v1068
        %v1073 = vadd.f32 %v1010, %v1069
        %s1074 = sld [smem:[#allocation3 + $0x43]]
        %v1075 = vstv %s1074
        %v1076 = vmul.f32 %v1075, %v940
        %v1078 = vperm.slane %v1076, 0
        %v1079 = vperm.slane %v1076, 1
        %v1080 = vperm.slane %v1076, 2
        %1081 = vrot.lane.b32.xlu0 %v1078, 112
        %v1082 = vpop.permute.xlu0 %1081
        %1083 = vrot.lane.b32.xlu0 %v1079, 112
        %v1084 = vpop.permute.xlu0 %1083
        %1085 = vrot.lane.b32.xlu0 %v1080, 112
        %v1086 = vpop.permute.xlu0 %1085
        %v1087 = vsel %vm606, %v1082, %v1084
        %v1088 = vsel %vm606, %v1084, %v1086
        %v1091 = vadd.f32 %v1015, %v1087
        %v1092 = vadd.f32 %v1016, %v1088
        %1093 = vrot.lane.b32.xlu0 %v942, 111
        %v1094 = vpop.permute.xlu0 %1093
        %1095 = vrot.lane.b32.xlu0 %v943, 111
        %v1096 = vpop.permute.xlu0 %1095
        %1097 = vrot.lane.b32.xlu0 %v944, 111
        %v1098 = vpop.permute.xlu0 %1097
        %v1099 = vsel %vm676, %v1094, %v1096
        %v1100 = vsel %vm676, %v1096, %v1098
        %v1103 = vsel %vm274, %v1099, 0.0
        %v1104 = vsel %vm275, %v1100, 0.0
        %s1105 = sld [smem:[#allocation3 + $0x44]]
        %v1106 = vstv %s1105
        %v1107 = vmul.f32 %v1106, %v1103
        %v1108 = vmul.f32 %v1106, %v1104
        %v1109 = vadd.f32 %v1034, %v1107
        %v1110 = vadd.f32 %v1035, %v1108
        %s1111 = sld [smem:[#allocation3 + $0x45]]
        %v1112 = vstv %s1111
        %v1113 = vmul.f32 %v1112, %v1103
        %v1114 = vmul.f32 %v1112, %v1104
        %v1115 = vadd.f32 %v1053, %v1113
        %v1116 = vadd.f32 %v1054, %v1114
        %s1117 = sld [smem:[#allocation3 + $0x46]]
        %v1118 = vstv %s1117
        %v1119 = vmul.f32 %v1118, %v1103
        %v1120 = vmul.f32 %v1118, %v1104
        %v1121 = vadd.f32 %v1072, %v1119
        %v1122 = vadd.f32 %v1073, %v1120
        %s1123 = sld [smem:[#allocation3 + $0x47]]
        %v1124 = vstv %s1123
        %v1125 = vmul.f32 %v1124, %v1103
        %v1126 = vmul.f32 %v1124, %v1104
        %v1127 = vadd.f32 %v1091, %v1125
        %v1128 = vadd.f32 %v1092, %v1126
        %s1129 = scalar_lea.vmem %s229, 2
        %v1130 = vld [vmem:[%s1129] ss:$4 sm:$0x3]
        %1131 = vst.msk [vmem:[#allocation2 + $0x1] sm:$0x3] %vm278, %v1130
        %v1132 = vld [vmem:[#allocation2] sm:$0x7]
        %v1134 = vperm.slane %v1132, 0
        %v1135 = vperm.slane %v1132, 1
        %v1136 = vperm.slane %v1132, 2
        %1137 = vrot.lane.b32.xlu0 %v1134, 17
        %v1138 = vpop.permute.xlu0 %1137
        %1139 = vrot.lane.b32.xlu0 %v1135, 17
        %v1140 = vpop.permute.xlu0 %1139
        %1141 = vrot.lane.b32.xlu0 %v1136, 17
        %v1142 = vpop.permute.xlu0 %1141
        %v1143 = vsel %vm291, %v1138, %v1140
        %v1144 = vsel %vm291, %v1140, %v1142
        %v1147 = vsel %vm272, %v1143, 0.0
        %v1148 = vsel %vm273, %v1144, 0.0
        %s1149 = sld [smem:[#allocation3 + $0x48]]
        %v1150 = vstv %s1149
        %v1151 = vmul.f32 %v1150, %v1147
        %v1152 = vmul.f32 %v1150, %v1148
        %v1153 = vadd.f32 %v1109, %v1151
        %v1154 = vadd.f32 %v1110, %v1152
        %s1155 = sld [smem:[#allocation3 + $0x49]]
        %v1156 = vstv %s1155
        %v1157 = vmul.f32 %v1156, %v1147
        %v1158 = vmul.f32 %v1156, %v1148
        %v1159 = vadd.f32 %v1115, %v1157
        %v1160 = vadd.f32 %v1116, %v1158
        %s1161 = sld [smem:[#allocation3 + $0x4a]]
        %v1162 = vstv %s1161
        %v1163 = vmul.f32 %v1162, %v1147
        %v1164 = vmul.f32 %v1162, %v1148
        %v1165 = vadd.f32 %v1121, %v1163
        %v1166 = vadd.f32 %v1122, %v1164
        %s1167 = sld [smem:[#allocation3 + $0x4b]]
        %v1168 = vstv %s1167
        %v1169 = vmul.f32 %v1168, %v1147
        %v1170 = vmul.f32 %v1168, %v1148
        %v1171 = vadd.f32 %v1127, %v1169
        %v1172 = vadd.f32 %v1128, %v1170
        %s1173 = sld [smem:[#allocation3 + $0x4c]]
        %v1174 = vstv %s1173
        %v1175 = vmul.f32 %v1174, %v1132
        %v1177 = vperm.slane %v1175, 0
        %v1178 = vperm.slane %v1175, 1
        %v1179 = vperm.slane %v1175, 2
        %1180 = vrot.lane.b32.xlu0 %v1177, 16
        %v1181 = vpop.permute.xlu0 %1180
        %1182 = vrot.lane.b32.xlu0 %v1178, 16
        %v1183 = vpop.permute.xlu0 %1182
        %1184 = vrot.lane.b32.xlu0 %v1179, 16
        %v1185 = vpop.permute.xlu0 %1184
        %v1186 = vsel %vm335, %v1181, %v1183
        %v1187 = vsel %vm335, %v1183, %v1185
        %v1190 = vadd.f32 %v1153, %v1186
        %v1191 = vadd.f32 %v1154, %v1187
        %s1192 = sld [smem:[#allocation3 + $0x4d]]
        %v1193 = vstv %s1192
        %v1194 = vmul.f32 %v1193, %v1132
        %v1196 = vperm.slane %v1194, 0
        %v1197 = vperm.slane %v1194, 1
        %v1198 = vperm.slane %v1194, 2
        %1199 = vrot.lane.b32.xlu0 %v1196, 16
        %v1200 = vpop.permute.xlu0 %1199
        %1201 = vrot.lane.b32.xlu0 %v1197, 16
        %v1202 = vpop.permute.xlu0 %1201
        %1203 = vrot.lane.b32.xlu0 %v1198, 16
        %v1204 = vpop.permute.xlu0 %1203
        %v1205 = vsel %vm335, %v1200, %v1202
        %v1206 = vsel %vm335, %v1202, %v1204
        %v1209 = vadd.f32 %v1159, %v1205
        %v1210 = vadd.f32 %v1160, %v1206
        %s1211 = sld [smem:[#allocation3 + $0x4e]]
        %v1212 = vstv %s1211
        %v1213 = vmul.f32 %v1212, %v1132
        %v1215 = vperm.slane %v1213, 0
        %v1216 = vperm.slane %v1213, 1
        %v1217 = vperm.slane %v1213, 2
        %1218 = vrot.lane.b32.xlu0 %v1215, 16
        %v1219 = vpop.permute.xlu0 %1218
        %1220 = vrot.lane.b32.xlu0 %v1216, 16
        %v1221 = vpop.permute.xlu0 %1220
        %1222 = vrot.lane.b32.xlu0 %v1217, 16
        %v1223 = vpop.permute.xlu0 %1222
        %v1224 = vsel %vm335, %v1219, %v1221
        %v1225 = vsel %vm335, %v1221, %v1223
        %v1228 = vadd.f32 %v1165, %v1224
        %v1229 = vadd.f32 %v1166, %v1225
        %s1230 = sld [smem:[#allocation3 + $0x4f]]
        %v1231 = vstv %s1230
        %v1232 = vmul.f32 %v1231, %v1132
        %v1234 = vperm.slane %v1232, 0
        %v1235 = vperm.slane %v1232, 1
        %v1236 = vperm.slane %v1232, 2
        %1237 = vrot.lane.b32.xlu0 %v1234, 16
        %v1238 = vpop.permute.xlu0 %1237
        %1239 = vrot.lane.b32.xlu0 %v1235, 16
        %v1240 = vpop.permute.xlu0 %1239
        %1241 = vrot.lane.b32.xlu0 %v1236, 16
        %v1242 = vpop.permute.xlu0 %1241
        %v1243 = vsel %vm335, %v1238, %v1240
        %v1244 = vsel %vm335, %v1240, %v1242
        %v1247 = vadd.f32 %v1171, %v1243
        %v1248 = vadd.f32 %v1172, %v1244
        %1249 = vrot.lane.b32.xlu0 %v1134, 15
        %v1250 = vpop.permute.xlu0 %1249
        %1251 = vrot.lane.b32.xlu0 %v1135, 15
        %v1252 = vpop.permute.xlu0 %1251
        %1253 = vrot.lane.b32.xlu0 %v1136, 15
        %v1254 = vpop.permute.xlu0 %1253
        %v1255 = vsel %vm405, %v1250, %v1252
        %v1256 = vsel %vm405, %v1252, %v1254
        %v1259 = vsel %vm274, %v1255, 0.0
        %v1260 = vsel %vm275, %v1256, 0.0
        %s1261 = sld [smem:[#allocation3 + $0x50]]
        %v1262 = vstv %s1261
        %v1263 = vmul.f32 %v1262, %v1259
        %v1264 = vmul.f32 %v1262, %v1260
        %v1265 = vadd.f32 %v1190, %v1263
        %v1266 = vadd.f32 %v1191, %v1264
        %s1267 = sld [smem:[#allocation3 + $0x51]]
        %v1268 = vstv %s1267
        %v1269 = vmul.f32 %v1268, %v1259
        %v1270 = vmul.f32 %v1268, %v1260
        %v1271 = vadd.f32 %v1209, %v1269
        %v1272 = vadd.f32 %v1210, %v1270
        %s1273 = sld [smem:[#allocation3 + $0x52]]
        %v1274 = vstv %s1273
        %v1275 = vmul.f32 %v1274, %v1259
        %v1276 = vmul.f32 %v1274, %v1260
        %v1277 = vadd.f32 %v1228, %v1275
        %v1278 = vadd.f32 %v1229, %v1276
        %s1279 = sld [smem:[#allocation3 + $0x53]]
        %v1280 = vstv %s1279
        %v1281 = vmul.f32 %v1280, %v1259
        %v1282 = vmul.f32 %v1280, %v1260
        %v1283 = vadd.f32 %v1247, %v1281
        %v1284 = vadd.f32 %v1248, %v1282
        %1285 = vrot.lane.b32.xlu0 %v1134, 1
        %v1286 = vpop.permute.xlu0 %1285
        %1287 = vrot.lane.b32.xlu0 %v1135, 1
        %v1288 = vpop.permute.xlu0 %1287
        %1289 = vrot.lane.b32.xlu0 %v1136, 1
        %v1290 = vpop.permute.xlu0 %1289
        %v1291 = vsel %vm442, %v1286, %v1288
        %v1292 = vsel %vm442, %v1288, %v1290
        %v1295 = vsel %vm272, %v1291, 0.0
        %v1296 = vsel %vm273, %v1292, 0.0
        %s1297 = sld [smem:[#allocation3 + $0x54]]
        %v1298 = vstv %s1297
        %v1299 = vmul.f32 %v1298, %v1295
        %v1300 = vmul.f32 %v1298, %v1296
        %v1301 = vadd.f32 %v1265, %v1299
        %v1302 = vadd.f32 %v1266, %v1300
        %s1303 = sld [smem:[#allocation3 + $0x55]]
        %v1304 = vstv %s1303
        %v1305 = vmul.f32 %v1304, %v1295
        %v1306 = vmul.f32 %v1304, %v1296
        %v1307 = vadd.f32 %v1271, %v1305
        %v1308 = vadd.f32 %v1272, %v1306
        %s1309 = sld [smem:[#allocation3 + $0x56]]
        %v1310 = vstv %s1309
        %v1311 = vmul.f32 %v1310, %v1295
        %v1312 = vmul.f32 %v1310, %v1296
        %v1313 = vadd.f32 %v1277, %v1311
        %v1314 = vadd.f32 %v1278, %v1312
        %s1315 = sld [smem:[#allocation3 + $0x57]]
        %v1316 = vstv %s1315
        %v1317 = vmul.f32 %v1316, %v1295
        %v1318 = vmul.f32 %v1316, %v1296
        %v1319 = vadd.f32 %v1283, %v1317
        %v1320 = vadd.f32 %v1284, %v1318
        %v1321 = vld [vmem:[#allocation2 + $0x1] sm:$0x3]
        %s1322 = sld [smem:[#allocation3 + $0x58]]
        %v1323 = vstv %s1322
        %v1324 = vmul.f32 %v1323, %v1321
        %v1326 = vperm.slane %v1324, 0
        %v1327 = vperm.slane %v1324, 1
        %v1330 = vadd.f32 %v1301, %v1326
        %v1331 = vadd.f32 %v1302, %v1327
        %s1332 = sld [smem:[#allocation3 + $0x59]]
        %v1333 = vstv %s1332
        %v1334 = vmul.f32 %v1333, %v1321
        %v1336 = vperm.slane %v1334, 0
        %v1337 = vperm.slane %v1334, 1
        %v1340 = vadd.f32 %v1307, %v1336
        %v1341 = vadd.f32 %v1308, %v1337
        %s1342 = sld [smem:[#allocation3 + $0x5a]]
        %v1343 = vstv %s1342
        %v1344 = vmul.f32 %v1343, %v1321
        %v1346 = vperm.slane %v1344, 0
        %v1347 = vperm.slane %v1344, 1
        %v1350 = vadd.f32 %v1313, %v1346
        %v1351 = vadd.f32 %v1314, %v1347
        %s1352 = sld [smem:[#allocation3 + $0x5b]]
        %v1353 = vstv %s1352
        %v1354 = vmul.f32 %v1353, %v1321
        %v1356 = vperm.slane %v1354, 0
        %v1357 = vperm.slane %v1354, 1
        %v1360 = vadd.f32 %v1319, %v1356
        %v1361 = vadd.f32 %v1320, %v1357
        %v1362 = vld [vmem:[#allocation2 + $0x1] sm:$0x7]
        %v1364 = vperm.slane %v1362, 0
        %v1365 = vperm.slane %v1362, 1
        %v1366 = vperm.slane %v1362, 2
        %1367 = vrot.lane.b32.xlu0 %v1364, 127
        %v1368 = vpop.permute.xlu0 %1367
        %1369 = vrot.lane.b32.xlu0 %v1365, 127
        %v1370 = vpop.permute.xlu0 %1369
        %1371 = vrot.lane.b32.xlu0 %v1366, 127
        %v1372 = vpop.permute.xlu0 %1371
        %v1373 = vsel %vm525, %v1368, %v1370
        %v1374 = vsel %vm525, %v1370, %v1372
        %v1377 = vsel %vm274, %v1373, 0.0
        %v1378 = vsel %vm275, %v1374, 0.0
        %s1379 = sld [smem:[#allocation3 + $0x5c]]
        %v1380 = vstv %s1379
        %v1381 = vmul.f32 %v1380, %v1377
        %v1382 = vmul.f32 %v1380, %v1378
        %v1383 = vadd.f32 %v1330, %v1381
        %v1384 = vadd.f32 %v1331, %v1382
        %s1385 = sld [smem:[#allocation3 + $0x5d]]
        %v1386 = vstv %s1385
        %v1387 = vmul.f32 %v1386, %v1377
        %v1388 = vmul.f32 %v1386, %v1378
        %v1389 = vadd.f32 %v1340, %v1387
        %v1390 = vadd.f32 %v1341, %v1388
        %s1391 = sld [smem:[#allocation3 + $0x5e]]
        %v1392 = vstv %s1391
        %v1393 = vmul.f32 %v1392, %v1377
        %v1394 = vmul.f32 %v1392, %v1378
        %v1395 = vadd.f32 %v1350, %v1393
        %v1396 = vadd.f32 %v1351, %v1394
        %s1397 = sld [smem:[#allocation3 + $0x5f]]
        %v1398 = vstv %s1397
        %v1399 = vmul.f32 %v1398, %v1377
        %v1400 = vmul.f32 %v1398, %v1378
        %v1401 = vadd.f32 %v1360, %v1399
        %v1402 = vadd.f32 %v1361, %v1400
        %1403 = vrot.lane.b32.xlu0 %v1364, 113
        %v1404 = vpop.permute.xlu0 %1403
        %1405 = vrot.lane.b32.xlu0 %v1365, 113
        %v1406 = vpop.permute.xlu0 %1405
        %1407 = vrot.lane.b32.xlu0 %v1366, 113
        %v1408 = vpop.permute.xlu0 %1407
        %v1409 = vsel %vm562, %v1404, %v1406
        %v1410 = vsel %vm562, %v1406, %v1408
        %v1413 = vsel %vm272, %v1409, 0.0
        %v1414 = vsel %vm273, %v1410, 0.0
        %s1415 = sld [smem:[#allocation3 + $0x60]]
        %v1416 = vstv %s1415
        %v1417 = vmul.f32 %v1416, %v1413
        %v1418 = vmul.f32 %v1416, %v1414
        %v1419 = vadd.f32 %v1383, %v1417
        %v1420 = vadd.f32 %v1384, %v1418
        %s1421 = sld [smem:[#allocation3 + $0x61]]
        %v1422 = vstv %s1421
        %v1423 = vmul.f32 %v1422, %v1413
        %v1424 = vmul.f32 %v1422, %v1414
        %v1425 = vadd.f32 %v1389, %v1423
        %v1426 = vadd.f32 %v1390, %v1424
        %s1427 = sld [smem:[#allocation3 + $0x62]]
        %v1428 = vstv %s1427
        %v1429 = vmul.f32 %v1428, %v1413
        %v1430 = vmul.f32 %v1428, %v1414
        %v1431 = vadd.f32 %v1395, %v1429
        %v1432 = vadd.f32 %v1396, %v1430
        %s1433 = sld [smem:[#allocation3 + $0x63]]
        %v1434 = vstv %s1433
        %v1435 = vmul.f32 %v1434, %v1413
        %v1436 = vmul.f32 %v1434, %v1414
        %v1437 = vadd.f32 %v1401, %v1435
        %v1438 = vadd.f32 %v1402, %v1436
        %s1439 = sld [smem:[#allocation3 + $0x64]]
        %v1440 = vstv %s1439
        %v1441 = vmul.f32 %v1440, %v1362
        %v1443 = vperm.slane %v1441, 0
        %v1444 = vperm.slane %v1441, 1
        %v1445 = vperm.slane %v1441, 2
        %1446 = vrot.lane.b32.xlu0 %v1443, 112
        %v1447 = vpop.permute.xlu0 %1446
        %1448 = vrot.lane.b32.xlu0 %v1444, 112
        %v1449 = vpop.permute.xlu0 %1448
        %1450 = vrot.lane.b32.xlu0 %v1445, 112
        %v1451 = vpop.permute.xlu0 %1450
        %v1452 = vsel %vm606, %v1447, %v1449
        %v1453 = vsel %vm606, %v1449, %v1451
        %v1456 = vadd.f32 %v1419, %v1452
        %v1457 = vadd.f32 %v1420, %v1453
        %s1458 = sld [smem:[#allocation3 + $0x65]]
        %v1459 = vstv %s1458
        %v1460 = vmul.f32 %v1459, %v1362
        %v1462 = vperm.slane %v1460, 0
        %v1463 = vperm.slane %v1460, 1
        %v1464 = vperm.slane %v1460, 2
        %1465 = vrot.lane.b32.xlu0 %v1462, 112
        %v1466 = vpop.permute.xlu0 %1465
        %1467 = vrot.lane.b32.xlu0 %v1463, 112
        %v1468 = vpop.permute.xlu0 %1467
        %1469 = vrot.lane.b32.xlu0 %v1464, 112
        %v1470 = vpop.permute.xlu0 %1469
        %v1471 = vsel %vm606, %v1466, %v1468
        %v1472 = vsel %vm606, %v1468, %v1470
        %v1475 = vadd.f32 %v1425, %v1471
        %v1476 = vadd.f32 %v1426, %v1472
        %s1477 = sld [smem:[#allocation3 + $0x66]]
        %v1478 = vstv %s1477
        %v1479 = vmul.f32 %v1478, %v1362
        %v1481 = vperm.slane %v1479, 0
        %v1482 = vperm.slane %v1479, 1
        %v1483 = vperm.slane %v1479, 2
        %1484 = vrot.lane.b32.xlu0 %v1481, 112
        %v1485 = vpop.permute.xlu0 %1484
        %1486 = vrot.lane.b32.xlu0 %v1482, 112
        %v1487 = vpop.permute.xlu0 %1486
        %1488 = vrot.lane.b32.xlu0 %v1483, 112
        %v1489 = vpop.permute.xlu0 %1488
        %v1490 = vsel %vm606, %v1485, %v1487
        %v1491 = vsel %vm606, %v1487, %v1489
        %v1494 = vadd.f32 %v1431, %v1490
        %v1495 = vadd.f32 %v1432, %v1491
        %s1496 = sld [smem:[#allocation3 + $0x67]]
        %v1497 = vstv %s1496
        %v1498 = vmul.f32 %v1497, %v1362
        %v1500 = vperm.slane %v1498, 0
        %v1501 = vperm.slane %v1498, 1
        %v1502 = vperm.slane %v1498, 2
        %1503 = vrot.lane.b32.xlu0 %v1500, 112
        %v1504 = vpop.permute.xlu0 %1503
        %1505 = vrot.lane.b32.xlu0 %v1501, 112
        %v1506 = vpop.permute.xlu0 %1505
        %1507 = vrot.lane.b32.xlu0 %v1502, 112
        %v1508 = vpop.permute.xlu0 %1507
        %v1509 = vsel %vm606, %v1504, %v1506
        %v1510 = vsel %vm606, %v1506, %v1508
        %v1513 = vadd.f32 %v1437, %v1509
        %v1514 = vadd.f32 %v1438, %v1510
        %1515 = vrot.lane.b32.xlu0 %v1364, 111
        %v1516 = vpop.permute.xlu0 %1515
        %1517 = vrot.lane.b32.xlu0 %v1365, 111
        %v1518 = vpop.permute.xlu0 %1517
        %1519 = vrot.lane.b32.xlu0 %v1366, 111
        %v1520 = vpop.permute.xlu0 %1519
        %v1521 = vsel %vm676, %v1516, %v1518
        %v1522 = vsel %vm676, %v1518, %v1520
        %v1525 = vsel %vm274, %v1521, 0.0
        %v1526 = vsel %vm275, %v1522, 0.0
        %s1527 = sld [smem:[#allocation3 + $0x68]]
        %v1528 = vstv %s1527
        %v1529 = vmul.f32 %v1528, %v1525
        %v1530 = vmul.f32 %v1528, %v1526
        %v1531 = vadd.f32 %v1456, %v1529
        %v1532 = vadd.f32 %v1457, %v1530
        %s1533 = sld [smem:[#allocation3 + $0x69]]
        %v1534 = vstv %s1533
        %v1535 = vmul.f32 %v1534, %v1525
        %v1536 = vmul.f32 %v1534, %v1526
        %v1537 = vadd.f32 %v1475, %v1535
        %v1538 = vadd.f32 %v1476, %v1536
        %s1539 = sld [smem:[#allocation3 + $0x6a]]
        %v1540 = vstv %s1539
        %v1541 = vmul.f32 %v1540, %v1525
        %v1542 = vmul.f32 %v1540, %v1526
        %v1543 = vadd.f32 %v1494, %v1541
        %v1544 = vadd.f32 %v1495, %v1542
        %s1545 = sld [smem:[#allocation3 + $0x6b]]
        %v1546 = vstv %s1545
        %v1547 = vmul.f32 %v1546, %v1525
        %v1548 = vmul.f32 %v1546, %v1526
        %v1549 = vadd.f32 %v1513, %v1547
        %v1550 = vadd.f32 %v1514, %v1548
        %s1551 = scalar_lea.vmem %s229, 3
        %v1552 = vld [vmem:[%s1551] ss:$4 sm:$0x3]
        %1553 = vst.msk [vmem:[#allocation2 + $0x1] sm:$0x3] %vm278, %v1552
        %v1554 = vld [vmem:[#allocation2] sm:$0x7]
        %v1556 = vperm.slane %v1554, 0
        %v1557 = vperm.slane %v1554, 1
        %v1558 = vperm.slane %v1554, 2
        %1559 = vrot.lane.b32.xlu0 %v1556, 17
        %v1560 = vpop.permute.xlu0 %1559
        %1561 = vrot.lane.b32.xlu0 %v1557, 17
        %v1562 = vpop.permute.xlu0 %1561
        %1563 = vrot.lane.b32.xlu0 %v1558, 17
        %v1564 = vpop.permute.xlu0 %1563
        %v1565 = vsel %vm291, %v1560, %v1562
        %v1566 = vsel %vm291, %v1562, %v1564
        %v1569 = vsel %vm272, %v1565, 0.0
        %v1570 = vsel %vm273, %v1566, 0.0
        %s1571 = sld [smem:[#allocation3 + $0x6c]]
        %v1572 = vstv %s1571
        %v1573 = vmul.f32 %v1572, %v1569
        %v1574 = vmul.f32 %v1572, %v1570
        %v1575 = vadd.f32 %v1531, %v1573
        %v1576 = vadd.f32 %v1532, %v1574
        %s1577 = sld [smem:[#allocation3 + $0x6d]]
        %v1578 = vstv %s1577
        %v1579 = vmul.f32 %v1578, %v1569
        %v1580 = vmul.f32 %v1578, %v1570
        %v1581 = vadd.f32 %v1537, %v1579
        %v1582 = vadd.f32 %v1538, %v1580
        %s1583 = sld [smem:[#allocation3 + $0x6e]]
        %v1584 = vstv %s1583
        %v1585 = vmul.f32 %v1584, %v1569
        %v1586 = vmul.f32 %v1584, %v1570
        %v1587 = vadd.f32 %v1543, %v1585
        %v1588 = vadd.f32 %v1544, %v1586
        %s1589 = sld [smem:[#allocation3 + $0x6f]]
        %v1590 = vstv %s1589
        %v1591 = vmul.f32 %v1590, %v1569
        %v1592 = vmul.f32 %v1590, %v1570
        %v1593 = vadd.f32 %v1549, %v1591
        %v1594 = vadd.f32 %v1550, %v1592
        %s1595 = sld [smem:[#allocation3 + $0x70]]
        %v1596 = vstv %s1595
        %v1597 = vmul.f32 %v1596, %v1554
        %v1599 = vperm.slane %v1597, 0
        %v1600 = vperm.slane %v1597, 1
        %v1601 = vperm.slane %v1597, 2
        %1602 = vrot.lane.b32.xlu0 %v1599, 16
        %v1603 = vpop.permute.xlu0 %1602
        %1604 = vrot.lane.b32.xlu0 %v1600, 16
        %v1605 = vpop.permute.xlu0 %1604
        %1606 = vrot.lane.b32.xlu0 %v1601, 16
        %v1607 = vpop.permute.xlu0 %1606
        %v1608 = vsel %vm335, %v1603, %v1605
        %v1609 = vsel %vm335, %v1605, %v1607
        %v1612 = vadd.f32 %v1575, %v1608
        %v1613 = vadd.f32 %v1576, %v1609
        %s1614 = sld [smem:[#allocation3 + $0x71]]
        %v1615 = vstv %s1614
        %v1616 = vmul.f32 %v1615, %v1554
        %v1618 = vperm.slane %v1616, 0
        %v1619 = vperm.slane %v1616, 1
        %v1620 = vperm.slane %v1616, 2
        %1621 = vrot.lane.b32.xlu0 %v1618, 16
        %v1622 = vpop.permute.xlu0 %1621
        %1623 = vrot.lane.b32.xlu0 %v1619, 16
        %v1624 = vpop.permute.xlu0 %1623
        %1625 = vrot.lane.b32.xlu0 %v1620, 16
        %v1626 = vpop.permute.xlu0 %1625
        %v1627 = vsel %vm335, %v1622, %v1624
        %v1628 = vsel %vm335, %v1624, %v1626
        %v1631 = vadd.f32 %v1581, %v1627
        %v1632 = vadd.f32 %v1582, %v1628
        %s1633 = sld [smem:[#allocation3 + $0x72]]
        %v1634 = vstv %s1633
        %v1635 = vmul.f32 %v1634, %v1554
        %v1637 = vperm.slane %v1635, 0
        %v1638 = vperm.slane %v1635, 1
        %v1639 = vperm.slane %v1635, 2
        %1640 = vrot.lane.b32.xlu0 %v1637, 16
        %v1641 = vpop.permute.xlu0 %1640
        %1642 = vrot.lane.b32.xlu0 %v1638, 16
        %v1643 = vpop.permute.xlu0 %1642
        %1644 = vrot.lane.b32.xlu0 %v1639, 16
        %v1645 = vpop.permute.xlu0 %1644
        %v1646 = vsel %vm335, %v1641, %v1643
        %v1647 = vsel %vm335, %v1643, %v1645
        %v1650 = vadd.f32 %v1587, %v1646
        %v1651 = vadd.f32 %v1588, %v1647
        %s1652 = sld [smem:[#allocation3 + $0x73]]
        %v1653 = vstv %s1652
        %v1654 = vmul.f32 %v1653, %v1554
        %v1656 = vperm.slane %v1654, 0
        %v1657 = vperm.slane %v1654, 1
        %v1658 = vperm.slane %v1654, 2
        %1659 = vrot.lane.b32.xlu0 %v1656, 16
        %v1660 = vpop.permute.xlu0 %1659
        %1661 = vrot.lane.b32.xlu0 %v1657, 16
        %v1662 = vpop.permute.xlu0 %1661
        %1663 = vrot.lane.b32.xlu0 %v1658, 16
        %v1664 = vpop.permute.xlu0 %1663
        %v1665 = vsel %vm335, %v1660, %v1662
        %v1666 = vsel %vm335, %v1662, %v1664
        %v1669 = vadd.f32 %v1593, %v1665
        %v1670 = vadd.f32 %v1594, %v1666
        %1671 = vrot.lane.b32.xlu0 %v1556, 15
        %v1672 = vpop.permute.xlu0 %1671
        %1673 = vrot.lane.b32.xlu0 %v1557, 15
        %v1674 = vpop.permute.xlu0 %1673
        %1675 = vrot.lane.b32.xlu0 %v1558, 15
        %v1676 = vpop.permute.xlu0 %1675
        %v1677 = vsel %vm405, %v1672, %v1674
        %v1678 = vsel %vm405, %v1674, %v1676
        %v1681 = vsel %vm274, %v1677, 0.0
        %v1682 = vsel %vm275, %v1678, 0.0
        %s1683 = sld [smem:[#allocation3 + $0x74]]
        %v1684 = vstv %s1683
        %v1685 = vmul.f32 %v1684, %v1681
        %v1686 = vmul.f32 %v1684, %v1682
        %v1687 = vadd.f32 %v1612, %v1685
        %v1688 = vadd.f32 %v1613, %v1686
        %s1689 = sld [smem:[#allocation3 + $0x75]]
        %v1690 = vstv %s1689
        %v1691 = vmul.f32 %v1690, %v1681
        %v1692 = vmul.f32 %v1690, %v1682
        %v1693 = vadd.f32 %v1631, %v1691
        %v1694 = vadd.f32 %v1632, %v1692
        %s1695 = sld [smem:[#allocation3 + $0x76]]
        %v1696 = vstv %s1695
        %v1697 = vmul.f32 %v1696, %v1681
        %v1698 = vmul.f32 %v1696, %v1682
        %v1699 = vadd.f32 %v1650, %v1697
        %v1700 = vadd.f32 %v1651, %v1698
        %s1701 = sld [smem:[#allocation3 + $0x77]]
        %v1702 = vstv %s1701
        %v1703 = vmul.f32 %v1702, %v1681
        %v1704 = vmul.f32 %v1702, %v1682
        %v1705 = vadd.f32 %v1669, %v1703
        %v1706 = vadd.f32 %v1670, %v1704
        %1707 = vrot.lane.b32.xlu0 %v1556, 1
        %v1708 = vpop.permute.xlu0 %1707
        %1709 = vrot.lane.b32.xlu0 %v1557, 1
        %v1710 = vpop.permute.xlu0 %1709
        %1711 = vrot.lane.b32.xlu0 %v1558, 1
        %v1712 = vpop.permute.xlu0 %1711
        %v1713 = vsel %vm442, %v1708, %v1710
        %v1714 = vsel %vm442, %v1710, %v1712
        %v1717 = vsel %vm272, %v1713, 0.0
        %v1718 = vsel %vm273, %v1714, 0.0
        %s1719 = sld [smem:[#allocation3 + $0x78]]
        %v1720 = vstv %s1719
        %v1721 = vmul.f32 %v1720, %v1717
        %v1722 = vmul.f32 %v1720, %v1718
        %v1723 = vadd.f32 %v1687, %v1721
        %v1724 = vadd.f32 %v1688, %v1722
        %s1725 = sld [smem:[#allocation3 + $0x79]]
        %v1726 = vstv %s1725
        %v1727 = vmul.f32 %v1726, %v1717
        %v1728 = vmul.f32 %v1726, %v1718
        %v1729 = vadd.f32 %v1693, %v1727
        %v1730 = vadd.f32 %v1694, %v1728
        %s1731 = sld [smem:[#allocation3 + $0x7a]]
        %v1732 = vstv %s1731
        %v1733 = vmul.f32 %v1732, %v1717
        %v1734 = vmul.f32 %v1732, %v1718
        %v1735 = vadd.f32 %v1699, %v1733
        %v1736 = vadd.f32 %v1700, %v1734
        %s1737 = sld [smem:[#allocation3 + $0x7b]]
        %v1738 = vstv %s1737
        %v1739 = vmul.f32 %v1738, %v1717
        %v1740 = vmul.f32 %v1738, %v1718
        %v1741 = vadd.f32 %v1705, %v1739
        %v1742 = vadd.f32 %v1706, %v1740
        %v1743 = vld [vmem:[#allocation2 + $0x1] sm:$0x3]
        %s1744 = sld [smem:[#allocation3 + $0x7c]]
        %v1745 = vstv %s1744
        %v1746 = vmul.f32 %v1745, %v1743
        %v1748 = vperm.slane %v1746, 0
        %v1749 = vperm.slane %v1746, 1
        %v1752 = vadd.f32 %v1723, %v1748
        %v1753 = vadd.f32 %v1724, %v1749
        %s1754 = sld [smem:[#allocation3 + $0x7d]]
        %v1755 = vstv %s1754
        %v1756 = vmul.f32 %v1755, %v1743
        %v1758 = vperm.slane %v1756, 0
        %v1759 = vperm.slane %v1756, 1
        %v1762 = vadd.f32 %v1729, %v1758
        %v1763 = vadd.f32 %v1730, %v1759
        %s1764 = sld [smem:[#allocation3 + $0x7e]]
        %v1765 = vstv %s1764
        %v1766 = vmul.f32 %v1765, %v1743
        %v1768 = vperm.slane %v1766, 0
        %v1769 = vperm.slane %v1766, 1
        %v1772 = vadd.f32 %v1735, %v1768
        %v1773 = vadd.f32 %v1736, %v1769
        %s1774 = sld [smem:[#allocation3 + $0x7f]]
        %v1775 = vstv %s1774
        %v1776 = vmul.f32 %v1775, %v1743
        %v1778 = vperm.slane %v1776, 0
        %v1779 = vperm.slane %v1776, 1
        %v1782 = vadd.f32 %v1741, %v1778
        %v1783 = vadd.f32 %v1742, %v1779
        %v1784 = vld [vmem:[#allocation2 + $0x1] sm:$0x7]
        %v1786 = vperm.slane %v1784, 0
        %v1787 = vperm.slane %v1784, 1
        %v1788 = vperm.slane %v1784, 2
        %1789 = vrot.lane.b32.xlu0 %v1786, 127
        %v1790 = vpop.permute.xlu0 %1789
        %1791 = vrot.lane.b32.xlu0 %v1787, 127
        %v1792 = vpop.permute.xlu0 %1791
        %1793 = vrot.lane.b32.xlu0 %v1788, 127
        %v1794 = vpop.permute.xlu0 %1793
        %v1795 = vsel %vm525, %v1790, %v1792
        %v1796 = vsel %vm525, %v1792, %v1794
        %v1799 = vsel %vm274, %v1795, 0.0
        %v1800 = vsel %vm275, %v1796, 0.0
        %s1801 = sld [smem:[#allocation3 + $0x80]]
        %v1802 = vstv %s1801
        %v1803 = vmul.f32 %v1802, %v1799
        %v1804 = vmul.f32 %v1802, %v1800
        %v1805 = vadd.f32 %v1752, %v1803
        %v1806 = vadd.f32 %v1753, %v1804
        %s1807 = sld [smem:[#allocation3 + $0x81]]
        %v1808 = vstv %s1807
        %v1809 = vmul.f32 %v1808, %v1799
        %v1810 = vmul.f32 %v1808, %v1800
        %v1811 = vadd.f32 %v1762, %v1809
        %v1812 = vadd.f32 %v1763, %v1810
        %s1813 = sld [smem:[#allocation3 + $0x82]]
        %v1814 = vstv %s1813
        %v1815 = vmul.f32 %v1814, %v1799
        %v1816 = vmul.f32 %v1814, %v1800
        %v1817 = vadd.f32 %v1772, %v1815
        %v1818 = vadd.f32 %v1773, %v1816
        %s1819 = sld [smem:[#allocation3 + $0x83]]
        %v1820 = vstv %s1819
        %v1821 = vmul.f32 %v1820, %v1799
        %v1822 = vmul.f32 %v1820, %v1800
        %v1823 = vadd.f32 %v1782, %v1821
        %v1824 = vadd.f32 %v1783, %v1822
        %1825 = vrot.lane.b32.xlu0 %v1786, 113
        %v1826 = vpop.permute.xlu0 %1825
        %1827 = vrot.lane.b32.xlu0 %v1787, 113
        %v1828 = vpop.permute.xlu0 %1827
        %1829 = vrot.lane.b32.xlu0 %v1788, 113
        %v1830 = vpop.permute.xlu0 %1829
        %v1831 = vsel %vm562, %v1826, %v1828
        %v1832 = vsel %vm562, %v1828, %v1830
        %v1835 = vsel %vm272, %v1831, 0.0
        %v1836 = vsel %vm273, %v1832, 0.0
        %s1837 = sld [smem:[#allocation3 + $0x84]]
        %v1838 = vstv %s1837
        %v1839 = vmul.f32 %v1838, %v1835
        %v1840 = vmul.f32 %v1838, %v1836
        %v1841 = vadd.f32 %v1805, %v1839
        %v1842 = vadd.f32 %v1806, %v1840
        %s1843 = sld [smem:[#allocation3 + $0x85]]
        %v1844 = vstv %s1843
        %v1845 = vmul.f32 %v1844, %v1835
        %v1846 = vmul.f32 %v1844, %v1836
        %v1847 = vadd.f32 %v1811, %v1845
        %v1848 = vadd.f32 %v1812, %v1846
        %s1849 = sld [smem:[#allocation3 + $0x86]]
        %v1850 = vstv %s1849
        %v1851 = vmul.f32 %v1850, %v1835
        %v1852 = vmul.f32 %v1850, %v1836
        %v1853 = vadd.f32 %v1817, %v1851
        %v1854 = vadd.f32 %v1818, %v1852
        %s1855 = sld [smem:[#allocation3 + $0x87]]
        %v1856 = vstv %s1855
        %v1857 = vmul.f32 %v1856, %v1835
        %v1858 = vmul.f32 %v1856, %v1836
        %v1859 = vadd.f32 %v1823, %v1857
        %v1860 = vadd.f32 %v1824, %v1858
        %s1861 = sld [smem:[#allocation3 + $0x88]]
        %v1862 = vstv %s1861
        %v1863 = vmul.f32 %v1862, %v1784
        %v1865 = vperm.slane %v1863, 0
        %v1866 = vperm.slane %v1863, 1
        %v1867 = vperm.slane %v1863, 2
        %1868 = vrot.lane.b32.xlu0 %v1865, 112
        %v1869 = vpop.permute.xlu0 %1868
        %1870 = vrot.lane.b32.xlu0 %v1866, 112
        %v1871 = vpop.permute.xlu0 %1870
        %1872 = vrot.lane.b32.xlu0 %v1867, 112
        %v1873 = vpop.permute.xlu0 %1872
        %v1874 = vsel %vm606, %v1869, %v1871
        %v1875 = vsel %vm606, %v1871, %v1873
        %v1878 = vadd.f32 %v1841, %v1874
        %v1879 = vadd.f32 %v1842, %v1875
        %s1880 = sld [smem:[#allocation3 + $0x89]]
        %v1881 = vstv %s1880
        %v1882 = vmul.f32 %v1881, %v1784
        %v1884 = vperm.slane %v1882, 0
        %v1885 = vperm.slane %v1882, 1
        %v1886 = vperm.slane %v1882, 2
        %1887 = vrot.lane.b32.xlu0 %v1884, 112
        %v1888 = vpop.permute.xlu0 %1887
        %1889 = vrot.lane.b32.xlu0 %v1885, 112
        %v1890 = vpop.permute.xlu0 %1889
        %1891 = vrot.lane.b32.xlu0 %v1886, 112
        %v1892 = vpop.permute.xlu0 %1891
        %v1893 = vsel %vm606, %v1888, %v1890
        %v1894 = vsel %vm606, %v1890, %v1892
        %v1897 = vadd.f32 %v1847, %v1893
        %v1898 = vadd.f32 %v1848, %v1894
        %s1899 = sld [smem:[#allocation3 + $0x8a]]
        %v1900 = vstv %s1899
        %v1901 = vmul.f32 %v1900, %v1784
        %v1903 = vperm.slane %v1901, 0
        %v1904 = vperm.slane %v1901, 1
        %v1905 = vperm.slane %v1901, 2
        %1906 = vrot.lane.b32.xlu0 %v1903, 112
        %v1907 = vpop.permute.xlu0 %1906
        %1908 = vrot.lane.b32.xlu0 %v1904, 112
        %v1909 = vpop.permute.xlu0 %1908
        %1910 = vrot.lane.b32.xlu0 %v1905, 112
        %v1911 = vpop.permute.xlu0 %1910
        %v1912 = vsel %vm606, %v1907, %v1909
        %v1913 = vsel %vm606, %v1909, %v1911
        %v1916 = vadd.f32 %v1853, %v1912
        %v1917 = vadd.f32 %v1854, %v1913
        %s1918 = sld [smem:[#allocation3 + $0x8b]]
        %v1919 = vstv %s1918
        %v1920 = vmul.f32 %v1919, %v1784
        %v1922 = vperm.slane %v1920, 0
        %v1923 = vperm.slane %v1920, 1
        %v1924 = vperm.slane %v1920, 2
        %1925 = vrot.lane.b32.xlu0 %v1922, 112
        %v1926 = vpop.permute.xlu0 %1925
        %1927 = vrot.lane.b32.xlu0 %v1923, 112
        %v1928 = vpop.permute.xlu0 %1927
        %1929 = vrot.lane.b32.xlu0 %v1924, 112
        %v1930 = vpop.permute.xlu0 %1929
        %v1931 = vsel %vm606, %v1926, %v1928
        %v1932 = vsel %vm606, %v1928, %v1930
        %v1935 = vadd.f32 %v1859, %v1931
        %v1936 = vadd.f32 %v1860, %v1932
        %1937 = vrot.lane.b32.xlu0 %v1786, 111
        %v1938 = vpop.permute.xlu0 %1937
        %1939 = vrot.lane.b32.xlu0 %v1787, 111
        %v1940 = vpop.permute.xlu0 %1939
        %1941 = vrot.lane.b32.xlu0 %v1788, 111
        %v1942 = vpop.permute.xlu0 %1941
        %v1943 = vsel %vm676, %v1938, %v1940
        %v1944 = vsel %vm676, %v1940, %v1942
        %v1947 = vsel %vm274, %v1943, 0.0
        %v1948 = vsel %vm275, %v1944, 0.0
        %s1949 = sld [smem:[#allocation3 + $0x8c]]
        %v1950 = vstv %s1949
        %v1951 = vmul.f32 %v1950, %v1947
        %v1952 = vmul.f32 %v1950, %v1948
        %v1953 = vadd.f32 %v1878, %v1951
        %v1954 = vadd.f32 %v1879, %v1952
        %s1955 = sld [smem:[#allocation3 + $0x8d]]
        %v1956 = vstv %s1955
        %v1957 = vmul.f32 %v1956, %v1947
        %v1958 = vmul.f32 %v1956, %v1948
        %v1959 = vadd.f32 %v1897, %v1957
        %v1960 = vadd.f32 %v1898, %v1958
        %s1961 = sld [smem:[#allocation3 + $0x8e]]
        %v1962 = vstv %s1961
        %v1963 = vmul.f32 %v1962, %v1947
        %v1964 = vmul.f32 %v1962, %v1948
        %v1965 = vadd.f32 %v1916, %v1963
        %v1966 = vadd.f32 %v1917, %v1964
        %s1967 = sld [smem:[#allocation3 + $0x8f]]
        %v1968 = vstv %s1967
        %v1969 = vmul.f32 %v1968, %v1947
        %v1970 = vmul.f32 %v1968, %v1948
        %v1971 = vadd.f32 %v1935, %v1969
        %v1972 = vadd.f32 %v1936, %v1970
        %v1973 = vld [vmem:[%s234] ss:$4 sm:$0x3]
        %1974 = vst.msk [vmem:[#allocation2 + $0x1] sm:$0x3] %vm278, %v1973
        %v1975 = vld [vmem:[#allocation2] sm:$0x7]
        %v1977 = vperm.slane %v1975, 0
        %v1978 = vperm.slane %v1975, 1
        %v1979 = vperm.slane %v1975, 2
        %1980 = vrot.lane.b32.xlu0 %v1977, 17
        %v1981 = vpop.permute.xlu0 %1980
        %1982 = vrot.lane.b32.xlu0 %v1978, 17
        %v1983 = vpop.permute.xlu0 %1982
        %1984 = vrot.lane.b32.xlu0 %v1979, 17
        %v1985 = vpop.permute.xlu0 %1984
        %v1986 = vsel %vm291, %v1981, %v1983
        %v1987 = vsel %vm291, %v1983, %v1985
        %v1990 = vsel %vm272, %v1986, 0.0
        %v1991 = vsel %vm273, %v1987, 0.0
        %s1992 = sld [smem:[#allocation3 + $0x90]]
        %v1993 = vstv %s1992
        %v1994 = vmul.f32 %v1993, %v1990
        %v1995 = vmul.f32 %v1993, %v1991
        %v1996 = vadd.f32 %v1953, %v1994
        %v1997 = vadd.f32 %v1954, %v1995
        %s1998 = sld [smem:[#allocation3 + $0x91]]
        %v1999 = vstv %s1998
        %v2000 = vmul.f32 %v1999, %v1990
        %v2001 = vmul.f32 %v1999, %v1991
        %v2002 = vadd.f32 %v1959, %v2000
        %v2003 = vadd.f32 %v1960, %v2001
        %s2004 = sld [smem:[#allocation3 + $0x92]]
        %v2005 = vstv %s2004
        %v2006 = vmul.f32 %v2005, %v1990
        %v2007 = vmul.f32 %v2005, %v1991
        %v2008 = vadd.f32 %v1965, %v2006
        %v2009 = vadd.f32 %v1966, %v2007
        %s2010 = sld [smem:[#allocation3 + $0x93]]
        %v2011 = vstv %s2010
        %v2012 = vmul.f32 %v2011, %v1990
        %v2013 = vmul.f32 %v2011, %v1991
        %v2014 = vadd.f32 %v1971, %v2012
        %v2015 = vadd.f32 %v1972, %v2013
        %s2016 = sld [smem:[#allocation3 + $0x94]]
        %v2017 = vstv %s2016
        %v2018 = vmul.f32 %v2017, %v1975
        %v2020 = vperm.slane %v2018, 0
        %v2021 = vperm.slane %v2018, 1
        %v2022 = vperm.slane %v2018, 2
        %2023 = vrot.lane.b32.xlu0 %v2020, 16
        %v2024 = vpop.permute.xlu0 %2023
        %2025 = vrot.lane.b32.xlu0 %v2021, 16
        %v2026 = vpop.permute.xlu0 %2025
        %2027 = vrot.lane.b32.xlu0 %v2022, 16
        %v2028 = vpop.permute.xlu0 %2027
        %v2029 = vsel %vm335, %v2024, %v2026
        %v2030 = vsel %vm335, %v2026, %v2028
        %v2033 = vadd.f32 %v1996, %v2029
        %v2034 = vadd.f32 %v1997, %v2030
        %s2035 = sld [smem:[#allocation3 + $0x95]]
        %v2036 = vstv %s2035
        %v2037 = vmul.f32 %v2036, %v1975
        %v2039 = vperm.slane %v2037, 0
        %v2040 = vperm.slane %v2037, 1
        %v2041 = vperm.slane %v2037, 2
        %2042 = vrot.lane.b32.xlu0 %v2039, 16
        %v2043 = vpop.permute.xlu0 %2042
        %2044 = vrot.lane.b32.xlu0 %v2040, 16
        %v2045 = vpop.permute.xlu0 %2044
        %2046 = vrot.lane.b32.xlu0 %v2041, 16
        %v2047 = vpop.permute.xlu0 %2046
        %v2048 = vsel %vm335, %v2043, %v2045
        %v2049 = vsel %vm335, %v2045, %v2047
        %v2052 = vadd.f32 %v2002, %v2048
        %v2053 = vadd.f32 %v2003, %v2049
        %s2054 = sld [smem:[#allocation3 + $0x96]]
        %v2055 = vstv %s2054
        %v2056 = vmul.f32 %v2055, %v1975
        %v2058 = vperm.slane %v2056, 0
        %v2059 = vperm.slane %v2056, 1
        %v2060 = vperm.slane %v2056, 2
        %2061 = vrot.lane.b32.xlu0 %v2058, 16
        %v2062 = vpop.permute.xlu0 %2061
        %2063 = vrot.lane.b32.xlu0 %v2059, 16
        %v2064 = vpop.permute.xlu0 %2063
        %2065 = vrot.lane.b32.xlu0 %v2060, 16
        %v2066 = vpop.permute.xlu0 %2065
        %v2067 = vsel %vm335, %v2062, %v2064
        %v2068 = vsel %vm335, %v2064, %v2066
        %v2071 = vadd.f32 %v2008, %v2067
        %v2072 = vadd.f32 %v2009, %v2068
        %s2073 = sld [smem:[#allocation3 + $0x97]]
        %v2074 = vstv %s2073
        %v2075 = vmul.f32 %v2074, %v1975
        %v2077 = vperm.slane %v2075, 0
        %v2078 = vperm.slane %v2075, 1
        %v2079 = vperm.slane %v2075, 2
        %2080 = vrot.lane.b32.xlu0 %v2077, 16
        %v2081 = vpop.permute.xlu0 %2080
        %2082 = vrot.lane.b32.xlu0 %v2078, 16
        %v2083 = vpop.permute.xlu0 %2082
        %2084 = vrot.lane.b32.xlu0 %v2079, 16
        %v2085 = vpop.permute.xlu0 %2084
        %v2086 = vsel %vm335, %v2081, %v2083
        %v2087 = vsel %vm335, %v2083, %v2085
        %v2090 = vadd.f32 %v2014, %v2086
        %v2091 = vadd.f32 %v2015, %v2087
        %2092 = vrot.lane.b32.xlu0 %v1977, 15
        %v2093 = vpop.permute.xlu0 %2092
        %2094 = vrot.lane.b32.xlu0 %v1978, 15
        %v2095 = vpop.permute.xlu0 %2094
        %2096 = vrot.lane.b32.xlu0 %v1979, 15
        %v2097 = vpop.permute.xlu0 %2096
        %v2098 = vsel %vm405, %v2093, %v2095
        %v2099 = vsel %vm405, %v2095, %v2097
        %v2102 = vsel %vm274, %v2098, 0.0
        %v2103 = vsel %vm275, %v2099, 0.0
        %s2104 = sld [smem:[#allocation3 + $0x98]]
        %v2105 = vstv %s2104
        %v2106 = vmul.f32 %v2105, %v2102
        %v2107 = vmul.f32 %v2105, %v2103
        %v2108 = vadd.f32 %v2033, %v2106
        %v2109 = vadd.f32 %v2034, %v2107
        %s2110 = sld [smem:[#allocation3 + $0x99]]
        %v2111 = vstv %s2110
        %v2112 = vmul.f32 %v2111, %v2102
        %v2113 = vmul.f32 %v2111, %v2103
        %v2114 = vadd.f32 %v2052, %v2112
        %v2115 = vadd.f32 %v2053, %v2113
        %s2116 = sld [smem:[#allocation3 + $0x9a]]
        %v2117 = vstv %s2116
        %v2118 = vmul.f32 %v2117, %v2102
        %v2119 = vmul.f32 %v2117, %v2103
        %v2120 = vadd.f32 %v2071, %v2118
        %v2121 = vadd.f32 %v2072, %v2119
        %s2122 = sld [smem:[#allocation3 + $0x9b]]
        %v2123 = vstv %s2122
        %v2124 = vmul.f32 %v2123, %v2102
        %v2125 = vmul.f32 %v2123, %v2103
        %v2126 = vadd.f32 %v2090, %v2124
        %v2127 = vadd.f32 %v2091, %v2125
        %2128 = vrot.lane.b32.xlu0 %v1977, 1
        %v2129 = vpop.permute.xlu0 %2128
        %2130 = vrot.lane.b32.xlu0 %v1978, 1
        %v2131 = vpop.permute.xlu0 %2130
        %2132 = vrot.lane.b32.xlu0 %v1979, 1
        %v2133 = vpop.permute.xlu0 %2132
        %v2134 = vsel %vm442, %v2129, %v2131
        %v2135 = vsel %vm442, %v2131, %v2133
        %v2138 = vsel %vm272, %v2134, 0.0
        %v2139 = vsel %vm273, %v2135, 0.0
        %s2140 = sld [smem:[#allocation3 + $0x9c]]
        %v2141 = vstv %s2140
        %v2142 = vmul.f32 %v2141, %v2138
        %v2143 = vmul.f32 %v2141, %v2139
        %v2144 = vadd.f32 %v2108, %v2142
        %v2145 = vadd.f32 %v2109, %v2143
        %s2146 = sld [smem:[#allocation3 + $0x9d]]
        %v2147 = vstv %s2146
        %v2148 = vmul.f32 %v2147, %v2138
        %v2149 = vmul.f32 %v2147, %v2139
        %v2150 = vadd.f32 %v2114, %v2148
        %v2151 = vadd.f32 %v2115, %v2149
        %s2152 = sld [smem:[#allocation3 + $0x9e]]
        %v2153 = vstv %s2152
        %v2154 = vmul.f32 %v2153, %v2138
        %v2155 = vmul.f32 %v2153, %v2139
        %v2156 = vadd.f32 %v2120, %v2154
        %v2157 = vadd.f32 %v2121, %v2155
        %s2158 = sld [smem:[#allocation3 + $0x9f]]
        %v2159 = vstv %s2158
        %v2160 = vmul.f32 %v2159, %v2138
        %v2161 = vmul.f32 %v2159, %v2139
        %v2162 = vadd.f32 %v2126, %v2160
        %v2163 = vadd.f32 %v2127, %v2161
        %v2164 = vld [vmem:[#allocation2 + $0x1] sm:$0x3]
        %s2165 = sld [smem:[#allocation3 + $0xa0]]
        %v2166 = vstv %s2165
        %v2167 = vmul.f32 %v2166, %v2164
        %v2169 = vperm.slane %v2167, 0
        %v2170 = vperm.slane %v2167, 1
        %v2173 = vadd.f32 %v2144, %v2169
        %v2174 = vadd.f32 %v2145, %v2170
        %s2175 = sld [smem:[#allocation3 + $0xa1]]
        %v2176 = vstv %s2175
        %v2177 = vmul.f32 %v2176, %v2164
        %v2179 = vperm.slane %v2177, 0
        %v2180 = vperm.slane %v2177, 1
        %v2183 = vadd.f32 %v2150, %v2179
        %v2184 = vadd.f32 %v2151, %v2180
        %s2185 = sld [smem:[#allocation3 + $0xa2]]
        %v2186 = vstv %s2185
        %v2187 = vmul.f32 %v2186, %v2164
        %v2189 = vperm.slane %v2187, 0
        %v2190 = vperm.slane %v2187, 1
        %v2193 = vadd.f32 %v2156, %v2189
        %v2194 = vadd.f32 %v2157, %v2190
        %s2195 = sld [smem:[#allocation3 + $0xa3]]
        %v2196 = vstv %s2195
        %v2197 = vmul.f32 %v2196, %v2164
        %v2199 = vperm.slane %v2197, 0
        %v2200 = vperm.slane %v2197, 1
        %v2203 = vadd.f32 %v2162, %v2199
        %v2204 = vadd.f32 %v2163, %v2200
        %v2205 = vld [vmem:[#allocation2 + $0x1] sm:$0x7]
        %v2207 = vperm.slane %v2205, 0
        %v2208 = vperm.slane %v2205, 1
        %v2209 = vperm.slane %v2205, 2
        %2210 = vrot.lane.b32.xlu0 %v2207, 127
        %v2211 = vpop.permute.xlu0 %2210
        %2212 = vrot.lane.b32.xlu0 %v2208, 127
        %v2213 = vpop.permute.xlu0 %2212
        %2214 = vrot.lane.b32.xlu0 %v2209, 127
        %v2215 = vpop.permute.xlu0 %2214
        %v2216 = vsel %vm525, %v2211, %v2213
        %v2217 = vsel %vm525, %v2213, %v2215
        %v2220 = vsel %vm274, %v2216, 0.0
        %v2221 = vsel %vm275, %v2217, 0.0
        %s2222 = sld [smem:[#allocation3 + $0xa4]]
        %v2223 = vstv %s2222
        %v2224 = vmul.f32 %v2223, %v2220
        %v2225 = vmul.f32 %v2223, %v2221
        %v2226 = vadd.f32 %v2173, %v2224
        %v2227 = vadd.f32 %v2174, %v2225
        %s2228 = sld [smem:[#allocation3 + $0xa5]]
        %v2229 = vstv %s2228
        %v2230 = vmul.f32 %v2229, %v2220
        %v2231 = vmul.f32 %v2229, %v2221
        %v2232 = vadd.f32 %v2183, %v2230
        %v2233 = vadd.f32 %v2184, %v2231
        %s2234 = sld [smem:[#allocation3 + $0xa6]]
        %v2235 = vstv %s2234
        %v2236 = vmul.f32 %v2235, %v2220
        %v2237 = vmul.f32 %v2235, %v2221
        %v2238 = vadd.f32 %v2193, %v2236
        %v2239 = vadd.f32 %v2194, %v2237
        %s2240 = sld [smem:[#allocation3 + $0xa7]]
        %v2241 = vstv %s2240
        %v2242 = vmul.f32 %v2241, %v2220
        %v2243 = vmul.f32 %v2241, %v2221
        %v2244 = vadd.f32 %v2203, %v2242
        %v2245 = vadd.f32 %v2204, %v2243
        %2246 = vrot.lane.b32.xlu0 %v2207, 113
        %v2247 = vpop.permute.xlu0 %2246
        %2248 = vrot.lane.b32.xlu0 %v2208, 113
        %v2249 = vpop.permute.xlu0 %2248
        %2250 = vrot.lane.b32.xlu0 %v2209, 113
        %v2251 = vpop.permute.xlu0 %2250
        %v2252 = vsel %vm562, %v2247, %v2249
        %v2253 = vsel %vm562, %v2249, %v2251
        %v2256 = vsel %vm272, %v2252, 0.0
        %v2257 = vsel %vm273, %v2253, 0.0
        %s2258 = sld [smem:[#allocation3 + $0xa8]]
        %v2259 = vstv %s2258
        %v2260 = vmul.f32 %v2259, %v2256
        %v2261 = vmul.f32 %v2259, %v2257
        %v2262 = vadd.f32 %v2226, %v2260
        %v2263 = vadd.f32 %v2227, %v2261
        %s2264 = sld [smem:[#allocation3 + $0xa9]]
        %v2265 = vstv %s2264
        %v2266 = vmul.f32 %v2265, %v2256
        %v2267 = vmul.f32 %v2265, %v2257
        %v2268 = vadd.f32 %v2232, %v2266
        %v2269 = vadd.f32 %v2233, %v2267
        %s2270 = sld [smem:[#allocation3 + $0xaa]]
        %v2271 = vstv %s2270
        %v2272 = vmul.f32 %v2271, %v2256
        %v2273 = vmul.f32 %v2271, %v2257
        %v2274 = vadd.f32 %v2238, %v2272
        %v2275 = vadd.f32 %v2239, %v2273
        %s2276 = sld [smem:[#allocation3 + $0xab]]
        %v2277 = vstv %s2276
        %v2278 = vmul.f32 %v2277, %v2256
        %v2279 = vmul.f32 %v2277, %v2257
        %v2280 = vadd.f32 %v2244, %v2278
        %v2281 = vadd.f32 %v2245, %v2279
        %s2282 = sld [smem:[#allocation3 + $0xac]]
        %v2283 = vstv %s2282
        %v2284 = vmul.f32 %v2283, %v2205
        %v2286 = vperm.slane %v2284, 0
        %v2287 = vperm.slane %v2284, 1
        %v2288 = vperm.slane %v2284, 2
        %2289 = vrot.lane.b32.xlu0 %v2286, 112
        %v2290 = vpop.permute.xlu0 %2289
        %2291 = vrot.lane.b32.xlu0 %v2287, 112
        %v2292 = vpop.permute.xlu0 %2291
        %2293 = vrot.lane.b32.xlu0 %v2288, 112
        %v2294 = vpop.permute.xlu0 %2293
        %v2295 = vsel %vm606, %v2290, %v2292
        %v2296 = vsel %vm606, %v2292, %v2294
        %v2299 = vadd.f32 %v2262, %v2295
        %v2300 = vadd.f32 %v2263, %v2296
        %s2301 = sld [smem:[#allocation3 + $0xad]]
        %v2302 = vstv %s2301
        %v2303 = vmul.f32 %v2302, %v2205
        %v2305 = vperm.slane %v2303, 0
        %v2306 = vperm.slane %v2303, 1
        %v2307 = vperm.slane %v2303, 2
        %2308 = vrot.lane.b32.xlu0 %v2305, 112
        %v2309 = vpop.permute.xlu0 %2308
        %2310 = vrot.lane.b32.xlu0 %v2306, 112
        %v2311 = vpop.permute.xlu0 %2310
        %2312 = vrot.lane.b32.xlu0 %v2307, 112
        %v2313 = vpop.permute.xlu0 %2312
        %v2314 = vsel %vm606, %v2309, %v2311
        %v2315 = vsel %vm606, %v2311, %v2313
        %v2318 = vadd.f32 %v2268, %v2314
        %v2319 = vadd.f32 %v2269, %v2315
        %s2320 = sld [smem:[#allocation3 + $0xae]]
        %v2321 = vstv %s2320
        %v2322 = vmul.f32 %v2321, %v2205
        %v2324 = vperm.slane %v2322, 0
        %v2325 = vperm.slane %v2322, 1
        %v2326 = vperm.slane %v2322, 2
        %2327 = vrot.lane.b32.xlu0 %v2324, 112
        %v2328 = vpop.permute.xlu0 %2327
        %2329 = vrot.lane.b32.xlu0 %v2325, 112
        %v2330 = vpop.permute.xlu0 %2329
        %2331 = vrot.lane.b32.xlu0 %v2326, 112
        %v2332 = vpop.permute.xlu0 %2331
        %v2333 = vsel %vm606, %v2328, %v2330
        %v2334 = vsel %vm606, %v2330, %v2332
        %v2337 = vadd.f32 %v2274, %v2333
        %v2338 = vadd.f32 %v2275, %v2334
        %s2339 = sld [smem:[#allocation3 + $0xaf]]
        %v2340 = vstv %s2339
        %v2341 = vmul.f32 %v2340, %v2205
        %v2343 = vperm.slane %v2341, 0
        %v2344 = vperm.slane %v2341, 1
        %v2345 = vperm.slane %v2341, 2
        %2346 = vrot.lane.b32.xlu0 %v2343, 112
        %v2347 = vpop.permute.xlu0 %2346
        %2348 = vrot.lane.b32.xlu0 %v2344, 112
        %v2349 = vpop.permute.xlu0 %2348
        %2350 = vrot.lane.b32.xlu0 %v2345, 112
        %v2351 = vpop.permute.xlu0 %2350
        %v2352 = vsel %vm606, %v2347, %v2349
        %v2353 = vsel %vm606, %v2349, %v2351
        %v2356 = vadd.f32 %v2280, %v2352
        %v2357 = vadd.f32 %v2281, %v2353
        %2358 = vrot.lane.b32.xlu0 %v2207, 111
        %v2359 = vpop.permute.xlu0 %2358
        %2360 = vrot.lane.b32.xlu0 %v2208, 111
        %v2361 = vpop.permute.xlu0 %2360
        %2362 = vrot.lane.b32.xlu0 %v2209, 111
        %v2363 = vpop.permute.xlu0 %2362
        %v2364 = vsel %vm676, %v2359, %v2361
        %v2365 = vsel %vm676, %v2361, %v2363
        %v2368 = vsel %vm274, %v2364, 0.0
        %v2369 = vsel %vm275, %v2365, 0.0
        %s2370 = sld [smem:[#allocation3 + $0xb0]]
        %v2371 = vstv %s2370
        %v2372 = vmul.f32 %v2371, %v2368
        %v2373 = vmul.f32 %v2371, %v2369
        %v2374 = vadd.f32 %v2299, %v2372
        %v2375 = vadd.f32 %v2300, %v2373
        %s2376 = sld [smem:[#allocation3 + $0xb1]]
        %v2377 = vstv %s2376
        %v2378 = vmul.f32 %v2377, %v2368
        %v2379 = vmul.f32 %v2377, %v2369
        %v2380 = vadd.f32 %v2318, %v2378
        %v2381 = vadd.f32 %v2319, %v2379
        %s2382 = sld [smem:[#allocation3 + $0xb2]]
        %v2383 = vstv %s2382
        %v2384 = vmul.f32 %v2383, %v2368
        %v2385 = vmul.f32 %v2383, %v2369
        %v2386 = vadd.f32 %v2337, %v2384
        %v2387 = vadd.f32 %v2338, %v2385
        %s2388 = sld [smem:[#allocation3 + $0xb3]]
        %v2389 = vstv %s2388
        %v2390 = vmul.f32 %v2389, %v2368
        %v2391 = vmul.f32 %v2389, %v2369
        %v2392 = vadd.f32 %v2356, %v2390
        %v2393 = vadd.f32 %v2357, %v2391
        %s2394 = scalar_lea.vmem %s234, 1
        %v2395 = vld [vmem:[%s2394] ss:$4 sm:$0x3]
        %2396 = vst.msk [vmem:[#allocation2 + $0x1] sm:$0x3] %vm278, %v2395
        %v2397 = vld [vmem:[#allocation2] sm:$0x7]
        %v2399 = vperm.slane %v2397, 0
        %v2400 = vperm.slane %v2397, 1
        %v2401 = vperm.slane %v2397, 2
        %2402 = vrot.lane.b32.xlu0 %v2399, 17
        %v2403 = vpop.permute.xlu0 %2402
        %2404 = vrot.lane.b32.xlu0 %v2400, 17
        %v2405 = vpop.permute.xlu0 %2404
        %2406 = vrot.lane.b32.xlu0 %v2401, 17
        %v2407 = vpop.permute.xlu0 %2406
        %v2408 = vsel %vm291, %v2403, %v2405
        %v2409 = vsel %vm291, %v2405, %v2407
        %v2412 = vsel %vm272, %v2408, 0.0
        %v2413 = vsel %vm273, %v2409, 0.0
        %s2414 = sld [smem:[#allocation3 + $0xb4]]
        %v2415 = vstv %s2414
        %v2416 = vmul.f32 %v2415, %v2412
        %v2417 = vmul.f32 %v2415, %v2413
        %v2418 = vadd.f32 %v2374, %v2416
        %v2419 = vadd.f32 %v2375, %v2417
        %s2420 = sld [smem:[#allocation3 + $0xb5]]
        %v2421 = vstv %s2420
        %v2422 = vmul.f32 %v2421, %v2412
        %v2423 = vmul.f32 %v2421, %v2413
        %v2424 = vadd.f32 %v2380, %v2422
        %v2425 = vadd.f32 %v2381, %v2423
        %s2426 = sld [smem:[#allocation3 + $0xb6]]
        %v2427 = vstv %s2426
        %v2428 = vmul.f32 %v2427, %v2412
        %v2429 = vmul.f32 %v2427, %v2413
        %v2430 = vadd.f32 %v2386, %v2428
        %v2431 = vadd.f32 %v2387, %v2429
        %s2432 = sld [smem:[#allocation3 + $0xb7]]
        %v2433 = vstv %s2432
        %v2434 = vmul.f32 %v2433, %v2412
        %v2435 = vmul.f32 %v2433, %v2413
        %v2436 = vadd.f32 %v2392, %v2434
        %v2437 = vadd.f32 %v2393, %v2435
        %s2438 = sld [smem:[#allocation3 + $0xb8]]
        %v2439 = vstv %s2438
        %v2440 = vmul.f32 %v2439, %v2397
        %v2442 = vperm.slane %v2440, 0
        %v2443 = vperm.slane %v2440, 1
        %v2444 = vperm.slane %v2440, 2
        %2445 = vrot.lane.b32.xlu0 %v2442, 16
        %v2446 = vpop.permute.xlu0 %2445
        %2447 = vrot.lane.b32.xlu0 %v2443, 16
        %v2448 = vpop.permute.xlu0 %2447
        %2449 = vrot.lane.b32.xlu0 %v2444, 16
        %v2450 = vpop.permute.xlu0 %2449
        %v2451 = vsel %vm335, %v2446, %v2448
        %v2452 = vsel %vm335, %v2448, %v2450
        %v2455 = vadd.f32 %v2418, %v2451
        %v2456 = vadd.f32 %v2419, %v2452
        %s2457 = sld [smem:[#allocation3 + $0xb9]]
        %v2458 = vstv %s2457
        %v2459 = vmul.f32 %v2458, %v2397
        %v2461 = vperm.slane %v2459, 0
        %v2462 = vperm.slane %v2459, 1
        %v2463 = vperm.slane %v2459, 2
        %2464 = vrot.lane.b32.xlu0 %v2461, 16
        %v2465 = vpop.permute.xlu0 %2464
        %2466 = vrot.lane.b32.xlu0 %v2462, 16
        %v2467 = vpop.permute.xlu0 %2466
        %2468 = vrot.lane.b32.xlu0 %v2463, 16
        %v2469 = vpop.permute.xlu0 %2468
        %v2470 = vsel %vm335, %v2465, %v2467
        %v2471 = vsel %vm335, %v2467, %v2469
        %v2474 = vadd.f32 %v2424, %v2470
        %v2475 = vadd.f32 %v2425, %v2471
        %s2476 = sld [smem:[#allocation3 + $0xba]]
        %v2477 = vstv %s2476
        %v2478 = vmul.f32 %v2477, %v2397
        %v2480 = vperm.slane %v2478, 0
        %v2481 = vperm.slane %v2478, 1
        %v2482 = vperm.slane %v2478, 2
        %2483 = vrot.lane.b32.xlu0 %v2480, 16
        %v2484 = vpop.permute.xlu0 %2483
        %2485 = vrot.lane.b32.xlu0 %v2481, 16
        %v2486 = vpop.permute.xlu0 %2485
        %2487 = vrot.lane.b32.xlu0 %v2482, 16
        %v2488 = vpop.permute.xlu0 %2487
        %v2489 = vsel %vm335, %v2484, %v2486
        %v2490 = vsel %vm335, %v2486, %v2488
        %v2493 = vadd.f32 %v2430, %v2489
        %v2494 = vadd.f32 %v2431, %v2490
        %s2495 = sld [smem:[#allocation3 + $0xbb]]
        %v2496 = vstv %s2495
        %v2497 = vmul.f32 %v2496, %v2397
        %v2499 = vperm.slane %v2497, 0
        %v2500 = vperm.slane %v2497, 1
        %v2501 = vperm.slane %v2497, 2
        %2502 = vrot.lane.b32.xlu0 %v2499, 16
        %v2503 = vpop.permute.xlu0 %2502
        %2504 = vrot.lane.b32.xlu0 %v2500, 16
        %v2505 = vpop.permute.xlu0 %2504
        %2506 = vrot.lane.b32.xlu0 %v2501, 16
        %v2507 = vpop.permute.xlu0 %2506
        %v2508 = vsel %vm335, %v2503, %v2505
        %v2509 = vsel %vm335, %v2505, %v2507
        %v2512 = vadd.f32 %v2436, %v2508
        %v2513 = vadd.f32 %v2437, %v2509
        %2514 = vrot.lane.b32.xlu0 %v2399, 15
        %v2515 = vpop.permute.xlu0 %2514
        %2516 = vrot.lane.b32.xlu0 %v2400, 15
        %v2517 = vpop.permute.xlu0 %2516
        %2518 = vrot.lane.b32.xlu0 %v2401, 15
        %v2519 = vpop.permute.xlu0 %2518
        %v2520 = vsel %vm405, %v2515, %v2517
        %v2521 = vsel %vm405, %v2517, %v2519
        %v2524 = vsel %vm274, %v2520, 0.0
        %v2525 = vsel %vm275, %v2521, 0.0
        %s2526 = sld [smem:[#allocation3 + $0xbc]]
        %v2527 = vstv %s2526
        %v2528 = vmul.f32 %v2527, %v2524
        %v2529 = vmul.f32 %v2527, %v2525
        %v2530 = vadd.f32 %v2455, %v2528
        %v2531 = vadd.f32 %v2456, %v2529
        %s2532 = sld [smem:[#allocation3 + $0xbd]]
        %v2533 = vstv %s2532
        %v2534 = vmul.f32 %v2533, %v2524
        %v2535 = vmul.f32 %v2533, %v2525
        %v2536 = vadd.f32 %v2474, %v2534
        %v2537 = vadd.f32 %v2475, %v2535
        %s2538 = sld [smem:[#allocation3 + $0xbe]]
        %v2539 = vstv %s2538
        %v2540 = vmul.f32 %v2539, %v2524
        %v2541 = vmul.f32 %v2539, %v2525
        %v2542 = vadd.f32 %v2493, %v2540
        %v2543 = vadd.f32 %v2494, %v2541
        %s2544 = sld [smem:[#allocation3 + $0xbf]]
        %v2545 = vstv %s2544
        %v2546 = vmul.f32 %v2545, %v2524
        %v2547 = vmul.f32 %v2545, %v2525
        %v2548 = vadd.f32 %v2512, %v2546
        %v2549 = vadd.f32 %v2513, %v2547
        %2550 = vrot.lane.b32.xlu0 %v2399, 1
        %v2551 = vpop.permute.xlu0 %2550
        %2552 = vrot.lane.b32.xlu0 %v2400, 1
        %v2553 = vpop.permute.xlu0 %2552
        %2554 = vrot.lane.b32.xlu0 %v2401, 1
        %v2555 = vpop.permute.xlu0 %2554
        %v2556 = vsel %vm442, %v2551, %v2553
        %v2557 = vsel %vm442, %v2553, %v2555
        %v2560 = vsel %vm272, %v2556, 0.0
        %v2561 = vsel %vm273, %v2557, 0.0
        %s2562 = sld [smem:[#allocation3 + $0xc0]]
        %v2563 = vstv %s2562
        %v2564 = vmul.f32 %v2563, %v2560
        %v2565 = vmul.f32 %v2563, %v2561
        %v2566 = vadd.f32 %v2530, %v2564
        %v2567 = vadd.f32 %v2531, %v2565
        %s2568 = sld [smem:[#allocation3 + $0xc1]]
        %v2569 = vstv %s2568
        %v2570 = vmul.f32 %v2569, %v2560
        %v2571 = vmul.f32 %v2569, %v2561
        %v2572 = vadd.f32 %v2536, %v2570
        %v2573 = vadd.f32 %v2537, %v2571
        %s2574 = sld [smem:[#allocation3 + $0xc2]]
        %v2575 = vstv %s2574
        %v2576 = vmul.f32 %v2575, %v2560
        %v2577 = vmul.f32 %v2575, %v2561
        %v2578 = vadd.f32 %v2542, %v2576
        %v2579 = vadd.f32 %v2543, %v2577
        %s2580 = sld [smem:[#allocation3 + $0xc3]]
        %v2581 = vstv %s2580
        %v2582 = vmul.f32 %v2581, %v2560
        %v2583 = vmul.f32 %v2581, %v2561
        %v2584 = vadd.f32 %v2548, %v2582
        %v2585 = vadd.f32 %v2549, %v2583
        %v2586 = vld [vmem:[#allocation2 + $0x1] sm:$0x3]
        %s2587 = sld [smem:[#allocation3 + $0xc4]]
        %v2588 = vstv %s2587
        %v2589 = vmul.f32 %v2588, %v2586
        %v2591 = vperm.slane %v2589, 0
        %v2592 = vperm.slane %v2589, 1
        %v2595 = vadd.f32 %v2566, %v2591
        %v2596 = vadd.f32 %v2567, %v2592
        %s2597 = sld [smem:[#allocation3 + $0xc5]]
        %v2598 = vstv %s2597
        %v2599 = vmul.f32 %v2598, %v2586
        %v2601 = vperm.slane %v2599, 0
        %v2602 = vperm.slane %v2599, 1
        %v2605 = vadd.f32 %v2572, %v2601
        %v2606 = vadd.f32 %v2573, %v2602
        %s2607 = sld [smem:[#allocation3 + $0xc6]]
        %v2608 = vstv %s2607
        %v2609 = vmul.f32 %v2608, %v2586
        %v2611 = vperm.slane %v2609, 0
        %v2612 = vperm.slane %v2609, 1
        %v2615 = vadd.f32 %v2578, %v2611
        %v2616 = vadd.f32 %v2579, %v2612
        %s2617 = sld [smem:[#allocation3 + $0xc7]]
        %v2618 = vstv %s2617
        %v2619 = vmul.f32 %v2618, %v2586
        %v2621 = vperm.slane %v2619, 0
        %v2622 = vperm.slane %v2619, 1
        %v2625 = vadd.f32 %v2584, %v2621
        %v2626 = vadd.f32 %v2585, %v2622
        %v2627 = vld [vmem:[#allocation2 + $0x1] sm:$0x7]
        %v2629 = vperm.slane %v2627, 0
        %v2630 = vperm.slane %v2627, 1
        %v2631 = vperm.slane %v2627, 2
        %2632 = vrot.lane.b32.xlu0 %v2629, 127
        %v2633 = vpop.permute.xlu0 %2632
        %2634 = vrot.lane.b32.xlu0 %v2630, 127
        %v2635 = vpop.permute.xlu0 %2634
        %2636 = vrot.lane.b32.xlu0 %v2631, 127
        %v2637 = vpop.permute.xlu0 %2636
        %v2638 = vsel %vm525, %v2633, %v2635
        %v2639 = vsel %vm525, %v2635, %v2637
        %v2642 = vsel %vm274, %v2638, 0.0
        %v2643 = vsel %vm275, %v2639, 0.0
        %s2644 = sld [smem:[#allocation3 + $0xc8]]
        %v2645 = vstv %s2644
        %v2646 = vmul.f32 %v2645, %v2642
        %v2647 = vmul.f32 %v2645, %v2643
        %v2648 = vadd.f32 %v2595, %v2646
        %v2649 = vadd.f32 %v2596, %v2647
        %s2650 = sld [smem:[#allocation3 + $0xc9]]
        %v2651 = vstv %s2650
        %v2652 = vmul.f32 %v2651, %v2642
        %v2653 = vmul.f32 %v2651, %v2643
        %v2654 = vadd.f32 %v2605, %v2652
        %v2655 = vadd.f32 %v2606, %v2653
        %s2656 = sld [smem:[#allocation3 + $0xca]]
        %v2657 = vstv %s2656
        %v2658 = vmul.f32 %v2657, %v2642
        %v2659 = vmul.f32 %v2657, %v2643
        %v2660 = vadd.f32 %v2615, %v2658
        %v2661 = vadd.f32 %v2616, %v2659
        %s2662 = sld [smem:[#allocation3 + $0xcb]]
        %v2663 = vstv %s2662
        %v2664 = vmul.f32 %v2663, %v2642
        %v2665 = vmul.f32 %v2663, %v2643
        %v2666 = vadd.f32 %v2625, %v2664
        %v2667 = vadd.f32 %v2626, %v2665
        %2668 = vrot.lane.b32.xlu0 %v2629, 113
        %v2669 = vpop.permute.xlu0 %2668
        %2670 = vrot.lane.b32.xlu0 %v2630, 113
        %v2671 = vpop.permute.xlu0 %2670
        %2672 = vrot.lane.b32.xlu0 %v2631, 113
        %v2673 = vpop.permute.xlu0 %2672
        %v2674 = vsel %vm562, %v2669, %v2671
        %v2675 = vsel %vm562, %v2671, %v2673
        %v2678 = vsel %vm272, %v2674, 0.0
        %v2679 = vsel %vm273, %v2675, 0.0
        %s2680 = sld [smem:[#allocation3 + $0xcc]]
        %v2681 = vstv %s2680
        %v2682 = vmul.f32 %v2681, %v2678
        %v2683 = vmul.f32 %v2681, %v2679
        %v2684 = vadd.f32 %v2648, %v2682
        %v2685 = vadd.f32 %v2649, %v2683
        %s2686 = sld [smem:[#allocation3 + $0xcd]]
        %v2687 = vstv %s2686
        %v2688 = vmul.f32 %v2687, %v2678
        %v2689 = vmul.f32 %v2687, %v2679
        %v2690 = vadd.f32 %v2654, %v2688
        %v2691 = vadd.f32 %v2655, %v2689
        %s2692 = sld [smem:[#allocation3 + $0xce]]
        %v2693 = vstv %s2692
        %v2694 = vmul.f32 %v2693, %v2678
        %v2695 = vmul.f32 %v2693, %v2679
        %v2696 = vadd.f32 %v2660, %v2694
        %v2697 = vadd.f32 %v2661, %v2695
        %s2698 = sld [smem:[#allocation3 + $0xcf]]
        %v2699 = vstv %s2698
        %v2700 = vmul.f32 %v2699, %v2678
        %v2701 = vmul.f32 %v2699, %v2679
        %v2702 = vadd.f32 %v2666, %v2700
        %v2703 = vadd.f32 %v2667, %v2701
        %s2704 = sld [smem:[#allocation3 + $0xd0]]
        %v2705 = vstv %s2704
        %v2706 = vmul.f32 %v2705, %v2627
        %v2708 = vperm.slane %v2706, 0
        %v2709 = vperm.slane %v2706, 1
        %v2710 = vperm.slane %v2706, 2
        %2711 = vrot.lane.b32.xlu0 %v2708, 112
        %v2712 = vpop.permute.xlu0 %2711
        %2713 = vrot.lane.b32.xlu0 %v2709, 112
        %v2714 = vpop.permute.xlu0 %2713
        %2715 = vrot.lane.b32.xlu0 %v2710, 112
        %v2716 = vpop.permute.xlu0 %2715
        %v2717 = vsel %vm606, %v2712, %v2714
        %v2718 = vsel %vm606, %v2714, %v2716
        %v2721 = vadd.f32 %v2684, %v2717
        %v2722 = vadd.f32 %v2685, %v2718
        %s2723 = sld [smem:[#allocation3 + $0xd1]]
        %v2724 = vstv %s2723
        %v2725 = vmul.f32 %v2724, %v2627
        %v2727 = vperm.slane %v2725, 0
        %v2728 = vperm.slane %v2725, 1
        %v2729 = vperm.slane %v2725, 2
        %2730 = vrot.lane.b32.xlu0 %v2727, 112
        %v2731 = vpop.permute.xlu0 %2730
        %2732 = vrot.lane.b32.xlu0 %v2728, 112
        %v2733 = vpop.permute.xlu0 %2732
        %2734 = vrot.lane.b32.xlu0 %v2729, 112
        %v2735 = vpop.permute.xlu0 %2734
        %v2736 = vsel %vm606, %v2731, %v2733
        %v2737 = vsel %vm606, %v2733, %v2735
        %v2740 = vadd.f32 %v2690, %v2736
        %v2741 = vadd.f32 %v2691, %v2737
        %s2742 = sld [smem:[#allocation3 + $0xd2]]
        %v2743 = vstv %s2742
        %v2744 = vmul.f32 %v2743, %v2627
        %v2746 = vperm.slane %v2744, 0
        %v2747 = vperm.slane %v2744, 1
        %v2748 = vperm.slane %v2744, 2
        %2749 = vrot.lane.b32.xlu0 %v2746, 112
        %v2750 = vpop.permute.xlu0 %2749
        %2751 = vrot.lane.b32.xlu0 %v2747, 112
        %v2752 = vpop.permute.xlu0 %2751
        %2753 = vrot.lane.b32.xlu0 %v2748, 112
        %v2754 = vpop.permute.xlu0 %2753
        %v2755 = vsel %vm606, %v2750, %v2752
        %v2756 = vsel %vm606, %v2752, %v2754
        %v2759 = vadd.f32 %v2696, %v2755
        %v2760 = vadd.f32 %v2697, %v2756
        %s2761 = sld [smem:[#allocation3 + $0xd3]]
        %v2762 = vstv %s2761
        %v2763 = vmul.f32 %v2762, %v2627
        %v2765 = vperm.slane %v2763, 0
        %v2766 = vperm.slane %v2763, 1
        %v2767 = vperm.slane %v2763, 2
        %2768 = vrot.lane.b32.xlu0 %v2765, 112
        %v2769 = vpop.permute.xlu0 %2768
        %2770 = vrot.lane.b32.xlu0 %v2766, 112
        %v2771 = vpop.permute.xlu0 %2770
        %2772 = vrot.lane.b32.xlu0 %v2767, 112
        %v2773 = vpop.permute.xlu0 %2772
        %v2774 = vsel %vm606, %v2769, %v2771
        %v2775 = vsel %vm606, %v2771, %v2773
        %v2778 = vadd.f32 %v2702, %v2774
        %v2779 = vadd.f32 %v2703, %v2775
        %2780 = vrot.lane.b32.xlu0 %v2629, 111
        %v2781 = vpop.permute.xlu0 %2780
        %2782 = vrot.lane.b32.xlu0 %v2630, 111
        %v2783 = vpop.permute.xlu0 %2782
        %2784 = vrot.lane.b32.xlu0 %v2631, 111
        %v2785 = vpop.permute.xlu0 %2784
        %v2786 = vsel %vm676, %v2781, %v2783
        %v2787 = vsel %vm676, %v2783, %v2785
        %v2790 = vsel %vm274, %v2786, 0.0
        %v2791 = vsel %vm275, %v2787, 0.0
        %s2792 = sld [smem:[#allocation3 + $0xd4]]
        %v2793 = vstv %s2792
        %v2794 = vmul.f32 %v2793, %v2790
        %v2795 = vmul.f32 %v2793, %v2791
        %v2796 = vadd.f32 %v2721, %v2794
        %v2797 = vadd.f32 %v2722, %v2795
        %s2798 = sld [smem:[#allocation3 + $0xd5]]
        %v2799 = vstv %s2798
        %v2800 = vmul.f32 %v2799, %v2790
        %v2801 = vmul.f32 %v2799, %v2791
        %v2802 = vadd.f32 %v2740, %v2800
        %v2803 = vadd.f32 %v2741, %v2801
        %s2804 = sld [smem:[#allocation3 + $0xd6]]
        %v2805 = vstv %s2804
        %v2806 = vmul.f32 %v2805, %v2790
        %v2807 = vmul.f32 %v2805, %v2791
        %v2808 = vadd.f32 %v2759, %v2806
        %v2809 = vadd.f32 %v2760, %v2807
        %s2810 = sld [smem:[#allocation3 + $0xd7]]
        %v2811 = vstv %s2810
        %v2812 = vmul.f32 %v2811, %v2790
        %v2813 = vmul.f32 %v2811, %v2791
        %v2814 = vadd.f32 %v2778, %v2812
        %v2815 = vadd.f32 %v2779, %v2813
        %s2816 = scalar_lea.vmem %s234, 2
        %v2817 = vld [vmem:[%s2816] ss:$4 sm:$0x3]
        %2818 = vst.msk [vmem:[#allocation2 + $0x1] sm:$0x3] %vm278, %v2817
        %v2819 = vld [vmem:[#allocation2] sm:$0x7]
        %v2821 = vperm.slane %v2819, 0
        %v2822 = vperm.slane %v2819, 1
        %v2823 = vperm.slane %v2819, 2
        %2824 = vrot.lane.b32.xlu0 %v2821, 17
        %v2825 = vpop.permute.xlu0 %2824
        %2826 = vrot.lane.b32.xlu0 %v2822, 17
        %v2827 = vpop.permute.xlu0 %2826
        %2828 = vrot.lane.b32.xlu0 %v2823, 17
        %v2829 = vpop.permute.xlu0 %2828
        %v2830 = vsel %vm291, %v2825, %v2827
        %v2831 = vsel %vm291, %v2827, %v2829
        %v2834 = vsel %vm272, %v2830, 0.0
        %v2835 = vsel %vm273, %v2831, 0.0
        %s2836 = sld [smem:[#allocation3 + $0xd8]]
        %v2837 = vstv %s2836
        %v2838 = vmul.f32 %v2837, %v2834
        %v2839 = vmul.f32 %v2837, %v2835
        %v2840 = vadd.f32 %v2796, %v2838
        %v2841 = vadd.f32 %v2797, %v2839
        %s2842 = sld [smem:[#allocation3 + $0xd9]]
        %v2843 = vstv %s2842
        %v2844 = vmul.f32 %v2843, %v2834
        %v2845 = vmul.f32 %v2843, %v2835
        %v2846 = vadd.f32 %v2802, %v2844
        %v2847 = vadd.f32 %v2803, %v2845
        %s2848 = sld [smem:[#allocation3 + $0xda]]
        %v2849 = vstv %s2848
        %v2850 = vmul.f32 %v2849, %v2834
        %v2851 = vmul.f32 %v2849, %v2835
        %v2852 = vadd.f32 %v2808, %v2850
        %v2853 = vadd.f32 %v2809, %v2851
        %s2854 = sld [smem:[#allocation3 + $0xdb]]
        %v2855 = vstv %s2854
        %v2856 = vmul.f32 %v2855, %v2834
        %v2857 = vmul.f32 %v2855, %v2835
        %v2858 = vadd.f32 %v2814, %v2856
        %v2859 = vadd.f32 %v2815, %v2857
        %s2860 = sld [smem:[#allocation3 + $0xdc]]
        %v2861 = vstv %s2860
        %v2862 = vmul.f32 %v2861, %v2819
        %v2864 = vperm.slane %v2862, 0
        %v2865 = vperm.slane %v2862, 1
        %v2866 = vperm.slane %v2862, 2
        %2867 = vrot.lane.b32.xlu0 %v2864, 16
        %v2868 = vpop.permute.xlu0 %2867
        %2869 = vrot.lane.b32.xlu0 %v2865, 16
        %v2870 = vpop.permute.xlu0 %2869
        %2871 = vrot.lane.b32.xlu0 %v2866, 16
        %v2872 = vpop.permute.xlu0 %2871
        %v2873 = vsel %vm335, %v2868, %v2870
        %v2874 = vsel %vm335, %v2870, %v2872
        %v2877 = vadd.f32 %v2840, %v2873
        %v2878 = vadd.f32 %v2841, %v2874
        %s2879 = sld [smem:[#allocation3 + $0xdd]]
        %v2880 = vstv %s2879
        %v2881 = vmul.f32 %v2880, %v2819
        %v2883 = vperm.slane %v2881, 0
        %v2884 = vperm.slane %v2881, 1
        %v2885 = vperm.slane %v2881, 2
        %2886 = vrot.lane.b32.xlu0 %v2883, 16
        %v2887 = vpop.permute.xlu0 %2886
        %2888 = vrot.lane.b32.xlu0 %v2884, 16
        %v2889 = vpop.permute.xlu0 %2888
        %2890 = vrot.lane.b32.xlu0 %v2885, 16
        %v2891 = vpop.permute.xlu0 %2890
        %v2892 = vsel %vm335, %v2887, %v2889
        %v2893 = vsel %vm335, %v2889, %v2891
        %v2896 = vadd.f32 %v2846, %v2892
        %v2897 = vadd.f32 %v2847, %v2893
        %s2898 = sld [smem:[#allocation3 + $0xde]]
        %v2899 = vstv %s2898
        %v2900 = vmul.f32 %v2899, %v2819
        %v2902 = vperm.slane %v2900, 0
        %v2903 = vperm.slane %v2900, 1
        %v2904 = vperm.slane %v2900, 2
        %2905 = vrot.lane.b32.xlu0 %v2902, 16
        %v2906 = vpop.permute.xlu0 %2905
        %2907 = vrot.lane.b32.xlu0 %v2903, 16
        %v2908 = vpop.permute.xlu0 %2907
        %2909 = vrot.lane.b32.xlu0 %v2904, 16
        %v2910 = vpop.permute.xlu0 %2909
        %v2911 = vsel %vm335, %v2906, %v2908
        %v2912 = vsel %vm335, %v2908, %v2910
        %v2915 = vadd.f32 %v2852, %v2911
        %v2916 = vadd.f32 %v2853, %v2912
        %s2917 = sld [smem:[#allocation3 + $0xdf]]
        %v2918 = vstv %s2917
        %v2919 = vmul.f32 %v2918, %v2819
        %v2921 = vperm.slane %v2919, 0
        %v2922 = vperm.slane %v2919, 1
        %v2923 = vperm.slane %v2919, 2
        %2924 = vrot.lane.b32.xlu0 %v2921, 16
        %v2925 = vpop.permute.xlu0 %2924
        %2926 = vrot.lane.b32.xlu0 %v2922, 16
        %v2927 = vpop.permute.xlu0 %2926
        %2928 = vrot.lane.b32.xlu0 %v2923, 16
        %v2929 = vpop.permute.xlu0 %2928
        %v2930 = vsel %vm335, %v2925, %v2927
        %v2931 = vsel %vm335, %v2927, %v2929
        %v2934 = vadd.f32 %v2858, %v2930
        %v2935 = vadd.f32 %v2859, %v2931
        %2936 = vrot.lane.b32.xlu0 %v2821, 15
        %v2937 = vpop.permute.xlu0 %2936
        %2938 = vrot.lane.b32.xlu0 %v2822, 15
        %v2939 = vpop.permute.xlu0 %2938
        %2940 = vrot.lane.b32.xlu0 %v2823, 15
        %v2941 = vpop.permute.xlu0 %2940
        %v2942 = vsel %vm405, %v2937, %v2939
        %v2943 = vsel %vm405, %v2939, %v2941
        %v2946 = vsel %vm274, %v2942, 0.0
        %v2947 = vsel %vm275, %v2943, 0.0
        %s2948 = sld [smem:[#allocation3 + $0xe0]]
        %v2949 = vstv %s2948
        %v2950 = vmul.f32 %v2949, %v2946
        %v2951 = vmul.f32 %v2949, %v2947
        %v2952 = vadd.f32 %v2877, %v2950
        %v2953 = vadd.f32 %v2878, %v2951
        %s2954 = sld [smem:[#allocation3 + $0xe1]]
        %v2955 = vstv %s2954
        %v2956 = vmul.f32 %v2955, %v2946
        %v2957 = vmul.f32 %v2955, %v2947
        %v2958 = vadd.f32 %v2896, %v2956
        %v2959 = vadd.f32 %v2897, %v2957
        %s2960 = sld [smem:[#allocation3 + $0xe2]]
        %v2961 = vstv %s2960
        %v2962 = vmul.f32 %v2961, %v2946
        %v2963 = vmul.f32 %v2961, %v2947
        %v2964 = vadd.f32 %v2915, %v2962
        %v2965 = vadd.f32 %v2916, %v2963
        %s2966 = sld [smem:[#allocation3 + $0xe3]]
        %v2967 = vstv %s2966
        %v2968 = vmul.f32 %v2967, %v2946
        %v2969 = vmul.f32 %v2967, %v2947
        %v2970 = vadd.f32 %v2934, %v2968
        %v2971 = vadd.f32 %v2935, %v2969
        %2972 = vrot.lane.b32.xlu0 %v2821, 1
        %v2973 = vpop.permute.xlu0 %2972
        %2974 = vrot.lane.b32.xlu0 %v2822, 1
        %v2975 = vpop.permute.xlu0 %2974
        %2976 = vrot.lane.b32.xlu0 %v2823, 1
        %v2977 = vpop.permute.xlu0 %2976
        %v2978 = vsel %vm442, %v2973, %v2975
        %v2979 = vsel %vm442, %v2975, %v2977
        %v2982 = vsel %vm272, %v2978, 0.0
        %v2983 = vsel %vm273, %v2979, 0.0
        %s2984 = sld [smem:[#allocation3 + $0xe4]]
        %v2985 = vstv %s2984
        %v2986 = vmul.f32 %v2985, %v2982
        %v2987 = vmul.f32 %v2985, %v2983
        %v2988 = vadd.f32 %v2952, %v2986
        %v2989 = vadd.f32 %v2953, %v2987
        %s2990 = sld [smem:[#allocation3 + $0xe5]]
        %v2991 = vstv %s2990
        %v2992 = vmul.f32 %v2991, %v2982
        %v2993 = vmul.f32 %v2991, %v2983
        %v2994 = vadd.f32 %v2958, %v2992
        %v2995 = vadd.f32 %v2959, %v2993
        %s2996 = sld [smem:[#allocation3 + $0xe6]]
        %v2997 = vstv %s2996
        %v2998 = vmul.f32 %v2997, %v2982
        %v2999 = vmul.f32 %v2997, %v2983
        %v3000 = vadd.f32 %v2964, %v2998
        %v3001 = vadd.f32 %v2965, %v2999
        %s3002 = sld [smem:[#allocation3 + $0xe7]]
        %v3003 = vstv %s3002
        %v3004 = vmul.f32 %v3003, %v2982
        %v3005 = vmul.f32 %v3003, %v2983
        %v3006 = vadd.f32 %v2970, %v3004
        %v3007 = vadd.f32 %v2971, %v3005
        %v3008 = vld [vmem:[#allocation2 + $0x1] sm:$0x3]
        %s3009 = sld [smem:[#allocation3 + $0xe8]]
        %v3010 = vstv %s3009
        %v3011 = vmul.f32 %v3010, %v3008
        %v3013 = vperm.slane %v3011, 0
        %v3014 = vperm.slane %v3011, 1
        %v3017 = vadd.f32 %v2988, %v3013
        %v3018 = vadd.f32 %v2989, %v3014
        %s3019 = sld [smem:[#allocation3 + $0xe9]]
        %v3020 = vstv %s3019
        %v3021 = vmul.f32 %v3020, %v3008
        %v3023 = vperm.slane %v3021, 0
        %v3024 = vperm.slane %v3021, 1
        %v3027 = vadd.f32 %v2994, %v3023
        %v3028 = vadd.f32 %v2995, %v3024
        %s3029 = sld [smem:[#allocation3 + $0xea]]
        %v3030 = vstv %s3029
        %v3031 = vmul.f32 %v3030, %v3008
        %v3033 = vperm.slane %v3031, 0
        %v3034 = vperm.slane %v3031, 1
        %v3037 = vadd.f32 %v3000, %v3033
        %v3038 = vadd.f32 %v3001, %v3034
        %s3039 = sld [smem:[#allocation3 + $0xeb]]
        %v3040 = vstv %s3039
        %v3041 = vmul.f32 %v3040, %v3008
        %v3043 = vperm.slane %v3041, 0
        %v3044 = vperm.slane %v3041, 1
        %v3047 = vadd.f32 %v3006, %v3043
        %v3048 = vadd.f32 %v3007, %v3044
        %v3049 = vld [vmem:[#allocation2 + $0x1] sm:$0x7]
        %v3051 = vperm.slane %v3049, 0
        %v3052 = vperm.slane %v3049, 1
        %v3053 = vperm.slane %v3049, 2
        %3054 = vrot.lane.b32.xlu0 %v3051, 127
        %v3055 = vpop.permute.xlu0 %3054
        %3056 = vrot.lane.b32.xlu0 %v3052, 127
        %v3057 = vpop.permute.xlu0 %3056
        %3058 = vrot.lane.b32.xlu0 %v3053, 127
        %v3059 = vpop.permute.xlu0 %3058
        %v3060 = vsel %vm525, %v3055, %v3057
        %v3061 = vsel %vm525, %v3057, %v3059
        %v3064 = vsel %vm274, %v3060, 0.0
        %v3065 = vsel %vm275, %v3061, 0.0
        %s3066 = sld [smem:[#allocation3 + $0xec]]
        %v3067 = vstv %s3066
        %v3068 = vmul.f32 %v3067, %v3064
        %v3069 = vmul.f32 %v3067, %v3065
        %v3070 = vadd.f32 %v3017, %v3068
        %v3071 = vadd.f32 %v3018, %v3069
        %s3072 = sld [smem:[#allocation3 + $0xed]]
        %v3073 = vstv %s3072
        %v3074 = vmul.f32 %v3073, %v3064
        %v3075 = vmul.f32 %v3073, %v3065
        %v3076 = vadd.f32 %v3027, %v3074
        %v3077 = vadd.f32 %v3028, %v3075
        %s3078 = sld [smem:[#allocation3 + $0xee]]
        %v3079 = vstv %s3078
        %v3080 = vmul.f32 %v3079, %v3064
        %v3081 = vmul.f32 %v3079, %v3065
        %v3082 = vadd.f32 %v3037, %v3080
        %v3083 = vadd.f32 %v3038, %v3081
        %s3084 = sld [smem:[#allocation3 + $0xef]]
        %v3085 = vstv %s3084
        %v3086 = vmul.f32 %v3085, %v3064
        %v3087 = vmul.f32 %v3085, %v3065
        %v3088 = vadd.f32 %v3047, %v3086
        %v3089 = vadd.f32 %v3048, %v3087
        %3090 = vrot.lane.b32.xlu0 %v3051, 113
        %v3091 = vpop.permute.xlu0 %3090
        %3092 = vrot.lane.b32.xlu0 %v3052, 113
        %v3093 = vpop.permute.xlu0 %3092
        %3094 = vrot.lane.b32.xlu0 %v3053, 113
        %v3095 = vpop.permute.xlu0 %3094
        %v3096 = vsel %vm562, %v3091, %v3093
        %v3097 = vsel %vm562, %v3093, %v3095
        %v3100 = vsel %vm272, %v3096, 0.0
        %v3101 = vsel %vm273, %v3097, 0.0
        %s3102 = sld [smem:[#allocation3 + $0xf0]]
        %v3103 = vstv %s3102
        %v3104 = vmul.f32 %v3103, %v3100
        %v3105 = vmul.f32 %v3103, %v3101
        %v3106 = vadd.f32 %v3070, %v3104
        %v3107 = vadd.f32 %v3071, %v3105
        %s3108 = sld [smem:[#allocation3 + $0xf1]]
        %v3109 = vstv %s3108
        %v3110 = vmul.f32 %v3109, %v3100
        %v3111 = vmul.f32 %v3109, %v3101
        %v3112 = vadd.f32 %v3076, %v3110
        %v3113 = vadd.f32 %v3077, %v3111
        %s3114 = sld [smem:[#allocation3 + $0xf2]]
        %v3115 = vstv %s3114
        %v3116 = vmul.f32 %v3115, %v3100
        %v3117 = vmul.f32 %v3115, %v3101
        %v3118 = vadd.f32 %v3082, %v3116
        %v3119 = vadd.f32 %v3083, %v3117
        %s3120 = sld [smem:[#allocation3 + $0xf3]]
        %v3121 = vstv %s3120
        %v3122 = vmul.f32 %v3121, %v3100
        %v3123 = vmul.f32 %v3121, %v3101
        %v3124 = vadd.f32 %v3088, %v3122
        %v3125 = vadd.f32 %v3089, %v3123
        %s3126 = sld [smem:[#allocation3 + $0xf4]]
        %v3127 = vstv %s3126
        %v3128 = vmul.f32 %v3127, %v3049
        %v3130 = vperm.slane %v3128, 0
        %v3131 = vperm.slane %v3128, 1
        %v3132 = vperm.slane %v3128, 2
        %3133 = vrot.lane.b32.xlu0 %v3130, 112
        %v3134 = vpop.permute.xlu0 %3133
        %3135 = vrot.lane.b32.xlu0 %v3131, 112
        %v3136 = vpop.permute.xlu0 %3135
        %3137 = vrot.lane.b32.xlu0 %v3132, 112
        %v3138 = vpop.permute.xlu0 %3137
        %v3139 = vsel %vm606, %v3134, %v3136
        %v3140 = vsel %vm606, %v3136, %v3138
        %v3143 = vadd.f32 %v3106, %v3139
        %v3144 = vadd.f32 %v3107, %v3140
        %s3145 = sld [smem:[#allocation3 + $0xf5]]
        %v3146 = vstv %s3145
        %v3147 = vmul.f32 %v3146, %v3049
        %v3149 = vperm.slane %v3147, 0
        %v3150 = vperm.slane %v3147, 1
        %v3151 = vperm.slane %v3147, 2
        %3152 = vrot.lane.b32.xlu0 %v3149, 112
        %v3153 = vpop.permute.xlu0 %3152
        %3154 = vrot.lane.b32.xlu0 %v3150, 112
        %v3155 = vpop.permute.xlu0 %3154
        %3156 = vrot.lane.b32.xlu0 %v3151, 112
        %v3157 = vpop.permute.xlu0 %3156
        %v3158 = vsel %vm606, %v3153, %v3155
        %v3159 = vsel %vm606, %v3155, %v3157
        %v3162 = vadd.f32 %v3112, %v3158
        %v3163 = vadd.f32 %v3113, %v3159
        %s3164 = sld [smem:[#allocation3 + $0xf6]]
        %v3165 = vstv %s3164
        %v3166 = vmul.f32 %v3165, %v3049
        %v3168 = vperm.slane %v3166, 0
        %v3169 = vperm.slane %v3166, 1
        %v3170 = vperm.slane %v3166, 2
        %3171 = vrot.lane.b32.xlu0 %v3168, 112
        %v3172 = vpop.permute.xlu0 %3171
        %3173 = vrot.lane.b32.xlu0 %v3169, 112
        %v3174 = vpop.permute.xlu0 %3173
        %3175 = vrot.lane.b32.xlu0 %v3170, 112
        %v3176 = vpop.permute.xlu0 %3175
        %v3177 = vsel %vm606, %v3172, %v3174
        %v3178 = vsel %vm606, %v3174, %v3176
        %v3181 = vadd.f32 %v3118, %v3177
        %v3182 = vadd.f32 %v3119, %v3178
        %s3183 = sld [smem:[#allocation3 + $0xf7]]
        %v3184 = vstv %s3183
        %v3185 = vmul.f32 %v3184, %v3049
        %v3187 = vperm.slane %v3185, 0
        %v3188 = vperm.slane %v3185, 1
        %v3189 = vperm.slane %v3185, 2
        %3190 = vrot.lane.b32.xlu0 %v3187, 112
        %v3191 = vpop.permute.xlu0 %3190
        %3192 = vrot.lane.b32.xlu0 %v3188, 112
        %v3193 = vpop.permute.xlu0 %3192
        %3194 = vrot.lane.b32.xlu0 %v3189, 112
        %v3195 = vpop.permute.xlu0 %3194
        %v3196 = vsel %vm606, %v3191, %v3193
        %v3197 = vsel %vm606, %v3193, %v3195
        %v3200 = vadd.f32 %v3124, %v3196
        %v3201 = vadd.f32 %v3125, %v3197
        %3202 = vrot.lane.b32.xlu0 %v3051, 111
        %v3203 = vpop.permute.xlu0 %3202
        %3204 = vrot.lane.b32.xlu0 %v3052, 111
        %v3205 = vpop.permute.xlu0 %3204
        %3206 = vrot.lane.b32.xlu0 %v3053, 111
        %v3207 = vpop.permute.xlu0 %3206
        %v3208 = vsel %vm676, %v3203, %v3205
        %v3209 = vsel %vm676, %v3205, %v3207
        %v3212 = vsel %vm274, %v3208, 0.0
        %v3213 = vsel %vm275, %v3209, 0.0
        %s3214 = sld [smem:[#allocation3 + $0xf8]]
        %v3215 = vstv %s3214
        %v3216 = vmul.f32 %v3215, %v3212
        %v3217 = vmul.f32 %v3215, %v3213
        %v3218 = vadd.f32 %v3143, %v3216
        %v3219 = vadd.f32 %v3144, %v3217
        %s3220 = sld [smem:[#allocation3 + $0xf9]]
        %v3221 = vstv %s3220
        %v3222 = vmul.f32 %v3221, %v3212
        %v3223 = vmul.f32 %v3221, %v3213
        %v3224 = vadd.f32 %v3162, %v3222
        %v3225 = vadd.f32 %v3163, %v3223
        %s3226 = sld [smem:[#allocation3 + $0xfa]]
        %v3227 = vstv %s3226
        %v3228 = vmul.f32 %v3227, %v3212
        %v3229 = vmul.f32 %v3227, %v3213
        %v3230 = vadd.f32 %v3181, %v3228
        %v3231 = vadd.f32 %v3182, %v3229
        %s3232 = sld [smem:[#allocation3 + $0xfb]]
        %v3233 = vstv %s3232
        %v3234 = vmul.f32 %v3233, %v3212
        %v3235 = vmul.f32 %v3233, %v3213
        %v3236 = vadd.f32 %v3200, %v3234
        %v3237 = vadd.f32 %v3201, %v3235
        %s3238 = scalar_lea.vmem %s234, 3
        %v3239 = vld [vmem:[%s3238] ss:$4 sm:$0x3]
        %3240 = vst.msk [vmem:[#allocation2 + $0x1] sm:$0x3] %vm278, %v3239
        %v3241 = vld [vmem:[#allocation2] sm:$0x7]
        %v3243 = vperm.slane %v3241, 0
        %v3244 = vperm.slane %v3241, 1
        %v3245 = vperm.slane %v3241, 2
        %3246 = vrot.lane.b32.xlu0 %v3243, 17
        %v3247 = vpop.permute.xlu0 %3246
        %3248 = vrot.lane.b32.xlu0 %v3244, 17
        %v3249 = vpop.permute.xlu0 %3248
        %3250 = vrot.lane.b32.xlu0 %v3245, 17
        %v3251 = vpop.permute.xlu0 %3250
        %v3252 = vsel %vm291, %v3247, %v3249
        %v3253 = vsel %vm291, %v3249, %v3251
        %v3256 = vsel %vm272, %v3252, 0.0
        %v3257 = vsel %vm273, %v3253, 0.0
        %s3258 = sld [smem:[#allocation3 + $0xfc]]
        %v3259 = vstv %s3258
        %v3260 = vmul.f32 %v3259, %v3256
        %v3261 = vmul.f32 %v3259, %v3257
        %v3262 = vadd.f32 %v3218, %v3260
        %v3263 = vadd.f32 %v3219, %v3261
        %s3264 = sld [smem:[#allocation3 + $0xfd]]
        %v3265 = vstv %s3264
        %v3266 = vmul.f32 %v3265, %v3256
        %v3267 = vmul.f32 %v3265, %v3257
        %v3268 = vadd.f32 %v3224, %v3266
        %v3269 = vadd.f32 %v3225, %v3267
        %s3270 = sld [smem:[#allocation3 + $0xfe]]
        %v3271 = vstv %s3270
        %v3272 = vmul.f32 %v3271, %v3256
        %v3273 = vmul.f32 %v3271, %v3257
        %v3274 = vadd.f32 %v3230, %v3272
        %v3275 = vadd.f32 %v3231, %v3273
        %s3276 = sld [smem:[#allocation3 + $0xff]]
        %v3277 = vstv %s3276
        %v3278 = vmul.f32 %v3277, %v3256
        %v3279 = vmul.f32 %v3277, %v3257
        %v3280 = vadd.f32 %v3236, %v3278
        %v3281 = vadd.f32 %v3237, %v3279
        %s3282 = sld [smem:[#allocation3 + $0x100]]
        %v3283 = vstv %s3282
        %v3284 = vmul.f32 %v3283, %v3241
        %v3286 = vperm.slane %v3284, 0
        %v3287 = vperm.slane %v3284, 1
        %v3288 = vperm.slane %v3284, 2
        %3289 = vrot.lane.b32.xlu0 %v3286, 16
        %v3290 = vpop.permute.xlu0 %3289
        %3291 = vrot.lane.b32.xlu0 %v3287, 16
        %v3292 = vpop.permute.xlu0 %3291
        %3293 = vrot.lane.b32.xlu0 %v3288, 16
        %v3294 = vpop.permute.xlu0 %3293
        %v3295 = vsel %vm335, %v3290, %v3292
        %v3296 = vsel %vm335, %v3292, %v3294
        %v3299 = vadd.f32 %v3262, %v3295
        %v3300 = vadd.f32 %v3263, %v3296
        %s3301 = sld [smem:[#allocation3 + $0x101]]
        %v3302 = vstv %s3301
        %v3303 = vmul.f32 %v3302, %v3241
        %v3305 = vperm.slane %v3303, 0
        %v3306 = vperm.slane %v3303, 1
        %v3307 = vperm.slane %v3303, 2
        %3308 = vrot.lane.b32.xlu0 %v3305, 16
        %v3309 = vpop.permute.xlu0 %3308
        %3310 = vrot.lane.b32.xlu0 %v3306, 16
        %v3311 = vpop.permute.xlu0 %3310
        %3312 = vrot.lane.b32.xlu0 %v3307, 16
        %v3313 = vpop.permute.xlu0 %3312
        %v3314 = vsel %vm335, %v3309, %v3311
        %v3315 = vsel %vm335, %v3311, %v3313
        %v3318 = vadd.f32 %v3268, %v3314
        %v3319 = vadd.f32 %v3269, %v3315
        %s3320 = sld [smem:[#allocation3 + $0x102]]
        %v3321 = vstv %s3320
        %v3322 = vmul.f32 %v3321, %v3241
        %v3324 = vperm.slane %v3322, 0
        %v3325 = vperm.slane %v3322, 1
        %v3326 = vperm.slane %v3322, 2
        %3327 = vrot.lane.b32.xlu0 %v3324, 16
        %v3328 = vpop.permute.xlu0 %3327
        %3329 = vrot.lane.b32.xlu0 %v3325, 16
        %v3330 = vpop.permute.xlu0 %3329
        %3331 = vrot.lane.b32.xlu0 %v3326, 16
        %v3332 = vpop.permute.xlu0 %3331
        %v3333 = vsel %vm335, %v3328, %v3330
        %v3334 = vsel %vm335, %v3330, %v3332
        %v3337 = vadd.f32 %v3274, %v3333
        %v3338 = vadd.f32 %v3275, %v3334
        %s3339 = sld [smem:[#allocation3 + $0x103]]
        %v3340 = vstv %s3339
        %v3341 = vmul.f32 %v3340, %v3241
        %v3343 = vperm.slane %v3341, 0
        %v3344 = vperm.slane %v3341, 1
        %v3345 = vperm.slane %v3341, 2
        %3346 = vrot.lane.b32.xlu0 %v3343, 16
        %v3347 = vpop.permute.xlu0 %3346
        %3348 = vrot.lane.b32.xlu0 %v3344, 16
        %v3349 = vpop.permute.xlu0 %3348
        %3350 = vrot.lane.b32.xlu0 %v3345, 16
        %v3351 = vpop.permute.xlu0 %3350
        %v3352 = vsel %vm335, %v3347, %v3349
        %v3353 = vsel %vm335, %v3349, %v3351
        %v3356 = vadd.f32 %v3280, %v3352
        %v3357 = vadd.f32 %v3281, %v3353
        %3358 = vrot.lane.b32.xlu0 %v3243, 15
        %v3359 = vpop.permute.xlu0 %3358
        %3360 = vrot.lane.b32.xlu0 %v3244, 15
        %v3361 = vpop.permute.xlu0 %3360
        %3362 = vrot.lane.b32.xlu0 %v3245, 15
        %v3363 = vpop.permute.xlu0 %3362
        %v3364 = vsel %vm405, %v3359, %v3361
        %v3365 = vsel %vm405, %v3361, %v3363
        %v3368 = vsel %vm274, %v3364, 0.0
        %v3369 = vsel %vm275, %v3365, 0.0
        %s3370 = sld [smem:[#allocation3 + $0x104]]
        %v3371 = vstv %s3370
        %v3372 = vmul.f32 %v3371, %v3368
        %v3373 = vmul.f32 %v3371, %v3369
        %v3374 = vadd.f32 %v3299, %v3372
        %v3375 = vadd.f32 %v3300, %v3373
        %s3376 = sld [smem:[#allocation3 + $0x105]]
        %v3377 = vstv %s3376
        %v3378 = vmul.f32 %v3377, %v3368
        %v3379 = vmul.f32 %v3377, %v3369
        %v3380 = vadd.f32 %v3318, %v3378
        %v3381 = vadd.f32 %v3319, %v3379
        %s3382 = sld [smem:[#allocation3 + $0x106]]
        %v3383 = vstv %s3382
        %v3384 = vmul.f32 %v3383, %v3368
        %v3385 = vmul.f32 %v3383, %v3369
        %v3386 = vadd.f32 %v3337, %v3384
        %v3387 = vadd.f32 %v3338, %v3385
        %s3388 = sld [smem:[#allocation3 + $0x107]]
        %v3389 = vstv %s3388
        %v3390 = vmul.f32 %v3389, %v3368
        %v3391 = vmul.f32 %v3389, %v3369
        %v3392 = vadd.f32 %v3356, %v3390
        %v3393 = vadd.f32 %v3357, %v3391
        %3394 = vrot.lane.b32.xlu0 %v3243, 1
        %v3395 = vpop.permute.xlu0 %3394
        %3396 = vrot.lane.b32.xlu0 %v3244, 1
        %v3397 = vpop.permute.xlu0 %3396
        %3398 = vrot.lane.b32.xlu0 %v3245, 1
        %v3399 = vpop.permute.xlu0 %3398
        %v3400 = vsel %vm442, %v3395, %v3397
        %v3401 = vsel %vm442, %v3397, %v3399
        %v3404 = vsel %vm272, %v3400, 0.0
        %v3405 = vsel %vm273, %v3401, 0.0
        %s3406 = sld [smem:[#allocation3 + $0x108]]
        %v3407 = vstv %s3406
        %v3408 = vmul.f32 %v3407, %v3404
        %v3409 = vmul.f32 %v3407, %v3405
        %v3410 = vadd.f32 %v3374, %v3408
        %v3411 = vadd.f32 %v3375, %v3409
        %s3412 = sld [smem:[#allocation3 + $0x109]]
        %v3413 = vstv %s3412
        %v3414 = vmul.f32 %v3413, %v3404
        %v3415 = vmul.f32 %v3413, %v3405
        %v3416 = vadd.f32 %v3380, %v3414
        %v3417 = vadd.f32 %v3381, %v3415
        %s3418 = sld [smem:[#allocation3 + $0x10a]]
        %v3419 = vstv %s3418
        %v3420 = vmul.f32 %v3419, %v3404
        %v3421 = vmul.f32 %v3419, %v3405
        %v3422 = vadd.f32 %v3386, %v3420
        %v3423 = vadd.f32 %v3387, %v3421
        %s3424 = sld [smem:[#allocation3 + $0x10b]]
        %v3425 = vstv %s3424
        %v3426 = vmul.f32 %v3425, %v3404
        %v3427 = vmul.f32 %v3425, %v3405
        %v3428 = vadd.f32 %v3392, %v3426
        %v3429 = vadd.f32 %v3393, %v3427
        %v3430 = vld [vmem:[#allocation2 + $0x1] sm:$0x3]
        %s3431 = sld [smem:[#allocation3 + $0x10c]]
        %v3432 = vstv %s3431
        %v3433 = vmul.f32 %v3432, %v3430
        %v3435 = vperm.slane %v3433, 0
        %v3436 = vperm.slane %v3433, 1
        %v3439 = vadd.f32 %v3410, %v3435
        %v3440 = vadd.f32 %v3411, %v3436
        %s3441 = sld [smem:[#allocation3 + $0x10d]]
        %v3442 = vstv %s3441
        %v3443 = vmul.f32 %v3442, %v3430
        %v3445 = vperm.slane %v3443, 0
        %v3446 = vperm.slane %v3443, 1
        %v3449 = vadd.f32 %v3416, %v3445
        %v3450 = vadd.f32 %v3417, %v3446
        %s3451 = sld [smem:[#allocation3 + $0x10e]]
        %v3452 = vstv %s3451
        %v3453 = vmul.f32 %v3452, %v3430
        %v3455 = vperm.slane %v3453, 0
        %v3456 = vperm.slane %v3453, 1
        %v3459 = vadd.f32 %v3422, %v3455
        %v3460 = vadd.f32 %v3423, %v3456
        %s3461 = sld [smem:[#allocation3 + $0x10f]]
        %v3462 = vstv %s3461
        %v3463 = vmul.f32 %v3462, %v3430
        %v3465 = vperm.slane %v3463, 0
        %v3466 = vperm.slane %v3463, 1
        %v3469 = vadd.f32 %v3428, %v3465
        %v3470 = vadd.f32 %v3429, %v3466
        %v3471 = vld [vmem:[#allocation2 + $0x1] sm:$0x7]
        %v3473 = vperm.slane %v3471, 0
        %v3474 = vperm.slane %v3471, 1
        %v3475 = vperm.slane %v3471, 2
        %3476 = vrot.lane.b32.xlu0 %v3473, 127
        %v3477 = vpop.permute.xlu0 %3476
        %3478 = vrot.lane.b32.xlu0 %v3474, 127
        %v3479 = vpop.permute.xlu0 %3478
        %3480 = vrot.lane.b32.xlu0 %v3475, 127
        %v3481 = vpop.permute.xlu0 %3480
        %v3482 = vsel %vm525, %v3477, %v3479
        %v3483 = vsel %vm525, %v3479, %v3481
        %v3486 = vsel %vm274, %v3482, 0.0
        %v3487 = vsel %vm275, %v3483, 0.0
        %s3488 = sld [smem:[#allocation3 + $0x110]]
        %v3489 = vstv %s3488
        %v3490 = vmul.f32 %v3489, %v3486
        %v3491 = vmul.f32 %v3489, %v3487
        %v3492 = vadd.f32 %v3439, %v3490
        %v3493 = vadd.f32 %v3440, %v3491
        %s3494 = sld [smem:[#allocation3 + $0x111]]
        %v3495 = vstv %s3494
        %v3496 = vmul.f32 %v3495, %v3486
        %v3497 = vmul.f32 %v3495, %v3487
        %v3498 = vadd.f32 %v3449, %v3496
        %v3499 = vadd.f32 %v3450, %v3497
        %s3500 = sld [smem:[#allocation3 + $0x112]]
        %v3501 = vstv %s3500
        %v3502 = vmul.f32 %v3501, %v3486
        %v3503 = vmul.f32 %v3501, %v3487
        %v3504 = vadd.f32 %v3459, %v3502
        %v3505 = vadd.f32 %v3460, %v3503
        %s3506 = sld [smem:[#allocation3 + $0x113]]
        %v3507 = vstv %s3506
        %v3508 = vmul.f32 %v3507, %v3486
        %v3509 = vmul.f32 %v3507, %v3487
        %v3510 = vadd.f32 %v3469, %v3508
        %v3511 = vadd.f32 %v3470, %v3509
        %3512 = vrot.lane.b32.xlu0 %v3473, 113
        %v3513 = vpop.permute.xlu0 %3512
        %3514 = vrot.lane.b32.xlu0 %v3474, 113
        %v3515 = vpop.permute.xlu0 %3514
        %3516 = vrot.lane.b32.xlu0 %v3475, 113
        %v3517 = vpop.permute.xlu0 %3516
        %v3518 = vsel %vm562, %v3513, %v3515
        %v3519 = vsel %vm562, %v3515, %v3517
        %v3522 = vsel %vm272, %v3518, 0.0
        %v3523 = vsel %vm273, %v3519, 0.0
        %s3524 = sld [smem:[#allocation3 + $0x114]]
        %v3525 = vstv %s3524
        %v3526 = vmul.f32 %v3525, %v3522
        %v3527 = vmul.f32 %v3525, %v3523
        %v3528 = vadd.f32 %v3492, %v3526
        %v3529 = vadd.f32 %v3493, %v3527
        %s3530 = sld [smem:[#allocation3 + $0x115]]
        %v3531 = vstv %s3530
        %v3532 = vmul.f32 %v3531, %v3522
        %v3533 = vmul.f32 %v3531, %v3523
        %v3534 = vadd.f32 %v3498, %v3532
        %v3535 = vadd.f32 %v3499, %v3533
        %s3536 = sld [smem:[#allocation3 + $0x116]]
        %v3537 = vstv %s3536
        %v3538 = vmul.f32 %v3537, %v3522
        %v3539 = vmul.f32 %v3537, %v3523
        %v3540 = vadd.f32 %v3504, %v3538
        %v3541 = vadd.f32 %v3505, %v3539
        %s3542 = sld [smem:[#allocation3 + $0x117]]
        %v3543 = vstv %s3542
        %v3544 = vmul.f32 %v3543, %v3522
        %v3545 = vmul.f32 %v3543, %v3523
        %v3546 = vadd.f32 %v3510, %v3544
        %v3547 = vadd.f32 %v3511, %v3545
        %s3548 = sld [smem:[#allocation3 + $0x118]]
        %v3549 = vstv %s3548
        %v3550 = vmul.f32 %v3549, %v3471
        %v3552 = vperm.slane %v3550, 0
        %v3553 = vperm.slane %v3550, 1
        %v3554 = vperm.slane %v3550, 2
        %3555 = vrot.lane.b32.xlu0 %v3552, 112
        %v3556 = vpop.permute.xlu0 %3555
        %3557 = vrot.lane.b32.xlu0 %v3553, 112
        %v3558 = vpop.permute.xlu0 %3557
        %3559 = vrot.lane.b32.xlu0 %v3554, 112
        %v3560 = vpop.permute.xlu0 %3559
        %v3561 = vsel %vm606, %v3556, %v3558
        %v3562 = vsel %vm606, %v3558, %v3560
        %v3565 = vadd.f32 %v3528, %v3561
        %v3566 = vadd.f32 %v3529, %v3562
        %s3567 = sld [smem:[#allocation3 + $0x119]]
        %v3568 = vstv %s3567
        %v3569 = vmul.f32 %v3568, %v3471
        %v3571 = vperm.slane %v3569, 0
        %v3572 = vperm.slane %v3569, 1
        %v3573 = vperm.slane %v3569, 2
        %3574 = vrot.lane.b32.xlu0 %v3571, 112
        %v3575 = vpop.permute.xlu0 %3574
        %3576 = vrot.lane.b32.xlu0 %v3572, 112
        %v3577 = vpop.permute.xlu0 %3576
        %3578 = vrot.lane.b32.xlu0 %v3573, 112
        %v3579 = vpop.permute.xlu0 %3578
        %v3580 = vsel %vm606, %v3575, %v3577
        %v3581 = vsel %vm606, %v3577, %v3579
        %v3584 = vadd.f32 %v3534, %v3580
        %v3585 = vadd.f32 %v3535, %v3581
        %s3586 = sld [smem:[#allocation3 + $0x11a]]
        %v3587 = vstv %s3586
        %v3588 = vmul.f32 %v3587, %v3471
        %v3590 = vperm.slane %v3588, 0
        %v3591 = vperm.slane %v3588, 1
        %v3592 = vperm.slane %v3588, 2
        %3593 = vrot.lane.b32.xlu0 %v3590, 112
        %v3594 = vpop.permute.xlu0 %3593
        %3595 = vrot.lane.b32.xlu0 %v3591, 112
        %v3596 = vpop.permute.xlu0 %3595
        %3597 = vrot.lane.b32.xlu0 %v3592, 112
        %v3598 = vpop.permute.xlu0 %3597
        %v3599 = vsel %vm606, %v3594, %v3596
        %v3600 = vsel %vm606, %v3596, %v3598
        %v3603 = vadd.f32 %v3540, %v3599
        %v3604 = vadd.f32 %v3541, %v3600
        %s3605 = sld [smem:[#allocation3 + $0x11b]]
        %v3606 = vstv %s3605
        %v3607 = vmul.f32 %v3606, %v3471
        %v3609 = vperm.slane %v3607, 0
        %v3610 = vperm.slane %v3607, 1
        %v3611 = vperm.slane %v3607, 2
        %3612 = vrot.lane.b32.xlu0 %v3609, 112
        %v3613 = vpop.permute.xlu0 %3612
        %3614 = vrot.lane.b32.xlu0 %v3610, 112
        %v3615 = vpop.permute.xlu0 %3614
        %3616 = vrot.lane.b32.xlu0 %v3611, 112
        %v3617 = vpop.permute.xlu0 %3616
        %v3618 = vsel %vm606, %v3613, %v3615
        %v3619 = vsel %vm606, %v3615, %v3617
        %v3622 = vadd.f32 %v3546, %v3618
        %v3623 = vadd.f32 %v3547, %v3619
        %3624 = vrot.lane.b32.xlu0 %v3473, 111
        %v3625 = vpop.permute.xlu0 %3624
        %3626 = vrot.lane.b32.xlu0 %v3474, 111
        %v3627 = vpop.permute.xlu0 %3626
        %3628 = vrot.lane.b32.xlu0 %v3475, 111
        %v3629 = vpop.permute.xlu0 %3628
        %v3630 = vsel %vm676, %v3625, %v3627
        %v3631 = vsel %vm676, %v3627, %v3629
        %v3634 = vsel %vm274, %v3630, 0.0
        %v3635 = vsel %vm275, %v3631, 0.0
        %s3636 = sld [smem:[#allocation3 + $0x11c]]
        %v3637 = vstv %s3636
        %v3638 = vmul.f32 %v3637, %v3634
        %v3639 = vmul.f32 %v3637, %v3635
        %v3640 = vadd.f32 %v3565, %v3638
        %v3641 = vadd.f32 %v3566, %v3639
        %s3642 = sld [smem:[#allocation3 + $0x11d]]
        %v3643 = vstv %s3642
        %v3644 = vmul.f32 %v3643, %v3634
        %v3645 = vmul.f32 %v3643, %v3635
        %v3646 = vadd.f32 %v3584, %v3644
        %v3647 = vadd.f32 %v3585, %v3645
        %s3648 = sld [smem:[#allocation3 + $0x11e]]
        %v3649 = vstv %s3648
        %v3650 = vmul.f32 %v3649, %v3634
        %v3651 = vmul.f32 %v3649, %v3635
        %v3652 = vadd.f32 %v3603, %v3650
        %v3653 = vadd.f32 %v3604, %v3651
        %s3654 = sld [smem:[#allocation3 + $0x11f]]
        %v3655 = vstv %s3654
        %v3656 = vmul.f32 %v3655, %v3634
        %v3657 = vmul.f32 %v3655, %v3635
        %v3658 = vadd.f32 %v3622, %v3656
        %v3659 = vadd.f32 %v3623, %v3657
        %v3660 = vlaneseq
        %v3661 = vshrl.u32 %v3660, 7
        %v3662 = vadd.s32 %v3661, 8
        %v3663 = vadd.s32 %v3661, 16
        %v3664 = vadd.s32 %v3661, 24
        %v3665 = vadd.s32 %v3661, 32
        %v3666 = vadd.s32 %v3661, 40
        %v3667 = vadd.s32 %v3661, 48
        %v3668 = vadd.s32 %v3661, 56
        %v3669 = vadd.s32 %v3661, 64
        %v3670 = vadd.s32 %v3661, 72
        %v3671 = vadd.s32 %v3661, 80
        %v3672 = vadd.s32 %v3661, 88
        %v3673 = vadd.s32 %v3661, 96
        %v3674 = vadd.s32 %v3661, 104
        %v3675 = vadd.s32 %v3661, 112
        %v3676 = vadd.s32 %v3661, 120
        %v3677 = vadd.s32 %v3661, 128
        %v3678 = vadd.s32 %v3661, 136
        %v3679 = vadd.s32 %v3661, 144
        %v3680 = vadd.s32 %v3661, 152
        %v3681 = vadd.s32 %v3661, 160
        %v3682 = vadd.s32 %v3661, 168
        %v3683 = vadd.s32 %v3661, 176
        %v3684 = vadd.s32 %v3661, 184
        %v3685 = vadd.s32 %v3661, 192
        %v3686 = vadd.s32 %v3661, 200
        %v3687 = vadd.s32 %v3661, 208
        %v3688 = vadd.s32 %v3661, 216
        %v3689 = vadd.s32 %v3661, 224
        %v3690 = vadd.s32 %v3661, 232
        %v3691 = vadd.s32 %v3661, 240
        %v3692 = vadd.s32 %v3661, 248
        %v3693 = vld [vmem:[%s229] sm:$0xff]
        %3695 = vst [vmem:[#allocation1] ss:$2 sm:$0xff] %v3693
        %v3696 = vld.sshfl [vmem:[#allocation1] sm:$0xff pattern:$0x75316420]
        %v3697 = vld.sshfl [vmem:[#allocation1 + $0x8] sm:$0xff pattern:$0x75316420]
        %v3700 = vpack.c.bf16 %v3696, %v3696
        %v3701 = vpack.c.bf16 %v3697, %v3697
        %v3702 = vld [vmem:[%s234] sm:$0xff]
        %3704 = vst [vmem:[#allocation1] ss:$2 sm:$0xff] %v3702
        %v3705 = vld.sshfl [vmem:[#allocation1] sm:$0xff pattern:$0x75316420]
        %v3706 = vld.sshfl [vmem:[#allocation1 + $0x8] sm:$0xff pattern:$0x75316420]
        %v3709 = vpack.c.bf16 %v3705, %v3705
        %v3710 = vpack.c.bf16 %v3706, %v3706
        %v3711 = vmul.f32 %v265, 1.0666667
        %v3712 = vmul.f32 %v266, 1.0666667
        %v3713 = vsub.f32 %v3711, 0.5
        %v3714 = vsub.f32 %v3712, 0.5
        %v3715 = vmul.f32 %v3640, 0.5
        %v3716 = vmul.f32 %v3641, 0.5
        %v3717 = vadd.f32 %v3713, %v3715
        %v3718 = vadd.f32 %v3714, %v3716
        %v3719 = vmul.f32 %v261, 1.0666667
        %v3720 = vmul.f32 %v262, 1.0666667
        %v3721 = vsub.f32 %v3719, 0.5
        %v3722 = vsub.f32 %v3720, 0.5
        %v3723 = vmul.f32 %v3646, 0.5
        %v3724 = vmul.f32 %v3647, 0.5
        %v3725 = vadd.f32 %v3721, %v3723
        %v3726 = vadd.f32 %v3722, %v3724
        %v3727 = vfloor.f32 %v3717
        %v3728 = vfloor.f32 %v3718
        %v3729 = vfloor.f32 %v3725
        %v3730 = vfloor.f32 %v3726
        %v3731 = vsub.f32 %v3717, %v3727
        %v3732 = vsub.f32 %v3718, %v3728
        %v3733 = vsub.f32 %v3725, %v3729
        %v3734 = vsub.f32 %v3726, %v3730
        %v3735 = vsub.f32 1.0, %v3731
        %v3736 = vsub.f32 1.0, %v3732
        %v3737 = vsub.f32 1.0, %v3733
        %v3738 = vsub.f32 1.0, %v3734
        %v3739 = vmul.f32 %v3735, %v3737
        %v3740 = vmul.f32 %v3736, %v3738
        %vm3741 = vcmp.ge.f32.partialorder %v3727, 0.0
        %vm3742 = vcmp.ge.f32.partialorder %v3728, 0.0
        %vm3743 = vcmp.le.f32.partialorder %v3727, 15.0
        %vm3744 = vcmp.le.f32.partialorder %v3728, 15.0
        %vm3745 = vmand %vm3741, %vm3743
        %vm3746 = vmand %vm3742, %vm3744
        %vm3747 = vcmp.ge.f32.partialorder %v3729, 0.0
        %vm3748 = vcmp.ge.f32.partialorder %v3730, 0.0
        %vm3749 = vmand %vm3745, %vm3747
        %vm3750 = vmand %vm3746, %vm3748
        %vm3751 = vcmp.le.f32.partialorder %v3729, 15.0
        %vm3752 = vcmp.le.f32.partialorder %v3730, 15.0
        %vm3753 = vmand %vm3749, %vm3751
        %vm3754 = vmand %vm3750, %vm3752
        %v3755 = vsel %vm3753, %v3739, 0.0
        %v3756 = vsel %vm3754, %v3740, 0.0
        %v3757 = vmax.f32 %v3727, 0.0
        %v3758 = vmax.f32 %v3728, 0.0
        %v3759 = vmin.f32 %v3757, 15.0
        %v3760 = vmin.f32 %v3758, 15.0
        %v3761 = vcvt.f32.s32.to.zero.pseudo %v3759
        %v3762 = vcvt.f32.s32.to.zero.pseudo %v3760
        %v3763 = vmax.f32 %v3729, 0.0
        %v3764 = vmax.f32 %v3730, 0.0
        %v3765 = vmin.f32 %v3763, 15.0
        %v3766 = vmin.f32 %v3764, 15.0
        %v3767 = vcvt.f32.s32.to.zero.pseudo %v3765
        %v3768 = vcvt.f32.s32.to.zero.pseudo %v3766
        %v3769 = vmul.u32 %v3767, 16
        %v3770 = vmul.u32 %v3768, 16
        %v3771 = vadd.s32 %v3769, %v3761
        %v3772 = vadd.s32 %v3770, %v3762
        %v3773 = vperm.slane %v3771, 0
        %v3774 = vperm.slane %v3772, 0
        %vm3775 = vcmp.eq.s32.totalorder %v3661, %v3773
        %vm3776 = vcmp.eq.s32.totalorder %v3661, %v3774
        %vm3777 = vcmp.eq.s32.totalorder %v3662, %v3773
        %vm3778 = vcmp.eq.s32.totalorder %v3662, %v3774
        %vm3779 = vcmp.eq.s32.totalorder %v3663, %v3773
        %vm3780 = vcmp.eq.s32.totalorder %v3663, %v3774
        %vm3781 = vcmp.eq.s32.totalorder %v3664, %v3773
        %vm3782 = vcmp.eq.s32.totalorder %v3664, %v3774
        %vm3783 = vcmp.eq.s32.totalorder %v3665, %v3773
        %vm3784 = vcmp.eq.s32.totalorder %v3665, %v3774
        %vm3785 = vcmp.eq.s32.totalorder %v3666, %v3773
        %vm3786 = vcmp.eq.s32.totalorder %v3666, %v3774
        %vm3787 = vcmp.eq.s32.totalorder %v3667, %v3773
        %vm3788 = vcmp.eq.s32.totalorder %v3667, %v3774
        %vm3789 = vcmp.eq.s32.totalorder %v3668, %v3773
        %vm3790 = vcmp.eq.s32.totalorder %v3668, %v3774
        %vm3791 = vcmp.eq.s32.totalorder %v3669, %v3773
        %vm3792 = vcmp.eq.s32.totalorder %v3669, %v3774
        %vm3793 = vcmp.eq.s32.totalorder %v3670, %v3773
        %vm3794 = vcmp.eq.s32.totalorder %v3670, %v3774
        %vm3795 = vcmp.eq.s32.totalorder %v3671, %v3773
        %vm3796 = vcmp.eq.s32.totalorder %v3671, %v3774
        %vm3797 = vcmp.eq.s32.totalorder %v3672, %v3773
        %vm3798 = vcmp.eq.s32.totalorder %v3672, %v3774
        %vm3799 = vcmp.eq.s32.totalorder %v3673, %v3773
        %vm3800 = vcmp.eq.s32.totalorder %v3673, %v3774
        %vm3801 = vcmp.eq.s32.totalorder %v3674, %v3773
        %vm3802 = vcmp.eq.s32.totalorder %v3674, %v3774
        %vm3803 = vcmp.eq.s32.totalorder %v3675, %v3773
        %vm3804 = vcmp.eq.s32.totalorder %v3675, %v3774
        %vm3805 = vcmp.eq.s32.totalorder %v3676, %v3773
        %vm3806 = vcmp.eq.s32.totalorder %v3676, %v3774
        %vm3807 = vcmp.eq.s32.totalorder %v3677, %v3773
        %vm3808 = vcmp.eq.s32.totalorder %v3677, %v3774
        %vm3809 = vcmp.eq.s32.totalorder %v3678, %v3773
        %vm3810 = vcmp.eq.s32.totalorder %v3678, %v3774
        %vm3811 = vcmp.eq.s32.totalorder %v3679, %v3773
        %vm3812 = vcmp.eq.s32.totalorder %v3679, %v3774
        %vm3813 = vcmp.eq.s32.totalorder %v3680, %v3773
        %vm3814 = vcmp.eq.s32.totalorder %v3680, %v3774
        %vm3815 = vcmp.eq.s32.totalorder %v3681, %v3773
        %vm3816 = vcmp.eq.s32.totalorder %v3681, %v3774
        %vm3817 = vcmp.eq.s32.totalorder %v3682, %v3773
        %vm3818 = vcmp.eq.s32.totalorder %v3682, %v3774
        %vm3819 = vcmp.eq.s32.totalorder %v3683, %v3773
        %vm3820 = vcmp.eq.s32.totalorder %v3683, %v3774
        %vm3821 = vcmp.eq.s32.totalorder %v3684, %v3773
        %vm3822 = vcmp.eq.s32.totalorder %v3684, %v3774
        %vm3823 = vcmp.eq.s32.totalorder %v3685, %v3773
        %vm3824 = vcmp.eq.s32.totalorder %v3685, %v3774
        %vm3825 = vcmp.eq.s32.totalorder %v3686, %v3773
        %vm3826 = vcmp.eq.s32.totalorder %v3686, %v3774
        %vm3827 = vcmp.eq.s32.totalorder %v3687, %v3773
        %vm3828 = vcmp.eq.s32.totalorder %v3687, %v3774
        %vm3829 = vcmp.eq.s32.totalorder %v3688, %v3773
        %vm3830 = vcmp.eq.s32.totalorder %v3688, %v3774
        %vm3831 = vcmp.eq.s32.totalorder %v3689, %v3773
        %vm3832 = vcmp.eq.s32.totalorder %v3689, %v3774
        %vm3833 = vcmp.eq.s32.totalorder %v3690, %v3773
        %vm3834 = vcmp.eq.s32.totalorder %v3690, %v3774
        %vm3835 = vcmp.eq.s32.totalorder %v3691, %v3773
        %vm3836 = vcmp.eq.s32.totalorder %v3691, %v3774
        %vm3837 = vcmp.eq.s32.totalorder %v3692, %v3773
        %vm3838 = vcmp.eq.s32.totalorder %v3692, %v3774
        %v3839 = vperm.slane %v3755, 0
        %v3840 = vperm.slane %v3756, 0
        %v3841 = vsel %vm3775, %v3839, 0.0
        %v3842 = vsel %vm3776, %v3840, 0.0
        %v3843 = vsel %vm3777, %v3839, 0.0
        %v3844 = vsel %vm3778, %v3840, 0.0
        %v3845 = vsel %vm3779, %v3839, 0.0
        %v3846 = vsel %vm3780, %v3840, 0.0
        %v3847 = vsel %vm3781, %v3839, 0.0
        %v3848 = vsel %vm3782, %v3840, 0.0
        %v3849 = vsel %vm3783, %v3839, 0.0
        %v3850 = vsel %vm3784, %v3840, 0.0
        %v3851 = vsel %vm3785, %v3839, 0.0
        %v3852 = vsel %vm3786, %v3840, 0.0
        %v3853 = vsel %vm3787, %v3839, 0.0
        %v3854 = vsel %vm3788, %v3840, 0.0
        %v3855 = vsel %vm3789, %v3839, 0.0
        %v3856 = vsel %vm3790, %v3840, 0.0
        %v3857 = vsel %vm3791, %v3839, 0.0
        %v3858 = vsel %vm3792, %v3840, 0.0
        %v3859 = vsel %vm3793, %v3839, 0.0
        %v3860 = vsel %vm3794, %v3840, 0.0
        %v3861 = vsel %vm3795, %v3839, 0.0
        %v3862 = vsel %vm3796, %v3840, 0.0
        %v3863 = vsel %vm3797, %v3839, 0.0
        %v3864 = vsel %vm3798, %v3840, 0.0
        %v3865 = vsel %vm3799, %v3839, 0.0
        %v3866 = vsel %vm3800, %v3840, 0.0
        %v3867 = vsel %vm3801, %v3839, 0.0
        %v3868 = vsel %vm3802, %v3840, 0.0
        %v3869 = vsel %vm3803, %v3839, 0.0
        %v3870 = vsel %vm3804, %v3840, 0.0
        %v3871 = vsel %vm3805, %v3839, 0.0
        %v3872 = vsel %vm3806, %v3840, 0.0
        %v3873 = vsel %vm3807, %v3839, 0.0
        %v3874 = vsel %vm3808, %v3840, 0.0
        %v3875 = vsel %vm3809, %v3839, 0.0
        %v3876 = vsel %vm3810, %v3840, 0.0
        %v3877 = vsel %vm3811, %v3839, 0.0
        %v3878 = vsel %vm3812, %v3840, 0.0
        %v3879 = vsel %vm3813, %v3839, 0.0
        %v3880 = vsel %vm3814, %v3840, 0.0
        %v3881 = vsel %vm3815, %v3839, 0.0
        %v3882 = vsel %vm3816, %v3840, 0.0
        %v3883 = vsel %vm3817, %v3839, 0.0
        %v3884 = vsel %vm3818, %v3840, 0.0
        %v3885 = vsel %vm3819, %v3839, 0.0
        %v3886 = vsel %vm3820, %v3840, 0.0
        %v3887 = vsel %vm3821, %v3839, 0.0
        %v3888 = vsel %vm3822, %v3840, 0.0
        %v3889 = vsel %vm3823, %v3839, 0.0
        %v3890 = vsel %vm3824, %v3840, 0.0
        %v3891 = vsel %vm3825, %v3839, 0.0
        %v3892 = vsel %vm3826, %v3840, 0.0
        %v3893 = vsel %vm3827, %v3839, 0.0
        %v3894 = vsel %vm3828, %v3840, 0.0
        %v3895 = vsel %vm3829, %v3839, 0.0
        %v3896 = vsel %vm3830, %v3840, 0.0
        %v3897 = vsel %vm3831, %v3839, 0.0
        %v3898 = vsel %vm3832, %v3840, 0.0
        %v3899 = vsel %vm3833, %v3839, 0.0
        %v3900 = vsel %vm3834, %v3840, 0.0
        %v3901 = vsel %vm3835, %v3839, 0.0
        %v3902 = vsel %vm3836, %v3840, 0.0
        %v3903 = vsel %vm3837, %v3839, 0.0
        %v3904 = vsel %vm3838, %v3840, 0.0
        %v3905 = vadd.f32 %v3727, 1.0
        %v3906 = vadd.f32 %v3728, 1.0
        %v3907 = vmul.f32 %v3731, %v3737
        %v3908 = vmul.f32 %v3732, %v3738
        %vm3909 = vcmp.ge.f32.partialorder %v3905, 0.0
        %vm3910 = vcmp.ge.f32.partialorder %v3906, 0.0
        %vm3911 = vcmp.le.f32.partialorder %v3905, 15.0
        %vm3912 = vcmp.le.f32.partialorder %v3906, 15.0
        %vm3913 = vmand %vm3909, %vm3911
        %vm3914 = vmand %vm3910, %vm3912
        %vm3915 = vmand %vm3913, %vm3747
        %vm3916 = vmand %vm3914, %vm3748
        %vm3917 = vmand %vm3915, %vm3751
        %vm3918 = vmand %vm3916, %vm3752
        %v3919 = vsel %vm3917, %v3907, 0.0
        %v3920 = vsel %vm3918, %v3908, 0.0
        %v3921 = vmax.f32 %v3905, 0.0
        %v3922 = vmax.f32 %v3906, 0.0
        %v3923 = vmin.f32 %v3921, 15.0
        %v3924 = vmin.f32 %v3922, 15.0
        %v3925 = vcvt.f32.s32.to.zero.pseudo %v3923
        %v3926 = vcvt.f32.s32.to.zero.pseudo %v3924
        %v3927 = vadd.s32 %v3769, %v3925
        %v3928 = vadd.s32 %v3770, %v3926
        %v3929 = vperm.slane %v3927, 0
        %v3930 = vperm.slane %v3928, 0
        %vm3931 = vcmp.eq.s32.totalorder %v3661, %v3929
        %vm3932 = vcmp.eq.s32.totalorder %v3661, %v3930
        %vm3933 = vcmp.eq.s32.totalorder %v3662, %v3929
        %vm3934 = vcmp.eq.s32.totalorder %v3662, %v3930
        %vm3935 = vcmp.eq.s32.totalorder %v3663, %v3929
        %vm3936 = vcmp.eq.s32.totalorder %v3663, %v3930
        %vm3937 = vcmp.eq.s32.totalorder %v3664, %v3929
        %vm3938 = vcmp.eq.s32.totalorder %v3664, %v3930
        %vm3939 = vcmp.eq.s32.totalorder %v3665, %v3929
        %vm3940 = vcmp.eq.s32.totalorder %v3665, %v3930
        %vm3941 = vcmp.eq.s32.totalorder %v3666, %v3929
        %vm3942 = vcmp.eq.s32.totalorder %v3666, %v3930
        %vm3943 = vcmp.eq.s32.totalorder %v3667, %v3929
        %vm3944 = vcmp.eq.s32.totalorder %v3667, %v3930
        %vm3945 = vcmp.eq.s32.totalorder %v3668, %v3929
        %vm3946 = vcmp.eq.s32.totalorder %v3668, %v3930
        %vm3947 = vcmp.eq.s32.totalorder %v3669, %v3929
        %vm3948 = vcmp.eq.s32.totalorder %v3669, %v3930
        %vm3949 = vcmp.eq.s32.totalorder %v3670, %v3929
        %vm3950 = vcmp.eq.s32.totalorder %v3670, %v3930
        %vm3951 = vcmp.eq.s32.totalorder %v3671, %v3929
        %vm3952 = vcmp.eq.s32.totalorder %v3671, %v3930
        %vm3953 = vcmp.eq.s32.totalorder %v3672, %v3929
        %vm3954 = vcmp.eq.s32.totalorder %v3672, %v3930
        %vm3955 = vcmp.eq.s32.totalorder %v3673, %v3929
        %vm3956 = vcmp.eq.s32.totalorder %v3673, %v3930
        %vm3957 = vcmp.eq.s32.totalorder %v3674, %v3929
        %vm3958 = vcmp.eq.s32.totalorder %v3674, %v3930
        %vm3959 = vcmp.eq.s32.totalorder %v3675, %v3929
        %vm3960 = vcmp.eq.s32.totalorder %v3675, %v3930
        %vm3961 = vcmp.eq.s32.totalorder %v3676, %v3929
        %vm3962 = vcmp.eq.s32.totalorder %v3676, %v3930
        %vm3963 = vcmp.eq.s32.totalorder %v3677, %v3929
        %vm3964 = vcmp.eq.s32.totalorder %v3677, %v3930
        %vm3965 = vcmp.eq.s32.totalorder %v3678, %v3929
        %vm3966 = vcmp.eq.s32.totalorder %v3678, %v3930
        %vm3967 = vcmp.eq.s32.totalorder %v3679, %v3929
        %vm3968 = vcmp.eq.s32.totalorder %v3679, %v3930
        %vm3969 = vcmp.eq.s32.totalorder %v3680, %v3929
        %vm3970 = vcmp.eq.s32.totalorder %v3680, %v3930
        %vm3971 = vcmp.eq.s32.totalorder %v3681, %v3929
        %vm3972 = vcmp.eq.s32.totalorder %v3681, %v3930
        %vm3973 = vcmp.eq.s32.totalorder %v3682, %v3929
        %vm3974 = vcmp.eq.s32.totalorder %v3682, %v3930
        %vm3975 = vcmp.eq.s32.totalorder %v3683, %v3929
        %vm3976 = vcmp.eq.s32.totalorder %v3683, %v3930
        %vm3977 = vcmp.eq.s32.totalorder %v3684, %v3929
        %vm3978 = vcmp.eq.s32.totalorder %v3684, %v3930
        %vm3979 = vcmp.eq.s32.totalorder %v3685, %v3929
        %vm3980 = vcmp.eq.s32.totalorder %v3685, %v3930
        %vm3981 = vcmp.eq.s32.totalorder %v3686, %v3929
        %vm3982 = vcmp.eq.s32.totalorder %v3686, %v3930
        %vm3983 = vcmp.eq.s32.totalorder %v3687, %v3929
        %vm3984 = vcmp.eq.s32.totalorder %v3687, %v3930
        %vm3985 = vcmp.eq.s32.totalorder %v3688, %v3929
        %vm3986 = vcmp.eq.s32.totalorder %v3688, %v3930
        %vm3987 = vcmp.eq.s32.totalorder %v3689, %v3929
        %vm3988 = vcmp.eq.s32.totalorder %v3689, %v3930
        %vm3989 = vcmp.eq.s32.totalorder %v3690, %v3929
        %vm3990 = vcmp.eq.s32.totalorder %v3690, %v3930
        %vm3991 = vcmp.eq.s32.totalorder %v3691, %v3929
        %vm3992 = vcmp.eq.s32.totalorder %v3691, %v3930
        %vm3993 = vcmp.eq.s32.totalorder %v3692, %v3929
        %vm3994 = vcmp.eq.s32.totalorder %v3692, %v3930
        %v3995 = vperm.slane %v3919, 0
        %v3996 = vperm.slane %v3920, 0
        %v3997 = vsel %vm3931, %v3995, 0.0
        %v3998 = vsel %vm3932, %v3996, 0.0
        %v3999 = vsel %vm3933, %v3995, 0.0
        %v4000 = vsel %vm3934, %v3996, 0.0
        %v4001 = vsel %vm3935, %v3995, 0.0
        %v4002 = vsel %vm3936, %v3996, 0.0
        %v4003 = vsel %vm3937, %v3995, 0.0
        %v4004 = vsel %vm3938, %v3996, 0.0
        %v4005 = vsel %vm3939, %v3995, 0.0
        %v4006 = vsel %vm3940, %v3996, 0.0
        %v4007 = vsel %vm3941, %v3995, 0.0
        %v4008 = vsel %vm3942, %v3996, 0.0
        %v4009 = vsel %vm3943, %v3995, 0.0
        %v4010 = vsel %vm3944, %v3996, 0.0
        %v4011 = vsel %vm3945, %v3995, 0.0
        %v4012 = vsel %vm3946, %v3996, 0.0
        %v4013 = vsel %vm3947, %v3995, 0.0
        %v4014 = vsel %vm3948, %v3996, 0.0
        %v4015 = vsel %vm3949, %v3995, 0.0
        %v4016 = vsel %vm3950, %v3996, 0.0
        %v4017 = vsel %vm3951, %v3995, 0.0
        %v4018 = vsel %vm3952, %v3996, 0.0
        %v4019 = vsel %vm3953, %v3995, 0.0
        %v4020 = vsel %vm3954, %v3996, 0.0
        %v4021 = vsel %vm3955, %v3995, 0.0
        %v4022 = vsel %vm3956, %v3996, 0.0
        %v4023 = vsel %vm3957, %v3995, 0.0
        %v4024 = vsel %vm3958, %v3996, 0.0
        %v4025 = vsel %vm3959, %v3995, 0.0
        %v4026 = vsel %vm3960, %v3996, 0.0
        %v4027 = vsel %vm3961, %v3995, 0.0
        %v4028 = vsel %vm3962, %v3996, 0.0
        %v4029 = vsel %vm3963, %v3995, 0.0
        %v4030 = vsel %vm3964, %v3996, 0.0
        %v4031 = vsel %vm3965, %v3995, 0.0
        %v4032 = vsel %vm3966, %v3996, 0.0
        %v4033 = vsel %vm3967, %v3995, 0.0
        %v4034 = vsel %vm3968, %v3996, 0.0
        %v4035 = vsel %vm3969, %v3995, 0.0
        %v4036 = vsel %vm3970, %v3996, 0.0
        %v4037 = vsel %vm3971, %v3995, 0.0
        %v4038 = vsel %vm3972, %v3996, 0.0
        %v4039 = vsel %vm3973, %v3995, 0.0
        %v4040 = vsel %vm3974, %v3996, 0.0
        %v4041 = vsel %vm3975, %v3995, 0.0
        %v4042 = vsel %vm3976, %v3996, 0.0
        %v4043 = vsel %vm3977, %v3995, 0.0
        %v4044 = vsel %vm3978, %v3996, 0.0
        %v4045 = vsel %vm3979, %v3995, 0.0
        %v4046 = vsel %vm3980, %v3996, 0.0
        %v4047 = vsel %vm3981, %v3995, 0.0
        %v4048 = vsel %vm3982, %v3996, 0.0
        %v4049 = vsel %vm3983, %v3995, 0.0
        %v4050 = vsel %vm3984, %v3996, 0.0
        %v4051 = vsel %vm3985, %v3995, 0.0
        %v4052 = vsel %vm3986, %v3996, 0.0
        %v4053 = vsel %vm3987, %v3995, 0.0
        %v4054 = vsel %vm3988, %v3996, 0.0
        %v4055 = vsel %vm3989, %v3995, 0.0
        %v4056 = vsel %vm3990, %v3996, 0.0
        %v4057 = vsel %vm3991, %v3995, 0.0
        %v4058 = vsel %vm3992, %v3996, 0.0
        %v4059 = vsel %vm3993, %v3995, 0.0
        %v4060 = vsel %vm3994, %v3996, 0.0
        %v4061 = vadd.f32 %v3841, %v3997
        %v4062 = vadd.f32 %v3842, %v3998
        %v4063 = vadd.f32 %v3843, %v3999
        %v4064 = vadd.f32 %v3844, %v4000
        %v4065 = vadd.f32 %v3845, %v4001
        %v4066 = vadd.f32 %v3846, %v4002
        %v4067 = vadd.f32 %v3847, %v4003
        %v4068 = vadd.f32 %v3848, %v4004
        %v4069 = vadd.f32 %v3849, %v4005
        %v4070 = vadd.f32 %v3850, %v4006
        %v4071 = vadd.f32 %v3851, %v4007
        %v4072 = vadd.f32 %v3852, %v4008
        %v4073 = vadd.f32 %v3853, %v4009
        %v4074 = vadd.f32 %v3854, %v4010
        %v4075 = vadd.f32 %v3855, %v4011
        %v4076 = vadd.f32 %v3856, %v4012
        %v4077 = vadd.f32 %v3857, %v4013
        %v4078 = vadd.f32 %v3858, %v4014
        %v4079 = vadd.f32 %v3859, %v4015
        %v4080 = vadd.f32 %v3860, %v4016
        %v4081 = vadd.f32 %v3861, %v4017
        %v4082 = vadd.f32 %v3862, %v4018
        %v4083 = vadd.f32 %v3863, %v4019
        %v4084 = vadd.f32 %v3864, %v4020
        %v4085 = vadd.f32 %v3865, %v4021
        %v4086 = vadd.f32 %v3866, %v4022
        %v4087 = vadd.f32 %v3867, %v4023
        %v4088 = vadd.f32 %v3868, %v4024
        %v4089 = vadd.f32 %v3869, %v4025
        %v4090 = vadd.f32 %v3870, %v4026
        %v4091 = vadd.f32 %v3871, %v4027
        %v4092 = vadd.f32 %v3872, %v4028
        %v4093 = vadd.f32 %v3873, %v4029
        %v4094 = vadd.f32 %v3874, %v4030
        %v4095 = vadd.f32 %v3875, %v4031
        %v4096 = vadd.f32 %v3876, %v4032
        %v4097 = vadd.f32 %v3877, %v4033
        %v4098 = vadd.f32 %v3878, %v4034
        %v4099 = vadd.f32 %v3879, %v4035
        %v4100 = vadd.f32 %v3880, %v4036
        %v4101 = vadd.f32 %v3881, %v4037
        %v4102 = vadd.f32 %v3882, %v4038
        %v4103 = vadd.f32 %v3883, %v4039
        %v4104 = vadd.f32 %v3884, %v4040
        %v4105 = vadd.f32 %v3885, %v4041
        %v4106 = vadd.f32 %v3886, %v4042
        %v4107 = vadd.f32 %v3887, %v4043
        %v4108 = vadd.f32 %v3888, %v4044
        %v4109 = vadd.f32 %v3889, %v4045
        %v4110 = vadd.f32 %v3890, %v4046
        %v4111 = vadd.f32 %v3891, %v4047
        %v4112 = vadd.f32 %v3892, %v4048
        %v4113 = vadd.f32 %v3893, %v4049
        %v4114 = vadd.f32 %v3894, %v4050
        %v4115 = vadd.f32 %v3895, %v4051
        %v4116 = vadd.f32 %v3896, %v4052
        %v4117 = vadd.f32 %v3897, %v4053
        %v4118 = vadd.f32 %v3898, %v4054
        %v4119 = vadd.f32 %v3899, %v4055
        %v4120 = vadd.f32 %v3900, %v4056
        %v4121 = vadd.f32 %v3901, %v4057
        %v4122 = vadd.f32 %v3902, %v4058
        %v4123 = vadd.f32 %v3903, %v4059
        %v4124 = vadd.f32 %v3904, %v4060
        %v4125 = vadd.f32 %v3729, 1.0
        %v4126 = vadd.f32 %v3730, 1.0
        %v4127 = vmul.f32 %v3735, %v3733
        %v4128 = vmul.f32 %v3736, %v3734
        %vm4129 = vcmp.ge.f32.partialorder %v4125, 0.0
        %vm4130 = vcmp.ge.f32.partialorder %v4126, 0.0
        %vm4131 = vmand %vm3745, %vm4129
        %vm4132 = vmand %vm3746, %vm4130
        %vm4133 = vcmp.le.f32.partialorder %v4125, 15.0
        %vm4134 = vcmp.le.f32.partialorder %v4126, 15.0
        %vm4135 = vmand %vm4131, %vm4133
        %vm4136 = vmand %vm4132, %vm4134
        %v4137 = vsel %vm4135, %v4127, 0.0
        %v4138 = vsel %vm4136, %v4128, 0.0
        %v4139 = vmax.f32 %v4125, 0.0
        %v4140 = vmax.f32 %v4126, 0.0
        %v4141 = vmin.f32 %v4139, 15.0
        %v4142 = vmin.f32 %v4140, 15.0
        %v4143 = vcvt.f32.s32.to.zero.pseudo %v4141
        %v4144 = vcvt.f32.s32.to.zero.pseudo %v4142
        %v4145 = vmul.u32 %v4143, 16
        %v4146 = vmul.u32 %v4144, 16
        %v4147 = vadd.s32 %v4145, %v3761
        %v4148 = vadd.s32 %v4146, %v3762
        %v4149 = vperm.slane %v4147, 0
        %v4150 = vperm.slane %v4148, 0
        %vm4151 = vcmp.eq.s32.totalorder %v3661, %v4149
        %vm4152 = vcmp.eq.s32.totalorder %v3661, %v4150
        %vm4153 = vcmp.eq.s32.totalorder %v3662, %v4149
        %vm4154 = vcmp.eq.s32.totalorder %v3662, %v4150
        %vm4155 = vcmp.eq.s32.totalorder %v3663, %v4149
        %vm4156 = vcmp.eq.s32.totalorder %v3663, %v4150
        %vm4157 = vcmp.eq.s32.totalorder %v3664, %v4149
        %vm4158 = vcmp.eq.s32.totalorder %v3664, %v4150
        %vm4159 = vcmp.eq.s32.totalorder %v3665, %v4149
        %vm4160 = vcmp.eq.s32.totalorder %v3665, %v4150
        %vm4161 = vcmp.eq.s32.totalorder %v3666, %v4149
        %vm4162 = vcmp.eq.s32.totalorder %v3666, %v4150
        %vm4163 = vcmp.eq.s32.totalorder %v3667, %v4149
        %vm4164 = vcmp.eq.s32.totalorder %v3667, %v4150
        %vm4165 = vcmp.eq.s32.totalorder %v3668, %v4149
        %vm4166 = vcmp.eq.s32.totalorder %v3668, %v4150
        %vm4167 = vcmp.eq.s32.totalorder %v3669, %v4149
        %vm4168 = vcmp.eq.s32.totalorder %v3669, %v4150
        %vm4169 = vcmp.eq.s32.totalorder %v3670, %v4149
        %vm4170 = vcmp.eq.s32.totalorder %v3670, %v4150
        %vm4171 = vcmp.eq.s32.totalorder %v3671, %v4149
        %vm4172 = vcmp.eq.s32.totalorder %v3671, %v4150
        %vm4173 = vcmp.eq.s32.totalorder %v3672, %v4149
        %vm4174 = vcmp.eq.s32.totalorder %v3672, %v4150
        %vm4175 = vcmp.eq.s32.totalorder %v3673, %v4149
        %vm4176 = vcmp.eq.s32.totalorder %v3673, %v4150
        %vm4177 = vcmp.eq.s32.totalorder %v3674, %v4149
        %vm4178 = vcmp.eq.s32.totalorder %v3674, %v4150
        %vm4179 = vcmp.eq.s32.totalorder %v3675, %v4149
        %vm4180 = vcmp.eq.s32.totalorder %v3675, %v4150
        %vm4181 = vcmp.eq.s32.totalorder %v3676, %v4149
        %vm4182 = vcmp.eq.s32.totalorder %v3676, %v4150
        %vm4183 = vcmp.eq.s32.totalorder %v3677, %v4149
        %vm4184 = vcmp.eq.s32.totalorder %v3677, %v4150
        %vm4185 = vcmp.eq.s32.totalorder %v3678, %v4149
        %vm4186 = vcmp.eq.s32.totalorder %v3678, %v4150
        %vm4187 = vcmp.eq.s32.totalorder %v3679, %v4149
        %vm4188 = vcmp.eq.s32.totalorder %v3679, %v4150
        %vm4189 = vcmp.eq.s32.totalorder %v3680, %v4149
        %vm4190 = vcmp.eq.s32.totalorder %v3680, %v4150
        %vm4191 = vcmp.eq.s32.totalorder %v3681, %v4149
        %vm4192 = vcmp.eq.s32.totalorder %v3681, %v4150
        %vm4193 = vcmp.eq.s32.totalorder %v3682, %v4149
        %vm4194 = vcmp.eq.s32.totalorder %v3682, %v4150
        %vm4195 = vcmp.eq.s32.totalorder %v3683, %v4149
        %vm4196 = vcmp.eq.s32.totalorder %v3683, %v4150
        %vm4197 = vcmp.eq.s32.totalorder %v3684, %v4149
        %vm4198 = vcmp.eq.s32.totalorder %v3684, %v4150
        %vm4199 = vcmp.eq.s32.totalorder %v3685, %v4149
        %vm4200 = vcmp.eq.s32.totalorder %v3685, %v4150
        %vm4201 = vcmp.eq.s32.totalorder %v3686, %v4149
        %vm4202 = vcmp.eq.s32.totalorder %v3686, %v4150
        %vm4203 = vcmp.eq.s32.totalorder %v3687, %v4149
        %vm4204 = vcmp.eq.s32.totalorder %v3687, %v4150
        %vm4205 = vcmp.eq.s32.totalorder %v3688, %v4149
        %vm4206 = vcmp.eq.s32.totalorder %v3688, %v4150
        %vm4207 = vcmp.eq.s32.totalorder %v3689, %v4149
        %vm4208 = vcmp.eq.s32.totalorder %v3689, %v4150
        %vm4209 = vcmp.eq.s32.totalorder %v3690, %v4149
        %vm4210 = vcmp.eq.s32.totalorder %v3690, %v4150
        %vm4211 = vcmp.eq.s32.totalorder %v3691, %v4149
        %vm4212 = vcmp.eq.s32.totalorder %v3691, %v4150
        %vm4213 = vcmp.eq.s32.totalorder %v3692, %v4149
        %vm4214 = vcmp.eq.s32.totalorder %v3692, %v4150
        %v4215 = vperm.slane %v4137, 0
        %v4216 = vperm.slane %v4138, 0
        %v4217 = vsel %vm4151, %v4215, 0.0
        %v4218 = vsel %vm4152, %v4216, 0.0
        %v4219 = vsel %vm4153, %v4215, 0.0
        %v4220 = vsel %vm4154, %v4216, 0.0
        %v4221 = vsel %vm4155, %v4215, 0.0
        %v4222 = vsel %vm4156, %v4216, 0.0
        %v4223 = vsel %vm4157, %v4215, 0.0
        %v4224 = vsel %vm4158, %v4216, 0.0
        %v4225 = vsel %vm4159, %v4215, 0.0
        %v4226 = vsel %vm4160, %v4216, 0.0
        %v4227 = vsel %vm4161, %v4215, 0.0
        %v4228 = vsel %vm4162, %v4216, 0.0
        %v4229 = vsel %vm4163, %v4215, 0.0
        %v4230 = vsel %vm4164, %v4216, 0.0
        %v4231 = vsel %vm4165, %v4215, 0.0
        %v4232 = vsel %vm4166, %v4216, 0.0
        %v4233 = vsel %vm4167, %v4215, 0.0
        %v4234 = vsel %vm4168, %v4216, 0.0
        %v4235 = vsel %vm4169, %v4215, 0.0
        %v4236 = vsel %vm4170, %v4216, 0.0
        %v4237 = vsel %vm4171, %v4215, 0.0
        %v4238 = vsel %vm4172, %v4216, 0.0
        %v4239 = vsel %vm4173, %v4215, 0.0
        %v4240 = vsel %vm4174, %v4216, 0.0
        %v4241 = vsel %vm4175, %v4215, 0.0
        %v4242 = vsel %vm4176, %v4216, 0.0
        %v4243 = vsel %vm4177, %v4215, 0.0
        %v4244 = vsel %vm4178, %v4216, 0.0
        %v4245 = vsel %vm4179, %v4215, 0.0
        %v4246 = vsel %vm4180, %v4216, 0.0
        %v4247 = vsel %vm4181, %v4215, 0.0
        %v4248 = vsel %vm4182, %v4216, 0.0
        %v4249 = vsel %vm4183, %v4215, 0.0
        %v4250 = vsel %vm4184, %v4216, 0.0
        %v4251 = vsel %vm4185, %v4215, 0.0
        %v4252 = vsel %vm4186, %v4216, 0.0
        %v4253 = vsel %vm4187, %v4215, 0.0
        %v4254 = vsel %vm4188, %v4216, 0.0
        %v4255 = vsel %vm4189, %v4215, 0.0
        %v4256 = vsel %vm4190, %v4216, 0.0
        %v4257 = vsel %vm4191, %v4215, 0.0
        %v4258 = vsel %vm4192, %v4216, 0.0
        %v4259 = vsel %vm4193, %v4215, 0.0
        %v4260 = vsel %vm4194, %v4216, 0.0
        %v4261 = vsel %vm4195, %v4215, 0.0
        %v4262 = vsel %vm4196, %v4216, 0.0
        %v4263 = vsel %vm4197, %v4215, 0.0
        %v4264 = vsel %vm4198, %v4216, 0.0
        %v4265 = vsel %vm4199, %v4215, 0.0
        %v4266 = vsel %vm4200, %v4216, 0.0
        %v4267 = vsel %vm4201, %v4215, 0.0
        %v4268 = vsel %vm4202, %v4216, 0.0
        %v4269 = vsel %vm4203, %v4215, 0.0
        %v4270 = vsel %vm4204, %v4216, 0.0
        %v4271 = vsel %vm4205, %v4215, 0.0
        %v4272 = vsel %vm4206, %v4216, 0.0
        %v4273 = vsel %vm4207, %v4215, 0.0
        %v4274 = vsel %vm4208, %v4216, 0.0
        %v4275 = vsel %vm4209, %v4215, 0.0
        %v4276 = vsel %vm4210, %v4216, 0.0
        %v4277 = vsel %vm4211, %v4215, 0.0
        %v4278 = vsel %vm4212, %v4216, 0.0
        %v4279 = vsel %vm4213, %v4215, 0.0
        %v4280 = vsel %vm4214, %v4216, 0.0
        %v4281 = vadd.f32 %v4061, %v4217
        %v4282 = vadd.f32 %v4062, %v4218
        %v4283 = vadd.f32 %v4063, %v4219
        %v4284 = vadd.f32 %v4064, %v4220
        %v4285 = vadd.f32 %v4065, %v4221
        %v4286 = vadd.f32 %v4066, %v4222
        %v4287 = vadd.f32 %v4067, %v4223
        %v4288 = vadd.f32 %v4068, %v4224
        %v4289 = vadd.f32 %v4069, %v4225
        %v4290 = vadd.f32 %v4070, %v4226
        %v4291 = vadd.f32 %v4071, %v4227
        %v4292 = vadd.f32 %v4072, %v4228
        %v4293 = vadd.f32 %v4073, %v4229
        %v4294 = vadd.f32 %v4074, %v4230
        %v4295 = vadd.f32 %v4075, %v4231
        %v4296 = vadd.f32 %v4076, %v4232
        %v4297 = vadd.f32 %v4077, %v4233
        %v4298 = vadd.f32 %v4078, %v4234
        %v4299 = vadd.f32 %v4079, %v4235
        %v4300 = vadd.f32 %v4080, %v4236
        %v4301 = vadd.f32 %v4081, %v4237
        %v4302 = vadd.f32 %v4082, %v4238
        %v4303 = vadd.f32 %v4083, %v4239
        %v4304 = vadd.f32 %v4084, %v4240
        %v4305 = vadd.f32 %v4085, %v4241
        %v4306 = vadd.f32 %v4086, %v4242
        %v4307 = vadd.f32 %v4087, %v4243
        %v4308 = vadd.f32 %v4088, %v4244
        %v4309 = vadd.f32 %v4089, %v4245
        %v4310 = vadd.f32 %v4090, %v4246
        %v4311 = vadd.f32 %v4091, %v4247
        %v4312 = vadd.f32 %v4092, %v4248
        %v4313 = vadd.f32 %v4093, %v4249
        %v4314 = vadd.f32 %v4094, %v4250
        %v4315 = vadd.f32 %v4095, %v4251
        %v4316 = vadd.f32 %v4096, %v4252
        %v4317 = vadd.f32 %v4097, %v4253
        %v4318 = vadd.f32 %v4098, %v4254
        %v4319 = vadd.f32 %v4099, %v4255
        %v4320 = vadd.f32 %v4100, %v4256
        %v4321 = vadd.f32 %v4101, %v4257
        %v4322 = vadd.f32 %v4102, %v4258
        %v4323 = vadd.f32 %v4103, %v4259
        %v4324 = vadd.f32 %v4104, %v4260
        %v4325 = vadd.f32 %v4105, %v4261
        %v4326 = vadd.f32 %v4106, %v4262
        %v4327 = vadd.f32 %v4107, %v4263
        %v4328 = vadd.f32 %v4108, %v4264
        %v4329 = vadd.f32 %v4109, %v4265
        %v4330 = vadd.f32 %v4110, %v4266
        %v4331 = vadd.f32 %v4111, %v4267
        %v4332 = vadd.f32 %v4112, %v4268
        %v4333 = vadd.f32 %v4113, %v4269
        %v4334 = vadd.f32 %v4114, %v4270
        %v4335 = vadd.f32 %v4115, %v4271
        %v4336 = vadd.f32 %v4116, %v4272
        %v4337 = vadd.f32 %v4117, %v4273
        %v4338 = vadd.f32 %v4118, %v4274
        %v4339 = vadd.f32 %v4119, %v4275
        %v4340 = vadd.f32 %v4120, %v4276
        %v4341 = vadd.f32 %v4121, %v4277
        %v4342 = vadd.f32 %v4122, %v4278
        %v4343 = vadd.f32 %v4123, %v4279
        %v4344 = vadd.f32 %v4124, %v4280
        %v4345 = vmul.f32 %v3731, %v3733
        %v4346 = vmul.f32 %v3732, %v3734
        %vm4347 = vmand %vm3913, %vm4129
        %vm4348 = vmand %vm3914, %vm4130
        %vm4349 = vmand %vm4347, %vm4133
        %vm4350 = vmand %vm4348, %vm4134
        %v4351 = vsel %vm4349, %v4345, 0.0
        %v4352 = vsel %vm4350, %v4346, 0.0
        %v4353 = vadd.s32 %v4145, %v3925
        %v4354 = vadd.s32 %v4146, %v3926
        %v4355 = vperm.slane %v4353, 0
        %v4356 = vperm.slane %v4354, 0
        %vm4357 = vcmp.eq.s32.totalorder %v3661, %v4355
        %vm4358 = vcmp.eq.s32.totalorder %v3661, %v4356
        %vm4359 = vcmp.eq.s32.totalorder %v3662, %v4355
        %vm4360 = vcmp.eq.s32.totalorder %v3662, %v4356
        %vm4361 = vcmp.eq.s32.totalorder %v3663, %v4355
        %vm4362 = vcmp.eq.s32.totalorder %v3663, %v4356
        %vm4363 = vcmp.eq.s32.totalorder %v3664, %v4355
        %vm4364 = vcmp.eq.s32.totalorder %v3664, %v4356
        %vm4365 = vcmp.eq.s32.totalorder %v3665, %v4355
        %vm4366 = vcmp.eq.s32.totalorder %v3665, %v4356
        %vm4367 = vcmp.eq.s32.totalorder %v3666, %v4355
        %vm4368 = vcmp.eq.s32.totalorder %v3666, %v4356
        %vm4369 = vcmp.eq.s32.totalorder %v3667, %v4355
        %vm4370 = vcmp.eq.s32.totalorder %v3667, %v4356
        %vm4371 = vcmp.eq.s32.totalorder %v3668, %v4355
        %vm4372 = vcmp.eq.s32.totalorder %v3668, %v4356
        %vm4373 = vcmp.eq.s32.totalorder %v3669, %v4355
        %vm4374 = vcmp.eq.s32.totalorder %v3669, %v4356
        %vm4375 = vcmp.eq.s32.totalorder %v3670, %v4355
        %vm4376 = vcmp.eq.s32.totalorder %v3670, %v4356
        %vm4377 = vcmp.eq.s32.totalorder %v3671, %v4355
        %vm4378 = vcmp.eq.s32.totalorder %v3671, %v4356
        %vm4379 = vcmp.eq.s32.totalorder %v3672, %v4355
        %vm4380 = vcmp.eq.s32.totalorder %v3672, %v4356
        %vm4381 = vcmp.eq.s32.totalorder %v3673, %v4355
        %vm4382 = vcmp.eq.s32.totalorder %v3673, %v4356
        %vm4383 = vcmp.eq.s32.totalorder %v3674, %v4355
        %vm4384 = vcmp.eq.s32.totalorder %v3674, %v4356
        %vm4385 = vcmp.eq.s32.totalorder %v3675, %v4355
        %vm4386 = vcmp.eq.s32.totalorder %v3675, %v4356
        %vm4387 = vcmp.eq.s32.totalorder %v3676, %v4355
        %vm4388 = vcmp.eq.s32.totalorder %v3676, %v4356
        %vm4389 = vcmp.eq.s32.totalorder %v3677, %v4355
        %vm4390 = vcmp.eq.s32.totalorder %v3677, %v4356
        %vm4391 = vcmp.eq.s32.totalorder %v3678, %v4355
        %vm4392 = vcmp.eq.s32.totalorder %v3678, %v4356
        %vm4393 = vcmp.eq.s32.totalorder %v3679, %v4355
        %vm4394 = vcmp.eq.s32.totalorder %v3679, %v4356
        %vm4395 = vcmp.eq.s32.totalorder %v3680, %v4355
        %vm4396 = vcmp.eq.s32.totalorder %v3680, %v4356
        %vm4397 = vcmp.eq.s32.totalorder %v3681, %v4355
        %vm4398 = vcmp.eq.s32.totalorder %v3681, %v4356
        %vm4399 = vcmp.eq.s32.totalorder %v3682, %v4355
        %vm4400 = vcmp.eq.s32.totalorder %v3682, %v4356
        %vm4401 = vcmp.eq.s32.totalorder %v3683, %v4355
        %vm4402 = vcmp.eq.s32.totalorder %v3683, %v4356
        %vm4403 = vcmp.eq.s32.totalorder %v3684, %v4355
        %vm4404 = vcmp.eq.s32.totalorder %v3684, %v4356
        %vm4405 = vcmp.eq.s32.totalorder %v3685, %v4355
        %vm4406 = vcmp.eq.s32.totalorder %v3685, %v4356
        %vm4407 = vcmp.eq.s32.totalorder %v3686, %v4355
        %vm4408 = vcmp.eq.s32.totalorder %v3686, %v4356
        %vm4409 = vcmp.eq.s32.totalorder %v3687, %v4355
        %vm4410 = vcmp.eq.s32.totalorder %v3687, %v4356
        %vm4411 = vcmp.eq.s32.totalorder %v3688, %v4355
        %vm4412 = vcmp.eq.s32.totalorder %v3688, %v4356
        %vm4413 = vcmp.eq.s32.totalorder %v3689, %v4355
        %vm4414 = vcmp.eq.s32.totalorder %v3689, %v4356
        %vm4415 = vcmp.eq.s32.totalorder %v3690, %v4355
        %vm4416 = vcmp.eq.s32.totalorder %v3690, %v4356
        %vm4417 = vcmp.eq.s32.totalorder %v3691, %v4355
        %vm4418 = vcmp.eq.s32.totalorder %v3691, %v4356
        %vm4419 = vcmp.eq.s32.totalorder %v3692, %v4355
        %vm4420 = vcmp.eq.s32.totalorder %v3692, %v4356
        %v4421 = vperm.slane %v4351, 0
        %v4422 = vperm.slane %v4352, 0
        %v4423 = vsel %vm4357, %v4421, 0.0
        %v4424 = vsel %vm4358, %v4422, 0.0
        %v4425 = vsel %vm4359, %v4421, 0.0
        %v4426 = vsel %vm4360, %v4422, 0.0
        %v4427 = vsel %vm4361, %v4421, 0.0
        %v4428 = vsel %vm4362, %v4422, 0.0
        %v4429 = vsel %vm4363, %v4421, 0.0
        %v4430 = vsel %vm4364, %v4422, 0.0
        %v4431 = vsel %vm4365, %v4421, 0.0
        %v4432 = vsel %vm4366, %v4422, 0.0
        %v4433 = vsel %vm4367, %v4421, 0.0
        %v4434 = vsel %vm4368, %v4422, 0.0
        %v4435 = vsel %vm4369, %v4421, 0.0
        %v4436 = vsel %vm4370, %v4422, 0.0
        %v4437 = vsel %vm4371, %v4421, 0.0
        %v4438 = vsel %vm4372, %v4422, 0.0
        %v4439 = vsel %vm4373, %v4421, 0.0
        %v4440 = vsel %vm4374, %v4422, 0.0
        %v4441 = vsel %vm4375, %v4421, 0.0
        %v4442 = vsel %vm4376, %v4422, 0.0
        %v4443 = vsel %vm4377, %v4421, 0.0
        %v4444 = vsel %vm4378, %v4422, 0.0
        %v4445 = vsel %vm4379, %v4421, 0.0
        %v4446 = vsel %vm4380, %v4422, 0.0
        %v4447 = vsel %vm4381, %v4421, 0.0
        %v4448 = vsel %vm4382, %v4422, 0.0
        %v4449 = vsel %vm4383, %v4421, 0.0
        %v4450 = vsel %vm4384, %v4422, 0.0
        %v4451 = vsel %vm4385, %v4421, 0.0
        %v4452 = vsel %vm4386, %v4422, 0.0
        %v4453 = vsel %vm4387, %v4421, 0.0
        %v4454 = vsel %vm4388, %v4422, 0.0
        %v4455 = vsel %vm4389, %v4421, 0.0
        %v4456 = vsel %vm4390, %v4422, 0.0
        %v4457 = vsel %vm4391, %v4421, 0.0
        %v4458 = vsel %vm4392, %v4422, 0.0
        %v4459 = vsel %vm4393, %v4421, 0.0
        %v4460 = vsel %vm4394, %v4422, 0.0
        %v4461 = vsel %vm4395, %v4421, 0.0
        %v4462 = vsel %vm4396, %v4422, 0.0
        %v4463 = vsel %vm4397, %v4421, 0.0
        %v4464 = vsel %vm4398, %v4422, 0.0
        %v4465 = vsel %vm4399, %v4421, 0.0
        %v4466 = vsel %vm4400, %v4422, 0.0
        %v4467 = vsel %vm4401, %v4421, 0.0
        %v4468 = vsel %vm4402, %v4422, 0.0
        %v4469 = vsel %vm4403, %v4421, 0.0
        %v4470 = vsel %vm4404, %v4422, 0.0
        %v4471 = vsel %vm4405, %v4421, 0.0
        %v4472 = vsel %vm4406, %v4422, 0.0
        %v4473 = vsel %vm4407, %v4421, 0.0
        %v4474 = vsel %vm4408, %v4422, 0.0
        %v4475 = vsel %vm4409, %v4421, 0.0
        %v4476 = vsel %vm4410, %v4422, 0.0
        %v4477 = vsel %vm4411, %v4421, 0.0
        %v4478 = vsel %vm4412, %v4422, 0.0
        %v4479 = vsel %vm4413, %v4421, 0.0
        %v4480 = vsel %vm4414, %v4422, 0.0
        %v4481 = vsel %vm4415, %v4421, 0.0
        %v4482 = vsel %vm4416, %v4422, 0.0
        %v4483 = vsel %vm4417, %v4421, 0.0
        %v4484 = vsel %vm4418, %v4422, 0.0
        %v4485 = vsel %vm4419, %v4421, 0.0
        %v4486 = vsel %vm4420, %v4422, 0.0
        %v4487 = vadd.f32 %v4281, %v4423
        %v4488 = vadd.f32 %v4282, %v4424
        %v4489 = vadd.f32 %v4283, %v4425
        %v4490 = vadd.f32 %v4284, %v4426
        %v4491 = vadd.f32 %v4285, %v4427
        %v4492 = vadd.f32 %v4286, %v4428
        %v4493 = vadd.f32 %v4287, %v4429
        %v4494 = vadd.f32 %v4288, %v4430
        %v4495 = vadd.f32 %v4289, %v4431
        %v4496 = vadd.f32 %v4290, %v4432
        %v4497 = vadd.f32 %v4291, %v4433
        %v4498 = vadd.f32 %v4292, %v4434
        %v4499 = vadd.f32 %v4293, %v4435
        %v4500 = vadd.f32 %v4294, %v4436
        %v4501 = vadd.f32 %v4295, %v4437
        %v4502 = vadd.f32 %v4296, %v4438
        %v4503 = vadd.f32 %v4297, %v4439
        %v4504 = vadd.f32 %v4298, %v4440
        %v4505 = vadd.f32 %v4299, %v4441
        %v4506 = vadd.f32 %v4300, %v4442
        %v4507 = vadd.f32 %v4301, %v4443
        %v4508 = vadd.f32 %v4302, %v4444
        %v4509 = vadd.f32 %v4303, %v4445
        %v4510 = vadd.f32 %v4304, %v4446
        %v4511 = vadd.f32 %v4305, %v4447
        %v4512 = vadd.f32 %v4306, %v4448
        %v4513 = vadd.f32 %v4307, %v4449
        %v4514 = vadd.f32 %v4308, %v4450
        %v4515 = vadd.f32 %v4309, %v4451
        %v4516 = vadd.f32 %v4310, %v4452
        %v4517 = vadd.f32 %v4311, %v4453
        %v4518 = vadd.f32 %v4312, %v4454
        %v4519 = vadd.f32 %v4313, %v4455
        %v4520 = vadd.f32 %v4314, %v4456
        %v4521 = vadd.f32 %v4315, %v4457
        %v4522 = vadd.f32 %v4316, %v4458
        %v4523 = vadd.f32 %v4317, %v4459
        %v4524 = vadd.f32 %v4318, %v4460
        %v4525 = vadd.f32 %v4319, %v4461
        %v4526 = vadd.f32 %v4320, %v4462
        %v4527 = vadd.f32 %v4321, %v4463
        %v4528 = vadd.f32 %v4322, %v4464
        %v4529 = vadd.f32 %v4323, %v4465
        %v4530 = vadd.f32 %v4324, %v4466
        %v4531 = vadd.f32 %v4325, %v4467
        %v4532 = vadd.f32 %v4326, %v4468
        %v4533 = vadd.f32 %v4327, %v4469
        %v4534 = vadd.f32 %v4328, %v4470
        %v4535 = vadd.f32 %v4329, %v4471
        %v4536 = vadd.f32 %v4330, %v4472
        %v4537 = vadd.f32 %v4331, %v4473
        %v4538 = vadd.f32 %v4332, %v4474
        %v4539 = vadd.f32 %v4333, %v4475
        %v4540 = vadd.f32 %v4334, %v4476
        %v4541 = vadd.f32 %v4335, %v4477
        %v4542 = vadd.f32 %v4336, %v4478
        %v4543 = vadd.f32 %v4337, %v4479
        %v4544 = vadd.f32 %v4338, %v4480
        %v4545 = vadd.f32 %v4339, %v4481
        %v4546 = vadd.f32 %v4340, %v4482
        %v4547 = vadd.f32 %v4341, %v4483
        %v4548 = vadd.f32 %v4342, %v4484
        %v4549 = vadd.f32 %v4343, %v4485
        %v4550 = vadd.f32 %v4344, %v4486
        %v4551 = vpack.c.bf16 %v4489, %v4487
        %v4552 = vpack.c.bf16 %v4490, %v4488
        %v4553 = vpack.c.bf16 %v4493, %v4491
        %v4554 = vpack.c.bf16 %v4494, %v4492
        %v4555 = vpack.c.bf16 %v4497, %v4495
        %v4556 = vpack.c.bf16 %v4498, %v4496
        %v4557 = vpack.c.bf16 %v4501, %v4499
        %v4558 = vpack.c.bf16 %v4502, %v4500
        %v4559 = vpack.c.bf16 %v4505, %v4503
        %v4560 = vpack.c.bf16 %v4506, %v4504
        %v4561 = vpack.c.bf16 %v4509, %v4507
        %v4562 = vpack.c.bf16 %v4510, %v4508
        %v4563 = vpack.c.bf16 %v4513, %v4511
        %v4564 = vpack.c.bf16 %v4514, %v4512
        %v4565 = vpack.c.bf16 %v4517, %v4515
        %v4566 = vpack.c.bf16 %v4518, %v4516
        %v4567 = vpack.c.bf16 %v4521, %v4519
        %v4568 = vpack.c.bf16 %v4522, %v4520
        %v4569 = vpack.c.bf16 %v4525, %v4523
        %v4570 = vpack.c.bf16 %v4526, %v4524
        %v4571 = vpack.c.bf16 %v4529, %v4527
        %v4572 = vpack.c.bf16 %v4530, %v4528
        %v4573 = vpack.c.bf16 %v4533, %v4531
        %v4574 = vpack.c.bf16 %v4534, %v4532
        %v4575 = vpack.c.bf16 %v4537, %v4535
        %v4576 = vpack.c.bf16 %v4538, %v4536
        %v4577 = vpack.c.bf16 %v4541, %v4539
        %v4578 = vpack.c.bf16 %v4542, %v4540
        %v4579 = vpack.c.bf16 %v4545, %v4543
        %v4580 = vpack.c.bf16 %v4546, %v4544
        %v4581 = vpack.c.bf16 %v4549, %v4547
        %v4582 = vpack.c.bf16 %v4550, %v4548
        %4583 = vmatpush.bf16.msra.mxu0 %v4565
        %4584 = vmatpush.bf16.msra.mxu0 %v4563
        %4585 = vmatpush.bf16.msra.mxu0 %v4561
        %4586 = vmatpush.bf16.msra.mxu0 %v4559
        %4587 = vmatpush.bf16.msra.mxu0 %v4557
        %4588 = vmatpush.bf16.msra.mxu0 %v4555
        %4589 = vmatpush.bf16.msra.mxu0 %v4553
        %4590 = vmatpush.bf16.msra.mxu0 %v4551
        %4591 = vmatmul.bf16.gmra.mxu0 %v3700
        %v4592 = vpop.f32.mrf.mxu0
        %v4593 = vadd.f32 0.0, %v4592
        %v4594 = vpop.f32.mrf.mxu0
        %4595 = vdwg.mxu0
        %4596 = vmatpush.bf16.msra.mxu0 %v4581
        %4597 = vmatpush.bf16.msra.mxu0 %v4579
        %4598 = vmatpush.bf16.msra.mxu0 %v4577
        %4599 = vmatpush.bf16.msra.mxu0 %v4575
        %4600 = vmatpush.bf16.msra.mxu0 %v4573
        %4601 = vmatpush.bf16.msra.mxu0 %v4571
        %4602 = vmatpush.bf16.msra.mxu0 %v4569
        %4603 = vmatpush.bf16.msra.mxu0 %v4567
        %4604 = vmatmul.bf16.gmra.mxu0 %v3701
        %v4605 = vpop.f32.mrf.mxu0
        %v4606 = vadd.f32 %v4593, %v4605
        %v4607 = vpop.f32.mrf.mxu0
        %4608 = vdwg.mxu0
        %4609 = vmatpush.bf16.msra.mxu0 %v4566
        %4610 = vmatpush.bf16.msra.mxu0 %v4564
        %4611 = vmatpush.bf16.msra.mxu0 %v4562
        %4612 = vmatpush.bf16.msra.mxu0 %v4560
        %4613 = vmatpush.bf16.msra.mxu0 %v4558
        %4614 = vmatpush.bf16.msra.mxu0 %v4556
        %4615 = vmatpush.bf16.msra.mxu0 %v4554
        %4616 = vmatpush.bf16.msra.mxu0 %v4552
        %4617 = vmatmul.bf16.gmra.mxu0 %v3700
        %v4618 = vpop.f32.mrf.mxu0
        %v4619 = vadd.f32 0.0, %v4618
        %v4620 = vpop.f32.mrf.mxu0
        %4621 = vdwg.mxu0
        %4622 = vmatpush.bf16.msra.mxu0 %v4582
        %4623 = vmatpush.bf16.msra.mxu0 %v4580
        %4624 = vmatpush.bf16.msra.mxu0 %v4578
        %4625 = vmatpush.bf16.msra.mxu0 %v4576
        %4626 = vmatpush.bf16.msra.mxu0 %v4574
        %4627 = vmatpush.bf16.msra.mxu0 %v4572
        %4628 = vmatpush.bf16.msra.mxu0 %v4570
        %4629 = vmatpush.bf16.msra.mxu0 %v4568
        %4630 = vmatmul.bf16.gmra.mxu0 %v3701
        %v4631 = vpop.f32.mrf.mxu0
        %v4632 = vadd.f32 %v4619, %v4631
        %v4633 = vpop.f32.mrf.mxu0
        %4634 = vdwg.mxu0
        %v4637 = vrot.slane %v4632, 4
        %vm4638 = vcmask 1043456
        %v4639 = vsel %vm4638, %v4606, %v4637
        %4641 = vst [vmem:[%s239] sm:$0xff] %v4639
        %v4642 = vmul.f32 %v3652, 0.5
        %v4643 = vmul.f32 %v3653, 0.5
        %v4644 = vadd.f32 %v3713, %v4642
        %v4645 = vadd.f32 %v3714, %v4643
        %v4646 = vmul.f32 %v3658, 0.5
        %v4647 = vmul.f32 %v3659, 0.5
        %v4648 = vadd.f32 %v3721, %v4646
        %v4649 = vadd.f32 %v3722, %v4647
        %v4650 = vfloor.f32 %v4644
        %v4651 = vfloor.f32 %v4645
        %v4652 = vfloor.f32 %v4648
        %v4653 = vfloor.f32 %v4649
        %v4654 = vsub.f32 %v4644, %v4650
        %v4655 = vsub.f32 %v4645, %v4651
        %v4656 = vsub.f32 %v4648, %v4652
        %v4657 = vsub.f32 %v4649, %v4653
        %v4658 = vsub.f32 1.0, %v4654
        %v4659 = vsub.f32 1.0, %v4655
        %v4660 = vsub.f32 1.0, %v4656
        %v4661 = vsub.f32 1.0, %v4657
        %v4662 = vmul.f32 %v4658, %v4660
        %v4663 = vmul.f32 %v4659, %v4661
        %vm4664 = vcmp.ge.f32.partialorder %v4650, 0.0
        %vm4665 = vcmp.ge.f32.partialorder %v4651, 0.0
        %vm4666 = vcmp.le.f32.partialorder %v4650, 15.0
        %vm4667 = vcmp.le.f32.partialorder %v4651, 15.0
        %vm4668 = vmand %vm4664, %vm4666
        %vm4669 = vmand %vm4665, %vm4667
        %vm4670 = vcmp.ge.f32.partialorder %v4652, 0.0
        %vm4671 = vcmp.ge.f32.partialorder %v4653, 0.0
        %vm4672 = vmand %vm4668, %vm4670
        %vm4673 = vmand %vm4669, %vm4671
        %vm4674 = vcmp.le.f32.partialorder %v4652, 15.0
        %vm4675 = vcmp.le.f32.partialorder %v4653, 15.0
        %vm4676 = vmand %vm4672, %vm4674
        %vm4677 = vmand %vm4673, %vm4675
        %v4678 = vsel %vm4676, %v4662, 0.0
        %v4679 = vsel %vm4677, %v4663, 0.0
        %v4680 = vmax.f32 %v4650, 0.0
        %v4681 = vmax.f32 %v4651, 0.0
        %v4682 = vmin.f32 %v4680, 15.0
        %v4683 = vmin.f32 %v4681, 15.0
        %v4684 = vcvt.f32.s32.to.zero.pseudo %v4682
        %v4685 = vcvt.f32.s32.to.zero.pseudo %v4683
        %v4686 = vmax.f32 %v4652, 0.0
        %v4687 = vmax.f32 %v4653, 0.0
        %v4688 = vmin.f32 %v4686, 15.0
        %v4689 = vmin.f32 %v4687, 15.0
        %v4690 = vcvt.f32.s32.to.zero.pseudo %v4688
        %v4691 = vcvt.f32.s32.to.zero.pseudo %v4689
        %v4692 = vmul.u32 %v4690, 16
        %v4693 = vmul.u32 %v4691, 16
        %v4694 = vadd.s32 %v4692, %v4684
        %v4695 = vadd.s32 %v4693, %v4685
        %v4696 = vperm.slane %v4694, 0
        %v4697 = vperm.slane %v4695, 0
        %vm4698 = vcmp.eq.s32.totalorder %v3661, %v4696
        %vm4699 = vcmp.eq.s32.totalorder %v3661, %v4697
        %vm4700 = vcmp.eq.s32.totalorder %v3662, %v4696
        %vm4701 = vcmp.eq.s32.totalorder %v3662, %v4697
        %vm4702 = vcmp.eq.s32.totalorder %v3663, %v4696
        %vm4703 = vcmp.eq.s32.totalorder %v3663, %v4697
        %vm4704 = vcmp.eq.s32.totalorder %v3664, %v4696
        %vm4705 = vcmp.eq.s32.totalorder %v3664, %v4697
        %vm4706 = vcmp.eq.s32.totalorder %v3665, %v4696
        %vm4707 = vcmp.eq.s32.totalorder %v3665, %v4697
        %vm4708 = vcmp.eq.s32.totalorder %v3666, %v4696
        %vm4709 = vcmp.eq.s32.totalorder %v3666, %v4697
        %vm4710 = vcmp.eq.s32.totalorder %v3667, %v4696
        %vm4711 = vcmp.eq.s32.totalorder %v3667, %v4697
        %vm4712 = vcmp.eq.s32.totalorder %v3668, %v4696
        %vm4713 = vcmp.eq.s32.totalorder %v3668, %v4697
        %vm4714 = vcmp.eq.s32.totalorder %v3669, %v4696
        %vm4715 = vcmp.eq.s32.totalorder %v3669, %v4697
        %vm4716 = vcmp.eq.s32.totalorder %v3670, %v4696
        %vm4717 = vcmp.eq.s32.totalorder %v3670, %v4697
        %vm4718 = vcmp.eq.s32.totalorder %v3671, %v4696
        %vm4719 = vcmp.eq.s32.totalorder %v3671, %v4697
        %vm4720 = vcmp.eq.s32.totalorder %v3672, %v4696
        %vm4721 = vcmp.eq.s32.totalorder %v3672, %v4697
        %vm4722 = vcmp.eq.s32.totalorder %v3673, %v4696
        %vm4723 = vcmp.eq.s32.totalorder %v3673, %v4697
        %vm4724 = vcmp.eq.s32.totalorder %v3674, %v4696
        %vm4725 = vcmp.eq.s32.totalorder %v3674, %v4697
        %vm4726 = vcmp.eq.s32.totalorder %v3675, %v4696
        %vm4727 = vcmp.eq.s32.totalorder %v3675, %v4697
        %vm4728 = vcmp.eq.s32.totalorder %v3676, %v4696
        %vm4729 = vcmp.eq.s32.totalorder %v3676, %v4697
        %vm4730 = vcmp.eq.s32.totalorder %v3677, %v4696
        %vm4731 = vcmp.eq.s32.totalorder %v3677, %v4697
        %vm4732 = vcmp.eq.s32.totalorder %v3678, %v4696
        %vm4733 = vcmp.eq.s32.totalorder %v3678, %v4697
        %vm4734 = vcmp.eq.s32.totalorder %v3679, %v4696
        %vm4735 = vcmp.eq.s32.totalorder %v3679, %v4697
        %vm4736 = vcmp.eq.s32.totalorder %v3680, %v4696
        %vm4737 = vcmp.eq.s32.totalorder %v3680, %v4697
        %vm4738 = vcmp.eq.s32.totalorder %v3681, %v4696
        %vm4739 = vcmp.eq.s32.totalorder %v3681, %v4697
        %vm4740 = vcmp.eq.s32.totalorder %v3682, %v4696
        %vm4741 = vcmp.eq.s32.totalorder %v3682, %v4697
        %vm4742 = vcmp.eq.s32.totalorder %v3683, %v4696
        %vm4743 = vcmp.eq.s32.totalorder %v3683, %v4697
        %vm4744 = vcmp.eq.s32.totalorder %v3684, %v4696
        %vm4745 = vcmp.eq.s32.totalorder %v3684, %v4697
        %vm4746 = vcmp.eq.s32.totalorder %v3685, %v4696
        %vm4747 = vcmp.eq.s32.totalorder %v3685, %v4697
        %vm4748 = vcmp.eq.s32.totalorder %v3686, %v4696
        %vm4749 = vcmp.eq.s32.totalorder %v3686, %v4697
        %vm4750 = vcmp.eq.s32.totalorder %v3687, %v4696
        %vm4751 = vcmp.eq.s32.totalorder %v3687, %v4697
        %vm4752 = vcmp.eq.s32.totalorder %v3688, %v4696
        %vm4753 = vcmp.eq.s32.totalorder %v3688, %v4697
        %vm4754 = vcmp.eq.s32.totalorder %v3689, %v4696
        %vm4755 = vcmp.eq.s32.totalorder %v3689, %v4697
        %vm4756 = vcmp.eq.s32.totalorder %v3690, %v4696
        %vm4757 = vcmp.eq.s32.totalorder %v3690, %v4697
        %vm4758 = vcmp.eq.s32.totalorder %v3691, %v4696
        %vm4759 = vcmp.eq.s32.totalorder %v3691, %v4697
        %vm4760 = vcmp.eq.s32.totalorder %v3692, %v4696
        %vm4761 = vcmp.eq.s32.totalorder %v3692, %v4697
        %v4762 = vperm.slane %v4678, 0
        %v4763 = vperm.slane %v4679, 0
        %v4764 = vsel %vm4698, %v4762, 0.0
        %v4765 = vsel %vm4699, %v4763, 0.0
        %v4766 = vsel %vm4700, %v4762, 0.0
        %v4767 = vsel %vm4701, %v4763, 0.0
        %v4768 = vsel %vm4702, %v4762, 0.0
        %v4769 = vsel %vm4703, %v4763, 0.0
        %v4770 = vsel %vm4704, %v4762, 0.0
        %v4771 = vsel %vm4705, %v4763, 0.0
        %v4772 = vsel %vm4706, %v4762, 0.0
        %v4773 = vsel %vm4707, %v4763, 0.0
        %v4774 = vsel %vm4708, %v4762, 0.0
        %v4775 = vsel %vm4709, %v4763, 0.0
        %v4776 = vsel %vm4710, %v4762, 0.0
        %v4777 = vsel %vm4711, %v4763, 0.0
        %v4778 = vsel %vm4712, %v4762, 0.0
        %v4779 = vsel %vm4713, %v4763, 0.0
        %v4780 = vsel %vm4714, %v4762, 0.0
        %v4781 = vsel %vm4715, %v4763, 0.0
        %v4782 = vsel %vm4716, %v4762, 0.0
        %v4783 = vsel %vm4717, %v4763, 0.0
        %v4784 = vsel %vm4718, %v4762, 0.0
        %v4785 = vsel %vm4719, %v4763, 0.0
        %v4786 = vsel %vm4720, %v4762, 0.0
        %v4787 = vsel %vm4721, %v4763, 0.0
        %v4788 = vsel %vm4722, %v4762, 0.0
        %v4789 = vsel %vm4723, %v4763, 0.0
        %v4790 = vsel %vm4724, %v4762, 0.0
        %v4791 = vsel %vm4725, %v4763, 0.0
        %v4792 = vsel %vm4726, %v4762, 0.0
        %v4793 = vsel %vm4727, %v4763, 0.0
        %v4794 = vsel %vm4728, %v4762, 0.0
        %v4795 = vsel %vm4729, %v4763, 0.0
        %v4796 = vsel %vm4730, %v4762, 0.0
        %v4797 = vsel %vm4731, %v4763, 0.0
        %v4798 = vsel %vm4732, %v4762, 0.0
        %v4799 = vsel %vm4733, %v4763, 0.0
        %v4800 = vsel %vm4734, %v4762, 0.0
        %v4801 = vsel %vm4735, %v4763, 0.0
        %v4802 = vsel %vm4736, %v4762, 0.0
        %v4803 = vsel %vm4737, %v4763, 0.0
        %v4804 = vsel %vm4738, %v4762, 0.0
        %v4805 = vsel %vm4739, %v4763, 0.0
        %v4806 = vsel %vm4740, %v4762, 0.0
        %v4807 = vsel %vm4741, %v4763, 0.0
        %v4808 = vsel %vm4742, %v4762, 0.0
        %v4809 = vsel %vm4743, %v4763, 0.0
        %v4810 = vsel %vm4744, %v4762, 0.0
        %v4811 = vsel %vm4745, %v4763, 0.0
        %v4812 = vsel %vm4746, %v4762, 0.0
        %v4813 = vsel %vm4747, %v4763, 0.0
        %v4814 = vsel %vm4748, %v4762, 0.0
        %v4815 = vsel %vm4749, %v4763, 0.0
        %v4816 = vsel %vm4750, %v4762, 0.0
        %v4817 = vsel %vm4751, %v4763, 0.0
        %v4818 = vsel %vm4752, %v4762, 0.0
        %v4819 = vsel %vm4753, %v4763, 0.0
        %v4820 = vsel %vm4754, %v4762, 0.0
        %v4821 = vsel %vm4755, %v4763, 0.0
        %v4822 = vsel %vm4756, %v4762, 0.0
        %v4823 = vsel %vm4757, %v4763, 0.0
        %v4824 = vsel %vm4758, %v4762, 0.0
        %v4825 = vsel %vm4759, %v4763, 0.0
        %v4826 = vsel %vm4760, %v4762, 0.0
        %v4827 = vsel %vm4761, %v4763, 0.0
        %v4828 = vadd.f32 %v4650, 1.0
        %v4829 = vadd.f32 %v4651, 1.0
        %v4830 = vmul.f32 %v4654, %v4660
        %v4831 = vmul.f32 %v4655, %v4661
        %vm4832 = vcmp.ge.f32.partialorder %v4828, 0.0
        %vm4833 = vcmp.ge.f32.partialorder %v4829, 0.0
        %vm4834 = vcmp.le.f32.partialorder %v4828, 15.0
        %vm4835 = vcmp.le.f32.partialorder %v4829, 15.0
        %vm4836 = vmand %vm4832, %vm4834
        %vm4837 = vmand %vm4833, %vm4835
        %vm4838 = vmand %vm4836, %vm4670
        %vm4839 = vmand %vm4837, %vm4671
        %vm4840 = vmand %vm4838, %vm4674
        %vm4841 = vmand %vm4839, %vm4675
        %v4842 = vsel %vm4840, %v4830, 0.0
        %v4843 = vsel %vm4841, %v4831, 0.0
        %v4844 = vmax.f32 %v4828, 0.0
        %v4845 = vmax.f32 %v4829, 0.0
        %v4846 = vmin.f32 %v4844, 15.0
        %v4847 = vmin.f32 %v4845, 15.0
        %v4848 = vcvt.f32.s32.to.zero.pseudo %v4846
        %v4849 = vcvt.f32.s32.to.zero.pseudo %v4847
        %v4850 = vadd.s32 %v4692, %v4848
        %v4851 = vadd.s32 %v4693, %v4849
        %v4852 = vperm.slane %v4850, 0
        %v4853 = vperm.slane %v4851, 0
        %vm4854 = vcmp.eq.s32.totalorder %v3661, %v4852
        %vm4855 = vcmp.eq.s32.totalorder %v3661, %v4853
        %vm4856 = vcmp.eq.s32.totalorder %v3662, %v4852
        %vm4857 = vcmp.eq.s32.totalorder %v3662, %v4853
        %vm4858 = vcmp.eq.s32.totalorder %v3663, %v4852
        %vm4859 = vcmp.eq.s32.totalorder %v3663, %v4853
        %vm4860 = vcmp.eq.s32.totalorder %v3664, %v4852
        %vm4861 = vcmp.eq.s32.totalorder %v3664, %v4853
        %vm4862 = vcmp.eq.s32.totalorder %v3665, %v4852
        %vm4863 = vcmp.eq.s32.totalorder %v3665, %v4853
        %vm4864 = vcmp.eq.s32.totalorder %v3666, %v4852
        %vm4865 = vcmp.eq.s32.totalorder %v3666, %v4853
        %vm4866 = vcmp.eq.s32.totalorder %v3667, %v4852
        %vm4867 = vcmp.eq.s32.totalorder %v3667, %v4853
        %vm4868 = vcmp.eq.s32.totalorder %v3668, %v4852
        %vm4869 = vcmp.eq.s32.totalorder %v3668, %v4853
        %vm4870 = vcmp.eq.s32.totalorder %v3669, %v4852
        %vm4871 = vcmp.eq.s32.totalorder %v3669, %v4853
        %vm4872 = vcmp.eq.s32.totalorder %v3670, %v4852
        %vm4873 = vcmp.eq.s32.totalorder %v3670, %v4853
        %vm4874 = vcmp.eq.s32.totalorder %v3671, %v4852
        %vm4875 = vcmp.eq.s32.totalorder %v3671, %v4853
        %vm4876 = vcmp.eq.s32.totalorder %v3672, %v4852
        %vm4877 = vcmp.eq.s32.totalorder %v3672, %v4853
        %vm4878 = vcmp.eq.s32.totalorder %v3673, %v4852
        %vm4879 = vcmp.eq.s32.totalorder %v3673, %v4853
        %vm4880 = vcmp.eq.s32.totalorder %v3674, %v4852
        %vm4881 = vcmp.eq.s32.totalorder %v3674, %v4853
        %vm4882 = vcmp.eq.s32.totalorder %v3675, %v4852
        %vm4883 = vcmp.eq.s32.totalorder %v3675, %v4853
        %vm4884 = vcmp.eq.s32.totalorder %v3676, %v4852
        %vm4885 = vcmp.eq.s32.totalorder %v3676, %v4853
        %vm4886 = vcmp.eq.s32.totalorder %v3677, %v4852
        %vm4887 = vcmp.eq.s32.totalorder %v3677, %v4853
        %vm4888 = vcmp.eq.s32.totalorder %v3678, %v4852
        %vm4889 = vcmp.eq.s32.totalorder %v3678, %v4853
        %vm4890 = vcmp.eq.s32.totalorder %v3679, %v4852
        %vm4891 = vcmp.eq.s32.totalorder %v3679, %v4853
        %vm4892 = vcmp.eq.s32.totalorder %v3680, %v4852
        %vm4893 = vcmp.eq.s32.totalorder %v3680, %v4853
        %vm4894 = vcmp.eq.s32.totalorder %v3681, %v4852
        %vm4895 = vcmp.eq.s32.totalorder %v3681, %v4853
        %vm4896 = vcmp.eq.s32.totalorder %v3682, %v4852
        %vm4897 = vcmp.eq.s32.totalorder %v3682, %v4853
        %vm4898 = vcmp.eq.s32.totalorder %v3683, %v4852
        %vm4899 = vcmp.eq.s32.totalorder %v3683, %v4853
        %vm4900 = vcmp.eq.s32.totalorder %v3684, %v4852
        %vm4901 = vcmp.eq.s32.totalorder %v3684, %v4853
        %vm4902 = vcmp.eq.s32.totalorder %v3685, %v4852
        %vm4903 = vcmp.eq.s32.totalorder %v3685, %v4853
        %vm4904 = vcmp.eq.s32.totalorder %v3686, %v4852
        %vm4905 = vcmp.eq.s32.totalorder %v3686, %v4853
        %vm4906 = vcmp.eq.s32.totalorder %v3687, %v4852
        %vm4907 = vcmp.eq.s32.totalorder %v3687, %v4853
        %vm4908 = vcmp.eq.s32.totalorder %v3688, %v4852
        %vm4909 = vcmp.eq.s32.totalorder %v3688, %v4853
        %vm4910 = vcmp.eq.s32.totalorder %v3689, %v4852
        %vm4911 = vcmp.eq.s32.totalorder %v3689, %v4853
        %vm4912 = vcmp.eq.s32.totalorder %v3690, %v4852
        %vm4913 = vcmp.eq.s32.totalorder %v3690, %v4853
        %vm4914 = vcmp.eq.s32.totalorder %v3691, %v4852
        %vm4915 = vcmp.eq.s32.totalorder %v3691, %v4853
        %vm4916 = vcmp.eq.s32.totalorder %v3692, %v4852
        %vm4917 = vcmp.eq.s32.totalorder %v3692, %v4853
        %v4918 = vperm.slane %v4842, 0
        %v4919 = vperm.slane %v4843, 0
        %v4920 = vsel %vm4854, %v4918, 0.0
        %v4921 = vsel %vm4855, %v4919, 0.0
        %v4922 = vsel %vm4856, %v4918, 0.0
        %v4923 = vsel %vm4857, %v4919, 0.0
        %v4924 = vsel %vm4858, %v4918, 0.0
        %v4925 = vsel %vm4859, %v4919, 0.0
        %v4926 = vsel %vm4860, %v4918, 0.0
        %v4927 = vsel %vm4861, %v4919, 0.0
        %v4928 = vsel %vm4862, %v4918, 0.0
        %v4929 = vsel %vm4863, %v4919, 0.0
        %v4930 = vsel %vm4864, %v4918, 0.0
        %v4931 = vsel %vm4865, %v4919, 0.0
        %v4932 = vsel %vm4866, %v4918, 0.0
        %v4933 = vsel %vm4867, %v4919, 0.0
        %v4934 = vsel %vm4868, %v4918, 0.0
        %v4935 = vsel %vm4869, %v4919, 0.0
        %v4936 = vsel %vm4870, %v4918, 0.0
        %v4937 = vsel %vm4871, %v4919, 0.0
        %v4938 = vsel %vm4872, %v4918, 0.0
        %v4939 = vsel %vm4873, %v4919, 0.0
        %v4940 = vsel %vm4874, %v4918, 0.0
        %v4941 = vsel %vm4875, %v4919, 0.0
        %v4942 = vsel %vm4876, %v4918, 0.0
        %v4943 = vsel %vm4877, %v4919, 0.0
        %v4944 = vsel %vm4878, %v4918, 0.0
        %v4945 = vsel %vm4879, %v4919, 0.0
        %v4946 = vsel %vm4880, %v4918, 0.0
        %v4947 = vsel %vm4881, %v4919, 0.0
        %v4948 = vsel %vm4882, %v4918, 0.0
        %v4949 = vsel %vm4883, %v4919, 0.0
        %v4950 = vsel %vm4884, %v4918, 0.0
        %v4951 = vsel %vm4885, %v4919, 0.0
        %v4952 = vsel %vm4886, %v4918, 0.0
        %v4953 = vsel %vm4887, %v4919, 0.0
        %v4954 = vsel %vm4888, %v4918, 0.0
        %v4955 = vsel %vm4889, %v4919, 0.0
        %v4956 = vsel %vm4890, %v4918, 0.0
        %v4957 = vsel %vm4891, %v4919, 0.0
        %v4958 = vsel %vm4892, %v4918, 0.0
        %v4959 = vsel %vm4893, %v4919, 0.0
        %v4960 = vsel %vm4894, %v4918, 0.0
        %v4961 = vsel %vm4895, %v4919, 0.0
        %v4962 = vsel %vm4896, %v4918, 0.0
        %v4963 = vsel %vm4897, %v4919, 0.0
        %v4964 = vsel %vm4898, %v4918, 0.0
        %v4965 = vsel %vm4899, %v4919, 0.0
        %v4966 = vsel %vm4900, %v4918, 0.0
        %v4967 = vsel %vm4901, %v4919, 0.0
        %v4968 = vsel %vm4902, %v4918, 0.0
        %v4969 = vsel %vm4903, %v4919, 0.0
        %v4970 = vsel %vm4904, %v4918, 0.0
        %v4971 = vsel %vm4905, %v4919, 0.0
        %v4972 = vsel %vm4906, %v4918, 0.0
        %v4973 = vsel %vm4907, %v4919, 0.0
        %v4974 = vsel %vm4908, %v4918, 0.0
        %v4975 = vsel %vm4909, %v4919, 0.0
        %v4976 = vsel %vm4910, %v4918, 0.0
        %v4977 = vsel %vm4911, %v4919, 0.0
        %v4978 = vsel %vm4912, %v4918, 0.0
        %v4979 = vsel %vm4913, %v4919, 0.0
        %v4980 = vsel %vm4914, %v4918, 0.0
        %v4981 = vsel %vm4915, %v4919, 0.0
        %v4982 = vsel %vm4916, %v4918, 0.0
        %v4983 = vsel %vm4917, %v4919, 0.0
        %v4984 = vadd.f32 %v4764, %v4920
        %v4985 = vadd.f32 %v4765, %v4921
        %v4986 = vadd.f32 %v4766, %v4922
        %v4987 = vadd.f32 %v4767, %v4923
        %v4988 = vadd.f32 %v4768, %v4924
        %v4989 = vadd.f32 %v4769, %v4925
        %v4990 = vadd.f32 %v4770, %v4926
        %v4991 = vadd.f32 %v4771, %v4927
        %v4992 = vadd.f32 %v4772, %v4928
        %v4993 = vadd.f32 %v4773, %v4929
        %v4994 = vadd.f32 %v4774, %v4930
        %v4995 = vadd.f32 %v4775, %v4931
        %v4996 = vadd.f32 %v4776, %v4932
        %v4997 = vadd.f32 %v4777, %v4933
        %v4998 = vadd.f32 %v4778, %v4934
        %v4999 = vadd.f32 %v4779, %v4935
        %v5000 = vadd.f32 %v4780, %v4936
        %v5001 = vadd.f32 %v4781, %v4937
        %v5002 = vadd.f32 %v4782, %v4938
        %v5003 = vadd.f32 %v4783, %v4939
        %v5004 = vadd.f32 %v4784, %v4940
        %v5005 = vadd.f32 %v4785, %v4941
        %v5006 = vadd.f32 %v4786, %v4942
        %v5007 = vadd.f32 %v4787, %v4943
        %v5008 = vadd.f32 %v4788, %v4944
        %v5009 = vadd.f32 %v4789, %v4945
        %v5010 = vadd.f32 %v4790, %v4946
        %v5011 = vadd.f32 %v4791, %v4947
        %v5012 = vadd.f32 %v4792, %v4948
        %v5013 = vadd.f32 %v4793, %v4949
        %v5014 = vadd.f32 %v4794, %v4950
        %v5015 = vadd.f32 %v4795, %v4951
        %v5016 = vadd.f32 %v4796, %v4952
        %v5017 = vadd.f32 %v4797, %v4953
        %v5018 = vadd.f32 %v4798, %v4954
        %v5019 = vadd.f32 %v4799, %v4955
        %v5020 = vadd.f32 %v4800, %v4956
        %v5021 = vadd.f32 %v4801, %v4957
        %v5022 = vadd.f32 %v4802, %v4958
        %v5023 = vadd.f32 %v4803, %v4959
        %v5024 = vadd.f32 %v4804, %v4960
        %v5025 = vadd.f32 %v4805, %v4961
        %v5026 = vadd.f32 %v4806, %v4962
        %v5027 = vadd.f32 %v4807, %v4963
        %v5028 = vadd.f32 %v4808, %v4964
        %v5029 = vadd.f32 %v4809, %v4965
        %v5030 = vadd.f32 %v4810, %v4966
        %v5031 = vadd.f32 %v4811, %v4967
        %v5032 = vadd.f32 %v4812, %v4968
        %v5033 = vadd.f32 %v4813, %v4969
        %v5034 = vadd.f32 %v4814, %v4970
        %v5035 = vadd.f32 %v4815, %v4971
        %v5036 = vadd.f32 %v4816, %v4972
        %v5037 = vadd.f32 %v4817, %v4973
        %v5038 = vadd.f32 %v4818, %v4974
        %v5039 = vadd.f32 %v4819, %v4975
        %v5040 = vadd.f32 %v4820, %v4976
        %v5041 = vadd.f32 %v4821, %v4977
        %v5042 = vadd.f32 %v4822, %v4978
        %v5043 = vadd.f32 %v4823, %v4979
        %v5044 = vadd.f32 %v4824, %v4980
        %v5045 = vadd.f32 %v4825, %v4981
        %v5046 = vadd.f32 %v4826, %v4982
        %v5047 = vadd.f32 %v4827, %v4983
        %v5048 = vadd.f32 %v4652, 1.0
        %v5049 = vadd.f32 %v4653, 1.0
        %v5050 = vmul.f32 %v4658, %v4656
        %v5051 = vmul.f32 %v4659, %v4657
        %vm5052 = vcmp.ge.f32.partialorder %v5048, 0.0
        %vm5053 = vcmp.ge.f32.partialorder %v5049, 0.0
        %vm5054 = vmand %vm4668, %vm5052
        %vm5055 = vmand %vm4669, %vm5053
        %vm5056 = vcmp.le.f32.partialorder %v5048, 15.0
        %vm5057 = vcmp.le.f32.partialorder %v5049, 15.0
        %vm5058 = vmand %vm5054, %vm5056
        %vm5059 = vmand %vm5055, %vm5057
        %v5060 = vsel %vm5058, %v5050, 0.0
        %v5061 = vsel %vm5059, %v5051, 0.0
        %v5062 = vmax.f32 %v5048, 0.0
        %v5063 = vmax.f32 %v5049, 0.0
        %v5064 = vmin.f32 %v5062, 15.0
        %v5065 = vmin.f32 %v5063, 15.0
        %v5066 = vcvt.f32.s32.to.zero.pseudo %v5064
        %v5067 = vcvt.f32.s32.to.zero.pseudo %v5065
        %v5068 = vmul.u32 %v5066, 16
        %v5069 = vmul.u32 %v5067, 16
        %v5070 = vadd.s32 %v5068, %v4684
        %v5071 = vadd.s32 %v5069, %v4685
        %v5072 = vperm.slane %v5070, 0
        %v5073 = vperm.slane %v5071, 0
        %vm5074 = vcmp.eq.s32.totalorder %v3661, %v5072
        %vm5075 = vcmp.eq.s32.totalorder %v3661, %v5073
        %vm5076 = vcmp.eq.s32.totalorder %v3662, %v5072
        %vm5077 = vcmp.eq.s32.totalorder %v3662, %v5073
        %vm5078 = vcmp.eq.s32.totalorder %v3663, %v5072
        %vm5079 = vcmp.eq.s32.totalorder %v3663, %v5073
        %vm5080 = vcmp.eq.s32.totalorder %v3664, %v5072
        %vm5081 = vcmp.eq.s32.totalorder %v3664, %v5073
        %vm5082 = vcmp.eq.s32.totalorder %v3665, %v5072
        %vm5083 = vcmp.eq.s32.totalorder %v3665, %v5073
        %vm5084 = vcmp.eq.s32.totalorder %v3666, %v5072
        %vm5085 = vcmp.eq.s32.totalorder %v3666, %v5073
        %vm5086 = vcmp.eq.s32.totalorder %v3667, %v5072
        %vm5087 = vcmp.eq.s32.totalorder %v3667, %v5073
        %vm5088 = vcmp.eq.s32.totalorder %v3668, %v5072
        %vm5089 = vcmp.eq.s32.totalorder %v3668, %v5073
        %vm5090 = vcmp.eq.s32.totalorder %v3669, %v5072
        %vm5091 = vcmp.eq.s32.totalorder %v3669, %v5073
        %vm5092 = vcmp.eq.s32.totalorder %v3670, %v5072
        %vm5093 = vcmp.eq.s32.totalorder %v3670, %v5073
        %vm5094 = vcmp.eq.s32.totalorder %v3671, %v5072
        %vm5095 = vcmp.eq.s32.totalorder %v3671, %v5073
        %vm5096 = vcmp.eq.s32.totalorder %v3672, %v5072
        %vm5097 = vcmp.eq.s32.totalorder %v3672, %v5073
        %vm5098 = vcmp.eq.s32.totalorder %v3673, %v5072
        %vm5099 = vcmp.eq.s32.totalorder %v3673, %v5073
        %vm5100 = vcmp.eq.s32.totalorder %v3674, %v5072
        %vm5101 = vcmp.eq.s32.totalorder %v3674, %v5073
        %vm5102 = vcmp.eq.s32.totalorder %v3675, %v5072
        %vm5103 = vcmp.eq.s32.totalorder %v3675, %v5073
        %vm5104 = vcmp.eq.s32.totalorder %v3676, %v5072
        %vm5105 = vcmp.eq.s32.totalorder %v3676, %v5073
        %vm5106 = vcmp.eq.s32.totalorder %v3677, %v5072
        %vm5107 = vcmp.eq.s32.totalorder %v3677, %v5073
        %vm5108 = vcmp.eq.s32.totalorder %v3678, %v5072
        %vm5109 = vcmp.eq.s32.totalorder %v3678, %v5073
        %vm5110 = vcmp.eq.s32.totalorder %v3679, %v5072
        %vm5111 = vcmp.eq.s32.totalorder %v3679, %v5073
        %vm5112 = vcmp.eq.s32.totalorder %v3680, %v5072
        %vm5113 = vcmp.eq.s32.totalorder %v3680, %v5073
        %vm5114 = vcmp.eq.s32.totalorder %v3681, %v5072
        %vm5115 = vcmp.eq.s32.totalorder %v3681, %v5073
        %vm5116 = vcmp.eq.s32.totalorder %v3682, %v5072
        %vm5117 = vcmp.eq.s32.totalorder %v3682, %v5073
        %vm5118 = vcmp.eq.s32.totalorder %v3683, %v5072
        %vm5119 = vcmp.eq.s32.totalorder %v3683, %v5073
        %vm5120 = vcmp.eq.s32.totalorder %v3684, %v5072
        %vm5121 = vcmp.eq.s32.totalorder %v3684, %v5073
        %vm5122 = vcmp.eq.s32.totalorder %v3685, %v5072
        %vm5123 = vcmp.eq.s32.totalorder %v3685, %v5073
        %vm5124 = vcmp.eq.s32.totalorder %v3686, %v5072
        %vm5125 = vcmp.eq.s32.totalorder %v3686, %v5073
        %vm5126 = vcmp.eq.s32.totalorder %v3687, %v5072
        %vm5127 = vcmp.eq.s32.totalorder %v3687, %v5073
        %vm5128 = vcmp.eq.s32.totalorder %v3688, %v5072
        %vm5129 = vcmp.eq.s32.totalorder %v3688, %v5073
        %vm5130 = vcmp.eq.s32.totalorder %v3689, %v5072
        %vm5131 = vcmp.eq.s32.totalorder %v3689, %v5073
        %vm5132 = vcmp.eq.s32.totalorder %v3690, %v5072
        %vm5133 = vcmp.eq.s32.totalorder %v3690, %v5073
        %vm5134 = vcmp.eq.s32.totalorder %v3691, %v5072
        %vm5135 = vcmp.eq.s32.totalorder %v3691, %v5073
        %vm5136 = vcmp.eq.s32.totalorder %v3692, %v5072
        %vm5137 = vcmp.eq.s32.totalorder %v3692, %v5073
        %v5138 = vperm.slane %v5060, 0
        %v5139 = vperm.slane %v5061, 0
        %v5140 = vsel %vm5074, %v5138, 0.0
        %v5141 = vsel %vm5075, %v5139, 0.0
        %v5142 = vsel %vm5076, %v5138, 0.0
        %v5143 = vsel %vm5077, %v5139, 0.0
        %v5144 = vsel %vm5078, %v5138, 0.0
        %v5145 = vsel %vm5079, %v5139, 0.0
        %v5146 = vsel %vm5080, %v5138, 0.0
        %v5147 = vsel %vm5081, %v5139, 0.0
        %v5148 = vsel %vm5082, %v5138, 0.0
        %v5149 = vsel %vm5083, %v5139, 0.0
        %v5150 = vsel %vm5084, %v5138, 0.0
        %v5151 = vsel %vm5085, %v5139, 0.0
        %v5152 = vsel %vm5086, %v5138, 0.0
        %v5153 = vsel %vm5087, %v5139, 0.0
        %v5154 = vsel %vm5088, %v5138, 0.0
        %v5155 = vsel %vm5089, %v5139, 0.0
        %v5156 = vsel %vm5090, %v5138, 0.0
        %v5157 = vsel %vm5091, %v5139, 0.0
        %v5158 = vsel %vm5092, %v5138, 0.0
        %v5159 = vsel %vm5093, %v5139, 0.0
        %v5160 = vsel %vm5094, %v5138, 0.0
        %v5161 = vsel %vm5095, %v5139, 0.0
        %v5162 = vsel %vm5096, %v5138, 0.0
        %v5163 = vsel %vm5097, %v5139, 0.0
        %v5164 = vsel %vm5098, %v5138, 0.0
        %v5165 = vsel %vm5099, %v5139, 0.0
        %v5166 = vsel %vm5100, %v5138, 0.0
        %v5167 = vsel %vm5101, %v5139, 0.0
        %v5168 = vsel %vm5102, %v5138, 0.0
        %v5169 = vsel %vm5103, %v5139, 0.0
        %v5170 = vsel %vm5104, %v5138, 0.0
        %v5171 = vsel %vm5105, %v5139, 0.0
        %v5172 = vsel %vm5106, %v5138, 0.0
        %v5173 = vsel %vm5107, %v5139, 0.0
        %v5174 = vsel %vm5108, %v5138, 0.0
        %v5175 = vsel %vm5109, %v5139, 0.0
        %v5176 = vsel %vm5110, %v5138, 0.0
        %v5177 = vsel %vm5111, %v5139, 0.0
        %v5178 = vsel %vm5112, %v5138, 0.0
        %v5179 = vsel %vm5113, %v5139, 0.0
        %v5180 = vsel %vm5114, %v5138, 0.0
        %v5181 = vsel %vm5115, %v5139, 0.0
        %v5182 = vsel %vm5116, %v5138, 0.0
        %v5183 = vsel %vm5117, %v5139, 0.0
        %v5184 = vsel %vm5118, %v5138, 0.0
        %v5185 = vsel %vm5119, %v5139, 0.0
        %v5186 = vsel %vm5120, %v5138, 0.0
        %v5187 = vsel %vm5121, %v5139, 0.0
        %v5188 = vsel %vm5122, %v5138, 0.0
        %v5189 = vsel %vm5123, %v5139, 0.0
        %v5190 = vsel %vm5124, %v5138, 0.0
        %v5191 = vsel %vm5125, %v5139, 0.0
        %v5192 = vsel %vm5126, %v5138, 0.0
        %v5193 = vsel %vm5127, %v5139, 0.0
        %v5194 = vsel %vm5128, %v5138, 0.0
        %v5195 = vsel %vm5129, %v5139, 0.0
        %v5196 = vsel %vm5130, %v5138, 0.0
        %v5197 = vsel %vm5131, %v5139, 0.0
        %v5198 = vsel %vm5132, %v5138, 0.0
        %v5199 = vsel %vm5133, %v5139, 0.0
        %v5200 = vsel %vm5134, %v5138, 0.0
        %v5201 = vsel %vm5135, %v5139, 0.0
        %v5202 = vsel %vm5136, %v5138, 0.0
        %v5203 = vsel %vm5137, %v5139, 0.0
        %v5204 = vadd.f32 %v4984, %v5140
        %v5205 = vadd.f32 %v4985, %v5141
        %v5206 = vadd.f32 %v4986, %v5142
        %v5207 = vadd.f32 %v4987, %v5143
        %v5208 = vadd.f32 %v4988, %v5144
        %v5209 = vadd.f32 %v4989, %v5145
        %v5210 = vadd.f32 %v4990, %v5146
        %v5211 = vadd.f32 %v4991, %v5147
        %v5212 = vadd.f32 %v4992, %v5148
        %v5213 = vadd.f32 %v4993, %v5149
        %v5214 = vadd.f32 %v4994, %v5150
        %v5215 = vadd.f32 %v4995, %v5151
        %v5216 = vadd.f32 %v4996, %v5152
        %v5217 = vadd.f32 %v4997, %v5153
        %v5218 = vadd.f32 %v4998, %v5154
        %v5219 = vadd.f32 %v4999, %v5155
        %v5220 = vadd.f32 %v5000, %v5156
        %v5221 = vadd.f32 %v5001, %v5157
        %v5222 = vadd.f32 %v5002, %v5158
        %v5223 = vadd.f32 %v5003, %v5159
        %v5224 = vadd.f32 %v5004, %v5160
        %v5225 = vadd.f32 %v5005, %v5161
        %v5226 = vadd.f32 %v5006, %v5162
        %v5227 = vadd.f32 %v5007, %v5163
        %v5228 = vadd.f32 %v5008, %v5164
        %v5229 = vadd.f32 %v5009, %v5165
        %v5230 = vadd.f32 %v5010, %v5166
        %v5231 = vadd.f32 %v5011, %v5167
        %v5232 = vadd.f32 %v5012, %v5168
        %v5233 = vadd.f32 %v5013, %v5169
        %v5234 = vadd.f32 %v5014, %v5170
        %v5235 = vadd.f32 %v5015, %v5171
        %v5236 = vadd.f32 %v5016, %v5172
        %v5237 = vadd.f32 %v5017, %v5173
        %v5238 = vadd.f32 %v5018, %v5174
        %v5239 = vadd.f32 %v5019, %v5175
        %v5240 = vadd.f32 %v5020, %v5176
        %v5241 = vadd.f32 %v5021, %v5177
        %v5242 = vadd.f32 %v5022, %v5178
        %v5243 = vadd.f32 %v5023, %v5179
        %v5244 = vadd.f32 %v5024, %v5180
        %v5245 = vadd.f32 %v5025, %v5181
        %v5246 = vadd.f32 %v5026, %v5182
        %v5247 = vadd.f32 %v5027, %v5183
        %v5248 = vadd.f32 %v5028, %v5184
        %v5249 = vadd.f32 %v5029, %v5185
        %v5250 = vadd.f32 %v5030, %v5186
        %v5251 = vadd.f32 %v5031, %v5187
        %v5252 = vadd.f32 %v5032, %v5188
        %v5253 = vadd.f32 %v5033, %v5189
        %v5254 = vadd.f32 %v5034, %v5190
        %v5255 = vadd.f32 %v5035, %v5191
        %v5256 = vadd.f32 %v5036, %v5192
        %v5257 = vadd.f32 %v5037, %v5193
        %v5258 = vadd.f32 %v5038, %v5194
        %v5259 = vadd.f32 %v5039, %v5195
        %v5260 = vadd.f32 %v5040, %v5196
        %v5261 = vadd.f32 %v5041, %v5197
        %v5262 = vadd.f32 %v5042, %v5198
        %v5263 = vadd.f32 %v5043, %v5199
        %v5264 = vadd.f32 %v5044, %v5200
        %v5265 = vadd.f32 %v5045, %v5201
        %v5266 = vadd.f32 %v5046, %v5202
        %v5267 = vadd.f32 %v5047, %v5203
        %v5268 = vmul.f32 %v4654, %v4656
        %v5269 = vmul.f32 %v4655, %v4657
        %vm5270 = vmand %vm4836, %vm5052
        %vm5271 = vmand %vm4837, %vm5053
        %vm5272 = vmand %vm5270, %vm5056
        %vm5273 = vmand %vm5271, %vm5057
        %v5274 = vsel %vm5272, %v5268, 0.0
        %v5275 = vsel %vm5273, %v5269, 0.0
        %v5276 = vadd.s32 %v5068, %v4848
        %v5277 = vadd.s32 %v5069, %v4849
        %v5278 = vperm.slane %v5276, 0
        %v5279 = vperm.slane %v5277, 0
        %vm5280 = vcmp.eq.s32.totalorder %v3661, %v5278
        %vm5281 = vcmp.eq.s32.totalorder %v3661, %v5279
        %vm5282 = vcmp.eq.s32.totalorder %v3662, %v5278
        %vm5283 = vcmp.eq.s32.totalorder %v3662, %v5279
        %vm5284 = vcmp.eq.s32.totalorder %v3663, %v5278
        %vm5285 = vcmp.eq.s32.totalorder %v3663, %v5279
        %vm5286 = vcmp.eq.s32.totalorder %v3664, %v5278
        %vm5287 = vcmp.eq.s32.totalorder %v3664, %v5279
        %vm5288 = vcmp.eq.s32.totalorder %v3665, %v5278
        %vm5289 = vcmp.eq.s32.totalorder %v3665, %v5279
        %vm5290 = vcmp.eq.s32.totalorder %v3666, %v5278
        %vm5291 = vcmp.eq.s32.totalorder %v3666, %v5279
        %vm5292 = vcmp.eq.s32.totalorder %v3667, %v5278
        %vm5293 = vcmp.eq.s32.totalorder %v3667, %v5279
        %vm5294 = vcmp.eq.s32.totalorder %v3668, %v5278
        %vm5295 = vcmp.eq.s32.totalorder %v3668, %v5279
        %vm5296 = vcmp.eq.s32.totalorder %v3669, %v5278
        %vm5297 = vcmp.eq.s32.totalorder %v3669, %v5279
        %vm5298 = vcmp.eq.s32.totalorder %v3670, %v5278
        %vm5299 = vcmp.eq.s32.totalorder %v3670, %v5279
        %vm5300 = vcmp.eq.s32.totalorder %v3671, %v5278
        %vm5301 = vcmp.eq.s32.totalorder %v3671, %v5279
        %vm5302 = vcmp.eq.s32.totalorder %v3672, %v5278
        %vm5303 = vcmp.eq.s32.totalorder %v3672, %v5279
        %vm5304 = vcmp.eq.s32.totalorder %v3673, %v5278
        %vm5305 = vcmp.eq.s32.totalorder %v3673, %v5279
        %vm5306 = vcmp.eq.s32.totalorder %v3674, %v5278
        %vm5307 = vcmp.eq.s32.totalorder %v3674, %v5279
        %vm5308 = vcmp.eq.s32.totalorder %v3675, %v5278
        %vm5309 = vcmp.eq.s32.totalorder %v3675, %v5279
        %vm5310 = vcmp.eq.s32.totalorder %v3676, %v5278
        %vm5311 = vcmp.eq.s32.totalorder %v3676, %v5279
        %vm5312 = vcmp.eq.s32.totalorder %v3677, %v5278
        %vm5313 = vcmp.eq.s32.totalorder %v3677, %v5279
        %vm5314 = vcmp.eq.s32.totalorder %v3678, %v5278
        %vm5315 = vcmp.eq.s32.totalorder %v3678, %v5279
        %vm5316 = vcmp.eq.s32.totalorder %v3679, %v5278
        %vm5317 = vcmp.eq.s32.totalorder %v3679, %v5279
        %vm5318 = vcmp.eq.s32.totalorder %v3680, %v5278
        %vm5319 = vcmp.eq.s32.totalorder %v3680, %v5279
        %vm5320 = vcmp.eq.s32.totalorder %v3681, %v5278
        %vm5321 = vcmp.eq.s32.totalorder %v3681, %v5279
        %vm5322 = vcmp.eq.s32.totalorder %v3682, %v5278
        %vm5323 = vcmp.eq.s32.totalorder %v3682, %v5279
        %vm5324 = vcmp.eq.s32.totalorder %v3683, %v5278
        %vm5325 = vcmp.eq.s32.totalorder %v3683, %v5279
        %vm5326 = vcmp.eq.s32.totalorder %v3684, %v5278
        %vm5327 = vcmp.eq.s32.totalorder %v3684, %v5279
        %vm5328 = vcmp.eq.s32.totalorder %v3685, %v5278
        %vm5329 = vcmp.eq.s32.totalorder %v3685, %v5279
        %vm5330 = vcmp.eq.s32.totalorder %v3686, %v5278
        %vm5331 = vcmp.eq.s32.totalorder %v3686, %v5279
        %vm5332 = vcmp.eq.s32.totalorder %v3687, %v5278
        %vm5333 = vcmp.eq.s32.totalorder %v3687, %v5279
        %vm5334 = vcmp.eq.s32.totalorder %v3688, %v5278
        %vm5335 = vcmp.eq.s32.totalorder %v3688, %v5279
        %vm5336 = vcmp.eq.s32.totalorder %v3689, %v5278
        %vm5337 = vcmp.eq.s32.totalorder %v3689, %v5279
        %vm5338 = vcmp.eq.s32.totalorder %v3690, %v5278
        %vm5339 = vcmp.eq.s32.totalorder %v3690, %v5279
        %vm5340 = vcmp.eq.s32.totalorder %v3691, %v5278
        %vm5341 = vcmp.eq.s32.totalorder %v3691, %v5279
        %vm5342 = vcmp.eq.s32.totalorder %v3692, %v5278
        %vm5343 = vcmp.eq.s32.totalorder %v3692, %v5279
        %v5344 = vperm.slane %v5274, 0
        %v5345 = vperm.slane %v5275, 0
        %v5346 = vsel %vm5280, %v5344, 0.0
        %v5347 = vsel %vm5281, %v5345, 0.0
        %v5348 = vsel %vm5282, %v5344, 0.0
        %v5349 = vsel %vm5283, %v5345, 0.0
        %v5350 = vsel %vm5284, %v5344, 0.0
        %v5351 = vsel %vm5285, %v5345, 0.0
        %v5352 = vsel %vm5286, %v5344, 0.0
        %v5353 = vsel %vm5287, %v5345, 0.0
        %v5354 = vsel %vm5288, %v5344, 0.0
        %v5355 = vsel %vm5289, %v5345, 0.0
        %v5356 = vsel %vm5290, %v5344, 0.0
        %v5357 = vsel %vm5291, %v5345, 0.0
        %v5358 = vsel %vm5292, %v5344, 0.0
        %v5359 = vsel %vm5293, %v5345, 0.0
        %v5360 = vsel %vm5294, %v5344, 0.0
        %v5361 = vsel %vm5295, %v5345, 0.0
        %v5362 = vsel %vm5296, %v5344, 0.0
        %v5363 = vsel %vm5297, %v5345, 0.0
        %v5364 = vsel %vm5298, %v5344, 0.0
        %v5365 = vsel %vm5299, %v5345, 0.0
        %v5366 = vsel %vm5300, %v5344, 0.0
        %v5367 = vsel %vm5301, %v5345, 0.0
        %v5368 = vsel %vm5302, %v5344, 0.0
        %v5369 = vsel %vm5303, %v5345, 0.0
        %v5370 = vsel %vm5304, %v5344, 0.0
        %v5371 = vsel %vm5305, %v5345, 0.0
        %v5372 = vsel %vm5306, %v5344, 0.0
        %v5373 = vsel %vm5307, %v5345, 0.0
        %v5374 = vsel %vm5308, %v5344, 0.0
        %v5375 = vsel %vm5309, %v5345, 0.0
        %v5376 = vsel %vm5310, %v5344, 0.0
        %v5377 = vsel %vm5311, %v5345, 0.0
        %v5378 = vsel %vm5312, %v5344, 0.0
        %v5379 = vsel %vm5313, %v5345, 0.0
        %v5380 = vsel %vm5314, %v5344, 0.0
        %v5381 = vsel %vm5315, %v5345, 0.0
        %v5382 = vsel %vm5316, %v5344, 0.0
        %v5383 = vsel %vm5317, %v5345, 0.0
        %v5384 = vsel %vm5318, %v5344, 0.0
        %v5385 = vsel %vm5319, %v5345, 0.0
        %v5386 = vsel %vm5320, %v5344, 0.0
        %v5387 = vsel %vm5321, %v5345, 0.0
        %v5388 = vsel %vm5322, %v5344, 0.0
        %v5389 = vsel %vm5323, %v5345, 0.0
        %v5390 = vsel %vm5324, %v5344, 0.0
        %v5391 = vsel %vm5325, %v5345, 0.0
        %v5392 = vsel %vm5326, %v5344, 0.0
        %v5393 = vsel %vm5327, %v5345, 0.0
        %v5394 = vsel %vm5328, %v5344, 0.0
        %v5395 = vsel %vm5329, %v5345, 0.0
        %v5396 = vsel %vm5330, %v5344, 0.0
        %v5397 = vsel %vm5331, %v5345, 0.0
        %v5398 = vsel %vm5332, %v5344, 0.0
        %v5399 = vsel %vm5333, %v5345, 0.0
        %v5400 = vsel %vm5334, %v5344, 0.0
        %v5401 = vsel %vm5335, %v5345, 0.0
        %v5402 = vsel %vm5336, %v5344, 0.0
        %v5403 = vsel %vm5337, %v5345, 0.0
        %v5404 = vsel %vm5338, %v5344, 0.0
        %v5405 = vsel %vm5339, %v5345, 0.0
        %v5406 = vsel %vm5340, %v5344, 0.0
        %v5407 = vsel %vm5341, %v5345, 0.0
        %v5408 = vsel %vm5342, %v5344, 0.0
        %v5409 = vsel %vm5343, %v5345, 0.0
        %v5410 = vadd.f32 %v5204, %v5346
        %v5411 = vadd.f32 %v5205, %v5347
        %v5412 = vadd.f32 %v5206, %v5348
        %v5413 = vadd.f32 %v5207, %v5349
        %v5414 = vadd.f32 %v5208, %v5350
        %v5415 = vadd.f32 %v5209, %v5351
        %v5416 = vadd.f32 %v5210, %v5352
        %v5417 = vadd.f32 %v5211, %v5353
        %v5418 = vadd.f32 %v5212, %v5354
        %v5419 = vadd.f32 %v5213, %v5355
        %v5420 = vadd.f32 %v5214, %v5356
        %v5421 = vadd.f32 %v5215, %v5357
        %v5422 = vadd.f32 %v5216, %v5358
        %v5423 = vadd.f32 %v5217, %v5359
        %v5424 = vadd.f32 %v5218, %v5360
        %v5425 = vadd.f32 %v5219, %v5361
        %v5426 = vadd.f32 %v5220, %v5362
        %v5427 = vadd.f32 %v5221, %v5363
        %v5428 = vadd.f32 %v5222, %v5364
        %v5429 = vadd.f32 %v5223, %v5365
        %v5430 = vadd.f32 %v5224, %v5366
        %v5431 = vadd.f32 %v5225, %v5367
        %v5432 = vadd.f32 %v5226, %v5368
        %v5433 = vadd.f32 %v5227, %v5369
        %v5434 = vadd.f32 %v5228, %v5370
        %v5435 = vadd.f32 %v5229, %v5371
        %v5436 = vadd.f32 %v5230, %v5372
        %v5437 = vadd.f32 %v5231, %v5373
        %v5438 = vadd.f32 %v5232, %v5374
        %v5439 = vadd.f32 %v5233, %v5375
        %v5440 = vadd.f32 %v5234, %v5376
        %v5441 = vadd.f32 %v5235, %v5377
        %v5442 = vadd.f32 %v5236, %v5378
        %v5443 = vadd.f32 %v5237, %v5379
        %v5444 = vadd.f32 %v5238, %v5380
        %v5445 = vadd.f32 %v5239, %v5381
        %v5446 = vadd.f32 %v5240, %v5382
        %v5447 = vadd.f32 %v5241, %v5383
        %v5448 = vadd.f32 %v5242, %v5384
        %v5449 = vadd.f32 %v5243, %v5385
        %v5450 = vadd.f32 %v5244, %v5386
        %v5451 = vadd.f32 %v5245, %v5387
        %v5452 = vadd.f32 %v5246, %v5388
        %v5453 = vadd.f32 %v5247, %v5389
        %v5454 = vadd.f32 %v5248, %v5390
        %v5455 = vadd.f32 %v5249, %v5391
        %v5456 = vadd.f32 %v5250, %v5392
        %v5457 = vadd.f32 %v5251, %v5393
        %v5458 = vadd.f32 %v5252, %v5394
        %v5459 = vadd.f32 %v5253, %v5395
        %v5460 = vadd.f32 %v5254, %v5396
        %v5461 = vadd.f32 %v5255, %v5397
        %v5462 = vadd.f32 %v5256, %v5398
        %v5463 = vadd.f32 %v5257, %v5399
        %v5464 = vadd.f32 %v5258, %v5400
        %v5465 = vadd.f32 %v5259, %v5401
        %v5466 = vadd.f32 %v5260, %v5402
        %v5467 = vadd.f32 %v5261, %v5403
        %v5468 = vadd.f32 %v5262, %v5404
        %v5469 = vadd.f32 %v5263, %v5405
        %v5470 = vadd.f32 %v5264, %v5406
        %v5471 = vadd.f32 %v5265, %v5407
        %v5472 = vadd.f32 %v5266, %v5408
        %v5473 = vadd.f32 %v5267, %v5409
        %v5474 = vpack.c.bf16 %v5412, %v5410
        %v5475 = vpack.c.bf16 %v5413, %v5411
        %v5476 = vpack.c.bf16 %v5416, %v5414
        %v5477 = vpack.c.bf16 %v5417, %v5415
        %v5478 = vpack.c.bf16 %v5420, %v5418
        %v5479 = vpack.c.bf16 %v5421, %v5419
        %v5480 = vpack.c.bf16 %v5424, %v5422
        %v5481 = vpack.c.bf16 %v5425, %v5423
        %v5482 = vpack.c.bf16 %v5428, %v5426
        %v5483 = vpack.c.bf16 %v5429, %v5427
        %v5484 = vpack.c.bf16 %v5432, %v5430
        %v5485 = vpack.c.bf16 %v5433, %v5431
        %v5486 = vpack.c.bf16 %v5436, %v5434
        %v5487 = vpack.c.bf16 %v5437, %v5435
        %v5488 = vpack.c.bf16 %v5440, %v5438
        %v5489 = vpack.c.bf16 %v5441, %v5439
        %v5490 = vpack.c.bf16 %v5444, %v5442
        %v5491 = vpack.c.bf16 %v5445, %v5443
        %v5492 = vpack.c.bf16 %v5448, %v5446
        %v5493 = vpack.c.bf16 %v5449, %v5447
        %v5494 = vpack.c.bf16 %v5452, %v5450
        %v5495 = vpack.c.bf16 %v5453, %v5451
        %v5496 = vpack.c.bf16 %v5456, %v5454
        %v5497 = vpack.c.bf16 %v5457, %v5455
        %v5498 = vpack.c.bf16 %v5460, %v5458
        %v5499 = vpack.c.bf16 %v5461, %v5459
        %v5500 = vpack.c.bf16 %v5464, %v5462
        %v5501 = vpack.c.bf16 %v5465, %v5463
        %v5502 = vpack.c.bf16 %v5468, %v5466
        %v5503 = vpack.c.bf16 %v5469, %v5467
        %v5504 = vpack.c.bf16 %v5472, %v5470
        %v5505 = vpack.c.bf16 %v5473, %v5471
        %5506 = vmatpush.bf16.msra.mxu0 %v5488
        %5507 = vmatpush.bf16.msra.mxu0 %v5486
        %5508 = vmatpush.bf16.msra.mxu0 %v5484
        %5509 = vmatpush.bf16.msra.mxu0 %v5482
        %5510 = vmatpush.bf16.msra.mxu0 %v5480
        %5511 = vmatpush.bf16.msra.mxu0 %v5478
        %5512 = vmatpush.bf16.msra.mxu0 %v5476
        %5513 = vmatpush.bf16.msra.mxu0 %v5474
        %5514 = vmatmul.bf16.gmra.mxu0 %v3709
        %v5515 = vpop.f32.mrf.mxu0
        %v5516 = vadd.f32 0.0, %v5515
        %v5517 = vpop.f32.mrf.mxu0
        %5518 = vdwg.mxu0
        %5519 = vmatpush.bf16.msra.mxu0 %v5504
        %5520 = vmatpush.bf16.msra.mxu0 %v5502
        %5521 = vmatpush.bf16.msra.mxu0 %v5500
        %5522 = vmatpush.bf16.msra.mxu0 %v5498
        %5523 = vmatpush.bf16.msra.mxu0 %v5496
        %5524 = vmatpush.bf16.msra.mxu0 %v5494
        %5525 = vmatpush.bf16.msra.mxu0 %v5492
        %5526 = vmatpush.bf16.msra.mxu0 %v5490
        %5527 = vmatmul.bf16.gmra.mxu0 %v3710
        %v5528 = vpop.f32.mrf.mxu0
        %v5529 = vadd.f32 %v5516, %v5528
        %v5530 = vpop.f32.mrf.mxu0
        %5531 = vdwg.mxu0
        %5532 = vmatpush.bf16.msra.mxu0 %v5489
        %5533 = vmatpush.bf16.msra.mxu0 %v5487
        %5534 = vmatpush.bf16.msra.mxu0 %v5485
        %5535 = vmatpush.bf16.msra.mxu0 %v5483
        %5536 = vmatpush.bf16.msra.mxu0 %v5481
        %5537 = vmatpush.bf16.msra.mxu0 %v5479
        %5538 = vmatpush.bf16.msra.mxu0 %v5477
        %5539 = vmatpush.bf16.msra.mxu0 %v5475
        %5540 = vmatmul.bf16.gmra.mxu0 %v3709
        %v5541 = vpop.f32.mrf.mxu0
        %v5542 = vadd.f32 0.0, %v5541
        %v5543 = vpop.f32.mrf.mxu0
        %5544 = vdwg.mxu0
        %5545 = vmatpush.bf16.msra.mxu0 %v5505
        %5546 = vmatpush.bf16.msra.mxu0 %v5503
        %5547 = vmatpush.bf16.msra.mxu0 %v5501
        %5548 = vmatpush.bf16.msra.mxu0 %v5499
        %5549 = vmatpush.bf16.msra.mxu0 %v5497
        %5550 = vmatpush.bf16.msra.mxu0 %v5495
        %5551 = vmatpush.bf16.msra.mxu0 %v5493
        %5552 = vmatpush.bf16.msra.mxu0 %v5491
        %5553 = vmatmul.bf16.gmra.mxu0 %v3710
        %v5554 = vpop.f32.mrf.mxu0
        %v5555 = vadd.f32 %v5542, %v5554
        %v5556 = vpop.f32.mrf.mxu0
        %5557 = vdwg.mxu0
        %v5560 = vrot.slane %v5555, 4
        %v5561 = vsel %vm4638, %v5529, %v5560
        %5563 = vst [vmem:[%s244] sm:$0xff] %v5561
        %p5564 = scmp.lt.s32.totalorder %s17, 1
        %s5565 = scalar_select %p5564, %s17, 1
        %s5566 = smul.addr %s5565, 2
        %s5567 = smul.addr %s5566, 4
        %s5568 = scalar_lea.vmem %s3, %s5567
        %p5569 = scmp.lt.s32.totalorder %s17, 1
        %s5570 = scalar_select %p5569, %s17, 1
        %s5571 = smul.addr %s5570, 2
        %s5572 = smul.addr %s5571, 4
        %s5573 = scalar_lea.vmem %s4, %s5572
        // Predicated region
        $region37: #{align_module_forward.1} parent=31 // pred_check
          %p5574 = pneg %p108
        $region38: #{align_module_forward.1} parent=31 // pred_check_branch
          %5576 = sbr.rel (%p5574) target = $region40
        $region39: #{align_module_forward.1} parent=31 // pred_region
          _
        $region40: #{align_module_forward.1} parent=31 // pred_fallthru
          _
        // Predicated region
        $region41: #{align_module_forward.1} parent=31 // pred_check
          %p5577 = pneg %p134
        $region42: #{align_module_forward.1} parent=31 // pred_check_branch
          %5579 = sbr.rel (%p5577) target = $region44
        $region43: #{align_module_forward.1} parent=31 // pred_region
          _
        $region44: #{align_module_forward.1} parent=31 // pred_fallthru
          _
      $region32: #{align_module_forward.1} parent=5 // pred_fallthru
        _
      %p5580 = scmp.le.s32.totalorder 2, %s12
      // Predicated region
      $region45: #{align_module_forward.1} parent=5 // pred_check
        %p5581 = pneg %p5580
      $region46: #{align_module_forward.1} parent=5 // pred_check_branch
        %5583 = sbr.rel (%p5581) target = $region48
      $region47: #{align_module_forward.1} parent=5 // pred_region
        %s5584 = ssub.s32 %s12, 2
        // Predicated region
        $region49: #{align_module_forward.1} parent=47 // pred_check
          %p5585 = pneg %p114
        $region50: #{align_module_forward.1} parent=47 // pred_check_branch
          %5587 = sbr.rel (%p5585) target = $region52
        $region51: #{align_module_forward.1} parent=47 // pred_region
          %p5588 = scmp.lt.s32.totalorder %s18, 1
          %s5589 = scalar_select %p5588, %s18, 1
          %s5590 = smul.addr %s5589, 2
          %s5591 = smul.addr %s5590, 4
          %s5592 = scalar_lea.vmem %s3, %s5591
        $region52: #{align_module_forward.1} parent=47 // pred_fallthru
          _
        // Predicated region
        $region53: #{align_module_forward.1} parent=47 // pred_check
          %p5593 = pneg %p140
        $region54: #{align_module_forward.1} parent=47 // pred_check_branch
          %5595 = sbr.rel (%p5593) target = $region56
        $region55: #{align_module_forward.1} parent=47 // pred_region
          %p5596 = scmp.lt.s32.totalorder %s18, 1
          %s5597 = scalar_select %p5596, %s18, 1
          %s5598 = smul.addr %s5597, 2
          %s5599 = smul.addr %s5598, 4
          %s5600 = scalar_lea.vmem %s4, %s5599
        $region56: #{align_module_forward.1} parent=47 // pred_fallthru
          _
      $region48: #{align_module_forward.1} parent=5 // pred_fallthru
        _
    $region6: #{align_module_forward.1} parent=1 // loop_footer
      %s16 = sadd.s32 1, %s12
    $region7: #{align_module_forward.1} parent=1 // loop_footer_branch
      %11 = sbr.rel target = $region3
    $region8: #{align_module_forward.1} parent=1 // loop_exit
      _
    %5601 = vsyncpa [#allocation4], 1
    %s5602 = scalar_lea.sflag [#allocation4], 1
    %5603 = vsyncpa %s5602, 1

</llo_original>
